<compile_context>
chip_gen: v7x
topology: tpu7x:2x2x1
jax: 0.10.0
libtpu: 0.0.40
codegen_flags: <defaults>
</compile_context>

<pallas_src>
import math
import functools

import jax
import jax.numpy as jnp
from jax import lax
from jax.experimental import pallas as pl
from jax.experimental.pallas import tpu as pltpu


# ----------------------------- in-kernel helpers ----------------------------

def _ln(x, g, b, eps=1e-5):
    # E[x^2] - mu^2: the two cross-lane reductions are independent (XLU overlap).
    mu = jnp.mean(x, axis=-1, keepdims=True)
    var = jnp.maximum(jnp.mean(x * x, axis=-1, keepdims=True) - mu * mu, 0.0)
    return (x - mu) * lax.rsqrt(var + eps) * g + b


def _mm(x, w, b=None):
    # bf16 MXU operands, f32 accumulation.
    out = jnp.dot(x.astype(jnp.bfloat16), w.astype(jnp.bfloat16),
                  preferred_element_type=jnp.float32)
    return out if b is None else out + b


def _mha(x, wqkv, bqkv, wo, bo, attn_buf, *, B, S, D, heads):
    """Multi-head self-attention on a VMEM-resident (B*S, D) slab."""
    N = B * S
    Dh = D // heads
    scale = 1.0 / math.sqrt(Dh)
    qkv = _mm(x, wqkv, bqkv)                                           # (N, 3D)
    # TODO(synk): Mosaic dot_general supports one batch dim, so heads remain a
    # static unrolled loop; per-head outputs are written into attn_buf (no concat).
    for hd in range(heads):
        q = qkv[:, hd * Dh:(hd + 1) * Dh].reshape(B, S, Dh)
        k = qkv[:, D + hd * Dh:D + (hd + 1) * Dh].reshape(B, S, Dh)
        v = qkv[:, 2 * D + hd * Dh:2 * D + (hd + 1) * Dh].reshape(B, S, Dh)
        s = jnp.einsum('bqd,bkd->bqk', q.astype(jnp.bfloat16),
                       k.astype(jnp.bfloat16),
                       preferred_element_type=jnp.float32) * scale
        m = jnp.max(s, axis=-1, keepdims=True)
        p = jnp.exp(s - m)
        p = p * pl.reciprocal(jnp.sum(p, axis=-1, keepdims=True), approx=True)
        o = jnp.einsum('bqk,bkd->bqd', p.astype(jnp.bfloat16),
                       v.astype(jnp.bfloat16),
                       preferred_element_type=jnp.float32)
        attn_buf[:, hd * Dh:(hd + 1) * Dh] = o.reshape(N, Dh)
    return _mm(attn_buf[...], wo, bo)


def _encoder_block(x, w, attn_buf, *, B, S, D, heads):
    """Post-norm TransformerEncoderLayer (ReLU FFN, dropout == identity)."""
    (wqkv, bqkv, wo, bo, g1, be1, w1, b1, w2, b2, g2, be2) = w
    a = _mha(x, wqkv, bqkv, wo, bo, attn_buf, B=B, S=S, D=D, heads=heads)
    h = _ln(x + a, g1, be1)
    ff = _mm(jnp.maximum(_mm(h, w1, b1), 0.0), w2, b2)
    return _ln(h + ff, g2, be2)


# ----------------------------- fused Pallas kernel --------------------------

def _fused_forward_kernel(*refs, B, S, H, heads, n_lstm, n_tr, pidx):
    D = 2 * H
    N = B * S

    *ins, o_ref, lstm_buf, attn_buf = refs
    it = iter(ins)
    x_ref, pe_ref, p_ref, projw_ref = next(it), next(it), next(it), next(it)
    lstm_w = [(next(it), next(it)) for _ in range(n_lstm)]
    tr_w = [(next(it), next(it), next(it), next(it)) for _ in range(n_tr)]
    headw1_ref = next(it)

    def P(name):
        row, ln = pidx[name]                    # static offsets into the param slab
        return p_ref[row:row + 1, 0:ln]         # (1, ln)

    # 1) Projection Linear -> LayerNorm -> ReLU -> + positional encoding.
    h = _mm(x_ref[...], projw_ref[...], P('proj_b'))
    h = jnp.maximum(_ln(h, P('proj_ln_g'), P('proj_ln_b')), 0.0)
    h = (h.reshape(B, S, H) + pe_ref[...]).reshape(N, H)

    # 2) Stacked bidirectional LSTM.  Gate layout per direction: [i, f, o, g];
    #    combined columns: [fwd 4H | bwd 4H].  W_hh is block-diagonal (2H, 8H) so
    #    both directions share one bf16 MXU push per timestep.
    for l in range(n_lstm):
        wih = lstm_w[l][0][...]
        whh = lstm_w[l][1][...]
        gx = _mm(h, wih, P(f'lstm{l}_b')).reshape(B, S, 8 * H)   # hoisted, 8H wide
        h_all = jnp.zeros((B, D), jnp.float32)
        c_f = jnp.zeros((B, H), jnp.float32)
        c_b = jnp.zeros((B, H), jnp.float32)
        # TODO(synk): switch to lax.fori_loop(..., unroll=k) if S grows (live ranges).
        for t in range(S):
            tb = S - 1 - t
            g_f = gx[:, t, 0:4 * H]
            g_b = gx[:, tb, 4 * H:]
            if t > 0:
                hh = _mm(h_all, whh)                              # (B, 8H), one push
                g_f = g_f + hh[:, 0:4 * H]
                g_b = g_b + hh[:, 4 * H:]
            sf = jax.nn.sigmoid(g_f[:, 0:3 * H])                  # i,f,o batched
            sb = jax.nn.sigmoid(g_b[:, 0:3 * H])
            gf = jnp.tanh(g_f[:, 3 * H:])
            gb = jnp.tanh(g_b[:, 3 * H:])
            c_f = sf[:, H:2 * H] * c_f + sf[:, 0:H] * gf
            c_b = sb[:, H:2 * H] * c_b + sb[:, 0:H] * gb
            h_f = sf[:, 2 * H:] * jnp.tanh(c_f)
            h_b = sb[:, 2 * H:] * jnp.tanh(c_b)
            lstm_buf[:, t, 0:H] = h_f
            lstm_buf[:, tb, H:] = h_b
            h_all = jnp.concatenate([h_f, h_b], axis=-1)
        h = lstm_buf[...].reshape(N, D)

    # 3) Transformer encoder stack (post-norm, ReLU FFN, dropout == identity).
    # TODO(synk): the torch module also stashes per-layer attention weights in
    # self.attention_weights (stateful logging, not part of the return); omitted.
    for l in range(n_tr):
        wqkv_ref, wo_ref, w1_ref, w2_ref = tr_w[l]
        w = (wqkv_ref[...], P(f'tr{l}_bqkv'), wo_ref[...], P(f'tr{l}_bo'),
             P(f'tr{l}_ln1_g'), P(f'tr{l}_ln1_b'),
             w1_ref[...], P(f'tr{l}_b1'), w2_ref[...], P(f'tr{l}_b2'),
             P(f'tr{l}_ln2_g'), P(f'tr{l}_ln2_b'))
        h = _encoder_block(h, w, attn_buf, B=B, S=S, D=D, heads=heads)

    # 4) Anomaly head on the last timestep: LN -> Linear -> ReLU -> Linear.
    last = h.reshape(B, S, D)[:, S - 1, :]
    z = _ln(last, P('head_ln_g'), P('head_ln_b'))
    z = jnp.maximum(_mm(z, headw1_ref[...], P('head_b1')), 0.0)
    o_ref[...] = jnp.sum(z * P('head_w2'), axis=-1, keepdims=True) + P('head_b2')


# ----------------------------- wrappers & params ----------------------------

def positional_encoding(seq_len, d_model):
    position = jnp.arange(seq_len, dtype=jnp.float32)[:, None]
    div_term = jnp.exp(jnp.arange(0, d_model, 2, dtype=jnp.float32)
                       * (-math.log(10000.0) / d_model))
    pe = jnp.zeros((seq_len, d_model), dtype=jnp.float32)
    pe = pe.at[:, 0::2].set(jnp.sin(position * div_term))
    pe = pe.at[:, 1::2].set(jnp.cos(position * div_term))
    return pe


def _pack_rows(named_vecs):
    """Pack 1-D param vectors into one (rows, width) f32 slab + static index."""
    width = max(int(v.shape[-1]) for _, v in named_vecs)
    width = ((width + 127) // 128) * 128
    rows, pidx = [], {}
    for name, v in named_vecs:
        v = jnp.asarray(v, jnp.float32).reshape(-1)
        pidx[name] = (len(rows), int(v.shape[0]))
        rows.append(jnp.pad(v, (0, width - int(v.shape[0]))))
    while len(rows) % 8:
        rows.append(jnp.zeros((width,), jnp.float32))
    return jnp.stack(rows), pidx


def build_forward(hidden, num_heads, n_lstm, n_tr, pidx):
    H = hidden
    D = 2 * H

    def fwd(params, x):
        B, S, Din = x.shape
        N = B * S
        pe = positional_encoding(S, H)                      # (S, H), folded by XLA

        ins = [x.reshape(N, Din), pe, params['pslab'], params['proj_w']]
        for l in range(n_lstm):
            ins += [params[f'lstm{l}_wih'], params[f'lstm{l}_whh']]
        for l in range(n_tr):
            ins += [params[f'tr{l}_wqkv'], params[f'tr{l}_wo'],
                    params[f'tr{l}_w1'], params[f'tr{l}_w2']]
        ins.append(params['head_w1'])

        kernel = functools.partial(
            _fused_forward_kernel, B=B, S=S, H=H, heads=num_heads,
            n_lstm=n_lstm, n_tr=n_tr, pidx=pidx)

        vmem = pl.BlockSpec(memory_space=pltpu.MemorySpace.VMEM)
        z = pl.pallas_call(
            kernel,
            out_shape=jax.ShapeDtypeStruct((B, 1), jnp.float32),
            in_specs=[vmem] * len(ins),
            out_specs=vmem,
            scratch_shapes=[pltpu.VMEM((B, S, D), jnp.float32),   # LSTM layer output
                            pltpu.VMEM((N, D), jnp.float32)],     # attention output
        )(*ins)
        return z[:, 0]                                            # (B,)

    return jax.jit(fwd)


def init_params(key, input_dim, hidden, lstm_layers, transformer_layers):
    H = hidden
    D = 2 * H
    d_ff = 4 * H
    bf = jnp.bfloat16
    keys = iter(jax.random.split(key, 512))

    def w(shape, scale=0.05, dtype=jnp.float32):
        return (scale * jax.random.normal(next(keys), shape,
                                          dtype=jnp.float32)).astype(dtype)

    # Big weights pre-transposed to (Din, Dout), stored bf16 for the MXU.
    params = {'proj_w': w((input_dim, H), dtype=bf),
              'head_w1': w((D, H), dtype=bf)}
    vecs = [('proj_b', w((H,))),
            ('proj_ln_g', jnp.ones((H,), jnp.float32)),
            ('proj_ln_b', jnp.zeros((H,), jnp.float32))]

    for l in range(lstm_layers):
        din = H if l == 0 else D
        # columns: [fwd i,f,o,g | bwd i,f,o,g]
        params[f'lstm{l}_wih'] = w((din, 8 * H), dtype=bf)
        whh = jnp.zeros((2 * H, 8 * H), jnp.float32)
        whh = whh.at[:H, :4 * H].set(w((H, 4 * H)))     # fwd recurrent block
        whh = whh.at[H:, 4 * H:].set(w((H, 4 * H)))     # bwd recurrent block
        params[f'lstm{l}_whh'] = whh.astype(bf)
        vecs.append((f'lstm{l}_b', w((8 * H,))))        # combined b_ih + b_hh

    for l in range(transformer_layers):
        params[f'tr{l}_wqkv'] = w((D, 3 * D), dtype=bf)
        params[f'tr{l}_wo'] = w((D, D), dtype=bf)
        params[f'tr{l}_w1'] = w((D, d_ff), dtype=bf)
        params[f'tr{l}_w2'] = w((d_ff, D), dtype=bf)
        vecs += [(f'tr{l}_bqkv', w((3 * D,))), (f'tr{l}_bo', w((D,))),
                 (f'tr{l}_ln1_g', jnp.ones((D,), jnp.float32)),
                 (f'tr{l}_ln1_b', jnp.zeros((D,), jnp.float32)),
                 (f'tr{l}_b1', w((d_ff,))), (f'tr{l}_b2', w((D,))),
                 (f'tr{l}_ln2_g', jnp.ones((D,), jnp.float32)),
                 (f'tr{l}_ln2_b', jnp.zeros((D,), jnp.float32))]

    vecs += [('head_ln_g', jnp.ones((D,), jnp.float32)),
             ('head_ln_b', jnp.zeros((D,), jnp.float32)),
             ('head_b1', w((H,))), ('head_w2', w((H,))), ('head_b2', w((1,)))]

    params['pslab'], pidx = _pack_rows(vecs)
    return params, pidx


# --------------------------------- main --------------------------------------

if __name__ == "__main__":
    B, S, INPUT_DIM = 2, 8, 16
    HIDDEN, LSTM_LAYERS, TR_LAYERS, HEADS = 32, 2, 2, 4

    key = jax.random.PRNGKey(0)
    pkey, xkey = jax.random.split(key)
    params, pidx = init_params(pkey, INPUT_DIM, HIDDEN, LSTM_LAYERS, TR_LAYERS)
    x = jax.random.normal(xkey, (B, S, INPUT_DIM), dtype=jnp.float32)

    fwd = build_forward(HIDDEN, HEADS, LSTM_LAYERS, TR_LAYERS, pidx)
    out = fwd(params, x)
    jax.block_until_ready(out)

    assert out.shape == (B,), out.shape
    assert out.dtype == jnp.float32
    assert bool(jnp.all(jnp.isfinite(out)))
    print("KERNEL_OK")
</pallas_src>

<mosaic_0001>
module attributes {stable_mosaic.version = 11 : i64} {
  func.func @_fused_forward_kernel(%arg0: memref<16x16xf32, #tpu.memory_space<vmem>>, %arg1: memref<8x32xf32, #tpu.memory_space<vmem>>, %arg2: memref<32x256xf32, #tpu.memory_space<vmem>>, %arg3: memref<16x32xbf16, #tpu.memory_space<vmem>>, %arg4: memref<32x256xbf16, #tpu.memory_space<vmem>>, %arg5: memref<64x256xbf16, #tpu.memory_space<vmem>>, %arg6: memref<64x256xbf16, #tpu.memory_space<vmem>>, %arg7: memref<64x256xbf16, #tpu.memory_space<vmem>>, %arg8: memref<64x192xbf16, #tpu.memory_space<vmem>>, %arg9: memref<64x64xbf16, #tpu.memory_space<vmem>>, %arg10: memref<64x128xbf16, #tpu.memory_space<vmem>>, %arg11: memref<128x64xbf16, #tpu.memory_space<vmem>>, %arg12: memref<64x192xbf16, #tpu.memory_space<vmem>>, %arg13: memref<64x64xbf16, #tpu.memory_space<vmem>>, %arg14: memref<64x128xbf16, #tpu.memory_space<vmem>>, %arg15: memref<128x64xbf16, #tpu.memory_space<vmem>>, %arg16: memref<64x32xbf16, #tpu.memory_space<vmem>>, %arg17: memref<2x1xf32, #tpu.memory_space<vmem>>, %arg18: memref<2x8x64xf32, #tpu.memory_space<vmem>>, %arg19: memref<16x64xf32, #tpu.memory_space<vmem>>) attributes {dimension_semantics = [], scalar_prefetch = 0 : i64, scratch_operands = 2 : i64, tpu.core_type = #tpu.core_type<tc>} {
    %c0 = arith.constant 0 : index
    %c0_0 = arith.constant 0 : index
    %0 = vector.load %arg0[%c0, %c0_0] : memref<16x16xf32, #tpu.memory_space<vmem>>, vector<16x16xf32>
    %c0_1 = arith.constant 0 : index
    %c0_2 = arith.constant 0 : index
    %1 = vector.load %arg3[%c0_1, %c0_2] : memref<16x32xbf16, #tpu.memory_space<vmem>>, vector<16x32xbf16>
    %c0_3 = arith.constant 0 : index
    %c0_4 = arith.constant 0 : index
    %2 = vector.load %arg2[%c0_3, %c0_4] : memref<32x256xf32, #tpu.memory_space<vmem>>, vector<1x32xf32>
    %3 = arith.truncf %0 : vector<16x16xf32> to vector<16x16xbf16>
    %cst = arith.constant dense<0.000000e+00> : vector<16x32xf32>
    %4 = tpu.matmul %3, %1, %cst {dimension_numbers = #tpu.dot_dimension_numbers<[1], [0], [0], [1], [0, 0, 1, 1], [], []>} : vector<16x16xbf16>, vector<16x32xbf16>, vector<16x32xf32> -> vector<16x32xf32>
    %5 = vector.broadcast %2 : vector<1x32xf32> to vector<16x32xf32>
    %6 = arith.addf %4, %5 : vector<16x32xf32>
    %c1 = arith.constant 1 : index
    %c0_5 = arith.constant 0 : index
    %7 = vector.load %arg2[%c1, %c0_5] : memref<32x256xf32, #tpu.memory_space<vmem>>, vector<1x32xf32>
    %c2 = arith.constant 2 : index
    %c0_6 = arith.constant 0 : index
    %8 = vector.load %arg2[%c2, %c0_6] : memref<32x256xf32, #tpu.memory_space<vmem>>, vector<1x32xf32>
    %cst_7 = arith.constant dense<0.000000e+00> : vector<16xf32>
    %9 = vector.multi_reduction <add>, %6, %cst_7 [1] : vector<16x32xf32> to vector<16xf32>
    %10 = vector.shape_cast %9 : vector<16xf32> to vector<16x1xf32>
    %cst_8 = arith.constant 3.200000e+01 : f32
    %11 = vector.broadcast %cst_8 : f32 to vector<16x1xf32>
    %12 = arith.divf %10, %11 : vector<16x1xf32>
    %13 = arith.mulf %6, %6 : vector<16x32xf32>
    %cst_9 = arith.constant dense<0.000000e+00> : vector<16xf32>
    %14 = vector.multi_reduction <add>, %13, %cst_9 [1] : vector<16x32xf32> to vector<16xf32>
    %15 = vector.shape_cast %14 : vector<16xf32> to vector<16x1xf32>
    %cst_10 = arith.constant 3.200000e+01 : f32
    %16 = vector.broadcast %cst_10 : f32 to vector<16x1xf32>
    %17 = arith.divf %15, %16 : vector<16x1xf32>
    %18 = arith.mulf %12, %12 : vector<16x1xf32>
    %19 = arith.subf %17, %18 : vector<16x1xf32>
    %cst_11 = arith.constant 0.000000e+00 : f32
    %20 = vector.broadcast %cst_11 : f32 to vector<16x1xf32>
    %21 = arith.maximumf %19, %20 : vector<16x1xf32>
    %22 = vector.broadcast %12 : vector<16x1xf32> to vector<16x32xf32>
    %23 = arith.subf %6, %22 : vector<16x32xf32>
    %cst_12 = arith.constant 9.99999974E-6 : f32
    %24 = vector.broadcast %cst_12 : f32 to vector<16x1xf32>
    %25 = arith.addf %21, %24 : vector<16x1xf32>
    %26 = math.rsqrt %25 : vector<16x1xf32>
    %27 = vector.broadcast %26 : vector<16x1xf32> to vector<16x32xf32>
    %28 = arith.mulf %23, %27 : vector<16x32xf32>
    %29 = vector.broadcast %7 : vector<1x32xf32> to vector<16x32xf32>
    %30 = arith.mulf %28, %29 : vector<16x32xf32>
    %31 = vector.broadcast %8 : vector<1x32xf32> to vector<16x32xf32>
    %32 = arith.addf %30, %31 : vector<16x32xf32>
    %cst_13 = arith.constant 0.000000e+00 : f32
    %33 = vector.broadcast %cst_13 : f32 to vector<16x32xf32>
    %34 = arith.maximumf %32, %33 : vector<16x32xf32>
    %35 = vector.shape_cast %34 : vector<16x32xf32> to vector<2x8x32xf32>
    %c0_14 = arith.constant 0 : index
    %c0_15 = arith.constant 0 : index
    %36 = vector.load %arg1[%c0_14, %c0_15] : memref<8x32xf32, #tpu.memory_space<vmem>>, vector<8x32xf32>
    %37 = vector.shape_cast %36 : vector<8x32xf32> to vector<1x8x32xf32>
    %38 = vector.broadcast %37 : vector<1x8x32xf32> to vector<2x8x32xf32>
    %39 = arith.addf %35, %38 : vector<2x8x32xf32>
    %40 = vector.shape_cast %39 : vector<2x8x32xf32> to vector<16x32xf32>
    %c0_16 = arith.constant 0 : index
    %c0_17 = arith.constant 0 : index
    %41 = vector.load %arg4[%c0_16, %c0_17] : memref<32x256xbf16, #tpu.memory_space<vmem>>, vector<32x256xbf16>
    %c0_18 = arith.constant 0 : index
    %c0_19 = arith.constant 0 : index
    %42 = vector.load %arg5[%c0_18, %c0_19] : memref<64x256xbf16, #tpu.memory_space<vmem>>, vector<64x256xbf16>
    %c3 = arith.constant 3 : index
    %c0_20 = arith.constant 0 : index
    %43 = vector.load %arg2[%c3, %c0_20] : memref<32x256xf32, #tpu.memory_space<vmem>>, vector<1x256xf32>
    %44 = arith.truncf %40 : vector<16x32xf32> to vector<16x32xbf16>
    %cst_21 = arith.constant dense<0.000000e+00> : vector<16x256xf32>
    %45 = tpu.matmul %44, %41, %cst_21 {dimension_numbers = #tpu.dot_dimension_numbers<[1], [0], [0], [1], [0, 0, 1, 1], [], []>} : vector<16x32xbf16>, vector<32x256xbf16>, vector<16x256xf32> -> vector<16x256xf32>
    %46 = vector.broadcast %43 : vector<1x256xf32> to vector<16x256xf32>
    %47 = arith.addf %45, %46 : vector<16x256xf32>
    %48 = vector.shape_cast %47 : vector<16x256xf32> to vector<2x8x256xf32>
    %cst_22 = arith.constant 0.000000e+00 : f32
    %49 = vector.broadcast %cst_22 : f32 to vector<2x32xf32>
    %cst_23 = arith.constant 0.000000e+00 : f32
    %50 = vector.broadcast %cst_23 : f32 to vector<2x32xf32>
    %51 = vector.extract_strided_slice %48 {offsets = [0, 0, 0], sizes = [2, 1, 128], strides = [1, 1, 1]} : vector<2x8x256xf32> to vector<2x1x128xf32>
    %52 = vector.shape_cast %51 : vector<2x1x128xf32> to vector<2x128xf32>
    %53 = vector.extract_strided_slice %48 {offsets = [0, 7, 128], sizes = [2, 1, 128], strides = [1, 1, 1]} : vector<2x8x256xf32> to vector<2x1x128xf32>
    %54 = vector.shape_cast %53 : vector<2x1x128xf32> to vector<2x128xf32>
    %55 = vector.extract_strided_slice %52 {offsets = [0, 0], sizes = [2, 96], strides = [1, 1]} : vector<2x128xf32> to vector<2x96xf32>
    %56 = arith.negf %55 : vector<2x96xf32>
    %57 = math.exp %56 : vector<2x96xf32>
    %cst_24 = arith.constant 1.000000e+00 : f32
    %58 = vector.broadcast %cst_24 : f32 to vector<2x96xf32>
    %59 = arith.addf %58, %57 : vector<2x96xf32>
    %60 = arith.divf %58, %59 : vector<2x96xf32>
    %61 = vector.extract_strided_slice %54 {offsets = [0, 0], sizes = [2, 96], strides = [1, 1]} : vector<2x128xf32> to vector<2x96xf32>
    %62 = arith.negf %61 : vector<2x96xf32>
    %63 = math.exp %62 : vector<2x96xf32>
    %cst_25 = arith.constant 1.000000e+00 : f32
    %64 = vector.broadcast %cst_25 : f32 to vector<2x96xf32>
    %65 = arith.addf %64, %63 : vector<2x96xf32>
    %66 = arith.divf %64, %65 : vector<2x96xf32>
    %67 = vector.extract_strided_slice %52 {offsets = [0, 96], sizes = [2, 32], strides = [1, 1]} : vector<2x128xf32> to vector<2x32xf32>
    %68 = math.tanh %67 : vector<2x32xf32>
    %69 = vector.extract_strided_slice %54 {offsets = [0, 96], sizes = [2, 32], strides = [1, 1]} : vector<2x128xf32> to vector<2x32xf32>
    %70 = math.tanh %69 : vector<2x32xf32>
    %71 = vector.extract_strided_slice %60 {offsets = [0, 32], sizes = [2, 32], strides = [1, 1]} : vector<2x96xf32> to vector<2x32xf32>
    %72 = arith.mulf %71, %49 : vector<2x32xf32>
    %73 = vector.extract_strided_slice %60 {offsets = [0, 0], sizes = [2, 32], strides = [1, 1]} : vector<2x96xf32> to vector<2x32xf32>
    %74 = arith.mulf %73, %68 : vector<2x32xf32>
    %75 = arith.addf %72, %74 : vector<2x32xf32>
    %76 = vector.extract_strided_slice %66 {offsets = [0, 32], sizes = [2, 32], strides = [1, 1]} : vector<2x96xf32> to vector<2x32xf32>
    %77 = arith.mulf %76, %50 : vector<2x32xf32>
    %78 = vector.extract_strided_slice %66 {offsets = [0, 0], sizes = [2, 32], strides = [1, 1]} : vector<2x96xf32> to vector<2x32xf32>
    %79 = arith.mulf %78, %70 : vector<2x32xf32>
    %80 = arith.addf %77, %79 : vector<2x32xf32>
    %81 = vector.extract_strided_slice %60 {offsets = [0, 64], sizes = [2, 32], strides = [1, 1]} : vector<2x96xf32> to vector<2x32xf32>
    %82 = math.tanh %75 : vector<2x32xf32>
    %83 = arith.mulf %81, %82 : vector<2x32xf32>
    %84 = vector.extract_strided_slice %66 {offsets = [0, 64], sizes = [2, 32], strides = [1, 1]} : vector<2x96xf32> to vector<2x32xf32>
    %85 = math.tanh %80 : vector<2x32xf32>
    %86 = arith.mulf %84, %85 : vector<2x32xf32>
    %c0_26 = arith.constant 0 : index
    %c0_27 = arith.constant 0 : index
    %c0_28 = arith.constant 0 : index
    %87 = vector.load %arg18[%c0_26, %c0_27, %c0_28] : memref<2x8x64xf32, #tpu.memory_space<vmem>>, vector<2x1x32xf32>
    %88 = vector.shape_cast %87 : vector<2x1x32xf32> to vector<2x32xf32>
    %89 = vector.shape_cast %83 : vector<2x32xf32> to vector<2x1x32xf32>
    tpu.vector_store %arg18[%c0_26, %c0_27, %c0_28], %89 {strides = array<i32>} : memref<2x8x64xf32, #tpu.memory_space<vmem>>, vector<2x1x32xf32>,
    %c0_29 = arith.constant 0 : index
    %c7 = arith.constant 7 : index
    %c32 = arith.constant 32 : index
    %90 = vector.load %arg18[%c0_29, %c7, %c32] : memref<2x8x64xf32, #tpu.memory_space<vmem>>, vector<2x1x32xf32>
    %91 = vector.shape_cast %90 : vector<2x1x32xf32> to vector<2x32xf32>
    %92 = vector.shape_cast %86 : vector<2x32xf32> to vector<2x1x32xf32>
    tpu.vector_store %arg18[%c0_29, %c7, %c32], %92 {strides = array<i32>} : memref<2x8x64xf32, #tpu.memory_space<vmem>>, vector<2x1x32xf32>,
    %93 = tpu.concatenate %83, %86 in 1 : vector<2x32xf32>, vector<2x32xf32> -> vector<2x64xf32>
    %94 = vector.extract_strided_slice %48 {offsets = [0, 1, 0], sizes = [2, 1, 128], strides = [1, 1, 1]} : vector<2x8x256xf32> to vector<2x1x128xf32>
    %95 = vector.shape_cast %94 : vector<2x1x128xf32> to vector<2x128xf32>
    %96 = vector.extract_strided_slice %48 {offsets = [0, 6, 128], sizes = [2, 1, 128], strides = [1, 1, 1]} : vector<2x8x256xf32> to vector<2x1x128xf32>
    %97 = vector.shape_cast %96 : vector<2x1x128xf32> to vector<2x128xf32>
    %98 = arith.truncf %93 : vector<2x64xf32> to vector<2x64xbf16>
    %cst_30 = arith.constant dense<0.000000e+00> : vector<2x256xf32>
    %99 = tpu.matmul %98, %42, %cst_30 {dimension_numbers = #tpu.dot_dimension_numbers<[1], [0], [0], [1], [0, 0, 1, 1], [], []>} : vector<2x64xbf16>, vector<64x256xbf16>, vector<2x256xf32> -> vector<2x256xf32>
    %100 = vector.extract_strided_slice %99 {offsets = [0, 0], sizes = [2, 128], strides = [1, 1]} : vector<2x256xf32> to vector<2x128xf32>
    %101 = arith.addf %95, %100 : vector<2x128xf32>
    %102 = vector.extract_strided_slice %99 {offsets = [0, 128], sizes = [2, 128], strides = [1, 1]} : vector<2x256xf32> to vector<2x128xf32>
    %103 = arith.addf %97, %102 : vector<2x128xf32>
    %104 = vector.extract_strided_slice %101 {offsets = [0, 0], sizes = [2, 96], strides = [1, 1]} : vector<2x128xf32> to vector<2x96xf32>
    %105 = arith.negf %104 : vector<2x96xf32>
    %106 = math.exp %105 : vector<2x96xf32>
    %cst_31 = arith.constant 1.000000e+00 : f32
    %107 = vector.broadcast %cst_31 : f32 to vector<2x96xf32>
    %108 = arith.addf %107, %106 : vector<2x96xf32>
    %109 = arith.divf %107, %108 : vector<2x96xf32>
    %110 = vector.extract_strided_slice %103 {offsets = [0, 0], sizes = [2, 96], strides = [1, 1]} : vector<2x128xf32> to vector<2x96xf32>
    %111 = arith.negf %110 : vector<2x96xf32>
    %112 = math.exp %111 : vector<2x96xf32>
    %cst_32 = arith.constant 1.000000e+00 : f32
    %113 = vector.broadcast %cst_32 : f32 to vector<2x96xf32>
    %114 = arith.addf %113, %112 : vector<2x96xf32>
    %115 = arith.divf %113, %114 : vector<2x96xf32>
    %116 = vector.extract_strided_slice %101 {offsets = [0, 96], sizes = [2, 32], strides = [1, 1]} : vector<2x128xf32> to vector<2x32xf32>
    %117 = math.tanh %116 : vector<2x32xf32>
    %118 = vector.extract_strided_slice %103 {offsets = [0, 96], sizes = [2, 32], strides = [1, 1]} : vector<2x128xf32> to vector<2x32xf32>
    %119 = math.tanh %118 : vector<2x32xf32>
    %120 = vector.extract_strided_slice %109 {offsets = [0, 32], sizes = [2, 32], strides = [1, 1]} : vector<2x96xf32> to vector<2x32xf32>
    %121 = arith.mulf %120, %75 : vector<2x32xf32>
    %122 = vector.extract_strided_slice %109 {offsets = [0, 0], sizes = [2, 32], strides = [1, 1]} : vector<2x96xf32> to vector<2x32xf32>
    %123 = arith.mulf %122, %117 : vector<2x32xf32>
    %124 = arith.addf %121, %123 : vector<2x32xf32>
    %125 = vector.extract_strided_slice %115 {offsets = [0, 32], sizes = [2, 32], strides = [1, 1]} : vector<2x96xf32> to vector<2x32xf32>
    %126 = arith.mulf %125, %80 : vector<2x32xf32>
    %127 = vector.extract_strided_slice %115 {offsets = [0, 0], sizes = [2, 32], strides = [1, 1]} : vector<2x96xf32> to vector<2x32xf32>
    %128 = arith.mulf %127, %119 : vector<2x32xf32>
    %129 = arith.addf %126, %128 : vector<2x32xf32>
    %130 = vector.extract_strided_slice %109 {offsets = [0, 64], sizes = [2, 32], strides = [1, 1]} : vector<2x96xf32> to vector<2x32xf32>
    %131 = math.tanh %124 : vector<2x32xf32>
    %132 = arith.mulf %130, %131 : vector<2x32xf32>
    %133 = vector.extract_strided_slice %115 {offsets = [0, 64], sizes = [2, 32], strides = [1, 1]} : vector<2x96xf32> to vector<2x32xf32>
    %134 = math.tanh %129 : vector<2x32xf32>
    %135 = arith.mulf %133, %134 : vector<2x32xf32>
    %c0_33 = arith.constant 0 : index
    %c1_34 = arith.constant 1 : index
    %c0_35 = arith.constant 0 : index
    %136 = vector.load %arg18[%c0_33, %c1_34, %c0_35] : memref<2x8x64xf32, #tpu.memory_space<vmem>>, vector<2x1x32xf32>
    %137 = vector.shape_cast %136 : vector<2x1x32xf32> to vector<2x32xf32>
    %138 = vector.shape_cast %132 : vector<2x32xf32> to vector<2x1x32xf32>
    tpu.vector_store %arg18[%c0_33, %c1_34, %c0_35], %138 {strides = array<i32>} : memref<2x8x64xf32, #tpu.memory_space<vmem>>, vector<2x1x32xf32>,
    %c0_36 = arith.constant 0 : index
    %c6 = arith.constant 6 : index
    %c32_37 = arith.constant 32 : index
    %139 = vector.load %arg18[%c0_36, %c6, %c32_37] : memref<2x8x64xf32, #tpu.memory_space<vmem>>, vector<2x1x32xf32>
    %140 = vector.shape_cast %139 : vector<2x1x32xf32> to vector<2x32xf32>
    %141 = vector.shape_cast %135 : vector<2x32xf32> to vector<2x1x32xf32>
    tpu.vector_store %arg18[%c0_36, %c6, %c32_37], %141 {strides = array<i32>} : memref<2x8x64xf32, #tpu.memory_space<vmem>>, vector<2x1x32xf32>,
    %142 = tpu.concatenate %132, %135 in 1 : vector<2x32xf32>, vector<2x32xf32> -> vector<2x64xf32>
    %143 = vector.extract_strided_slice %48 {offsets = [0, 2, 0], sizes = [2, 1, 128], strides = [1, 1, 1]} : vector<2x8x256xf32> to vector<2x1x128xf32>
    %144 = vector.shape_cast %143 : vector<2x1x128xf32> to vector<2x128xf32>
    %145 = vector.extract_strided_slice %48 {offsets = [0, 5, 128], sizes = [2, 1, 128], strides = [1, 1, 1]} : vector<2x8x256xf32> to vector<2x1x128xf32>
    %146 = vector.shape_cast %145 : vector<2x1x128xf32> to vector<2x128xf32>
    %147 = arith.truncf %142 : vector<2x64xf32> to vector<2x64xbf16>
    %cst_38 = arith.constant dense<0.000000e+00> : vector<2x256xf32>
    %148 = tpu.matmul %147, %42, %cst_38 {dimension_numbers = #tpu.dot_dimension_numbers<[1], [0], [0], [1], [0, 0, 1, 1], [], []>} : vector<2x64xbf16>, vector<64x256xbf16>, vector<2x256xf32> -> vector<2x256xf32>
    %149 = vector.extract_strided_slice %148 {offsets = [0, 0], sizes = [2, 128], strides = [1, 1]} : vector<2x256xf32> to vector<2x128xf32>
    %150 = arith.addf %144, %149 : vector<2x128xf32>
    %151 = vector.extract_strided_slice %148 {offsets = [0, 128], sizes = [2, 128], strides = [1, 1]} : vector<2x256xf32> to vector<2x128xf32>
    %152 = arith.addf %146, %151 : vector<2x128xf32>
    %153 = vector.extract_strided_slice %150 {offsets = [0, 0], sizes = [2, 96], strides = [1, 1]} : vector<2x128xf32> to vector<2x96xf32>
    %154 = arith.negf %153 : vector<2x96xf32>
    %155 = math.exp %154 : vector<2x96xf32>
    %cst_39 = arith.constant 1.000000e+00 : f32
    %156 = vector.broadcast %cst_39 : f32 to vector<2x96xf32>
    %157 = arith.addf %156, %155 : vector<2x96xf32>
    %158 = arith.divf %156, %157 : vector<2x96xf32>
    %159 = vector.extract_strided_slice %152 {offsets = [0, 0], sizes = [2, 96], strides = [1, 1]} : vector<2x128xf32> to vector<2x96xf32>
    %160 = arith.negf %159 : vector<2x96xf32>
    %161 = math.exp %160 : vector<2x96xf32>
    %cst_40 = arith.constant 1.000000e+00 : f32
    %162 = vector.broadcast %cst_40 : f32 to vector<2x96xf32>
    %163 = arith.addf %162, %161 : vector<2x96xf32>
    %164 = arith.divf %162, %163 : vector<2x96xf32>
    %165 = vector.extract_strided_slice %150 {offsets = [0, 96], sizes = [2, 32], strides = [1, 1]} : vector<2x128xf32> to vector<2x32xf32>
    %166 = math.tanh %165 : vector<2x32xf32>
    %167 = vector.extract_strided_slice %152 {offsets = [0, 96], sizes = [2, 32], strides = [1, 1]} : vector<2x128xf32> to vector<2x32xf32>
    %168 = math.tanh %167 : vector<2x32xf32>
    %169 = vector.extract_strided_slice %158 {offsets = [0, 32], sizes = [2, 32], strides = [1, 1]} : vector<2x96xf32> to vector<2x32xf32>
    %170 = arith.mulf %169, %124 : vector<2x32xf32>
    %171 = vector.extract_strided_slice %158 {offsets = [0, 0], sizes = [2, 32], strides = [1, 1]} : vector<2x96xf32> to vector<2x32xf32>
    %172 = arith.mulf %171, %166 : vector<2x32xf32>
    %173 = arith.addf %170, %172 : vector<2x32xf32>
    %174 = vector.extract_strided_slice %164 {offsets = [0, 32], sizes = [2, 32], strides = [1, 1]} : vector<2x96xf32> to vector<2x32xf32>
    %175 = arith.mulf %174, %129 : vector<2x32xf32>
    %176 = vector.extract_strided_slice %164 {offsets = [0, 0], sizes = [2, 32], strides = [1, 1]} : vector<2x96xf32> to vector<2x32xf32>
    %177 = arith.mulf %176, %168 : vector<2x32xf32>
    %178 = arith.addf %175, %177 : vector<2x32xf32>
    %179 = vector.extract_strided_slice %158 {offsets = [0, 64], sizes = [2, 32], strides = [1, 1]} : vector<2x96xf32> to vector<2x32xf32>
    %180 = math.tanh %173 : vector<2x32xf32>
    %181 = arith.mulf %179, %180 : vector<2x32xf32>
    %182 = vector.extract_strided_slice %164 {offsets = [0, 64], sizes = [2, 32], strides = [1, 1]} : vector<2x96xf32> to vector<2x32xf32>
    %183 = math.tanh %178 : vector<2x32xf32>
    %184 = arith.mulf %182, %183 : vector<2x32xf32>
    %c0_41 = arith.constant 0 : index
    %c2_42 = arith.constant 2 : index
    %c0_43 = arith.constant 0 : index
    %185 = vector.load %arg18[%c0_41, %c2_42, %c0_43] : memref<2x8x64xf32, #tpu.memory_space<vmem>>, vector<2x1x32xf32>
    %186 = vector.shape_cast %185 : vector<2x1x32xf32> to vector<2x32xf32>
    %187 = vector.shape_cast %181 : vector<2x32xf32> to vector<2x1x32xf32>
    tpu.vector_store %arg18[%c0_41, %c2_42, %c0_43], %187 {strides = array<i32>} : memref<2x8x64xf32, #tpu.memory_space<vmem>>, vector<2x1x32xf32>,
    %c0_44 = arith.constant 0 : index
    %c5 = arith.constant 5 : index
    %c32_45 = arith.constant 32 : index
    %188 = vector.load %arg18[%c0_44, %c5, %c32_45] : memref<2x8x64xf32, #tpu.memory_space<vmem>>, vector<2x1x32xf32>
    %189 = vector.shape_cast %188 : vector<2x1x32xf32> to vector<2x32xf32>
    %190 = vector.shape_cast %184 : vector<2x32xf32> to vector<2x1x32xf32>
    tpu.vector_store %arg18[%c0_44, %c5, %c32_45], %190 {strides = array<i32>} : memref<2x8x64xf32, #tpu.memory_space<vmem>>, vector<2x1x32xf32>,
    %191 = tpu.concatenate %181, %184 in 1 : vector<2x32xf32>, vector<2x32xf32> -> vector<2x64xf32>
    %192 = vector.extract_strided_slice %48 {offsets = [0, 3, 0], sizes = [2, 1, 128], strides = [1, 1, 1]} : vector<2x8x256xf32> to vector<2x1x128xf32>
    %193 = vector.shape_cast %192 : vector<2x1x128xf32> to vector<2x128xf32>
    %194 = vector.extract_strided_slice %48 {offsets = [0, 4, 128], sizes = [2, 1, 128], strides = [1, 1, 1]} : vector<2x8x256xf32> to vector<2x1x128xf32>
    %195 = vector.shape_cast %194 : vector<2x1x128xf32> to vector<2x128xf32>
    %196 = arith.truncf %191 : vector<2x64xf32> to vector<2x64xbf16>
    %cst_46 = arith.constant dense<0.000000e+00> : vector<2x256xf32>
    %197 = tpu.matmul %196, %42, %cst_46 {dimension_numbers = #tpu.dot_dimension_numbers<[1], [0], [0], [1], [0, 0, 1, 1], [], []>} : vector<2x64xbf16>, vector<64x256xbf16>, vector<2x256xf32> -> vector<2x256xf32>
    %198 = vector.extract_strided_slice %197 {offsets = [0, 0], sizes = [2, 128], strides = [1, 1]} : vector<2x256xf32> to vector<2x128xf32>
    %199 = arith.addf %193, %198 : vector<2x128xf32>
    %200 = vector.extract_strided_slice %197 {offsets = [0, 128], sizes = [2, 128], strides = [1, 1]} : vector<2x256xf32> to vector<2x128xf32>
    %201 = arith.addf %195, %200 : vector<2x128xf32>
    %202 = vector.extract_strided_slice %199 {offsets = [0, 0], sizes = [2, 96], strides = [1, 1]} : vector<2x128xf32> to vector<2x96xf32>
    %203 = arith.negf %202 : vector<2x96xf32>
    %204 = math.exp %203 : vector<2x96xf32>
    %cst_47 = arith.constant 1.000000e+00 : f32
    %205 = vector.broadcast %cst_47 : f32 to vector<2x96xf32>
    %206 = arith.addf %205, %204 : vector<2x96xf32>
    %207 = arith.divf %205, %206 : vector<2x96xf32>
    %208 = vector.extract_strided_slice %201 {offsets = [0, 0], sizes = [2, 96], strides = [1, 1]} : vector<2x128xf32> to vector<2x96xf32>
    %209 = arith.negf %208 : vector<2x96xf32>
    %210 = math.exp %209 : vector<2x96xf32>
    %cst_48 = arith.constant 1.000000e+00 : f32
    %211 = vector.broadcast %cst_48 : f32 to vector<2x96xf32>
    %212 = arith.addf %211, %210 : vector<2x96xf32>
    %213 = arith.divf %211, %212 : vector<2x96xf32>
    %214 = vector.extract_strided_slice %199 {offsets = [0, 96], sizes = [2, 32], strides = [1, 1]} : vector<2x128xf32> to vector<2x32xf32>
    %215 = math.tanh %214 : vector<2x32xf32>
    %216 = vector.extract_strided_slice %201 {offsets = [0, 96], sizes = [2, 32], strides = [1, 1]} : vector<2x128xf32> to vector<2x32xf32>
    %217 = math.tanh %216 : vector<2x32xf32>
    %218 = vector.extract_strided_slice %207 {offsets = [0, 32], sizes = [2, 32], strides = [1, 1]} : vector<2x96xf32> to vector<2x32xf32>
    %219 = arith.mulf %218, %173 : vector<2x32xf32>
    %220 = vector.extract_strided_slice %207 {offsets = [0, 0], sizes = [2, 32], strides = [1, 1]} : vector<2x96xf32> to vector<2x32xf32>
    %221 = arith.mulf %220, %215 : vector<2x32xf32>
    %222 = arith.addf %219, %221 : vector<2x32xf32>
    %223 = vector.extract_strided_slice %213 {offsets = [0, 32], sizes = [2, 32], strides = [1, 1]} : vector<2x96xf32> to vector<2x32xf32>
    %224 = arith.mulf %223, %178 : vector<2x32xf32>
    %225 = vector.extract_strided_slice %213 {offsets = [0, 0], sizes = [2, 32], strides = [1, 1]} : vector<2x96xf32> to vector<2x32xf32>
    %226 = arith.mulf %225, %217 : vector<2x32xf32>
    %227 = arith.addf %224, %226 : vector<2x32xf32>
    %228 = vector.extract_strided_slice %207 {offsets = [0, 64], sizes = [2, 32], strides = [1, 1]} : vector<2x96xf32> to vector<2x32xf32>
    %229 = math.tanh %222 : vector<2x32xf32>
    %230 = arith.mulf %228, %229 : vector<2x32xf32>
    %231 = vector.extract_strided_slice %213 {offsets = [0, 64], sizes = [2, 32], strides = [1, 1]} : vector<2x96xf32> to vector<2x32xf32>
    %232 = math.tanh %227 : vector<2x32xf32>
    %233 = arith.mulf %231, %232 : vector<2x32xf32>
    %c0_49 = arith.constant 0 : index
    %c3_50 = arith.constant 3 : index
    %c0_51 = arith.constant 0 : index
    %234 = vector.load %arg18[%c0_49, %c3_50, %c0_51] : memref<2x8x64xf32, #tpu.memory_space<vmem>>, vector<2x1x32xf32>
    %235 = vector.shape_cast %234 : vector<2x1x32xf32> to vector<2x32xf32>
    %236 = vector.shape_cast %230 : vector<2x32xf32> to vector<2x1x32xf32>
    tpu.vector_store %arg18[%c0_49, %c3_50, %c0_51], %236 {strides = array<i32>} : memref<2x8x64xf32, #tpu.memory_space<vmem>>, vector<2x1x32xf32>,
    %c0_52 = arith.constant 0 : index
    %c4 = arith.constant 4 : index
    %c32_53 = arith.constant 32 : index
    %237 = vector.load %arg18[%c0_52, %c4, %c32_53] : memref<2x8x64xf32, #tpu.memory_space<vmem>>, vector<2x1x32xf32>
    %238 = vector.shape_cast %237 : vector<2x1x32xf32> to vector<2x32xf32>
    %239 = vector.shape_cast %233 : vector<2x32xf32> to vector<2x1x32xf32>
    tpu.vector_store %arg18[%c0_52, %c4, %c32_53], %239 {strides = array<i32>} : memref<2x8x64xf32, #tpu.memory_space<vmem>>, vector<2x1x32xf32>,
    %240 = tpu.concatenate %230, %233 in 1 : vector<2x32xf32>, vector<2x32xf32> -> vector<2x64xf32>
    %241 = vector.extract_strided_slice %48 {offsets = [0, 4, 0], sizes = [2, 1, 128], strides = [1, 1, 1]} : vector<2x8x256xf32> to vector<2x1x128xf32>
    %242 = vector.shape_cast %241 : vector<2x1x128xf32> to vector<2x128xf32>
    %243 = vector.extract_strided_slice %48 {offsets = [0, 3, 128], sizes = [2, 1, 128], strides = [1, 1, 1]} : vector<2x8x256xf32> to vector<2x1x128xf32>
    %244 = vector.shape_cast %243 : vector<2x1x128xf32> to vector<2x128xf32>
    %245 = arith.truncf %240 : vector<2x64xf32> to vector<2x64xbf16>
    %cst_54 = arith.constant dense<0.000000e+00> : vector<2x256xf32>
    %246 = tpu.matmul %245, %42, %cst_54 {dimension_numbers = #tpu.dot_dimension_numbers<[1], [0], [0], [1], [0, 0, 1, 1], [], []>} : vector<2x64xbf16>, vector<64x256xbf16>, vector<2x256xf32> -> vector<2x256xf32>
    %247 = vector.extract_strided_slice %246 {offsets = [0, 0], sizes = [2, 128], strides = [1, 1]} : vector<2x256xf32> to vector<2x128xf32>
    %248 = arith.addf %242, %247 : vector<2x128xf32>
    %249 = vector.extract_strided_slice %246 {offsets = [0, 128], sizes = [2, 128], strides = [1, 1]} : vector<2x256xf32> to vector<2x128xf32>
    %250 = arith.addf %244, %249 : vector<2x128xf32>
    %251 = vector.extract_strided_slice %248 {offsets = [0, 0], sizes = [2, 96], strides = [1, 1]} : vector<2x128xf32> to vector<2x96xf32>
    %252 = arith.negf %251 : vector<2x96xf32>
    %253 = math.exp %252 : vector<2x96xf32>
    %cst_55 = arith.constant 1.000000e+00 : f32
    %254 = vector.broadcast %cst_55 : f32 to vector<2x96xf32>
    %255 = arith.addf %254, %253 : vector<2x96xf32>
    %256 = arith.divf %254, %255 : vector<2x96xf32>
    %257 = vector.extract_strided_slice %250 {offsets = [0, 0], sizes = [2, 96], strides = [1, 1]} : vector<2x128xf32> to vector<2x96xf32>
    %258 = arith.negf %257 : vector<2x96xf32>
    %259 = math.exp %258 : vector<2x96xf32>
    %cst_56 = arith.constant 1.000000e+00 : f32
    %260 = vector.broadcast %cst_56 : f32 to vector<2x96xf32>
    %261 = arith.addf %260, %259 : vector<2x96xf32>
    %262 = arith.divf %260, %261 : vector<2x96xf32>
    %263 = vector.extract_strided_slice %248 {offsets = [0, 96], sizes = [2, 32], strides = [1, 1]} : vector<2x128xf32> to vector<2x32xf32>
    %264 = math.tanh %263 : vector<2x32xf32>
    %265 = vector.extract_strided_slice %250 {offsets = [0, 96], sizes = [2, 32], strides = [1, 1]} : vector<2x128xf32> to vector<2x32xf32>
    %266 = math.tanh %265 : vector<2x32xf32>
    %267 = vector.extract_strided_slice %256 {offsets = [0, 32], sizes = [2, 32], strides = [1, 1]} : vector<2x96xf32> to vector<2x32xf32>
    %268 = arith.mulf %267, %222 : vector<2x32xf32>
    %269 = vector.extract_strided_slice %256 {offsets = [0, 0], sizes = [2, 32], strides = [1, 1]} : vector<2x96xf32> to vector<2x32xf32>
    %270 = arith.mulf %269, %264 : vector<2x32xf32>
    %271 = arith.addf %268, %270 : vector<2x32xf32>
    %272 = vector.extract_strided_slice %262 {offsets = [0, 32], sizes = [2, 32], strides = [1, 1]} : vector<2x96xf32> to vector<2x32xf32>
    %273 = arith.mulf %272, %227 : vector<2x32xf32>
    %274 = vector.extract_strided_slice %262 {offsets = [0, 0], sizes = [2, 32], strides = [1, 1]} : vector<2x96xf32> to vector<2x32xf32>
    %275 = arith.mulf %274, %266 : vector<2x32xf32>
    %276 = arith.addf %273, %275 : vector<2x32xf32>
    %277 = vector.extract_strided_slice %256 {offsets = [0, 64], sizes = [2, 32], strides = [1, 1]} : vector<2x96xf32> to vector<2x32xf32>
    %278 = math.tanh %271 : vector<2x32xf32>
    %279 = arith.mulf %277, %278 : vector<2x32xf32>
    %280 = vector.extract_strided_slice %262 {offsets = [0, 64], sizes = [2, 32], strides = [1, 1]} : vector<2x96xf32> to vector<2x32xf32>
    %281 = math.tanh %276 : vector<2x32xf32>
    %282 = arith.mulf %280, %281 : vector<2x32xf32>
    %c0_57 = arith.constant 0 : index
    %c4_58 = arith.constant 4 : index
    %c0_59 = arith.constant 0 : index
    %283 = vector.load %arg18[%c0_57, %c4_58, %c0_59] : memref<2x8x64xf32, #tpu.memory_space<vmem>>, vector<2x1x32xf32>
    %284 = vector.shape_cast %283 : vector<2x1x32xf32> to vector<2x32xf32>
    %285 = vector.shape_cast %279 : vector<2x32xf32> to vector<2x1x32xf32>
    tpu.vector_store %arg18[%c0_57, %c4_58, %c0_59], %285 {strides = array<i32>} : memref<2x8x64xf32, #tpu.memory_space<vmem>>, vector<2x1x32xf32>,
    %c0_60 = arith.constant 0 : index
    %c3_61 = arith.constant 3 : index
    %c32_62 = arith.constant 32 : index
    %286 = vector.load %arg18[%c0_60, %c3_61, %c32_62] : memref<2x8x64xf32, #tpu.memory_space<vmem>>, vector<2x1x32xf32>
    %287 = vector.shape_cast %286 : vector<2x1x32xf32> to vector<2x32xf32>
    %288 = vector.shape_cast %282 : vector<2x32xf32> to vector<2x1x32xf32>
    tpu.vector_store %arg18[%c0_60, %c3_61, %c32_62], %288 {strides = array<i32>} : memref<2x8x64xf32, #tpu.memory_space<vmem>>, vector<2x1x32xf32>,
    %289 = tpu.concatenate %279, %282 in 1 : vector<2x32xf32>, vector<2x32xf32> -> vector<2x64xf32>
    %290 = vector.extract_strided_slice %48 {offsets = [0, 5, 0], sizes = [2, 1, 128], strides = [1, 1, 1]} : vector<2x8x256xf32> to vector<2x1x128xf32>
    %291 = vector.shape_cast %290 : vector<2x1x128xf32> to vector<2x128xf32>
    %292 = vector.extract_strided_slice %48 {offsets = [0, 2, 128], sizes = [2, 1, 128], strides = [1, 1, 1]} : vector<2x8x256xf32> to vector<2x1x128xf32>
    %293 = vector.shape_cast %292 : vector<2x1x128xf32> to vector<2x128xf32>
    %294 = arith.truncf %289 : vector<2x64xf32> to vector<2x64xbf16>
    %cst_63 = arith.constant dense<0.000000e+00> : vector<2x256xf32>
    %295 = tpu.matmul %294, %42, %cst_63 {dimension_numbers = #tpu.dot_dimension_numbers<[1], [0], [0], [1], [0, 0, 1, 1], [], []>} : vector<2x64xbf16>, vector<64x256xbf16>, vector<2x256xf32> -> vector<2x256xf32>
    %296 = vector.extract_strided_slice %295 {offsets = [0, 0], sizes = [2, 128], strides = [1, 1]} : vector<2x256xf32> to vector<2x128xf32>
    %297 = arith.addf %291, %296 : vector<2x128xf32>
    %298 = vector.extract_strided_slice %295 {offsets = [0, 128], sizes = [2, 128], strides = [1, 1]} : vector<2x256xf32> to vector<2x128xf32>
    %299 = arith.addf %293, %298 : vector<2x128xf32>
    %300 = vector.extract_strided_slice %297 {offsets = [0, 0], sizes = [2, 96], strides = [1, 1]} : vector<2x128xf32> to vector<2x96xf32>
    %301 = arith.negf %300 : vector<2x96xf32>
    %302 = math.exp %301 : vector<2x96xf32>
    %cst_64 = arith.constant 1.000000e+00 : f32
    %303 = vector.broadcast %cst_64 : f32 to vector<2x96xf32>
    %304 = arith.addf %303, %302 : vector<2x96xf32>
    %305 = arith.divf %303, %304 : vector<2x96xf32>
    %306 = vector.extract_strided_slice %299 {offsets = [0, 0], sizes = [2, 96], strides = [1, 1]} : vector<2x128xf32> to vector<2x96xf32>
    %307 = arith.negf %306 : vector<2x96xf32>
    %308 = math.exp %307 : vector<2x96xf32>
    %cst_65 = arith.constant 1.000000e+00 : f32
    %309 = vector.broadcast %cst_65 : f32 to vector<2x96xf32>
    %310 = arith.addf %309, %308 : vector<2x96xf32>
    %311 = arith.divf %309, %310 : vector<2x96xf32>
    %312 = vector.extract_strided_slice %297 {offsets = [0, 96], sizes = [2, 32], strides = [1, 1]} : vector<2x128xf32> to vector<2x32xf32>
    %313 = math.tanh %312 : vector<2x32xf32>
    %314 = vector.extract_strided_slice %299 {offsets = [0, 96], sizes = [2, 32], strides = [1, 1]} : vector<2x128xf32> to vector<2x32xf32>
    %315 = math.tanh %314 : vector<2x32xf32>
    %316 = vector.extract_strided_slice %305 {offsets = [0, 32], sizes = [2, 32], strides = [1, 1]} : vector<2x96xf32> to vector<2x32xf32>
    %317 = arith.mulf %316, %271 : vector<2x32xf32>
    %318 = vector.extract_strided_slice %305 {offsets = [0, 0], sizes = [2, 32], strides = [1, 1]} : vector<2x96xf32> to vector<2x32xf32>
    %319 = arith.mulf %318, %313 : vector<2x32xf32>
    %320 = arith.addf %317, %319 : vector<2x32xf32>
    %321 = vector.extract_strided_slice %311 {offsets = [0, 32], sizes = [2, 32], strides = [1, 1]} : vector<2x96xf32> to vector<2x32xf32>
    %322 = arith.mulf %321, %276 : vector<2x32xf32>
    %323 = vector.extract_strided_slice %311 {offsets = [0, 0], sizes = [2, 32], strides = [1, 1]} : vector<2x96xf32> to vector<2x32xf32>
    %324 = arith.mulf %323, %315 : vector<2x32xf32>
    %325 = arith.addf %322, %324 : vector<2x32xf32>
    %326 = vector.extract_strided_slice %305 {offsets = [0, 64], sizes = [2, 32], strides = [1, 1]} : vector<2x96xf32> to vector<2x32xf32>
    %327 = math.tanh %320 : vector<2x32xf32>
    %328 = arith.mulf %326, %327 : vector<2x32xf32>
    %329 = vector.extract_strided_slice %311 {offsets = [0, 64], sizes = [2, 32], strides = [1, 1]} : vector<2x96xf32> to vector<2x32xf32>
    %330 = math.tanh %325 : vector<2x32xf32>
    %331 = arith.mulf %329, %330 : vector<2x32xf32>
    %c0_66 = arith.constant 0 : index
    %c5_67 = arith.constant 5 : index
    %c0_68 = arith.constant 0 : index
    %332 = vector.load %arg18[%c0_66, %c5_67, %c0_68] : memref<2x8x64xf32, #tpu.memory_space<vmem>>, vector<2x1x32xf32>
    %333 = vector.shape_cast %332 : vector<2x1x32xf32> to vector<2x32xf32>
    %334 = vector.shape_cast %328 : vector<2x32xf32> to vector<2x1x32xf32>
    tpu.vector_store %arg18[%c0_66, %c5_67, %c0_68], %334 {strides = array<i32>} : memref<2x8x64xf32, #tpu.memory_space<vmem>>, vector<2x1x32xf32>,
    %c0_69 = arith.constant 0 : index
    %c2_70 = arith.constant 2 : index
    %c32_71 = arith.constant 32 : index
    %335 = vector.load %arg18[%c0_69, %c2_70, %c32_71] : memref<2x8x64xf32, #tpu.memory_space<vmem>>, vector<2x1x32xf32>
    %336 = vector.shape_cast %335 : vector<2x1x32xf32> to vector<2x32xf32>
    %337 = vector.shape_cast %331 : vector<2x32xf32> to vector<2x1x32xf32>
    tpu.vector_store %arg18[%c0_69, %c2_70, %c32_71], %337 {strides = array<i32>} : memref<2x8x64xf32, #tpu.memory_space<vmem>>, vector<2x1x32xf32>,
    %338 = tpu.concatenate %328, %331 in 1 : vector<2x32xf32>, vector<2x32xf32> -> vector<2x64xf32>
    %339 = vector.extract_strided_slice %48 {offsets = [0, 6, 0], sizes = [2, 1, 128], strides = [1, 1, 1]} : vector<2x8x256xf32> to vector<2x1x128xf32>
    %340 = vector.shape_cast %339 : vector<2x1x128xf32> to vector<2x128xf32>
    %341 = vector.extract_strided_slice %48 {offsets = [0, 1, 128], sizes = [2, 1, 128], strides = [1, 1, 1]} : vector<2x8x256xf32> to vector<2x1x128xf32>
    %342 = vector.shape_cast %341 : vector<2x1x128xf32> to vector<2x128xf32>
    %343 = arith.truncf %338 : vector<2x64xf32> to vector<2x64xbf16>
    %cst_72 = arith.constant dense<0.000000e+00> : vector<2x256xf32>
    %344 = tpu.matmul %343, %42, %cst_72 {dimension_numbers = #tpu.dot_dimension_numbers<[1], [0], [0], [1], [0, 0, 1, 1], [], []>} : vector<2x64xbf16>, vector<64x256xbf16>, vector<2x256xf32> -> vector<2x256xf32>
    %345 = vector.extract_strided_slice %344 {offsets = [0, 0], sizes = [2, 128], strides = [1, 1]} : vector<2x256xf32> to vector<2x128xf32>
    %346 = arith.addf %340, %345 : vector<2x128xf32>
    %347 = vector.extract_strided_slice %344 {offsets = [0, 128], sizes = [2, 128], strides = [1, 1]} : vector<2x256xf32> to vector<2x128xf32>
    %348 = arith.addf %342, %347 : vector<2x128xf32>
    %349 = vector.extract_strided_slice %346 {offsets = [0, 0], sizes = [2, 96], strides = [1, 1]} : vector<2x128xf32> to vector<2x96xf32>
    %350 = arith.negf %349 : vector<2x96xf32>
    %351 = math.exp %350 : vector<2x96xf32>
    %cst_73 = arith.constant 1.000000e+00 : f32
    %352 = vector.broadcast %cst_73 : f32 to vector<2x96xf32>
    %353 = arith.addf %352, %351 : vector<2x96xf32>
    %354 = arith.divf %352, %353 : vector<2x96xf32>
    %355 = vector.extract_strided_slice %348 {offsets = [0, 0], sizes = [2, 96], strides = [1, 1]} : vector<2x128xf32> to vector<2x96xf32>
    %356 = arith.negf %355 : vector<2x96xf32>
    %357 = math.exp %356 : vector<2x96xf32>
    %cst_74 = arith.constant 1.000000e+00 : f32
    %358 = vector.broadcast %cst_74 : f32 to vector<2x96xf32>
    %359 = arith.addf %358, %357 : vector<2x96xf32>
    %360 = arith.divf %358, %359 : vector<2x96xf32>
    %361 = vector.extract_strided_slice %346 {offsets = [0, 96], sizes = [2, 32], strides = [1, 1]} : vector<2x128xf32> to vector<2x32xf32>
    %362 = math.tanh %361 : vector<2x32xf32>
    %363 = vector.extract_strided_slice %348 {offsets = [0, 96], sizes = [2, 32], strides = [1, 1]} : vector<2x128xf32> to vector<2x32xf32>
    %364 = math.tanh %363 : vector<2x32xf32>
    %365 = vector.extract_strided_slice %354 {offsets = [0, 32], sizes = [2, 32], strides = [1, 1]} : vector<2x96xf32> to vector<2x32xf32>
    %366 = arith.mulf %365, %320 : vector<2x32xf32>
    %367 = vector.extract_strided_slice %354 {offsets = [0, 0], sizes = [2, 32], strides = [1, 1]} : vector<2x96xf32> to vector<2x32xf32>
    %368 = arith.mulf %367, %362 : vector<2x32xf32>
    %369 = arith.addf %366, %368 : vector<2x32xf32>
    %370 = vector.extract_strided_slice %360 {offsets = [0, 32], sizes = [2, 32], strides = [1, 1]} : vector<2x96xf32> to vector<2x32xf32>
    %371 = arith.mulf %370, %325 : vector<2x32xf32>
    %372 = vector.extract_strided_slice %360 {offsets = [0, 0], sizes = [2, 32], strides = [1, 1]} : vector<2x96xf32> to vector<2x32xf32>
    %373 = arith.mulf %372, %364 : vector<2x32xf32>
    %374 = arith.addf %371, %373 : vector<2x32xf32>
    %375 = vector.extract_strided_slice %354 {offsets = [0, 64], sizes = [2, 32], strides = [1, 1]} : vector<2x96xf32> to vector<2x32xf32>
    %376 = math.tanh %369 : vector<2x32xf32>
    %377 = arith.mulf %375, %376 : vector<2x32xf32>
    %378 = vector.extract_strided_slice %360 {offsets = [0, 64], sizes = [2, 32], strides = [1, 1]} : vector<2x96xf32> to vector<2x32xf32>
    %379 = math.tanh %374 : vector<2x32xf32>
    %380 = arith.mulf %378, %379 : vector<2x32xf32>
    %c0_75 = arith.constant 0 : index
    %c6_76 = arith.constant 6 : index
    %c0_77 = arith.constant 0 : index
    %381 = vector.load %arg18[%c0_75, %c6_76, %c0_77] : memref<2x8x64xf32, #tpu.memory_space<vmem>>, vector<2x1x32xf32>
    %382 = vector.shape_cast %381 : vector<2x1x32xf32> to vector<2x32xf32>
    %383 = vector.shape_cast %377 : vector<2x32xf32> to vector<2x1x32xf32>
    tpu.vector_store %arg18[%c0_75, %c6_76, %c0_77], %383 {strides = array<i32>} : memref<2x8x64xf32, #tpu.memory_space<vmem>>, vector<2x1x32xf32>,
    %c0_78 = arith.constant 0 : index
    %c1_79 = arith.constant 1 : index
    %c32_80 = arith.constant 32 : index
    %384 = vector.load %arg18[%c0_78, %c1_79, %c32_80] : memref<2x8x64xf32, #tpu.memory_space<vmem>>, vector<2x1x32xf32>
    %385 = vector.shape_cast %384 : vector<2x1x32xf32> to vector<2x32xf32>
    %386 = vector.shape_cast %380 : vector<2x32xf32> to vector<2x1x32xf32>
    tpu.vector_store %arg18[%c0_78, %c1_79, %c32_80], %386 {strides = array<i32>} : memref<2x8x64xf32, #tpu.memory_space<vmem>>, vector<2x1x32xf32>,
    %387 = tpu.concatenate %377, %380 in 1 : vector<2x32xf32>, vector<2x32xf32> -> vector<2x64xf32>
    %388 = vector.extract_strided_slice %48 {offsets = [0, 7, 0], sizes = [2, 1, 128], strides = [1, 1, 1]} : vector<2x8x256xf32> to vector<2x1x128xf32>
    %389 = vector.shape_cast %388 : vector<2x1x128xf32> to vector<2x128xf32>
    %390 = vector.extract_strided_slice %48 {offsets = [0, 0, 128], sizes = [2, 1, 128], strides = [1, 1, 1]} : vector<2x8x256xf32> to vector<2x1x128xf32>
    %391 = vector.shape_cast %390 : vector<2x1x128xf32> to vector<2x128xf32>
    %392 = arith.truncf %387 : vector<2x64xf32> to vector<2x64xbf16>
    %cst_81 = arith.constant dense<0.000000e+00> : vector<2x256xf32>
    %393 = tpu.matmul %392, %42, %cst_81 {dimension_numbers = #tpu.dot_dimension_numbers<[1], [0], [0], [1], [0, 0, 1, 1], [], []>} : vector<2x64xbf16>, vector<64x256xbf16>, vector<2x256xf32> -> vector<2x256xf32>
    %394 = vector.extract_strided_slice %393 {offsets = [0, 0], sizes = [2, 128], strides = [1, 1]} : vector<2x256xf32> to vector<2x128xf32>
    %395 = arith.addf %389, %394 : vector<2x128xf32>
    %396 = vector.extract_strided_slice %393 {offsets = [0, 128], sizes = [2, 128], strides = [1, 1]} : vector<2x256xf32> to vector<2x128xf32>
    %397 = arith.addf %391, %396 : vector<2x128xf32>
    %398 = vector.extract_strided_slice %395 {offsets = [0, 0], sizes = [2, 96], strides = [1, 1]} : vector<2x128xf32> to vector<2x96xf32>
    %399 = arith.negf %398 : vector<2x96xf32>
    %400 = math.exp %399 : vector<2x96xf32>
    %cst_82 = arith.constant 1.000000e+00 : f32
    %401 = vector.broadcast %cst_82 : f32 to vector<2x96xf32>
    %402 = arith.addf %401, %400 : vector<2x96xf32>
    %403 = arith.divf %401, %402 : vector<2x96xf32>
    %404 = vector.extract_strided_slice %397 {offsets = [0, 0], sizes = [2, 96], strides = [1, 1]} : vector<2x128xf32> to vector<2x96xf32>
    %405 = arith.negf %404 : vector<2x96xf32>
    %406 = math.exp %405 : vector<2x96xf32>
    %cst_83 = arith.constant 1.000000e+00 : f32
    %407 = vector.broadcast %cst_83 : f32 to vector<2x96xf32>
    %408 = arith.addf %407, %406 : vector<2x96xf32>
    %409 = arith.divf %407, %408 : vector<2x96xf32>
    %410 = vector.extract_strided_slice %395 {offsets = [0, 96], sizes = [2, 32], strides = [1, 1]} : vector<2x128xf32> to vector<2x32xf32>
    %411 = math.tanh %410 : vector<2x32xf32>
    %412 = vector.extract_strided_slice %397 {offsets = [0, 96], sizes = [2, 32], strides = [1, 1]} : vector<2x128xf32> to vector<2x32xf32>
    %413 = math.tanh %412 : vector<2x32xf32>
    %414 = vector.extract_strided_slice %403 {offsets = [0, 32], sizes = [2, 32], strides = [1, 1]} : vector<2x96xf32> to vector<2x32xf32>
    %415 = arith.mulf %414, %369 : vector<2x32xf32>
    %416 = vector.extract_strided_slice %403 {offsets = [0, 0], sizes = [2, 32], strides = [1, 1]} : vector<2x96xf32> to vector<2x32xf32>
    %417 = arith.mulf %416, %411 : vector<2x32xf32>
    %418 = arith.addf %415, %417 : vector<2x32xf32>
    %419 = vector.extract_strided_slice %409 {offsets = [0, 32], sizes = [2, 32], strides = [1, 1]} : vector<2x96xf32> to vector<2x32xf32>
    %420 = arith.mulf %419, %374 : vector<2x32xf32>
    %421 = vector.extract_strided_slice %409 {offsets = [0, 0], sizes = [2, 32], strides = [1, 1]} : vector<2x96xf32> to vector<2x32xf32>
    %422 = arith.mulf %421, %413 : vector<2x32xf32>
    %423 = arith.addf %420, %422 : vector<2x32xf32>
    %424 = vector.extract_strided_slice %403 {offsets = [0, 64], sizes = [2, 32], strides = [1, 1]} : vector<2x96xf32> to vector<2x32xf32>
    %425 = math.tanh %418 : vector<2x32xf32>
    %426 = arith.mulf %424, %425 : vector<2x32xf32>
    %427 = vector.extract_strided_slice %409 {offsets = [0, 64], sizes = [2, 32], strides = [1, 1]} : vector<2x96xf32> to vector<2x32xf32>
    %428 = math.tanh %423 : vector<2x32xf32>
    %429 = arith.mulf %427, %428 : vector<2x32xf32>
    %c0_84 = arith.constant 0 : index
    %c7_85 = arith.constant 7 : index
    %c0_86 = arith.constant 0 : index
    %430 = vector.load %arg18[%c0_84, %c7_85, %c0_86] : memref<2x8x64xf32, #tpu.memory_space<vmem>>, vector<2x1x32xf32>
    %431 = vector.shape_cast %430 : vector<2x1x32xf32> to vector<2x32xf32>
    %432 = vector.shape_cast %426 : vector<2x32xf32> to vector<2x1x32xf32>
    tpu.vector_store %arg18[%c0_84, %c7_85, %c0_86], %432 {strides = array<i32>} : memref<2x8x64xf32, #tpu.memory_space<vmem>>, vector<2x1x32xf32>,
    %c0_87 = arith.constant 0 : index
    %c0_88 = arith.constant 0 : index
    %c32_89 = arith.constant 32 : index
    %433 = vector.load %arg18[%c0_87, %c0_88, %c32_89] : memref<2x8x64xf32, #tpu.memory_space<vmem>>, vector<2x1x32xf32>
    %434 = vector.shape_cast %433 : vector<2x1x32xf32> to vector<2x32xf32>
    %435 = vector.shape_cast %429 : vector<2x32xf32> to vector<2x1x32xf32>
    tpu.vector_store %arg18[%c0_87, %c0_88, %c32_89], %435 {strides = array<i32>} : memref<2x8x64xf32, #tpu.memory_space<vmem>>, vector<2x1x32xf32>,
    %c0_90 = arith.constant 0 : index
    %c0_91 = arith.constant 0 : index
    %c0_92 = arith.constant 0 : index
    %436 = vector.load %arg18[%c0_90, %c0_91, %c0_92] : memref<2x8x64xf32, #tpu.memory_space<vmem>>, vector<2x8x64xf32>
    %437 = vector.shape_cast %436 : vector<2x8x64xf32> to vector<16x64xf32>
    %c0_93 = arith.constant 0 : index
    %c0_94 = arith.constant 0 : index
    %438 = vector.load %arg6[%c0_93, %c0_94] : memref<64x256xbf16, #tpu.memory_space<vmem>>, vector<64x256xbf16>
    %c0_95 = arith.constant 0 : index
    %c0_96 = arith.constant 0 : index
    %439 = vector.load %arg7[%c0_95, %c0_96] : memref<64x256xbf16, #tpu.memory_space<vmem>>, vector<64x256xbf16>
    %c4_97 = arith.constant 4 : index
    %c0_98 = arith.constant 0 : index
    %440 = vector.load %arg2[%c4_97, %c0_98] : memref<32x256xf32, #tpu.memory_space<vmem>>, vector<1x256xf32>
    %441 = arith.truncf %437 : vector<16x64xf32> to vector<16x64xbf16>
    %cst_99 = arith.constant dense<0.000000e+00> : vector<16x256xf32>
    %442 = tpu.matmul %441, %438, %cst_99 {dimension_numbers = #tpu.dot_dimension_numbers<[1], [0], [0], [1], [0, 0, 1, 1], [], []>} : vector<16x64xbf16>, vector<64x256xbf16>, vector<16x256xf32> -> vector<16x256xf32>
    %443 = vector.broadcast %440 : vector<1x256xf32> to vector<16x256xf32>
    %444 = arith.addf %442, %443 : vector<16x256xf32>
    %445 = vector.shape_cast %444 : vector<16x256xf32> to vector<2x8x256xf32>
    %cst_100 = arith.constant 0.000000e+00 : f32
    %446 = vector.broadcast %cst_100 : f32 to vector<2x32xf32>
    %cst_101 = arith.constant 0.000000e+00 : f32
    %447 = vector.broadcast %cst_101 : f32 to vector<2x32xf32>
    %448 = vector.extract_strided_slice %445 {offsets = [0, 0, 0], sizes = [2, 1, 128], strides = [1, 1, 1]} : vector<2x8x256xf32> to vector<2x1x128xf32>
    %449 = vector.shape_cast %448 : vector<2x1x128xf32> to vector<2x128xf32>
    %450 = vector.extract_strided_slice %445 {offsets = [0, 7, 128], sizes = [2, 1, 128], strides = [1, 1, 1]} : vector<2x8x256xf32> to vector<2x1x128xf32>
    %451 = vector.shape_cast %450 : vector<2x1x128xf32> to vector<2x128xf32>
    %452 = vector.extract_strided_slice %449 {offsets = [0, 0], sizes = [2, 96], strides = [1, 1]} : vector<2x128xf32> to vector<2x96xf32>
    %453 = arith.negf %452 : vector<2x96xf32>
    %454 = math.exp %453 : vector<2x96xf32>
    %cst_102 = arith.constant 1.000000e+00 : f32
    %455 = vector.broadcast %cst_102 : f32 to vector<2x96xf32>
    %456 = arith.addf %455, %454 : vector<2x96xf32>
    %457 = arith.divf %455, %456 : vector<2x96xf32>
    %458 = vector.extract_strided_slice %451 {offsets = [0, 0], sizes = [2, 96], strides = [1, 1]} : vector<2x128xf32> to vector<2x96xf32>
    %459 = arith.negf %458 : vector<2x96xf32>
    %460 = math.exp %459 : vector<2x96xf32>
    %cst_103 = arith.constant 1.000000e+00 : f32
    %461 = vector.broadcast %cst_103 : f32 to vector<2x96xf32>
    %462 = arith.addf %461, %460 : vector<2x96xf32>
    %463 = arith.divf %461, %462 : vector<2x96xf32>
    %464 = vector.extract_strided_slice %449 {offsets = [0, 96], sizes = [2, 32], strides = [1, 1]} : vector<2x128xf32> to vector<2x32xf32>
    %465 = math.tanh %464 : vector<2x32xf32>
    %466 = vector.extract_strided_slice %451 {offsets = [0, 96], sizes = [2, 32], strides = [1, 1]} : vector<2x128xf32> to vector<2x32xf32>
    %467 = math.tanh %466 : vector<2x32xf32>
    %468 = vector.extract_strided_slice %457 {offsets = [0, 32], sizes = [2, 32], strides = [1, 1]} : vector<2x96xf32> to vector<2x32xf32>
    %469 = arith.mulf %468, %446 : vector<2x32xf32>
    %470 = vector.extract_strided_slice %457 {offsets = [0, 0], sizes = [2, 32], strides = [1, 1]} : vector<2x96xf32> to vector<2x32xf32>
    %471 = arith.mulf %470, %465 : vector<2x32xf32>
    %472 = arith.addf %469, %471 : vector<2x32xf32>
    %473 = vector.extract_strided_slice %463 {offsets = [0, 32], sizes = [2, 32], strides = [1, 1]} : vector<2x96xf32> to vector<2x32xf32>
    %474 = arith.mulf %473, %447 : vector<2x32xf32>
    %475 = vector.extract_strided_slice %463 {offsets = [0, 0], sizes = [2, 32], strides = [1, 1]} : vector<2x96xf32> to vector<2x32xf32>
    %476 = arith.mulf %475, %467 : vector<2x32xf32>
    %477 = arith.addf %474, %476 : vector<2x32xf32>
    %478 = vector.extract_strided_slice %457 {offsets = [0, 64], sizes = [2, 32], strides = [1, 1]} : vector<2x96xf32> to vector<2x32xf32>
    %479 = math.tanh %472 : vector<2x32xf32>
    %480 = arith.mulf %478, %479 : vector<2x32xf32>
    %481 = vector.extract_strided_slice %463 {offsets = [0, 64], sizes = [2, 32], strides = [1, 1]} : vector<2x96xf32> to vector<2x32xf32>
    %482 = math.tanh %477 : vector<2x32xf32>
    %483 = arith.mulf %481, %482 : vector<2x32xf32>
    %c0_104 = arith.constant 0 : index
    %c0_105 = arith.constant 0 : index
    %c0_106 = arith.constant 0 : index
    %484 = vector.load %arg18[%c0_104, %c0_105, %c0_106] : memref<2x8x64xf32, #tpu.memory_space<vmem>>, vector<2x1x32xf32>
    %485 = vector.shape_cast %484 : vector<2x1x32xf32> to vector<2x32xf32>
    %486 = vector.shape_cast %480 : vector<2x32xf32> to vector<2x1x32xf32>
    tpu.vector_store %arg18[%c0_104, %c0_105, %c0_106], %486 {strides = array<i32>} : memref<2x8x64xf32, #tpu.memory_space<vmem>>, vector<2x1x32xf32>,
    %c0_107 = arith.constant 0 : index
    %c7_108 = arith.constant 7 : index
    %c32_109 = arith.constant 32 : index
    %487 = vector.load %arg18[%c0_107, %c7_108, %c32_109] : memref<2x8x64xf32, #tpu.memory_space<vmem>>, vector<2x1x32xf32>
    %488 = vector.shape_cast %487 : vector<2x1x32xf32> to vector<2x32xf32>
    %489 = vector.shape_cast %483 : vector<2x32xf32> to vector<2x1x32xf32>
    tpu.vector_store %arg18[%c0_107, %c7_108, %c32_109], %489 {strides = array<i32>} : memref<2x8x64xf32, #tpu.memory_space<vmem>>, vector<2x1x32xf32>,
    %490 = tpu.concatenate %480, %483 in 1 : vector<2x32xf32>, vector<2x32xf32> -> vector<2x64xf32>
    %491 = vector.extract_strided_slice %445 {offsets = [0, 1, 0], sizes = [2, 1, 128], strides = [1, 1, 1]} : vector<2x8x256xf32> to vector<2x1x128xf32>
    %492 = vector.shape_cast %491 : vector<2x1x128xf32> to vector<2x128xf32>
    %493 = vector.extract_strided_slice %445 {offsets = [0, 6, 128], sizes = [2, 1, 128], strides = [1, 1, 1]} : vector<2x8x256xf32> to vector<2x1x128xf32>
    %494 = vector.shape_cast %493 : vector<2x1x128xf32> to vector<2x128xf32>
    %495 = arith.truncf %490 : vector<2x64xf32> to vector<2x64xbf16>
    %cst_110 = arith.constant dense<0.000000e+00> : vector<2x256xf32>
    %496 = tpu.matmul %495, %439, %cst_110 {dimension_numbers = #tpu.dot_dimension_numbers<[1], [0], [0], [1], [0, 0, 1, 1], [], []>} : vector<2x64xbf16>, vector<64x256xbf16>, vector<2x256xf32> -> vector<2x256xf32>
    %497 = vector.extract_strided_slice %496 {offsets = [0, 0], sizes = [2, 128], strides = [1, 1]} : vector<2x256xf32> to vector<2x128xf32>
    %498 = arith.addf %492, %497 : vector<2x128xf32>
    %499 = vector.extract_strided_slice %496 {offsets = [0, 128], sizes = [2, 128], strides = [1, 1]} : vector<2x256xf32> to vector<2x128xf32>
    %500 = arith.addf %494, %499 : vector<2x128xf32>
    %501 = vector.extract_strided_slice %498 {offsets = [0, 0], sizes = [2, 96], strides = [1, 1]} : vector<2x128xf32> to vector<2x96xf32>
    %502 = arith.negf %501 : vector<2x96xf32>
    %503 = math.exp %502 : vector<2x96xf32>
    %cst_111 = arith.constant 1.000000e+00 : f32
    %504 = vector.broadcast %cst_111 : f32 to vector<2x96xf32>
    %505 = arith.addf %504, %503 : vector<2x96xf32>
    %506 = arith.divf %504, %505 : vector<2x96xf32>
    %507 = vector.extract_strided_slice %500 {offsets = [0, 0], sizes = [2, 96], strides = [1, 1]} : vector<2x128xf32> to vector<2x96xf32>
    %508 = arith.negf %507 : vector<2x96xf32>
    %509 = math.exp %508 : vector<2x96xf32>
    %cst_112 = arith.constant 1.000000e+00 : f32
    %510 = vector.broadcast %cst_112 : f32 to vector<2x96xf32>
    %511 = arith.addf %510, %509 : vector<2x96xf32>
    %512 = arith.divf %510, %511 : vector<2x96xf32>
    %513 = vector.extract_strided_slice %498 {offsets = [0, 96], sizes = [2, 32], strides = [1, 1]} : vector<2x128xf32> to vector<2x32xf32>
    %514 = math.tanh %513 : vector<2x32xf32>
    %515 = vector.extract_strided_slice %500 {offsets = [0, 96], sizes = [2, 32], strides = [1, 1]} : vector<2x128xf32> to vector<2x32xf32>
    %516 = math.tanh %515 : vector<2x32xf32>
    %517 = vector.extract_strided_slice %506 {offsets = [0, 32], sizes = [2, 32], strides = [1, 1]} : vector<2x96xf32> to vector<2x32xf32>
    %518 = arith.mulf %517, %472 : vector<2x32xf32>
    %519 = vector.extract_strided_slice %506 {offsets = [0, 0], sizes = [2, 32], strides = [1, 1]} : vector<2x96xf32> to vector<2x32xf32>
    %520 = arith.mulf %519, %514 : vector<2x32xf32>
    %521 = arith.addf %518, %520 : vector<2x32xf32>
    %522 = vector.extract_strided_slice %512 {offsets = [0, 32], sizes = [2, 32], strides = [1, 1]} : vector<2x96xf32> to vector<2x32xf32>
    %523 = arith.mulf %522, %477 : vector<2x32xf32>
    %524 = vector.extract_strided_slice %512 {offsets = [0, 0], sizes = [2, 32], strides = [1, 1]} : vector<2x96xf32> to vector<2x32xf32>
    %525 = arith.mulf %524, %516 : vector<2x32xf32>
    %526 = arith.addf %523, %525 : vector<2x32xf32>
    %527 = vector.extract_strided_slice %506 {offsets = [0, 64], sizes = [2, 32], strides = [1, 1]} : vector<2x96xf32> to vector<2x32xf32>
    %528 = math.tanh %521 : vector<2x32xf32>
    %529 = arith.mulf %527, %528 : vector<2x32xf32>
    %530 = vector.extract_strided_slice %512 {offsets = [0, 64], sizes = [2, 32], strides = [1, 1]} : vector<2x96xf32> to vector<2x32xf32>
    %531 = math.tanh %526 : vector<2x32xf32>
    %532 = arith.mulf %530, %531 : vector<2x32xf32>
    %c0_113 = arith.constant 0 : index
    %c1_114 = arith.constant 1 : index
    %c0_115 = arith.constant 0 : index
    %533 = vector.load %arg18[%c0_113, %c1_114, %c0_115] : memref<2x8x64xf32, #tpu.memory_space<vmem>>, vector<2x1x32xf32>
    %534 = vector.shape_cast %533 : vector<2x1x32xf32> to vector<2x32xf32>
    %535 = vector.shape_cast %529 : vector<2x32xf32> to vector<2x1x32xf32>
    tpu.vector_store %arg18[%c0_113, %c1_114, %c0_115], %535 {strides = array<i32>} : memref<2x8x64xf32, #tpu.memory_space<vmem>>, vector<2x1x32xf32>,
    %c0_116 = arith.constant 0 : index
    %c6_117 = arith.constant 6 : index
    %c32_118 = arith.constant 32 : index
    %536 = vector.load %arg18[%c0_116, %c6_117, %c32_118] : memref<2x8x64xf32, #tpu.memory_space<vmem>>, vector<2x1x32xf32>
    %537 = vector.shape_cast %536 : vector<2x1x32xf32> to vector<2x32xf32>
    %538 = vector.shape_cast %532 : vector<2x32xf32> to vector<2x1x32xf32>
    tpu.vector_store %arg18[%c0_116, %c6_117, %c32_118], %538 {strides = array<i32>} : memref<2x8x64xf32, #tpu.memory_space<vmem>>, vector<2x1x32xf32>,
    %539 = tpu.concatenate %529, %532 in 1 : vector<2x32xf32>, vector<2x32xf32> -> vector<2x64xf32>
    %540 = vector.extract_strided_slice %445 {offsets = [0, 2, 0], sizes = [2, 1, 128], strides = [1, 1, 1]} : vector<2x8x256xf32> to vector<2x1x128xf32>
    %541 = vector.shape_cast %540 : vector<2x1x128xf32> to vector<2x128xf32>
    %542 = vector.extract_strided_slice %445 {offsets = [0, 5, 128], sizes = [2, 1, 128], strides = [1, 1, 1]} : vector<2x8x256xf32> to vector<2x1x128xf32>
    %543 = vector.shape_cast %542 : vector<2x1x128xf32> to vector<2x128xf32>
    %544 = arith.truncf %539 : vector<2x64xf32> to vector<2x64xbf16>
    %cst_119 = arith.constant dense<0.000000e+00> : vector<2x256xf32>
    %545 = tpu.matmul %544, %439, %cst_119 {dimension_numbers = #tpu.dot_dimension_numbers<[1], [0], [0], [1], [0, 0, 1, 1], [], []>} : vector<2x64xbf16>, vector<64x256xbf16>, vector<2x256xf32> -> vector<2x256xf32>
    %546 = vector.extract_strided_slice %545 {offsets = [0, 0], sizes = [2, 128], strides = [1, 1]} : vector<2x256xf32> to vector<2x128xf32>
    %547 = arith.addf %541, %546 : vector<2x128xf32>
    %548 = vector.extract_strided_slice %545 {offsets = [0, 128], sizes = [2, 128], strides = [1, 1]} : vector<2x256xf32> to vector<2x128xf32>
    %549 = arith.addf %543, %548 : vector<2x128xf32>
    %550 = vector.extract_strided_slice %547 {offsets = [0, 0], sizes = [2, 96], strides = [1, 1]} : vector<2x128xf32> to vector<2x96xf32>
    %551 = arith.negf %550 : vector<2x96xf32>
    %552 = math.exp %551 : vector<2x96xf32>
    %cst_120 = arith.constant 1.000000e+00 : f32
    %553 = vector.broadcast %cst_120 : f32 to vector<2x96xf32>
    %554 = arith.addf %553, %552 : vector<2x96xf32>
    %555 = arith.divf %553, %554 : vector<2x96xf32>
    %556 = vector.extract_strided_slice %549 {offsets = [0, 0], sizes = [2, 96], strides = [1, 1]} : vector<2x128xf32> to vector<2x96xf32>
    %557 = arith.negf %556 : vector<2x96xf32>
    %558 = math.exp %557 : vector<2x96xf32>
    %cst_121 = arith.constant 1.000000e+00 : f32
    %559 = vector.broadcast %cst_121 : f32 to vector<2x96xf32>
    %560 = arith.addf %559, %558 : vector<2x96xf32>
    %561 = arith.divf %559, %560 : vector<2x96xf32>
    %562 = vector.extract_strided_slice %547 {offsets = [0, 96], sizes = [2, 32], strides = [1, 1]} : vector<2x128xf32> to vector<2x32xf32>
    %563 = math.tanh %562 : vector<2x32xf32>
    %564 = vector.extract_strided_slice %549 {offsets = [0, 96], sizes = [2, 32], strides = [1, 1]} : vector<2x128xf32> to vector<2x32xf32>
    %565 = math.tanh %564 : vector<2x32xf32>
    %566 = vector.extract_strided_slice %555 {offsets = [0, 32], sizes = [2, 32], strides = [1, 1]} : vector<2x96xf32> to vector<2x32xf32>
    %567 = arith.mulf %566, %521 : vector<2x32xf32>
    %568 = vector.extract_strided_slice %555 {offsets = [0, 0], sizes = [2, 32], strides = [1, 1]} : vector<2x96xf32> to vector<2x32xf32>
    %569 = arith.mulf %568, %563 : vector<2x32xf32>
    %570 = arith.addf %567, %569 : vector<2x32xf32>
    %571 = vector.extract_strided_slice %561 {offsets = [0, 32], sizes = [2, 32], strides = [1, 1]} : vector<2x96xf32> to vector<2x32xf32>
    %572 = arith.mulf %571, %526 : vector<2x32xf32>
    %573 = vector.extract_strided_slice %561 {offsets = [0, 0], sizes = [2, 32], strides = [1, 1]} : vector<2x96xf32> to vector<2x32xf32>
    %574 = arith.mulf %573, %565 : vector<2x32xf32>
    %575 = arith.addf %572, %574 : vector<2x32xf32>
    %576 = vector.extract_strided_slice %555 {offsets = [0, 64], sizes = [2, 32], strides = [1, 1]} : vector<2x96xf32> to vector<2x32xf32>
    %577 = math.tanh %570 : vector<2x32xf32>
    %578 = arith.mulf %576, %577 : vector<2x32xf32>
    %579 = vector.extract_strided_slice %561 {offsets = [0, 64], sizes = [2, 32], strides = [1, 1]} : vector<2x96xf32> to vector<2x32xf32>
    %580 = math.tanh %575 : vector<2x32xf32>
    %581 = arith.mulf %579, %580 : vector<2x32xf32>
    %c0_122 = arith.constant 0 : index
    %c2_123 = arith.constant 2 : index
    %c0_124 = arith.constant 0 : index
    %582 = vector.load %arg18[%c0_122, %c2_123, %c0_124] : memref<2x8x64xf32, #tpu.memory_space<vmem>>, vector<2x1x32xf32>
    %583 = vector.shape_cast %582 : vector<2x1x32xf32> to vector<2x32xf32>
    %584 = vector.shape_cast %578 : vector<2x32xf32> to vector<2x1x32xf32>
    tpu.vector_store %arg18[%c0_122, %c2_123, %c0_124], %584 {strides = array<i32>} : memref<2x8x64xf32, #tpu.memory_space<vmem>>, vector<2x1x32xf32>,
    %c0_125 = arith.constant 0 : index
    %c5_126 = arith.constant 5 : index
    %c32_127 = arith.constant 32 : index
    %585 = vector.load %arg18[%c0_125, %c5_126, %c32_127] : memref<2x8x64xf32, #tpu.memory_space<vmem>>, vector<2x1x32xf32>
    %586 = vector.shape_cast %585 : vector<2x1x32xf32> to vector<2x32xf32>
    %587 = vector.shape_cast %581 : vector<2x32xf32> to vector<2x1x32xf32>
    tpu.vector_store %arg18[%c0_125, %c5_126, %c32_127], %587 {strides = array<i32>} : memref<2x8x64xf32, #tpu.memory_space<vmem>>, vector<2x1x32xf32>,
    %588 = tpu.concatenate %578, %581 in 1 : vector<2x32xf32>, vector<2x32xf32> -> vector<2x64xf32>
    %589 = vector.extract_strided_slice %445 {offsets = [0, 3, 0], sizes = [2, 1, 128], strides = [1, 1, 1]} : vector<2x8x256xf32> to vector<2x1x128xf32>
    %590 = vector.shape_cast %589 : vector<2x1x128xf32> to vector<2x128xf32>
    %591 = vector.extract_strided_slice %445 {offsets = [0, 4, 128], sizes = [2, 1, 128], strides = [1, 1, 1]} : vector<2x8x256xf32> to vector<2x1x128xf32>
    %592 = vector.shape_cast %591 : vector<2x1x128xf32> to vector<2x128xf32>
    %593 = arith.truncf %588 : vector<2x64xf32> to vector<2x64xbf16>
    %cst_128 = arith.constant dense<0.000000e+00> : vector<2x256xf32>
    %594 = tpu.matmul %593, %439, %cst_128 {dimension_numbers = #tpu.dot_dimension_numbers<[1], [0], [0], [1], [0, 0, 1, 1], [], []>} : vector<2x64xbf16>, vector<64x256xbf16>, vector<2x256xf32> -> vector<2x256xf32>
    %595 = vector.extract_strided_slice %594 {offsets = [0, 0], sizes = [2, 128], strides = [1, 1]} : vector<2x256xf32> to vector<2x128xf32>
    %596 = arith.addf %590, %595 : vector<2x128xf32>
    %597 = vector.extract_strided_slice %594 {offsets = [0, 128], sizes = [2, 128], strides = [1, 1]} : vector<2x256xf32> to vector<2x128xf32>
    %598 = arith.addf %592, %597 : vector<2x128xf32>
    %599 = vector.extract_strided_slice %596 {offsets = [0, 0], sizes = [2, 96], strides = [1, 1]} : vector<2x128xf32> to vector<2x96xf32>
    %600 = arith.negf %599 : vector<2x96xf32>
    %601 = math.exp %600 : vector<2x96xf32>
    %cst_129 = arith.constant 1.000000e+00 : f32
    %602 = vector.broadcast %cst_129 : f32 to vector<2x96xf32>
    %603 = arith.addf %602, %601 : vector<2x96xf32>
    %604 = arith.divf %602, %603 : vector<2x96xf32>
    %605 = vector.extract_strided_slice %598 {offsets = [0, 0], sizes = [2, 96], strides = [1, 1]} : vector<2x128xf32> to vector<2x96xf32>
    %606 = arith.negf %605 : vector<2x96xf32>
    %607 = math.exp %606 : vector<2x96xf32>
    %cst_130 = arith.constant 1.000000e+00 : f32
    %608 = vector.broadcast %cst_130 : f32 to vector<2x96xf32>
    %609 = arith.addf %608, %607 : vector<2x96xf32>
    %610 = arith.divf %608, %609 : vector<2x96xf32>
    %611 = vector.extract_strided_slice %596 {offsets = [0, 96], sizes = [2, 32], strides = [1, 1]} : vector<2x128xf32> to vector<2x32xf32>
    %612 = math.tanh %611 : vector<2x32xf32>
    %613 = vector.extract_strided_slice %598 {offsets = [0, 96], sizes = [2, 32], strides = [1, 1]} : vector<2x128xf32> to vector<2x32xf32>
    %614 = math.tanh %613 : vector<2x32xf32>
    %615 = vector.extract_strided_slice %604 {offsets = [0, 32], sizes = [2, 32], strides = [1, 1]} : vector<2x96xf32> to vector<2x32xf32>
    %616 = arith.mulf %615, %570 : vector<2x32xf32>
    %617 = vector.extract_strided_slice %604 {offsets = [0, 0], sizes = [2, 32], strides = [1, 1]} : vector<2x96xf32> to vector<2x32xf32>
    %618 = arith.mulf %617, %612 : vector<2x32xf32>
    %619 = arith.addf %616, %618 : vector<2x32xf32>
    %620 = vector.extract_strided_slice %610 {offsets = [0, 32], sizes = [2, 32], strides = [1, 1]} : vector<2x96xf32> to vector<2x32xf32>
    %621 = arith.mulf %620, %575 : vector<2x32xf32>
    %622 = vector.extract_strided_slice %610 {offsets = [0, 0], sizes = [2, 32], strides = [1, 1]} : vector<2x96xf32> to vector<2x32xf32>
    %623 = arith.mulf %622, %614 : vector<2x32xf32>
    %624 = arith.addf %621, %623 : vector<2x32xf32>
    %625 = vector.extract_strided_slice %604 {offsets = [0, 64], sizes = [2, 32], strides = [1, 1]} : vector<2x96xf32> to vector<2x32xf32>
    %626 = math.tanh %619 : vector<2x32xf32>
    %627 = arith.mulf %625, %626 : vector<2x32xf32>
    %628 = vector.extract_strided_slice %610 {offsets = [0, 64], sizes = [2, 32], strides = [1, 1]} : vector<2x96xf32> to vector<2x32xf32>
    %629 = math.tanh %624 : vector<2x32xf32>
    %630 = arith.mulf %628, %629 : vector<2x32xf32>
    %c0_131 = arith.constant 0 : index
    %c3_132 = arith.constant 3 : index
    %c0_133 = arith.constant 0 : index
    %631 = vector.load %arg18[%c0_131, %c3_132, %c0_133] : memref<2x8x64xf32, #tpu.memory_space<vmem>>, vector<2x1x32xf32>
    %632 = vector.shape_cast %631 : vector<2x1x32xf32> to vector<2x32xf32>
    %633 = vector.shape_cast %627 : vector<2x32xf32> to vector<2x1x32xf32>
    tpu.vector_store %arg18[%c0_131, %c3_132, %c0_133], %633 {strides = array<i32>} : memref<2x8x64xf32, #tpu.memory_space<vmem>>, vector<2x1x32xf32>,
    %c0_134 = arith.constant 0 : index
    %c4_135 = arith.constant 4 : index
    %c32_136 = arith.constant 32 : index
    %634 = vector.load %arg18[%c0_134, %c4_135, %c32_136] : memref<2x8x64xf32, #tpu.memory_space<vmem>>, vector<2x1x32xf32>
    %635 = vector.shape_cast %634 : vector<2x1x32xf32> to vector<2x32xf32>
    %636 = vector.shape_cast %630 : vector<2x32xf32> to vector<2x1x32xf32>
    tpu.vector_store %arg18[%c0_134, %c4_135, %c32_136], %636 {strides = array<i32>} : memref<2x8x64xf32, #tpu.memory_space<vmem>>, vector<2x1x32xf32>,
    %637 = tpu.concatenate %627, %630 in 1 : vector<2x32xf32>, vector<2x32xf32> -> vector<2x64xf32>
    %638 = vector.extract_strided_slice %445 {offsets = [0, 4, 0], sizes = [2, 1, 128], strides = [1, 1, 1]} : vector<2x8x256xf32> to vector<2x1x128xf32>
    %639 = vector.shape_cast %638 : vector<2x1x128xf32> to vector<2x128xf32>
    %640 = vector.extract_strided_slice %445 {offsets = [0, 3, 128], sizes = [2, 1, 128], strides = [1, 1, 1]} : vector<2x8x256xf32> to vector<2x1x128xf32>
    %641 = vector.shape_cast %640 : vector<2x1x128xf32> to vector<2x128xf32>
    %642 = arith.truncf %637 : vector<2x64xf32> to vector<2x64xbf16>
    %cst_137 = arith.constant dense<0.000000e+00> : vector<2x256xf32>
    %643 = tpu.matmul %642, %439, %cst_137 {dimension_numbers = #tpu.dot_dimension_numbers<[1], [0], [0], [1], [0, 0, 1, 1], [], []>} : vector<2x64xbf16>, vector<64x256xbf16>, vector<2x256xf32> -> vector<2x256xf32>
    %644 = vector.extract_strided_slice %643 {offsets = [0, 0], sizes = [2, 128], strides = [1, 1]} : vector<2x256xf32> to vector<2x128xf32>
    %645 = arith.addf %639, %644 : vector<2x128xf32>
    %646 = vector.extract_strided_slice %643 {offsets = [0, 128], sizes = [2, 128], strides = [1, 1]} : vector<2x256xf32> to vector<2x128xf32>
    %647 = arith.addf %641, %646 : vector<2x128xf32>
    %648 = vector.extract_strided_slice %645 {offsets = [0, 0], sizes = [2, 96], strides = [1, 1]} : vector<2x128xf32> to vector<2x96xf32>
    %649 = arith.negf %648 : vector<2x96xf32>
    %650 = math.exp %649 : vector<2x96xf32>
    %cst_138 = arith.constant 1.000000e+00 : f32
    %651 = vector.broadcast %cst_138 : f32 to vector<2x96xf32>
    %652 = arith.addf %651, %650 : vector<2x96xf32>
    %653 = arith.divf %651, %652 : vector<2x96xf32>
    %654 = vector.extract_strided_slice %647 {offsets = [0, 0], sizes = [2, 96], strides = [1, 1]} : vector<2x128xf32> to vector<2x96xf32>
    %655 = arith.negf %654 : vector<2x96xf32>
    %656 = math.exp %655 : vector<2x96xf32>
    %cst_139 = arith.constant 1.000000e+00 : f32
    %657 = vector.broadcast %cst_139 : f32 to vector<2x96xf32>
    %658 = arith.addf %657, %656 : vector<2x96xf32>
    %659 = arith.divf %657, %658 : vector<2x96xf32>
    %660 = vector.extract_strided_slice %645 {offsets = [0, 96], sizes = [2, 32], strides = [1, 1]} : vector<2x128xf32> to vector<2x32xf32>
    %661 = math.tanh %660 : vector<2x32xf32>
    %662 = vector.extract_strided_slice %647 {offsets = [0, 96], sizes = [2, 32], strides = [1, 1]} : vector<2x128xf32> to vector<2x32xf32>
    %663 = math.tanh %662 : vector<2x32xf32>
    %664 = vector.extract_strided_slice %653 {offsets = [0, 32], sizes = [2, 32], strides = [1, 1]} : vector<2x96xf32> to vector<2x32xf32>
    %665 = arith.mulf %664, %619 : vector<2x32xf32>
    %666 = vector.extract_strided_slice %653 {offsets = [0, 0], sizes = [2, 32], strides = [1, 1]} : vector<2x96xf32> to vector<2x32xf32>
    %667 = arith.mulf %666, %661 : vector<2x32xf32>
    %668 = arith.addf %665, %667 : vector<2x32xf32>
    %669 = vector.extract_strided_slice %659 {offsets = [0, 32], sizes = [2, 32], strides = [1, 1]} : vector<2x96xf32> to vector<2x32xf32>
    %670 = arith.mulf %669, %624 : vector<2x32xf32>
    %671 = vector.extract_strided_slice %659 {offsets = [0, 0], sizes = [2, 32], strides = [1, 1]} : vector<2x96xf32> to vector<2x32xf32>
    %672 = arith.mulf %671, %663 : vector<2x32xf32>
    %673 = arith.addf %670, %672 : vector<2x32xf32>
    %674 = vector.extract_strided_slice %653 {offsets = [0, 64], sizes = [2, 32], strides = [1, 1]} : vector<2x96xf32> to vector<2x32xf32>
    %675 = math.tanh %668 : vector<2x32xf32>
    %676 = arith.mulf %674, %675 : vector<2x32xf32>
    %677 = vector.extract_strided_slice %659 {offsets = [0, 64], sizes = [2, 32], strides = [1, 1]} : vector<2x96xf32> to vector<2x32xf32>
    %678 = math.tanh %673 : vector<2x32xf32>
    %679 = arith.mulf %677, %678 : vector<2x32xf32>
    %c0_140 = arith.constant 0 : index
    %c4_141 = arith.constant 4 : index
    %c0_142 = arith.constant 0 : index
    %680 = vector.load %arg18[%c0_140, %c4_141, %c0_142] : memref<2x8x64xf32, #tpu.memory_space<vmem>>, vector<2x1x32xf32>
    %681 = vector.shape_cast %680 : vector<2x1x32xf32> to vector<2x32xf32>
    %682 = vector.shape_cast %676 : vector<2x32xf32> to vector<2x1x32xf32>
    tpu.vector_store %arg18[%c0_140, %c4_141, %c0_142], %682 {strides = array<i32>} : memref<2x8x64xf32, #tpu.memory_space<vmem>>, vector<2x1x32xf32>,
    %c0_143 = arith.constant 0 : index
    %c3_144 = arith.constant 3 : index
    %c32_145 = arith.constant 32 : index
    %683 = vector.load %arg18[%c0_143, %c3_144, %c32_145] : memref<2x8x64xf32, #tpu.memory_space<vmem>>, vector<2x1x32xf32>
    %684 = vector.shape_cast %683 : vector<2x1x32xf32> to vector<2x32xf32>
    %685 = vector.shape_cast %679 : vector<2x32xf32> to vector<2x1x32xf32>
    tpu.vector_store %arg18[%c0_143, %c3_144, %c32_145], %685 {strides = array<i32>} : memref<2x8x64xf32, #tpu.memory_space<vmem>>, vector<2x1x32xf32>,
    %686 = tpu.concatenate %676, %679 in 1 : vector<2x32xf32>, vector<2x32xf32> -> vector<2x64xf32>
    %687 = vector.extract_strided_slice %445 {offsets = [0, 5, 0], sizes = [2, 1, 128], strides = [1, 1, 1]} : vector<2x8x256xf32> to vector<2x1x128xf32>
    %688 = vector.shape_cast %687 : vector<2x1x128xf32> to vector<2x128xf32>
    %689 = vector.extract_strided_slice %445 {offsets = [0, 2, 128], sizes = [2, 1, 128], strides = [1, 1, 1]} : vector<2x8x256xf32> to vector<2x1x128xf32>
    %690 = vector.shape_cast %689 : vector<2x1x128xf32> to vector<2x128xf32>
    %691 = arith.truncf %686 : vector<2x64xf32> to vector<2x64xbf16>
    %cst_146 = arith.constant dense<0.000000e+00> : vector<2x256xf32>
    %692 = tpu.matmul %691, %439, %cst_146 {dimension_numbers = #tpu.dot_dimension_numbers<[1], [0], [0], [1], [0, 0, 1, 1], [], []>} : vector<2x64xbf16>, vector<64x256xbf16>, vector<2x256xf32> -> vector<2x256xf32>
    %693 = vector.extract_strided_slice %692 {offsets = [0, 0], sizes = [2, 128], strides = [1, 1]} : vector<2x256xf32> to vector<2x128xf32>
    %694 = arith.addf %688, %693 : vector<2x128xf32>
    %695 = vector.extract_strided_slice %692 {offsets = [0, 128], sizes = [2, 128], strides = [1, 1]} : vector<2x256xf32> to vector<2x128xf32>
    %696 = arith.addf %690, %695 : vector<2x128xf32>
    %697 = vector.extract_strided_slice %694 {offsets = [0, 0], sizes = [2, 96], strides = [1, 1]} : vector<2x128xf32> to vector<2x96xf32>
    %698 = arith.negf %697 : vector<2x96xf32>
    %699 = math.exp %698 : vector<2x96xf32>
    %cst_147 = arith.constant 1.000000e+00 : f32
    %700 = vector.broadcast %cst_147 : f32 to vector<2x96xf32>
    %701 = arith.addf %700, %699 : vector<2x96xf32>
    %702 = arith.divf %700, %701 : vector<2x96xf32>
    %703 = vector.extract_strided_slice %696 {offsets = [0, 0], sizes = [2, 96], strides = [1, 1]} : vector<2x128xf32> to vector<2x96xf32>
    %704 = arith.negf %703 : vector<2x96xf32>
    %705 = math.exp %704 : vector<2x96xf32>
    %cst_148 = arith.constant 1.000000e+00 : f32
    %706 = vector.broadcast %cst_148 : f32 to vector<2x96xf32>
    %707 = arith.addf %706, %705 : vector<2x96xf32>
    %708 = arith.divf %706, %707 : vector<2x96xf32>
    %709 = vector.extract_strided_slice %694 {offsets = [0, 96], sizes = [2, 32], strides = [1, 1]} : vector<2x128xf32> to vector<2x32xf32>
    %710 = math.tanh %709 : vector<2x32xf32>
    %711 = vector.extract_strided_slice %696 {offsets = [0, 96], sizes = [2, 32], strides = [1, 1]} : vector<2x128xf32> to vector<2x32xf32>
    %712 = math.tanh %711 : vector<2x32xf32>
    %713 = vector.extract_strided_slice %702 {offsets = [0, 32], sizes = [2, 32], strides = [1, 1]} : vector<2x96xf32> to vector<2x32xf32>
    %714 = arith.mulf %713, %668 : vector<2x32xf32>
    %715 = vector.extract_strided_slice %702 {offsets = [0, 0], sizes = [2, 32], strides = [1, 1]} : vector<2x96xf32> to vector<2x32xf32>
    %716 = arith.mulf %715, %710 : vector<2x32xf32>
    %717 = arith.addf %714, %716 : vector<2x32xf32>
    %718 = vector.extract_strided_slice %708 {offsets = [0, 32], sizes = [2, 32], strides = [1, 1]} : vector<2x96xf32> to vector<2x32xf32>
    %719 = arith.mulf %718, %673 : vector<2x32xf32>
    %720 = vector.extract_strided_slice %708 {offsets = [0, 0], sizes = [2, 32], strides = [1, 1]} : vector<2x96xf32> to vector<2x32xf32>
    %721 = arith.mulf %720, %712 : vector<2x32xf32>
    %722 = arith.addf %719, %721 : vector<2x32xf32>
    %723 = vector.extract_strided_slice %702 {offsets = [0, 64], sizes = [2, 32], strides = [1, 1]} : vector<2x96xf32> to vector<2x32xf32>
    %724 = math.tanh %717 : vector<2x32xf32>
    %725 = arith.mulf %723, %724 : vector<2x32xf32>
    %726 = vector.extract_strided_slice %708 {offsets = [0, 64], sizes = [2, 32], strides = [1, 1]} : vector<2x96xf32> to vector<2x32xf32>
    %727 = math.tanh %722 : vector<2x32xf32>
    %728 = arith.mulf %726, %727 : vector<2x32xf32>
    %c0_149 = arith.constant 0 : index
    %c5_150 = arith.constant 5 : index
    %c0_151 = arith.constant 0 : index
    %729 = vector.load %arg18[%c0_149, %c5_150, %c0_151] : memref<2x8x64xf32, #tpu.memory_space<vmem>>, vector<2x1x32xf32>
    %730 = vector.shape_cast %729 : vector<2x1x32xf32> to vector<2x32xf32>
    %731 = vector.shape_cast %725 : vector<2x32xf32> to vector<2x1x32xf32>
    tpu.vector_store %arg18[%c0_149, %c5_150, %c0_151], %731 {strides = array<i32>} : memref<2x8x64xf32, #tpu.memory_space<vmem>>, vector<2x1x32xf32>,
    %c0_152 = arith.constant 0 : index
    %c2_153 = arith.constant 2 : index
    %c32_154 = arith.constant 32 : index
    %732 = vector.load %arg18[%c0_152, %c2_153, %c32_154] : memref<2x8x64xf32, #tpu.memory_space<vmem>>, vector<2x1x32xf32>
    %733 = vector.shape_cast %732 : vector<2x1x32xf32> to vector<2x32xf32>
    %734 = vector.shape_cast %728 : vector<2x32xf32> to vector<2x1x32xf32>
    tpu.vector_store %arg18[%c0_152, %c2_153, %c32_154], %734 {strides = array<i32>} : memref<2x8x64xf32, #tpu.memory_space<vmem>>, vector<2x1x32xf32>,
    %735 = tpu.concatenate %725, %728 in 1 : vector<2x32xf32>, vector<2x32xf32> -> vector<2x64xf32>
    %736 = vector.extract_strided_slice %445 {offsets = [0, 6, 0], sizes = [2, 1, 128], strides = [1, 1, 1]} : vector<2x8x256xf32> to vector<2x1x128xf32>
    %737 = vector.shape_cast %736 : vector<2x1x128xf32> to vector<2x128xf32>
    %738 = vector.extract_strided_slice %445 {offsets = [0, 1, 128], sizes = [2, 1, 128], strides = [1, 1, 1]} : vector<2x8x256xf32> to vector<2x1x128xf32>
    %739 = vector.shape_cast %738 : vector<2x1x128xf32> to vector<2x128xf32>
    %740 = arith.truncf %735 : vector<2x64xf32> to vector<2x64xbf16>
    %cst_155 = arith.constant dense<0.000000e+00> : vector<2x256xf32>
    %741 = tpu.matmul %740, %439, %cst_155 {dimension_numbers = #tpu.dot_dimension_numbers<[1], [0], [0], [1], [0, 0, 1, 1], [], []>} : vector<2x64xbf16>, vector<64x256xbf16>, vector<2x256xf32> -> vector<2x256xf32>
    %742 = vector.extract_strided_slice %741 {offsets = [0, 0], sizes = [2, 128], strides = [1, 1]} : vector<2x256xf32> to vector<2x128xf32>
    %743 = arith.addf %737, %742 : vector<2x128xf32>
    %744 = vector.extract_strided_slice %741 {offsets = [0, 128], sizes = [2, 128], strides = [1, 1]} : vector<2x256xf32> to vector<2x128xf32>
    %745 = arith.addf %739, %744 : vector<2x128xf32>
    %746 = vector.extract_strided_slice %743 {offsets = [0, 0], sizes = [2, 96], strides = [1, 1]} : vector<2x128xf32> to vector<2x96xf32>
    %747 = arith.negf %746 : vector<2x96xf32>
    %748 = math.exp %747 : vector<2x96xf32>
    %cst_156 = arith.constant 1.000000e+00 : f32
    %749 = vector.broadcast %cst_156 : f32 to vector<2x96xf32>
    %750 = arith.addf %749, %748 : vector<2x96xf32>
    %751 = arith.divf %749, %750 : vector<2x96xf32>
    %752 = vector.extract_strided_slice %745 {offsets = [0, 0], sizes = [2, 96], strides = [1, 1]} : vector<2x128xf32> to vector<2x96xf32>
    %753 = arith.negf %752 : vector<2x96xf32>
    %754 = math.exp %753 : vector<2x96xf32>
    %cst_157 = arith.constant 1.000000e+00 : f32
    %755 = vector.broadcast %cst_157 : f32 to vector<2x96xf32>
    %756 = arith.addf %755, %754 : vector<2x96xf32>
    %757 = arith.divf %755, %756 : vector<2x96xf32>
    %758 = vector.extract_strided_slice %743 {offsets = [0, 96], sizes = [2, 32], strides = [1, 1]} : vector<2x128xf32> to vector<2x32xf32>
    %759 = math.tanh %758 : vector<2x32xf32>
    %760 = vector.extract_strided_slice %745 {offsets = [0, 96], sizes = [2, 32], strides = [1, 1]} : vector<2x128xf32> to vector<2x32xf32>
    %761 = math.tanh %760 : vector<2x32xf32>
    %762 = vector.extract_strided_slice %751 {offsets = [0, 32], sizes = [2, 32], strides = [1, 1]} : vector<2x96xf32> to vector<2x32xf32>
    %763 = arith.mulf %762, %717 : vector<2x32xf32>
    %764 = vector.extract_strided_slice %751 {offsets = [0, 0], sizes = [2, 32], strides = [1, 1]} : vector<2x96xf32> to vector<2x32xf32>
    %765 = arith.mulf %764, %759 : vector<2x32xf32>
    %766 = arith.addf %763, %765 : vector<2x32xf32>
    %767 = vector.extract_strided_slice %757 {offsets = [0, 32], sizes = [2, 32], strides = [1, 1]} : vector<2x96xf32> to vector<2x32xf32>
    %768 = arith.mulf %767, %722 : vector<2x32xf32>
    %769 = vector.extract_strided_slice %757 {offsets = [0, 0], sizes = [2, 32], strides = [1, 1]} : vector<2x96xf32> to vector<2x32xf32>
    %770 = arith.mulf %769, %761 : vector<2x32xf32>
    %771 = arith.addf %768, %770 : vector<2x32xf32>
    %772 = vector.extract_strided_slice %751 {offsets = [0, 64], sizes = [2, 32], strides = [1, 1]} : vector<2x96xf32> to vector<2x32xf32>
    %773 = math.tanh %766 : vector<2x32xf32>
    %774 = arith.mulf %772, %773 : vector<2x32xf32>
    %775 = vector.extract_strided_slice %757 {offsets = [0, 64], sizes = [2, 32], strides = [1, 1]} : vector<2x96xf32> to vector<2x32xf32>
    %776 = math.tanh %771 : vector<2x32xf32>
    %777 = arith.mulf %775, %776 : vector<2x32xf32>
    %c0_158 = arith.constant 0 : index
    %c6_159 = arith.constant 6 : index
    %c0_160 = arith.constant 0 : index
    %778 = vector.load %arg18[%c0_158, %c6_159, %c0_160] : memref<2x8x64xf32, #tpu.memory_space<vmem>>, vector<2x1x32xf32>
    %779 = vector.shape_cast %778 : vector<2x1x32xf32> to vector<2x32xf32>
    %780 = vector.shape_cast %774 : vector<2x32xf32> to vector<2x1x32xf32>
    tpu.vector_store %arg18[%c0_158, %c6_159, %c0_160], %780 {strides = array<i32>} : memref<2x8x64xf32, #tpu.memory_space<vmem>>, vector<2x1x32xf32>,
    %c0_161 = arith.constant 0 : index
    %c1_162 = arith.constant 1 : index
    %c32_163 = arith.constant 32 : index
    %781 = vector.load %arg18[%c0_161, %c1_162, %c32_163] : memref<2x8x64xf32, #tpu.memory_space<vmem>>, vector<2x1x32xf32>
    %782 = vector.shape_cast %781 : vector<2x1x32xf32> to vector<2x32xf32>
    %783 = vector.shape_cast %777 : vector<2x32xf32> to vector<2x1x32xf32>
    tpu.vector_store %arg18[%c0_161, %c1_162, %c32_163], %783 {strides = array<i32>} : memref<2x8x64xf32, #tpu.memory_space<vmem>>, vector<2x1x32xf32>,
    %784 = tpu.concatenate %774, %777 in 1 : vector<2x32xf32>, vector<2x32xf32> -> vector<2x64xf32>
    %785 = vector.extract_strided_slice %445 {offsets = [0, 7, 0], sizes = [2, 1, 128], strides = [1, 1, 1]} : vector<2x8x256xf32> to vector<2x1x128xf32>
    %786 = vector.shape_cast %785 : vector<2x1x128xf32> to vector<2x128xf32>
    %787 = vector.extract_strided_slice %445 {offsets = [0, 0, 128], sizes = [2, 1, 128], strides = [1, 1, 1]} : vector<2x8x256xf32> to vector<2x1x128xf32>
    %788 = vector.shape_cast %787 : vector<2x1x128xf32> to vector<2x128xf32>
    %789 = arith.truncf %784 : vector<2x64xf32> to vector<2x64xbf16>
    %cst_164 = arith.constant dense<0.000000e+00> : vector<2x256xf32>
    %790 = tpu.matmul %789, %439, %cst_164 {dimension_numbers = #tpu.dot_dimension_numbers<[1], [0], [0], [1], [0, 0, 1, 1], [], []>} : vector<2x64xbf16>, vector<64x256xbf16>, vector<2x256xf32> -> vector<2x256xf32>
    %791 = vector.extract_strided_slice %790 {offsets = [0, 0], sizes = [2, 128], strides = [1, 1]} : vector<2x256xf32> to vector<2x128xf32>
    %792 = arith.addf %786, %791 : vector<2x128xf32>
    %793 = vector.extract_strided_slice %790 {offsets = [0, 128], sizes = [2, 128], strides = [1, 1]} : vector<2x256xf32> to vector<2x128xf32>
    %794 = arith.addf %788, %793 : vector<2x128xf32>
    %795 = vector.extract_strided_slice %792 {offsets = [0, 0], sizes = [2, 96], strides = [1, 1]} : vector<2x128xf32> to vector<2x96xf32>
    %796 = arith.negf %795 : vector<2x96xf32>
    %797 = math.exp %796 : vector<2x96xf32>
    %cst_165 = arith.constant 1.000000e+00 : f32
    %798 = vector.broadcast %cst_165 : f32 to vector<2x96xf32>
    %799 = arith.addf %798, %797 : vector<2x96xf32>
    %800 = arith.divf %798, %799 : vector<2x96xf32>
    %801 = vector.extract_strided_slice %794 {offsets = [0, 0], sizes = [2, 96], strides = [1, 1]} : vector<2x128xf32> to vector<2x96xf32>
    %802 = arith.negf %801 : vector<2x96xf32>
    %803 = math.exp %802 : vector<2x96xf32>
    %cst_166 = arith.constant 1.000000e+00 : f32
    %804 = vector.broadcast %cst_166 : f32 to vector<2x96xf32>
    %805 = arith.addf %804, %803 : vector<2x96xf32>
    %806 = arith.divf %804, %805 : vector<2x96xf32>
    %807 = vector.extract_strided_slice %792 {offsets = [0, 96], sizes = [2, 32], strides = [1, 1]} : vector<2x128xf32> to vector<2x32xf32>
    %808 = math.tanh %807 : vector<2x32xf32>
    %809 = vector.extract_strided_slice %794 {offsets = [0, 96], sizes = [2, 32], strides = [1, 1]} : vector<2x128xf32> to vector<2x32xf32>
    %810 = math.tanh %809 : vector<2x32xf32>
    %811 = vector.extract_strided_slice %800 {offsets = [0, 32], sizes = [2, 32], strides = [1, 1]} : vector<2x96xf32> to vector<2x32xf32>
    %812 = arith.mulf %811, %766 : vector<2x32xf32>
    %813 = vector.extract_strided_slice %800 {offsets = [0, 0], sizes = [2, 32], strides = [1, 1]} : vector<2x96xf32> to vector<2x32xf32>
    %814 = arith.mulf %813, %808 : vector<2x32xf32>
    %815 = arith.addf %812, %814 : vector<2x32xf32>
    %816 = vector.extract_strided_slice %806 {offsets = [0, 32], sizes = [2, 32], strides = [1, 1]} : vector<2x96xf32> to vector<2x32xf32>
    %817 = arith.mulf %816, %771 : vector<2x32xf32>
    %818 = vector.extract_strided_slice %806 {offsets = [0, 0], sizes = [2, 32], strides = [1, 1]} : vector<2x96xf32> to vector<2x32xf32>
    %819 = arith.mulf %818, %810 : vector<2x32xf32>
    %820 = arith.addf %817, %819 : vector<2x32xf32>
    %821 = vector.extract_strided_slice %800 {offsets = [0, 64], sizes = [2, 32], strides = [1, 1]} : vector<2x96xf32> to vector<2x32xf32>
    %822 = math.tanh %815 : vector<2x32xf32>
    %823 = arith.mulf %821, %822 : vector<2x32xf32>
    %824 = vector.extract_strided_slice %806 {offsets = [0, 64], sizes = [2, 32], strides = [1, 1]} : vector<2x96xf32> to vector<2x32xf32>
    %825 = math.tanh %820 : vector<2x32xf32>
    %826 = arith.mulf %824, %825 : vector<2x32xf32>
    %c0_167 = arith.constant 0 : index
    %c7_168 = arith.constant 7 : index
    %c0_169 = arith.constant 0 : index
    %827 = vector.load %arg18[%c0_167, %c7_168, %c0_169] : memref<2x8x64xf32, #tpu.memory_space<vmem>>, vector<2x1x32xf32>
    %828 = vector.shape_cast %827 : vector<2x1x32xf32> to vector<2x32xf32>
    %829 = vector.shape_cast %823 : vector<2x32xf32> to vector<2x1x32xf32>
    tpu.vector_store %arg18[%c0_167, %c7_168, %c0_169], %829 {strides = array<i32>} : memref<2x8x64xf32, #tpu.memory_space<vmem>>, vector<2x1x32xf32>,
    %c0_170 = arith.constant 0 : index
    %c0_171 = arith.constant 0 : index
    %c32_172 = arith.constant 32 : index
    %830 = vector.load %arg18[%c0_170, %c0_171, %c32_172] : memref<2x8x64xf32, #tpu.memory_space<vmem>>, vector<2x1x32xf32>
    %831 = vector.shape_cast %830 : vector<2x1x32xf32> to vector<2x32xf32>
    %832 = vector.shape_cast %826 : vector<2x32xf32> to vector<2x1x32xf32>
    tpu.vector_store %arg18[%c0_170, %c0_171, %c32_172], %832 {strides = array<i32>} : memref<2x8x64xf32, #tpu.memory_space<vmem>>, vector<2x1x32xf32>,
    %c0_173 = arith.constant 0 : index
    %c0_174 = arith.constant 0 : index
    %c0_175 = arith.constant 0 : index
    %833 = vector.load %arg18[%c0_173, %c0_174, %c0_175] : memref<2x8x64xf32, #tpu.memory_space<vmem>>, vector<2x8x64xf32>
    %834 = vector.shape_cast %833 : vector<2x8x64xf32> to vector<16x64xf32>
    %c0_176 = arith.constant 0 : index
    %c0_177 = arith.constant 0 : index
    %835 = vector.load %arg8[%c0_176, %c0_177] : memref<64x192xbf16, #tpu.memory_space<vmem>>, vector<64x192xbf16>
    %c5_178 = arith.constant 5 : index
    %c0_179 = arith.constant 0 : index
    %836 = vector.load %arg2[%c5_178, %c0_179] : memref<32x256xf32, #tpu.memory_space<vmem>>, vector<1x192xf32>
    %c0_180 = arith.constant 0 : index
    %c0_181 = arith.constant 0 : index
    %837 = vector.load %arg9[%c0_180, %c0_181] : memref<64x64xbf16, #tpu.memory_space<vmem>>, vector<64x64xbf16>
    %c6_182 = arith.constant 6 : index
    %c0_183 = arith.constant 0 : index
    %838 = vector.load %arg2[%c6_182, %c0_183] : memref<32x256xf32, #tpu.memory_space<vmem>>, vector<1x64xf32>
    %c7_184 = arith.constant 7 : index
    %c0_185 = arith.constant 0 : index
    %839 = vector.load %arg2[%c7_184, %c0_185] : memref<32x256xf32, #tpu.memory_space<vmem>>, vector<1x64xf32>
    %c8 = arith.constant 8 : index
    %c0_186 = arith.constant 0 : index
    %840 = vector.load %arg2[%c8, %c0_186] : memref<32x256xf32, #tpu.memory_space<vmem>>, vector<1x64xf32>
    %c0_187 = arith.constant 0 : index
    %c0_188 = arith.constant 0 : index
    %841 = vector.load %arg10[%c0_187, %c0_188] : memref<64x128xbf16, #tpu.memory_space<vmem>>, vector<64x128xbf16>
    %c9 = arith.constant 9 : index
    %c0_189 = arith.constant 0 : index
    %842 = vector.load %arg2[%c9, %c0_189] : memref<32x256xf32, #tpu.memory_space<vmem>>, vector<1x128xf32>
    %c0_190 = arith.constant 0 : index
    %c0_191 = arith.constant 0 : index
    %843 = vector.load %arg11[%c0_190, %c0_191] : memref<128x64xbf16, #tpu.memory_space<vmem>>, vector<128x64xbf16>
    %c10 = arith.constant 10 : index
    %c0_192 = arith.constant 0 : index
    %844 = vector.load %arg2[%c10, %c0_192] : memref<32x256xf32, #tpu.memory_space<vmem>>, vector<1x64xf32>
    %c11 = arith.constant 11 : index
    %c0_193 = arith.constant 0 : index
    %845 = vector.load %arg2[%c11, %c0_193] : memref<32x256xf32, #tpu.memory_space<vmem>>, vector<1x64xf32>
    %c12 = arith.constant 12 : index
    %c0_194 = arith.constant 0 : index
    %846 = vector.load %arg2[%c12, %c0_194] : memref<32x256xf32, #tpu.memory_space<vmem>>, vector<1x64xf32>
    %847 = arith.truncf %834 : vector<16x64xf32> to vector<16x64xbf16>
    %cst_195 = arith.constant dense<0.000000e+00> : vector<16x192xf32>
    %848 = tpu.matmul %847, %835, %cst_195 {dimension_numbers = #tpu.dot_dimension_numbers<[1], [0], [0], [1], [0, 0, 1, 1], [], []>} : vector<16x64xbf16>, vector<64x192xbf16>, vector<16x192xf32> -> vector<16x192xf32>
    %849 = vector.broadcast %836 : vector<1x192xf32> to vector<16x192xf32>
    %850 = arith.addf %848, %849 : vector<16x192xf32>
    %851 = vector.extract_strided_slice %850 {offsets = [0, 0], sizes = [16, 16], strides = [1, 1]} : vector<16x192xf32> to vector<16x16xf32>
    %852 = vector.shape_cast %851 : vector<16x16xf32> to vector<2x8x16xf32>
    %853 = vector.extract_strided_slice %850 {offsets = [0, 64], sizes = [16, 16], strides = [1, 1]} : vector<16x192xf32> to vector<16x16xf32>
    %854 = vector.shape_cast %853 : vector<16x16xf32> to vector<2x8x16xf32>
    %855 = vector.extract_strided_slice %850 {offsets = [0, 128], sizes = [16, 16], strides = [1, 1]} : vector<16x192xf32> to vector<16x16xf32>
    %856 = vector.shape_cast %855 : vector<16x16xf32> to vector<2x8x16xf32>
    %857 = arith.truncf %852 : vector<2x8x16xf32> to vector<2x8x16xbf16>
    %858 = arith.truncf %854 : vector<2x8x16xf32> to vector<2x8x16xbf16>
    "tpu.trace_start"() <{level = 10 : i32, message = "bqd,bkd->bqk"}> : () -> ()
    %cst_196 = arith.constant dense<0.000000e+00> : vector<2x8x8xf32>
    %859 = tpu.matmul %857, %858, %cst_196 {dimension_numbers = #tpu.dot_dimension_numbers<[2], [2], [1], [1], [0, 0, 0, 1, 1, 1], [0], [0]>} : vector<2x8x16xbf16>, vector<2x8x16xbf16>, vector<2x8x8xf32> -> vector<2x8x8xf32>
    "tpu.trace_stop"() : () -> ()
    %cst_197 = arith.constant 2.500000e-01 : f32
    %860 = vector.broadcast %cst_197 : f32 to vector<2x8x8xf32>
    %861 = arith.mulf %859, %860 : vector<2x8x8xf32>
    %cst_198 = arith.constant dense<0xFF800000> : vector<2x8xf32>
    %862 = vector.multi_reduction <maximumf>, %861, %cst_198 [2] : vector<2x8x8xf32> to vector<2x8xf32>
    %863 = vector.shape_cast %862 : vector<2x8xf32> to vector<2x8x1xf32>
    %864 = vector.broadcast %863 : vector<2x8x1xf32> to vector<2x8x8xf32>
    %865 = arith.subf %861, %864 : vector<2x8x8xf32>
    %866 = math.exp %865 : vector<2x8x8xf32>
    %cst_199 = arith.constant dense<0.000000e+00> : vector<2x8xf32>
    %867 = vector.multi_reduction <add>, %866, %cst_199 [2] : vector<2x8x8xf32> to vector<2x8xf32>
    %868 = vector.shape_cast %867 : vector<2x8xf32> to vector<2x8x1xf32>
    %869 = tpu.reciprocal %868 {approx = true} : vector<2x8x1xf32> -> vector<2x8x1xf32>
    %870 = vector.broadcast %869 : vector<2x8x1xf32> to vector<2x8x8xf32>
    %871 = arith.mulf %866, %870 : vector<2x8x8xf32>
    %872 = arith.truncf %871 : vector<2x8x8xf32> to vector<2x8x8xbf16>
    %873 = arith.truncf %856 : vector<2x8x16xf32> to vector<2x8x16xbf16>
    "tpu.trace_start"() <{level = 10 : i32, message = "bqk,bkd->bqd"}> : () -> ()
    %cst_200 = arith.constant dense<0.000000e+00> : vector<2x8x16xf32>
    %874 = tpu.matmul %872, %873, %cst_200 {dimension_numbers = #tpu.dot_dimension_numbers<[2], [1], [1], [2], [0, 0, 0, 1, 1, 2], [0], [0]>} : vector<2x8x8xbf16>, vector<2x8x16xbf16>, vector<2x8x16xf32> -> vector<2x8x16xf32>
    "tpu.trace_stop"() : () -> ()
    %875 = vector.shape_cast %874 : vector<2x8x16xf32> to vector<16x16xf32>
    %c0_201 = arith.constant 0 : index
    %c0_202 = arith.constant 0 : index
    %876 = vector.load %arg19[%c0_201, %c0_202] : memref<16x64xf32, #tpu.memory_space<vmem>>, vector<16x16xf32>
    tpu.vector_store %arg19[%c0_201, %c0_202], %875 {strides = array<i32>} : memref<16x64xf32, #tpu.memory_space<vmem>>, vector<16x16xf32>,
    %877 = vector.extract_strided_slice %850 {offsets = [0, 16], sizes = [16, 16], strides = [1, 1]} : vector<16x192xf32> to vector<16x16xf32>
    %878 = vector.shape_cast %877 : vector<16x16xf32> to vector<2x8x16xf32>
    %879 = vector.extract_strided_slice %850 {offsets = [0, 80], sizes = [16, 16], strides = [1, 1]} : vector<16x192xf32> to vector<16x16xf32>
    %880 = vector.shape_cast %879 : vector<16x16xf32> to vector<2x8x16xf32>
    %881 = vector.extract_strided_slice %850 {offsets = [0, 144], sizes = [16, 16], strides = [1, 1]} : vector<16x192xf32> to vector<16x16xf32>
    %882 = vector.shape_cast %881 : vector<16x16xf32> to vector<2x8x16xf32>
    %883 = arith.truncf %878 : vector<2x8x16xf32> to vector<2x8x16xbf16>
    %884 = arith.truncf %880 : vector<2x8x16xf32> to vector<2x8x16xbf16>
    "tpu.trace_start"() <{level = 10 : i32, message = "bqd,bkd->bqk"}> : () -> ()
    %cst_203 = arith.constant dense<0.000000e+00> : vector<2x8x8xf32>
    %885 = tpu.matmul %883, %884, %cst_203 {dimension_numbers = #tpu.dot_dimension_numbers<[2], [2], [1], [1], [0, 0, 0, 1, 1, 1], [0], [0]>} : vector<2x8x16xbf16>, vector<2x8x16xbf16>, vector<2x8x8xf32> -> vector<2x8x8xf32>
    "tpu.trace_stop"() : () -> ()
    %cst_204 = arith.constant 2.500000e-01 : f32
    %886 = vector.broadcast %cst_204 : f32 to vector<2x8x8xf32>
    %887 = arith.mulf %885, %886 : vector<2x8x8xf32>
    %cst_205 = arith.constant dense<0xFF800000> : vector<2x8xf32>
    %888 = vector.multi_reduction <maximumf>, %887, %cst_205 [2] : vector<2x8x8xf32> to vector<2x8xf32>
    %889 = vector.shape_cast %888 : vector<2x8xf32> to vector<2x8x1xf32>
    %890 = vector.broadcast %889 : vector<2x8x1xf32> to vector<2x8x8xf32>
    %891 = arith.subf %887, %890 : vector<2x8x8xf32>
    %892 = math.exp %891 : vector<2x8x8xf32>
    %cst_206 = arith.constant dense<0.000000e+00> : vector<2x8xf32>
    %893 = vector.multi_reduction <add>, %892, %cst_206 [2] : vector<2x8x8xf32> to vector<2x8xf32>
    %894 = vector.shape_cast %893 : vector<2x8xf32> to vector<2x8x1xf32>
    %895 = tpu.reciprocal %894 {approx = true} : vector<2x8x1xf32> -> vector<2x8x1xf32>
    %896 = vector.broadcast %895 : vector<2x8x1xf32> to vector<2x8x8xf32>
    %897 = arith.mulf %892, %896 : vector<2x8x8xf32>
    %898 = arith.truncf %897 : vector<2x8x8xf32> to vector<2x8x8xbf16>
    %899 = arith.truncf %882 : vector<2x8x16xf32> to vector<2x8x16xbf16>
    "tpu.trace_start"() <{level = 10 : i32, message = "bqk,bkd->bqd"}> : () -> ()
    %cst_207 = arith.constant dense<0.000000e+00> : vector<2x8x16xf32>
    %900 = tpu.matmul %898, %899, %cst_207 {dimension_numbers = #tpu.dot_dimension_numbers<[2], [1], [1], [2], [0, 0, 0, 1, 1, 2], [0], [0]>} : vector<2x8x8xbf16>, vector<2x8x16xbf16>, vector<2x8x16xf32> -> vector<2x8x16xf32>
    "tpu.trace_stop"() : () -> ()
    %901 = vector.shape_cast %900 : vector<2x8x16xf32> to vector<16x16xf32>
    %c0_208 = arith.constant 0 : index
    %c16 = arith.constant 16 : index
    %902 = vector.load %arg19[%c0_208, %c16] : memref<16x64xf32, #tpu.memory_space<vmem>>, vector<16x16xf32>
    tpu.vector_store %arg19[%c0_208, %c16], %901 {strides = array<i32>} : memref<16x64xf32, #tpu.memory_space<vmem>>, vector<16x16xf32>,
    %903 = vector.extract_strided_slice %850 {offsets = [0, 32], sizes = [16, 16], strides = [1, 1]} : vector<16x192xf32> to vector<16x16xf32>
    %904 = vector.shape_cast %903 : vector<16x16xf32> to vector<2x8x16xf32>
    %905 = vector.extract_strided_slice %850 {offsets = [0, 96], sizes = [16, 16], strides = [1, 1]} : vector<16x192xf32> to vector<16x16xf32>
    %906 = vector.shape_cast %905 : vector<16x16xf32> to vector<2x8x16xf32>
    %907 = vector.extract_strided_slice %850 {offsets = [0, 160], sizes = [16, 16], strides = [1, 1]} : vector<16x192xf32> to vector<16x16xf32>
    %908 = vector.shape_cast %907 : vector<16x16xf32> to vector<2x8x16xf32>
    %909 = arith.truncf %904 : vector<2x8x16xf32> to vector<2x8x16xbf16>
    %910 = arith.truncf %906 : vector<2x8x16xf32> to vector<2x8x16xbf16>
    "tpu.trace_start"() <{level = 10 : i32, message = "bqd,bkd->bqk"}> : () -> ()
    %cst_209 = arith.constant dense<0.000000e+00> : vector<2x8x8xf32>
    %911 = tpu.matmul %909, %910, %cst_209 {dimension_numbers = #tpu.dot_dimension_numbers<[2], [2], [1], [1], [0, 0, 0, 1, 1, 1], [0], [0]>} : vector<2x8x16xbf16>, vector<2x8x16xbf16>, vector<2x8x8xf32> -> vector<2x8x8xf32>
    "tpu.trace_stop"() : () -> ()
    %cst_210 = arith.constant 2.500000e-01 : f32
    %912 = vector.broadcast %cst_210 : f32 to vector<2x8x8xf32>
    %913 = arith.mulf %911, %912 : vector<2x8x8xf32>
    %cst_211 = arith.constant dense<0xFF800000> : vector<2x8xf32>
    %914 = vector.multi_reduction <maximumf>, %913, %cst_211 [2] : vector<2x8x8xf32> to vector<2x8xf32>
    %915 = vector.shape_cast %914 : vector<2x8xf32> to vector<2x8x1xf32>
    %916 = vector.broadcast %915 : vector<2x8x1xf32> to vector<2x8x8xf32>
    %917 = arith.subf %913, %916 : vector<2x8x8xf32>
    %918 = math.exp %917 : vector<2x8x8xf32>
    %cst_212 = arith.constant dense<0.000000e+00> : vector<2x8xf32>
    %919 = vector.multi_reduction <add>, %918, %cst_212 [2] : vector<2x8x8xf32> to vector<2x8xf32>
    %920 = vector.shape_cast %919 : vector<2x8xf32> to vector<2x8x1xf32>
    %921 = tpu.reciprocal %920 {approx = true} : vector<2x8x1xf32> -> vector<2x8x1xf32>
    %922 = vector.broadcast %921 : vector<2x8x1xf32> to vector<2x8x8xf32>
    %923 = arith.mulf %918, %922 : vector<2x8x8xf32>
    %924 = arith.truncf %923 : vector<2x8x8xf32> to vector<2x8x8xbf16>
    %925 = arith.truncf %908 : vector<2x8x16xf32> to vector<2x8x16xbf16>
    "tpu.trace_start"() <{level = 10 : i32, message = "bqk,bkd->bqd"}> : () -> ()
    %cst_213 = arith.constant dense<0.000000e+00> : vector<2x8x16xf32>
    %926 = tpu.matmul %924, %925, %cst_213 {dimension_numbers = #tpu.dot_dimension_numbers<[2], [1], [1], [2], [0, 0, 0, 1, 1, 2], [0], [0]>} : vector<2x8x8xbf16>, vector<2x8x16xbf16>, vector<2x8x16xf32> -> vector<2x8x16xf32>
    "tpu.trace_stop"() : () -> ()
    %927 = vector.shape_cast %926 : vector<2x8x16xf32> to vector<16x16xf32>
    %c0_214 = arith.constant 0 : index
    %c32_215 = arith.constant 32 : index
    %928 = vector.load %arg19[%c0_214, %c32_215] : memref<16x64xf32, #tpu.memory_space<vmem>>, vector<16x16xf32>
    tpu.vector_store %arg19[%c0_214, %c32_215], %927 {strides = array<i32>} : memref<16x64xf32, #tpu.memory_space<vmem>>, vector<16x16xf32>,
    %929 = vector.extract_strided_slice %850 {offsets = [0, 48], sizes = [16, 16], strides = [1, 1]} : vector<16x192xf32> to vector<16x16xf32>
    %930 = vector.shape_cast %929 : vector<16x16xf32> to vector<2x8x16xf32>
    %931 = vector.extract_strided_slice %850 {offsets = [0, 112], sizes = [16, 16], strides = [1, 1]} : vector<16x192xf32> to vector<16x16xf32>
    %932 = vector.shape_cast %931 : vector<16x16xf32> to vector<2x8x16xf32>
    %933 = vector.extract_strided_slice %850 {offsets = [0, 176], sizes = [16, 16], strides = [1, 1]} : vector<16x192xf32> to vector<16x16xf32>
    %934 = vector.shape_cast %933 : vector<16x16xf32> to vector<2x8x16xf32>
    %935 = arith.truncf %930 : vector<2x8x16xf32> to vector<2x8x16xbf16>
    %936 = arith.truncf %932 : vector<2x8x16xf32> to vector<2x8x16xbf16>
    "tpu.trace_start"() <{level = 10 : i32, message = "bqd,bkd->bqk"}> : () -> ()
    %cst_216 = arith.constant dense<0.000000e+00> : vector<2x8x8xf32>
    %937 = tpu.matmul %935, %936, %cst_216 {dimension_numbers = #tpu.dot_dimension_numbers<[2], [2], [1], [1], [0, 0, 0, 1, 1, 1], [0], [0]>} : vector<2x8x16xbf16>, vector<2x8x16xbf16>, vector<2x8x8xf32> -> vector<2x8x8xf32>
    "tpu.trace_stop"() : () -> ()
    %cst_217 = arith.constant 2.500000e-01 : f32
    %938 = vector.broadcast %cst_217 : f32 to vector<2x8x8xf32>
    %939 = arith.mulf %937, %938 : vector<2x8x8xf32>
    %cst_218 = arith.constant dense<0xFF800000> : vector<2x8xf32>
    %940 = vector.multi_reduction <maximumf>, %939, %cst_218 [2] : vector<2x8x8xf32> to vector<2x8xf32>
    %941 = vector.shape_cast %940 : vector<2x8xf32> to vector<2x8x1xf32>
    %942 = vector.broadcast %941 : vector<2x8x1xf32> to vector<2x8x8xf32>
    %943 = arith.subf %939, %942 : vector<2x8x8xf32>
    %944 = math.exp %943 : vector<2x8x8xf32>
    %cst_219 = arith.constant dense<0.000000e+00> : vector<2x8xf32>
    %945 = vector.multi_reduction <add>, %944, %cst_219 [2] : vector<2x8x8xf32> to vector<2x8xf32>
    %946 = vector.shape_cast %945 : vector<2x8xf32> to vector<2x8x1xf32>
    %947 = tpu.reciprocal %946 {approx = true} : vector<2x8x1xf32> -> vector<2x8x1xf32>
    %948 = vector.broadcast %947 : vector<2x8x1xf32> to vector<2x8x8xf32>
    %949 = arith.mulf %944, %948 : vector<2x8x8xf32>
    %950 = arith.truncf %949 : vector<2x8x8xf32> to vector<2x8x8xbf16>
    %951 = arith.truncf %934 : vector<2x8x16xf32> to vector<2x8x16xbf16>
    "tpu.trace_start"() <{level = 10 : i32, message = "bqk,bkd->bqd"}> : () -> ()
    %cst_220 = arith.constant dense<0.000000e+00> : vector<2x8x16xf32>
    %952 = tpu.matmul %950, %951, %cst_220 {dimension_numbers = #tpu.dot_dimension_numbers<[2], [1], [1], [2], [0, 0, 0, 1, 1, 2], [0], [0]>} : vector<2x8x8xbf16>, vector<2x8x16xbf16>, vector<2x8x16xf32> -> vector<2x8x16xf32>
    "tpu.trace_stop"() : () -> ()
    %953 = vector.shape_cast %952 : vector<2x8x16xf32> to vector<16x16xf32>
    %c0_221 = arith.constant 0 : index
    %c48 = arith.constant 48 : index
    %954 = vector.load %arg19[%c0_221, %c48] : memref<16x64xf32, #tpu.memory_space<vmem>>, vector<16x16xf32>
    tpu.vector_store %arg19[%c0_221, %c48], %953 {strides = array<i32>} : memref<16x64xf32, #tpu.memory_space<vmem>>, vector<16x16xf32>,
    %c0_222 = arith.constant 0 : index
    %c0_223 = arith.constant 0 : index
    %955 = vector.load %arg19[%c0_222, %c0_223] : memref<16x64xf32, #tpu.memory_space<vmem>>, vector<16x64xf32>
    %956 = arith.truncf %955 : vector<16x64xf32> to vector<16x64xbf16>
    %cst_224 = arith.constant dense<0.000000e+00> : vector<16x64xf32>
    %957 = tpu.matmul %956, %837, %cst_224 {dimension_numbers = #tpu.dot_dimension_numbers<[1], [0], [0], [1], [0, 0, 1, 1], [], []>} : vector<16x64xbf16>, vector<64x64xbf16>, vector<16x64xf32> -> vector<16x64xf32>
    %958 = vector.broadcast %838 : vector<1x64xf32> to vector<16x64xf32>
    %959 = arith.addf %957, %958 : vector<16x64xf32>
    %960 = arith.addf %834, %959 : vector<16x64xf32>
    %cst_225 = arith.constant dense<0.000000e+00> : vector<16xf32>
    %961 = vector.multi_reduction <add>, %960, %cst_225 [1] : vector<16x64xf32> to vector<16xf32>
    %962 = vector.shape_cast %961 : vector<16xf32> to vector<16x1xf32>
    %cst_226 = arith.constant 6.400000e+01 : f32
    %963 = vector.broadcast %cst_226 : f32 to vector<16x1xf32>
    %964 = arith.divf %962, %963 : vector<16x1xf32>
    %965 = arith.mulf %960, %960 : vector<16x64xf32>
    %cst_227 = arith.constant dense<0.000000e+00> : vector<16xf32>
    %966 = vector.multi_reduction <add>, %965, %cst_227 [1] : vector<16x64xf32> to vector<16xf32>
    %967 = vector.shape_cast %966 : vector<16xf32> to vector<16x1xf32>
    %cst_228 = arith.constant 6.400000e+01 : f32
    %968 = vector.broadcast %cst_228 : f32 to vector<16x1xf32>
    %969 = arith.divf %967, %968 : vector<16x1xf32>
    %970 = arith.mulf %964, %964 : vector<16x1xf32>
    %971 = arith.subf %969, %970 : vector<16x1xf32>
    %cst_229 = arith.constant 0.000000e+00 : f32
    %972 = vector.broadcast %cst_229 : f32 to vector<16x1xf32>
    %973 = arith.maximumf %971, %972 : vector<16x1xf32>
    %974 = vector.broadcast %964 : vector<16x1xf32> to vector<16x64xf32>
    %975 = arith.subf %960, %974 : vector<16x64xf32>
    %cst_230 = arith.constant 9.99999974E-6 : f32
    %976 = vector.broadcast %cst_230 : f32 to vector<16x1xf32>
    %977 = arith.addf %973, %976 : vector<16x1xf32>
    %978 = math.rsqrt %977 : vector<16x1xf32>
    %979 = vector.broadcast %978 : vector<16x1xf32> to vector<16x64xf32>
    %980 = arith.mulf %975, %979 : vector<16x64xf32>
    %981 = vector.broadcast %839 : vector<1x64xf32> to vector<16x64xf32>
    %982 = arith.mulf %980, %981 : vector<16x64xf32>
    %983 = vector.broadcast %840 : vector<1x64xf32> to vector<16x64xf32>
    %984 = arith.addf %982, %983 : vector<16x64xf32>
    %985 = arith.truncf %984 : vector<16x64xf32> to vector<16x64xbf16>
    %cst_231 = arith.constant dense<0.000000e+00> : vector<16x128xf32>
    %986 = tpu.matmul %985, %841, %cst_231 {dimension_numbers = #tpu.dot_dimension_numbers<[1], [0], [0], [1], [0, 0, 1, 1], [], []>} : vector<16x64xbf16>, vector<64x128xbf16>, vector<16x128xf32> -> vector<16x128xf32>
    %987 = vector.broadcast %842 : vector<1x128xf32> to vector<16x128xf32>
    %988 = arith.addf %986, %987 : vector<16x128xf32>
    %cst_232 = arith.constant 0.000000e+00 : f32
    %989 = vector.broadcast %cst_232 : f32 to vector<16x128xf32>
    %990 = arith.maximumf %988, %989 : vector<16x128xf32>
    %991 = arith.truncf %990 : vector<16x128xf32> to vector<16x128xbf16>
    %cst_233 = arith.constant dense<0.000000e+00> : vector<16x64xf32>
    %992 = tpu.matmul %991, %843, %cst_233 {dimension_numbers = #tpu.dot_dimension_numbers<[1], [0], [0], [1], [0, 0, 1, 1], [], []>} : vector<16x128xbf16>, vector<128x64xbf16>, vector<16x64xf32> -> vector<16x64xf32>
    %993 = vector.broadcast %844 : vector<1x64xf32> to vector<16x64xf32>
    %994 = arith.addf %992, %993 : vector<16x64xf32>
    %995 = arith.addf %984, %994 : vector<16x64xf32>
    %cst_234 = arith.constant dense<0.000000e+00> : vector<16xf32>
    %996 = vector.multi_reduction <add>, %995, %cst_234 [1] : vector<16x64xf32> to vector<16xf32>
    %997 = vector.shape_cast %996 : vector<16xf32> to vector<16x1xf32>
    %cst_235 = arith.constant 6.400000e+01 : f32
    %998 = vector.broadcast %cst_235 : f32 to vector<16x1xf32>
    %999 = arith.divf %997, %998 : vector<16x1xf32>
    %1000 = arith.mulf %995, %995 : vector<16x64xf32>
    %cst_236 = arith.constant dense<0.000000e+00> : vector<16xf32>
    %1001 = vector.multi_reduction <add>, %1000, %cst_236 [1] : vector<16x64xf32> to vector<16xf32>
    %1002 = vector.shape_cast %1001 : vector<16xf32> to vector<16x1xf32>
    %cst_237 = arith.constant 6.400000e+01 : f32
    %1003 = vector.broadcast %cst_237 : f32 to vector<16x1xf32>
    %1004 = arith.divf %1002, %1003 : vector<16x1xf32>
    %1005 = arith.mulf %999, %999 : vector<16x1xf32>
    %1006 = arith.subf %1004, %1005 : vector<16x1xf32>
    %cst_238 = arith.constant 0.000000e+00 : f32
    %1007 = vector.broadcast %cst_238 : f32 to vector<16x1xf32>
    %1008 = arith.maximumf %1006, %1007 : vector<16x1xf32>
    %1009 = vector.broadcast %999 : vector<16x1xf32> to vector<16x64xf32>
    %1010 = arith.subf %995, %1009 : vector<16x64xf32>
    %cst_239 = arith.constant 9.99999974E-6 : f32
    %1011 = vector.broadcast %cst_239 : f32 to vector<16x1xf32>
    %1012 = arith.addf %1008, %1011 : vector<16x1xf32>
    %1013 = math.rsqrt %1012 : vector<16x1xf32>
    %1014 = vector.broadcast %1013 : vector<16x1xf32> to vector<16x64xf32>
    %1015 = arith.mulf %1010, %1014 : vector<16x64xf32>
    %1016 = vector.broadcast %845 : vector<1x64xf32> to vector<16x64xf32>
    %1017 = arith.mulf %1015, %1016 : vector<16x64xf32>
    %1018 = vector.broadcast %846 : vector<1x64xf32> to vector<16x64xf32>
    %1019 = arith.addf %1017, %1018 : vector<16x64xf32>
    %c0_240 = arith.constant 0 : index
    %c0_241 = arith.constant 0 : index
    %1020 = vector.load %arg12[%c0_240, %c0_241] : memref<64x192xbf16, #tpu.memory_space<vmem>>, vector<64x192xbf16>
    %c13 = arith.constant 13 : index
    %c0_242 = arith.constant 0 : index
    %1021 = vector.load %arg2[%c13, %c0_242] : memref<32x256xf32, #tpu.memory_space<vmem>>, vector<1x192xf32>
    %c0_243 = arith.constant 0 : index
    %c0_244 = arith.constant 0 : index
    %1022 = vector.load %arg13[%c0_243, %c0_244] : memref<64x64xbf16, #tpu.memory_space<vmem>>, vector<64x64xbf16>
    %c14 = arith.constant 14 : index
    %c0_245 = arith.constant 0 : index
    %1023 = vector.load %arg2[%c14, %c0_245] : memref<32x256xf32, #tpu.memory_space<vmem>>, vector<1x64xf32>
    %c15 = arith.constant 15 : index
    %c0_246 = arith.constant 0 : index
    %1024 = vector.load %arg2[%c15, %c0_246] : memref<32x256xf32, #tpu.memory_space<vmem>>, vector<1x64xf32>
    %c16_247 = arith.constant 16 : index
    %c0_248 = arith.constant 0 : index
    %1025 = vector.load %arg2[%c16_247, %c0_248] : memref<32x256xf32, #tpu.memory_space<vmem>>, vector<1x64xf32>
    %c0_249 = arith.constant 0 : index
    %c0_250 = arith.constant 0 : index
    %1026 = vector.load %arg14[%c0_249, %c0_250] : memref<64x128xbf16, #tpu.memory_space<vmem>>, vector<64x128xbf16>
    %c17 = arith.constant 17 : index
    %c0_251 = arith.constant 0 : index
    %1027 = vector.load %arg2[%c17, %c0_251] : memref<32x256xf32, #tpu.memory_space<vmem>>, vector<1x128xf32>
    %c0_252 = arith.constant 0 : index
    %c0_253 = arith.constant 0 : index
    %1028 = vector.load %arg15[%c0_252, %c0_253] : memref<128x64xbf16, #tpu.memory_space<vmem>>, vector<128x64xbf16>
    %c18 = arith.constant 18 : index
    %c0_254 = arith.constant 0 : index
    %1029 = vector.load %arg2[%c18, %c0_254] : memref<32x256xf32, #tpu.memory_space<vmem>>, vector<1x64xf32>
    %c19 = arith.constant 19 : index
    %c0_255 = arith.constant 0 : index
    %1030 = vector.load %arg2[%c19, %c0_255] : memref<32x256xf32, #tpu.memory_space<vmem>>, vector<1x64xf32>
    %c20 = arith.constant 20 : index
    %c0_256 = arith.constant 0 : index
    %1031 = vector.load %arg2[%c20, %c0_256] : memref<32x256xf32, #tpu.memory_space<vmem>>, vector<1x64xf32>
    %1032 = arith.truncf %1019 : vector<16x64xf32> to vector<16x64xbf16>
    %cst_257 = arith.constant dense<0.000000e+00> : vector<16x192xf32>
    %1033 = tpu.matmul %1032, %1020, %cst_257 {dimension_numbers = #tpu.dot_dimension_numbers<[1], [0], [0], [1], [0, 0, 1, 1], [], []>} : vector<16x64xbf16>, vector<64x192xbf16>, vector<16x192xf32> -> vector<16x192xf32>
    %1034 = vector.broadcast %1021 : vector<1x192xf32> to vector<16x192xf32>
    %1035 = arith.addf %1033, %1034 : vector<16x192xf32>
    %1036 = vector.extract_strided_slice %1035 {offsets = [0, 0], sizes = [16, 16], strides = [1, 1]} : vector<16x192xf32> to vector<16x16xf32>
    %1037 = vector.shape_cast %1036 : vector<16x16xf32> to vector<2x8x16xf32>
    %1038 = vector.extract_strided_slice %1035 {offsets = [0, 64], sizes = [16, 16], strides = [1, 1]} : vector<16x192xf32> to vector<16x16xf32>
    %1039 = vector.shape_cast %1038 : vector<16x16xf32> to vector<2x8x16xf32>
    %1040 = vector.extract_strided_slice %1035 {offsets = [0, 128], sizes = [16, 16], strides = [1, 1]} : vector<16x192xf32> to vector<16x16xf32>
    %1041 = vector.shape_cast %1040 : vector<16x16xf32> to vector<2x8x16xf32>
    %1042 = arith.truncf %1037 : vector<2x8x16xf32> to vector<2x8x16xbf16>
    %1043 = arith.truncf %1039 : vector<2x8x16xf32> to vector<2x8x16xbf16>
    "tpu.trace_start"() <{level = 10 : i32, message = "bqd,bkd->bqk"}> : () -> ()
    %cst_258 = arith.constant dense<0.000000e+00> : vector<2x8x8xf32>
    %1044 = tpu.matmul %1042, %1043, %cst_258 {dimension_numbers = #tpu.dot_dimension_numbers<[2], [2], [1], [1], [0, 0, 0, 1, 1, 1], [0], [0]>} : vector<2x8x16xbf16>, vector<2x8x16xbf16>, vector<2x8x8xf32> -> vector<2x8x8xf32>
    "tpu.trace_stop"() : () -> ()
    %cst_259 = arith.constant 2.500000e-01 : f32
    %1045 = vector.broadcast %cst_259 : f32 to vector<2x8x8xf32>
    %1046 = arith.mulf %1044, %1045 : vector<2x8x8xf32>
    %cst_260 = arith.constant dense<0xFF800000> : vector<2x8xf32>
    %1047 = vector.multi_reduction <maximumf>, %1046, %cst_260 [2] : vector<2x8x8xf32> to vector<2x8xf32>
    %1048 = vector.shape_cast %1047 : vector<2x8xf32> to vector<2x8x1xf32>
    %1049 = vector.broadcast %1048 : vector<2x8x1xf32> to vector<2x8x8xf32>
    %1050 = arith.subf %1046, %1049 : vector<2x8x8xf32>
    %1051 = math.exp %1050 : vector<2x8x8xf32>
    %cst_261 = arith.constant dense<0.000000e+00> : vector<2x8xf32>
    %1052 = vector.multi_reduction <add>, %1051, %cst_261 [2] : vector<2x8x8xf32> to vector<2x8xf32>
    %1053 = vector.shape_cast %1052 : vector<2x8xf32> to vector<2x8x1xf32>
    %1054 = tpu.reciprocal %1053 {approx = true} : vector<2x8x1xf32> -> vector<2x8x1xf32>
    %1055 = vector.broadcast %1054 : vector<2x8x1xf32> to vector<2x8x8xf32>
    %1056 = arith.mulf %1051, %1055 : vector<2x8x8xf32>
    %1057 = arith.truncf %1056 : vector<2x8x8xf32> to vector<2x8x8xbf16>
    %1058 = arith.truncf %1041 : vector<2x8x16xf32> to vector<2x8x16xbf16>
    "tpu.trace_start"() <{level = 10 : i32, message = "bqk,bkd->bqd"}> : () -> ()
    %cst_262 = arith.constant dense<0.000000e+00> : vector<2x8x16xf32>
    %1059 = tpu.matmul %1057, %1058, %cst_262 {dimension_numbers = #tpu.dot_dimension_numbers<[2], [1], [1], [2], [0, 0, 0, 1, 1, 2], [0], [0]>} : vector<2x8x8xbf16>, vector<2x8x16xbf16>, vector<2x8x16xf32> -> vector<2x8x16xf32>
    "tpu.trace_stop"() : () -> ()
    %1060 = vector.shape_cast %1059 : vector<2x8x16xf32> to vector<16x16xf32>
    %c0_263 = arith.constant 0 : index
    %c0_264 = arith.constant 0 : index
    %1061 = vector.load %arg19[%c0_263, %c0_264] : memref<16x64xf32, #tpu.memory_space<vmem>>, vector<16x16xf32>
    tpu.vector_store %arg19[%c0_263, %c0_264], %1060 {strides = array<i32>} : memref<16x64xf32, #tpu.memory_space<vmem>>, vector<16x16xf32>,
    %1062 = vector.extract_strided_slice %1035 {offsets = [0, 16], sizes = [16, 16], strides = [1, 1]} : vector<16x192xf32> to vector<16x16xf32>
    %1063 = vector.shape_cast %1062 : vector<16x16xf32> to vector<2x8x16xf32>
    %1064 = vector.extract_strided_slice %1035 {offsets = [0, 80], sizes = [16, 16], strides = [1, 1]} : vector<16x192xf32> to vector<16x16xf32>
    %1065 = vector.shape_cast %1064 : vector<16x16xf32> to vector<2x8x16xf32>
    %1066 = vector.extract_strided_slice %1035 {offsets = [0, 144], sizes = [16, 16], strides = [1, 1]} : vector<16x192xf32> to vector<16x16xf32>
    %1067 = vector.shape_cast %1066 : vector<16x16xf32> to vector<2x8x16xf32>
    %1068 = arith.truncf %1063 : vector<2x8x16xf32> to vector<2x8x16xbf16>
    %1069 = arith.truncf %1065 : vector<2x8x16xf32> to vector<2x8x16xbf16>
    "tpu.trace_start"() <{level = 10 : i32, message = "bqd,bkd->bqk"}> : () -> ()
    %cst_265 = arith.constant dense<0.000000e+00> : vector<2x8x8xf32>
    %1070 = tpu.matmul %1068, %1069, %cst_265 {dimension_numbers = #tpu.dot_dimension_numbers<[2], [2], [1], [1], [0, 0, 0, 1, 1, 1], [0], [0]>} : vector<2x8x16xbf16>, vector<2x8x16xbf16>, vector<2x8x8xf32> -> vector<2x8x8xf32>
    "tpu.trace_stop"() : () -> ()
    %cst_266 = arith.constant 2.500000e-01 : f32
    %1071 = vector.broadcast %cst_266 : f32 to vector<2x8x8xf32>
    %1072 = arith.mulf %1070, %1071 : vector<2x8x8xf32>
    %cst_267 = arith.constant dense<0xFF800000> : vector<2x8xf32>
    %1073 = vector.multi_reduction <maximumf>, %1072, %cst_267 [2] : vector<2x8x8xf32> to vector<2x8xf32>
    %1074 = vector.shape_cast %1073 : vector<2x8xf32> to vector<2x8x1xf32>
    %1075 = vector.broadcast %1074 : vector<2x8x1xf32> to vector<2x8x8xf32>
    %1076 = arith.subf %1072, %1075 : vector<2x8x8xf32>
    %1077 = math.exp %1076 : vector<2x8x8xf32>
    %cst_268 = arith.constant dense<0.000000e+00> : vector<2x8xf32>
    %1078 = vector.multi_reduction <add>, %1077, %cst_268 [2] : vector<2x8x8xf32> to vector<2x8xf32>
    %1079 = vector.shape_cast %1078 : vector<2x8xf32> to vector<2x8x1xf32>
    %1080 = tpu.reciprocal %1079 {approx = true} : vector<2x8x1xf32> -> vector<2x8x1xf32>
    %1081 = vector.broadcast %1080 : vector<2x8x1xf32> to vector<2x8x8xf32>
    %1082 = arith.mulf %1077, %1081 : vector<2x8x8xf32>
    %1083 = arith.truncf %1082 : vector<2x8x8xf32> to vector<2x8x8xbf16>
    %1084 = arith.truncf %1067 : vector<2x8x16xf32> to vector<2x8x16xbf16>
    "tpu.trace_start"() <{level = 10 : i32, message = "bqk,bkd->bqd"}> : () -> ()
    %cst_269 = arith.constant dense<0.000000e+00> : vector<2x8x16xf32>
    %1085 = tpu.matmul %1083, %1084, %cst_269 {dimension_numbers = #tpu.dot_dimension_numbers<[2], [1], [1], [2], [0, 0, 0, 1, 1, 2], [0], [0]>} : vector<2x8x8xbf16>, vector<2x8x16xbf16>, vector<2x8x16xf32> -> vector<2x8x16xf32>
    "tpu.trace_stop"() : () -> ()
    %1086 = vector.shape_cast %1085 : vector<2x8x16xf32> to vector<16x16xf32>
    %c0_270 = arith.constant 0 : index
    %c16_271 = arith.constant 16 : index
    %1087 = vector.load %arg19[%c0_270, %c16_271] : memref<16x64xf32, #tpu.memory_space<vmem>>, vector<16x16xf32>
    tpu.vector_store %arg19[%c0_270, %c16_271], %1086 {strides = array<i32>} : memref<16x64xf32, #tpu.memory_space<vmem>>, vector<16x16xf32>,
    %1088 = vector.extract_strided_slice %1035 {offsets = [0, 32], sizes = [16, 16], strides = [1, 1]} : vector<16x192xf32> to vector<16x16xf32>
    %1089 = vector.shape_cast %1088 : vector<16x16xf32> to vector<2x8x16xf32>
    %1090 = vector.extract_strided_slice %1035 {offsets = [0, 96], sizes = [16, 16], strides = [1, 1]} : vector<16x192xf32> to vector<16x16xf32>
    %1091 = vector.shape_cast %1090 : vector<16x16xf32> to vector<2x8x16xf32>
    %1092 = vector.extract_strided_slice %1035 {offsets = [0, 160], sizes = [16, 16], strides = [1, 1]} : vector<16x192xf32> to vector<16x16xf32>
    %1093 = vector.shape_cast %1092 : vector<16x16xf32> to vector<2x8x16xf32>
    %1094 = arith.truncf %1089 : vector<2x8x16xf32> to vector<2x8x16xbf16>
    %1095 = arith.truncf %1091 : vector<2x8x16xf32> to vector<2x8x16xbf16>
    "tpu.trace_start"() <{level = 10 : i32, message = "bqd,bkd->bqk"}> : () -> ()
    %cst_272 = arith.constant dense<0.000000e+00> : vector<2x8x8xf32>
    %1096 = tpu.matmul %1094, %1095, %cst_272 {dimension_numbers = #tpu.dot_dimension_numbers<[2], [2], [1], [1], [0, 0, 0, 1, 1, 1], [0], [0]>} : vector<2x8x16xbf16>, vector<2x8x16xbf16>, vector<2x8x8xf32> -> vector<2x8x8xf32>
    "tpu.trace_stop"() : () -> ()
    %cst_273 = arith.constant 2.500000e-01 : f32
    %1097 = vector.broadcast %cst_273 : f32 to vector<2x8x8xf32>
    %1098 = arith.mulf %1096, %1097 : vector<2x8x8xf32>
    %cst_274 = arith.constant dense<0xFF800000> : vector<2x8xf32>
    %1099 = vector.multi_reduction <maximumf>, %1098, %cst_274 [2] : vector<2x8x8xf32> to vector<2x8xf32>
    %1100 = vector.shape_cast %1099 : vector<2x8xf32> to vector<2x8x1xf32>
    %1101 = vector.broadcast %1100 : vector<2x8x1xf32> to vector<2x8x8xf32>
    %1102 = arith.subf %1098, %1101 : vector<2x8x8xf32>
    %1103 = math.exp %1102 : vector<2x8x8xf32>
    %cst_275 = arith.constant dense<0.000000e+00> : vector<2x8xf32>
    %1104 = vector.multi_reduction <add>, %1103, %cst_275 [2] : vector<2x8x8xf32> to vector<2x8xf32>
    %1105 = vector.shape_cast %1104 : vector<2x8xf32> to vector<2x8x1xf32>
    %1106 = tpu.reciprocal %1105 {approx = true} : vector<2x8x1xf32> -> vector<2x8x1xf32>
    %1107 = vector.broadcast %1106 : vector<2x8x1xf32> to vector<2x8x8xf32>
    %1108 = arith.mulf %1103, %1107 : vector<2x8x8xf32>
    %1109 = arith.truncf %1108 : vector<2x8x8xf32> to vector<2x8x8xbf16>
    %1110 = arith.truncf %1093 : vector<2x8x16xf32> to vector<2x8x16xbf16>
    "tpu.trace_start"() <{level = 10 : i32, message = "bqk,bkd->bqd"}> : () -> ()
    %cst_276 = arith.constant dense<0.000000e+00> : vector<2x8x16xf32>
    %1111 = tpu.matmul %1109, %1110, %cst_276 {dimension_numbers = #tpu.dot_dimension_numbers<[2], [1], [1], [2], [0, 0, 0, 1, 1, 2], [0], [0]>} : vector<2x8x8xbf16>, vector<2x8x16xbf16>, vector<2x8x16xf32> -> vector<2x8x16xf32>
    "tpu.trace_stop"() : () -> ()
    %1112 = vector.shape_cast %1111 : vector<2x8x16xf32> to vector<16x16xf32>
    %c0_277 = arith.constant 0 : index
    %c32_278 = arith.constant 32 : index
    %1113 = vector.load %arg19[%c0_277, %c32_278] : memref<16x64xf32, #tpu.memory_space<vmem>>, vector<16x16xf32>
    tpu.vector_store %arg19[%c0_277, %c32_278], %1112 {strides = array<i32>} : memref<16x64xf32, #tpu.memory_space<vmem>>, vector<16x16xf32>,
    %1114 = vector.extract_strided_slice %1035 {offsets = [0, 48], sizes = [16, 16], strides = [1, 1]} : vector<16x192xf32> to vector<16x16xf32>
    %1115 = vector.shape_cast %1114 : vector<16x16xf32> to vector<2x8x16xf32>
    %1116 = vector.extract_strided_slice %1035 {offsets = [0, 112], sizes = [16, 16], strides = [1, 1]} : vector<16x192xf32> to vector<16x16xf32>
    %1117 = vector.shape_cast %1116 : vector<16x16xf32> to vector<2x8x16xf32>
    %1118 = vector.extract_strided_slice %1035 {offsets = [0, 176], sizes = [16, 16], strides = [1, 1]} : vector<16x192xf32> to vector<16x16xf32>
    %1119 = vector.shape_cast %1118 : vector<16x16xf32> to vector<2x8x16xf32>
    %1120 = arith.truncf %1115 : vector<2x8x16xf32> to vector<2x8x16xbf16>
    %1121 = arith.truncf %1117 : vector<2x8x16xf32> to vector<2x8x16xbf16>
    "tpu.trace_start"() <{level = 10 : i32, message = "bqd,bkd->bqk"}> : () -> ()
    %cst_279 = arith.constant dense<0.000000e+00> : vector<2x8x8xf32>
    %1122 = tpu.matmul %1120, %1121, %cst_279 {dimension_numbers = #tpu.dot_dimension_numbers<[2], [2], [1], [1], [0, 0, 0, 1, 1, 1], [0], [0]>} : vector<2x8x16xbf16>, vector<2x8x16xbf16>, vector<2x8x8xf32> -> vector<2x8x8xf32>
    "tpu.trace_stop"() : () -> ()
    %cst_280 = arith.constant 2.500000e-01 : f32
    %1123 = vector.broadcast %cst_280 : f32 to vector<2x8x8xf32>
    %1124 = arith.mulf %1122, %1123 : vector<2x8x8xf32>
    %cst_281 = arith.constant dense<0xFF800000> : vector<2x8xf32>
    %1125 = vector.multi_reduction <maximumf>, %1124, %cst_281 [2] : vector<2x8x8xf32> to vector<2x8xf32>
    %1126 = vector.shape_cast %1125 : vector<2x8xf32> to vector<2x8x1xf32>
    %1127 = vector.broadcast %1126 : vector<2x8x1xf32> to vector<2x8x8xf32>
    %1128 = arith.subf %1124, %1127 : vector<2x8x8xf32>
    %1129 = math.exp %1128 : vector<2x8x8xf32>
    %cst_282 = arith.constant dense<0.000000e+00> : vector<2x8xf32>
    %1130 = vector.multi_reduction <add>, %1129, %cst_282 [2] : vector<2x8x8xf32> to vector<2x8xf32>
    %1131 = vector.shape_cast %1130 : vector<2x8xf32> to vector<2x8x1xf32>
    %1132 = tpu.reciprocal %1131 {approx = true} : vector<2x8x1xf32> -> vector<2x8x1xf32>
    %1133 = vector.broadcast %1132 : vector<2x8x1xf32> to vector<2x8x8xf32>
    %1134 = arith.mulf %1129, %1133 : vector<2x8x8xf32>
    %1135 = arith.truncf %1134 : vector<2x8x8xf32> to vector<2x8x8xbf16>
    %1136 = arith.truncf %1119 : vector<2x8x16xf32> to vector<2x8x16xbf16>
    "tpu.trace_start"() <{level = 10 : i32, message = "bqk,bkd->bqd"}> : () -> ()
    %cst_283 = arith.constant dense<0.000000e+00> : vector<2x8x16xf32>
    %1137 = tpu.matmul %1135, %1136, %cst_283 {dimension_numbers = #tpu.dot_dimension_numbers<[2], [1], [1], [2], [0, 0, 0, 1, 1, 2], [0], [0]>} : vector<2x8x8xbf16>, vector<2x8x16xbf16>, vector<2x8x16xf32> -> vector<2x8x16xf32>
    "tpu.trace_stop"() : () -> ()
    %1138 = vector.shape_cast %1137 : vector<2x8x16xf32> to vector<16x16xf32>
    %c0_284 = arith.constant 0 : index
    %c48_285 = arith.constant 48 : index
    %1139 = vector.load %arg19[%c0_284, %c48_285] : memref<16x64xf32, #tpu.memory_space<vmem>>, vector<16x16xf32>
    tpu.vector_store %arg19[%c0_284, %c48_285], %1138 {strides = array<i32>} : memref<16x64xf32, #tpu.memory_space<vmem>>, vector<16x16xf32>,
    %c0_286 = arith.constant 0 : index
    %c0_287 = arith.constant 0 : index
    %1140 = vector.load %arg19[%c0_286, %c0_287] : memref<16x64xf32, #tpu.memory_space<vmem>>, vector<16x64xf32>
    %1141 = arith.truncf %1140 : vector<16x64xf32> to vector<16x64xbf16>
    %cst_288 = arith.constant dense<0.000000e+00> : vector<16x64xf32>
    %1142 = tpu.matmul %1141, %1022, %cst_288 {dimension_numbers = #tpu.dot_dimension_numbers<[1], [0], [0], [1], [0, 0, 1, 1], [], []>} : vector<16x64xbf16>, vector<64x64xbf16>, vector<16x64xf32> -> vector<16x64xf32>
    %1143 = vector.broadcast %1023 : vector<1x64xf32> to vector<16x64xf32>
    %1144 = arith.addf %1142, %1143 : vector<16x64xf32>
    %1145 = arith.addf %1019, %1144 : vector<16x64xf32>
    %cst_289 = arith.constant dense<0.000000e+00> : vector<16xf32>
    %1146 = vector.multi_reduction <add>, %1145, %cst_289 [1] : vector<16x64xf32> to vector<16xf32>
    %1147 = vector.shape_cast %1146 : vector<16xf32> to vector<16x1xf32>
    %cst_290 = arith.constant 6.400000e+01 : f32
    %1148 = vector.broadcast %cst_290 : f32 to vector<16x1xf32>
    %1149 = arith.divf %1147, %1148 : vector<16x1xf32>
    %1150 = arith.mulf %1145, %1145 : vector<16x64xf32>
    %cst_291 = arith.constant dense<0.000000e+00> : vector<16xf32>
    %1151 = vector.multi_reduction <add>, %1150, %cst_291 [1] : vector<16x64xf32> to vector<16xf32>
    %1152 = vector.shape_cast %1151 : vector<16xf32> to vector<16x1xf32>
    %cst_292 = arith.constant 6.400000e+01 : f32
    %1153 = vector.broadcast %cst_292 : f32 to vector<16x1xf32>
    %1154 = arith.divf %1152, %1153 : vector<16x1xf32>
    %1155 = arith.mulf %1149, %1149 : vector<16x1xf32>
    %1156 = arith.subf %1154, %1155 : vector<16x1xf32>
    %cst_293 = arith.constant 0.000000e+00 : f32
    %1157 = vector.broadcast %cst_293 : f32 to vector<16x1xf32>
    %1158 = arith.maximumf %1156, %1157 : vector<16x1xf32>
    %1159 = vector.broadcast %1149 : vector<16x1xf32> to vector<16x64xf32>
    %1160 = arith.subf %1145, %1159 : vector<16x64xf32>
    %cst_294 = arith.constant 9.99999974E-6 : f32
    %1161 = vector.broadcast %cst_294 : f32 to vector<16x1xf32>
    %1162 = arith.addf %1158, %1161 : vector<16x1xf32>
    %1163 = math.rsqrt %1162 : vector<16x1xf32>
    %1164 = vector.broadcast %1163 : vector<16x1xf32> to vector<16x64xf32>
    %1165 = arith.mulf %1160, %1164 : vector<16x64xf32>
    %1166 = vector.broadcast %1024 : vector<1x64xf32> to vector<16x64xf32>
    %1167 = arith.mulf %1165, %1166 : vector<16x64xf32>
    %1168 = vector.broadcast %1025 : vector<1x64xf32> to vector<16x64xf32>
    %1169 = arith.addf %1167, %1168 : vector<16x64xf32>
    %1170 = arith.truncf %1169 : vector<16x64xf32> to vector<16x64xbf16>
    %cst_295 = arith.constant dense<0.000000e+00> : vector<16x128xf32>
    %1171 = tpu.matmul %1170, %1026, %cst_295 {dimension_numbers = #tpu.dot_dimension_numbers<[1], [0], [0], [1], [0, 0, 1, 1], [], []>} : vector<16x64xbf16>, vector<64x128xbf16>, vector<16x128xf32> -> vector<16x128xf32>
    %1172 = vector.broadcast %1027 : vector<1x128xf32> to vector<16x128xf32>
    %1173 = arith.addf %1171, %1172 : vector<16x128xf32>
    %cst_296 = arith.constant 0.000000e+00 : f32
    %1174 = vector.broadcast %cst_296 : f32 to vector<16x128xf32>
    %1175 = arith.maximumf %1173, %1174 : vector<16x128xf32>
    %1176 = arith.truncf %1175 : vector<16x128xf32> to vector<16x128xbf16>
    %cst_297 = arith.constant dense<0.000000e+00> : vector<16x64xf32>
    %1177 = tpu.matmul %1176, %1028, %cst_297 {dimension_numbers = #tpu.dot_dimension_numbers<[1], [0], [0], [1], [0, 0, 1, 1], [], []>} : vector<16x128xbf16>, vector<128x64xbf16>, vector<16x64xf32> -> vector<16x64xf32>
    %1178 = vector.broadcast %1029 : vector<1x64xf32> to vector<16x64xf32>
    %1179 = arith.addf %1177, %1178 : vector<16x64xf32>
    %1180 = arith.addf %1169, %1179 : vector<16x64xf32>
    %cst_298 = arith.constant dense<0.000000e+00> : vector<16xf32>
    %1181 = vector.multi_reduction <add>, %1180, %cst_298 [1] : vector<16x64xf32> to vector<16xf32>
    %1182 = vector.shape_cast %1181 : vector<16xf32> to vector<16x1xf32>
    %cst_299 = arith.constant 6.400000e+01 : f32
    %1183 = vector.broadcast %cst_299 : f32 to vector<16x1xf32>
    %1184 = arith.divf %1182, %1183 : vector<16x1xf32>
    %1185 = arith.mulf %1180, %1180 : vector<16x64xf32>
    %cst_300 = arith.constant dense<0.000000e+00> : vector<16xf32>
    %1186 = vector.multi_reduction <add>, %1185, %cst_300 [1] : vector<16x64xf32> to vector<16xf32>
    %1187 = vector.shape_cast %1186 : vector<16xf32> to vector<16x1xf32>
    %cst_301 = arith.constant 6.400000e+01 : f32
    %1188 = vector.broadcast %cst_301 : f32 to vector<16x1xf32>
    %1189 = arith.divf %1187, %1188 : vector<16x1xf32>
    %1190 = arith.mulf %1184, %1184 : vector<16x1xf32>
    %1191 = arith.subf %1189, %1190 : vector<16x1xf32>
    %cst_302 = arith.constant 0.000000e+00 : f32
    %1192 = vector.broadcast %cst_302 : f32 to vector<16x1xf32>
    %1193 = arith.maximumf %1191, %1192 : vector<16x1xf32>
    %1194 = vector.broadcast %1184 : vector<16x1xf32> to vector<16x64xf32>
    %1195 = arith.subf %1180, %1194 : vector<16x64xf32>
    %cst_303 = arith.constant 9.99999974E-6 : f32
    %1196 = vector.broadcast %cst_303 : f32 to vector<16x1xf32>
    %1197 = arith.addf %1193, %1196 : vector<16x1xf32>
    %1198 = math.rsqrt %1197 : vector<16x1xf32>
    %1199 = vector.broadcast %1198 : vector<16x1xf32> to vector<16x64xf32>
    %1200 = arith.mulf %1195, %1199 : vector<16x64xf32>
    %1201 = vector.broadcast %1030 : vector<1x64xf32> to vector<16x64xf32>
    %1202 = arith.mulf %1200, %1201 : vector<16x64xf32>
    %1203 = vector.broadcast %1031 : vector<1x64xf32> to vector<16x64xf32>
    %1204 = arith.addf %1202, %1203 : vector<16x64xf32>
    %1205 = vector.shape_cast %1204 : vector<16x64xf32> to vector<2x8x64xf32>
    %1206 = vector.extract_strided_slice %1205 {offsets = [0, 7, 0], sizes = [2, 1, 64], strides = [1, 1, 1]} : vector<2x8x64xf32> to vector<2x1x64xf32>
    %1207 = vector.shape_cast %1206 : vector<2x1x64xf32> to vector<2x64xf32>
    %c21 = arith.constant 21 : index
    %c0_304 = arith.constant 0 : index
    %1208 = vector.load %arg2[%c21, %c0_304] : memref<32x256xf32, #tpu.memory_space<vmem>>, vector<1x64xf32>
    %c22 = arith.constant 22 : index
    %c0_305 = arith.constant 0 : index
    %1209 = vector.load %arg2[%c22, %c0_305] : memref<32x256xf32, #tpu.memory_space<vmem>>, vector<1x64xf32>
    %cst_306 = arith.constant dense<0.000000e+00> : vector<2xf32>
    %1210 = vector.multi_reduction <add>, %1207, %cst_306 [1] : vector<2x64xf32> to vector<2xf32>
    %1211 = vector.shape_cast %1210 : vector<2xf32> to vector<2x1xf32>
    %cst_307 = arith.constant 6.400000e+01 : f32
    %1212 = vector.broadcast %cst_307 : f32 to vector<2x1xf32>
    %1213 = arith.divf %1211, %1212 : vector<2x1xf32>
    %1214 = arith.mulf %1207, %1207 : vector<2x64xf32>
    %cst_308 = arith.constant dense<0.000000e+00> : vector<2xf32>
    %1215 = vector.multi_reduction <add>, %1214, %cst_308 [1] : vector<2x64xf32> to vector<2xf32>
    %1216 = vector.shape_cast %1215 : vector<2xf32> to vector<2x1xf32>
    %cst_309 = arith.constant 6.400000e+01 : f32
    %1217 = vector.broadcast %cst_309 : f32 to vector<2x1xf32>
    %1218 = arith.divf %1216, %1217 : vector<2x1xf32>
    %1219 = arith.mulf %1213, %1213 : vector<2x1xf32>
    %1220 = arith.subf %1218, %1219 : vector<2x1xf32>
    %cst_310 = arith.constant 0.000000e+00 : f32
    %1221 = vector.broadcast %cst_310 : f32 to vector<2x1xf32>
    %1222 = arith.maximumf %1220, %1221 : vector<2x1xf32>
    %1223 = vector.broadcast %1213 : vector<2x1xf32> to vector<2x64xf32>
    %1224 = arith.subf %1207, %1223 : vector<2x64xf32>
    %cst_311 = arith.constant 9.99999974E-6 : f32
    %1225 = vector.broadcast %cst_311 : f32 to vector<2x1xf32>
    %1226 = arith.addf %1222, %1225 : vector<2x1xf32>
    %1227 = math.rsqrt %1226 : vector<2x1xf32>
    %1228 = vector.broadcast %1227 : vector<2x1xf32> to vector<2x64xf32>
    %1229 = arith.mulf %1224, %1228 : vector<2x64xf32>
    %1230 = vector.broadcast %1208 : vector<1x64xf32> to vector<2x64xf32>
    %1231 = arith.mulf %1229, %1230 : vector<2x64xf32>
    %1232 = vector.broadcast %1209 : vector<1x64xf32> to vector<2x64xf32>
    %1233 = arith.addf %1231, %1232 : vector<2x64xf32>
    %c0_312 = arith.constant 0 : index
    %c0_313 = arith.constant 0 : index
    %1234 = vector.load %arg16[%c0_312, %c0_313] : memref<64x32xbf16, #tpu.memory_space<vmem>>, vector<64x32xbf16>
    %c23 = arith.constant 23 : index
    %c0_314 = arith.constant 0 : index
    %1235 = vector.load %arg2[%c23, %c0_314] : memref<32x256xf32, #tpu.memory_space<vmem>>, vector<1x32xf32>
    %1236 = arith.truncf %1233 : vector<2x64xf32> to vector<2x64xbf16>
    %cst_315 = arith.constant dense<0.000000e+00> : vector<2x32xf32>
    %1237 = tpu.matmul %1236, %1234, %cst_315 {dimension_numbers = #tpu.dot_dimension_numbers<[1], [0], [0], [1], [0, 0, 1, 1], [], []>} : vector<2x64xbf16>, vector<64x32xbf16>, vector<2x32xf32> -> vector<2x32xf32>
    %1238 = vector.broadcast %1235 : vector<1x32xf32> to vector<2x32xf32>
    %1239 = arith.addf %1237, %1238 : vector<2x32xf32>
    %cst_316 = arith.constant 0.000000e+00 : f32
    %1240 = vector.broadcast %cst_316 : f32 to vector<2x32xf32>
    %1241 = arith.maximumf %1239, %1240 : vector<2x32xf32>
    %c24 = arith.constant 24 : index
    %c0_317 = arith.constant 0 : index
    %1242 = vector.load %arg2[%c24, %c0_317] : memref<32x256xf32, #tpu.memory_space<vmem>>, vector<1x32xf32>
    %1243 = vector.broadcast %1242 : vector<1x32xf32> to vector<2x32xf32>
    %1244 = arith.mulf %1241, %1243 : vector<2x32xf32>
    %cst_318 = arith.constant dense<0.000000e+00> : vector<2xf32>
    %1245 = vector.multi_reduction <add>, %1244, %cst_318 [1] : vector<2x32xf32> to vector<2xf32>
    %1246 = vector.shape_cast %1245 : vector<2xf32> to vector<2x1xf32>
    %c25 = arith.constant 25 : index
    %c0_319 = arith.constant 0 : index
    %1247 = vector.load %arg2[%c25, %c0_319] : memref<32x256xf32, #tpu.memory_space<vmem>>, vector<1x1xf32>
    %1248 = vector.broadcast %1247 : vector<1x1xf32> to vector<2x1xf32>
    %1249 = arith.addf %1246, %1248 : vector<2x1xf32>
    %c0_320 = arith.constant 0 : index
    %c0_321 = arith.constant 0 : index
    %1250 = vector.load %arg17[%c0_320, %c0_321] : memref<2x1xf32, #tpu.memory_space<vmem>>, vector<2x1xf32>
    tpu.vector_store %arg17[%c0_320, %c0_321], %1249 {strides = array<i32>} : memref<2x1xf32, #tpu.memory_space<vmem>>, vector<2x1xf32>,
    return
  }
}

</mosaic_0001>

<llo_original>
// kernel: fwd.1
$region0: #{fwd.1}
  #allocation0 [shape = 'u32[]', space=smem, size = 0x4, offset = 0x4, fixed_abs, tag = 'smem constant byte address 0x4 - core index']
  #allocation1 [shape = 'u32[144,128]{1,0:T(1,128)}', space=vmem, size = 0x12000, scoped, tag = 'internal scratch']
  #allocation2 [shape = 'f32[2,8,64]{2,1,0:T(8,128)}', space=vmem, size = 0x2000, scoped, tag = 'scratch operand']
  #allocation3 [shape = 'f32[16,64]{1,0:T(8,128)}', space=vmem, size = 0x2000, scoped, tag = 'scratch operand']
  %s0 = inlined_call_operand.vmem [shape: f32[16,16], index: 0, kind: input, shape index: {}]
  %s1 = inlined_call_operand.vmem [shape: f32[8,32], index: 1, kind: input, shape index: {}]
  %s2 = inlined_call_operand.vmem [shape: f32[32,256], index: 2, kind: input, shape index: {}]
  %s3 = inlined_call_operand.hbm [shape: bf16[16,32], index: 3, kind: input, shape index: {}]
  %s4 = inlined_call_operand.hbm [shape: bf16[32,256], index: 4, kind: input, shape index: {}]
  %s5 = inlined_call_operand.vmem [shape: bf16[64,256], index: 5, kind: input, shape index: {}]
  %s6 = inlined_call_operand.vmem [shape: bf16[64,256], index: 6, kind: input, shape index: {}]
  %s7 = inlined_call_operand.vmem [shape: bf16[64,256], index: 7, kind: input, shape index: {}]
  %s8 = inlined_call_operand.vmem [shape: bf16[64,192], index: 8, kind: input, shape index: {}]
  %s9 = inlined_call_operand.hbm [shape: bf16[64,64], index: 9, kind: input, shape index: {}]
  %s10 = inlined_call_operand.hbm [shape: bf16[64,128], index: 10, kind: input, shape index: {}]
  %s11 = inlined_call_operand.vmem [shape: bf16[128,64], index: 11, kind: input, shape index: {}]
  %s12 = inlined_call_operand.vmem [shape: bf16[64,192], index: 12, kind: input, shape index: {}]
  %s13 = inlined_call_operand.hbm [shape: bf16[64,64], index: 13, kind: input, shape index: {}]
  %s14 = inlined_call_operand.hbm [shape: bf16[64,128], index: 14, kind: input, shape index: {}]
  %s15 = inlined_call_operand.vmem [shape: bf16[128,64], index: 15, kind: input, shape index: {}]
  %s16 = inlined_call_operand.vmem [shape: bf16[64,32], index: 16, kind: input, shape index: {}]
  %s17 = inlined_call_operand.vmem [shape: f32[2,1], index: 17, kind: output, shape index: {}]
  %s18 = sld [smem:[#allocation0]]
  $region102: #{fwd.1} parent=0
    _
  %s20 = ssub.s32 1, %s18
  %s21 = scalar_select 0, %s20, %s18
  $region1: #{fwd.1} parent=0
    #allocation4 [shape = 'u8[4096]{0}', space=vmem, size = 0x1000, scoped, tag = 'input window, operand 3, single buffered']
    #allocation5 [shape = 's32[1]{0}', space=sflag, size = 0x4, scoped, tag = 'scoped memory for fwd.1']
    #allocation6 [shape = 'u8[16384]{0}', space=vmem, size = 0x4000, scoped, tag = 'input window, operand 4, single buffered']
    #allocation7 [shape = 's32[1]{0}', space=sflag, size = 0x4, scoped, tag = 'scoped memory for fwd.1']
    #allocation8 [shape = 'u8[16384]{0}', space=vmem, size = 0x4000, scoped, tag = 'input window, operand 9, single buffered']
    #allocation9 [shape = 'u8[16384]{0}', space=vmem, size = 0x4000, scoped, tag = 'input window, operand 10, single buffered']
    #allocation10 [shape = 's32[1]{0}', space=sflag, size = 0x4, scoped, tag = 'scoped memory for fwd.1']
    #allocation11 [shape = 'u8[16384]{0}', space=vmem, size = 0x4000, scoped, tag = 'input window, operand 13, single buffered']
    #allocation12 [shape = 'u8[16384]{0}', space=vmem, size = 0x4000, scoped, tag = 'input window, operand 14, single buffered']
    #allocation13 [shape = 's32[1]{0}', space=sflag, size = 0x4, scoped, tag = 'scoped memory for fwd.1']
    %22 = vsyncpa [#allocation5], 0
    %23 = vsyncpa [#allocation7], 0
    %24 = vsyncpa [#allocation10], 0
    %25 = vsyncpa [#allocation13], 0
    // Predicated region
    $region2: #{fwd.1} parent=1 // pred_check
      _
    $region3: #{fwd.1} parent=1 // pred_check_branch
      %27 = sbr.rel (0) target = $region5
    $region4: #{fwd.1} parent=1 // pred_region
      _
    $region5: #{fwd.1} parent=1 // pred_fallthru
      _
    // Predicated region
    $region6: #{fwd.1} parent=1 // pred_check
      _
    $region7: #{fwd.1} parent=1 // pred_check_branch
      %29 = sbr.rel (0) target = $region9
    $region8: #{fwd.1} parent=1 // pred_region
      _
    $region9: #{fwd.1} parent=1 // pred_fallthru
      _
    // Predicated region
    $region10: #{fwd.1} parent=1 // pred_check
      _
    $region11: #{fwd.1} parent=1 // pred_check_branch
      %31 = sbr.rel (0) target = $region13
    $region12: #{fwd.1} parent=1 // pred_region
      _
    $region13: #{fwd.1} parent=1 // pred_fallthru
      _
    // Predicated region
    $region14: #{fwd.1} parent=1 // pred_check
      _
    $region15: #{fwd.1} parent=1 // pred_check_branch
      %33 = sbr.rel (0) target = $region17
    $region16: #{fwd.1} parent=1 // pred_region
      %s35 = ssub.s32 128, 128
      %36 = vsyncadd [#allocation5], %s35
      %s37 = sshll.u32 [#allocation4], 4
      %s38 = int_to_ptr.vmem [resolvable:$true] %s37
      %43 = dma.hbm_to_vmem [thread:$0]  %s3, 128, %s38, [#allocation5], 64, 64, 4
    $region17: #{fwd.1} parent=1 // pred_fallthru
      _
    // Predicated region
    $region18: #{fwd.1} parent=1 // pred_check
      _
    $region19: #{fwd.1} parent=1 // pred_check_branch
      %45 = sbr.rel (0) target = $region21
    $region20: #{fwd.1} parent=1 // pred_region
      %s47 = ssub.s32 512, 512
      %48 = vsyncadd [#allocation7], %s47
      %s49 = sshll.u32 [#allocation6], 4
      %s50 = int_to_ptr.vmem [resolvable:$true] %s49
      %55 = dma.hbm_to_vmem [thread:$0]  %s4, 512, %s50, [#allocation7], 128, 128, 8
    $region21: #{fwd.1} parent=1 // pred_fallthru
      _
    // Predicated region
    $region22: #{fwd.1} parent=1 // pred_check
      _
    $region23: #{fwd.1} parent=1 // pred_check_branch
      %57 = sbr.rel (0) target = $region25
    $region24: #{fwd.1} parent=1 // pred_region
      _
    $region25: #{fwd.1} parent=1 // pred_fallthru
      _
    // Predicated region
    $region26: #{fwd.1} parent=1 // pred_check
      _
    $region27: #{fwd.1} parent=1 // pred_check_branch
      %59 = sbr.rel (0) target = $region29
    $region28: #{fwd.1} parent=1 // pred_region
      _
    $region29: #{fwd.1} parent=1 // pred_fallthru
      _
    // Predicated region
    $region30: #{fwd.1} parent=1 // pred_check
      _
    $region31: #{fwd.1} parent=1 // pred_check_branch
      %61 = sbr.rel (0) target = $region33
    $region32: #{fwd.1} parent=1 // pred_region
      _
    $region33: #{fwd.1} parent=1 // pred_fallthru
      _
    // Predicated region
    $region34: #{fwd.1} parent=1 // pred_check
      _
    $region35: #{fwd.1} parent=1 // pred_check_branch
      %63 = sbr.rel (0) target = $region37
    $region36: #{fwd.1} parent=1 // pred_region
      _
    $region37: #{fwd.1} parent=1 // pred_fallthru
      _
    // Predicated region
    $region38: #{fwd.1} parent=1 // pred_check
      _
    $region39: #{fwd.1} parent=1 // pred_check_branch
      %65 = sbr.rel (0) target = $region41
    $region40: #{fwd.1} parent=1 // pred_region
      %s67 = ssub.s32 512, 512
      %68 = vsyncadd [#allocation7], %s67
      %s69 = sshll.u32 [#allocation8], 4
      %s70 = int_to_ptr.vmem [resolvable:$true] %s69
      %75 = dma.hbm_to_vmem [thread:$0]  %s9, 512, %s70, [#allocation7], 64, 64, 4
    $region41: #{fwd.1} parent=1 // pred_fallthru
      _
    // Predicated region
    $region42: #{fwd.1} parent=1 // pred_check
      _
    $region43: #{fwd.1} parent=1 // pred_check_branch
      %77 = sbr.rel (0) target = $region45
    $region44: #{fwd.1} parent=1 // pred_region
      %s79 = ssub.s32 512, 512
      %80 = vsyncadd [#allocation10], %s79
      %s81 = sshll.u32 [#allocation9], 4
      %s82 = int_to_ptr.vmem [resolvable:$true] %s81
      %87 = dma.hbm_to_vmem [thread:$0]  %s10, 512, %s82, [#allocation10], 64, 64, 4
    $region45: #{fwd.1} parent=1 // pred_fallthru
      _
    // Predicated region
    $region46: #{fwd.1} parent=1 // pred_check
      _
    $region47: #{fwd.1} parent=1 // pred_check_branch
      %89 = sbr.rel (0) target = $region49
    $region48: #{fwd.1} parent=1 // pred_region
      _
    $region49: #{fwd.1} parent=1 // pred_fallthru
      _
    // Predicated region
    $region50: #{fwd.1} parent=1 // pred_check
      _
    $region51: #{fwd.1} parent=1 // pred_check_branch
      %91 = sbr.rel (0) target = $region53
    $region52: #{fwd.1} parent=1 // pred_region
      _
    $region53: #{fwd.1} parent=1 // pred_fallthru
      _
    // Predicated region
    $region54: #{fwd.1} parent=1 // pred_check
      _
    $region55: #{fwd.1} parent=1 // pred_check_branch
      %93 = sbr.rel (0) target = $region57
    $region56: #{fwd.1} parent=1 // pred_region
      %s95 = ssub.s32 512, 512
      %96 = vsyncadd [#allocation10], %s95
      %s97 = sshll.u32 [#allocation11], 4
      %s98 = int_to_ptr.vmem [resolvable:$true] %s97
      %103 = dma.hbm_to_vmem [thread:$0]  %s13, 512, %s98, [#allocation10], 64, 64, 4
    $region57: #{fwd.1} parent=1 // pred_fallthru
      _
    // Predicated region
    $region58: #{fwd.1} parent=1 // pred_check
      _
    $region59: #{fwd.1} parent=1 // pred_check_branch
      %105 = sbr.rel (0) target = $region61
    $region60: #{fwd.1} parent=1 // pred_region
      %s107 = ssub.s32 512, 512
      %108 = vsyncadd [#allocation13], %s107
      %s109 = sshll.u32 [#allocation12], 4
      %s110 = int_to_ptr.vmem [resolvable:$true] %s109
      %115 = dma.hbm_to_vmem [thread:$0]  %s14, 512, %s110, [#allocation13], 64, 64, 4
    $region61: #{fwd.1} parent=1 // pred_fallthru
      _
    // Predicated region
    $region62: #{fwd.1} parent=1 // pred_check
      _
    $region63: #{fwd.1} parent=1 // pred_check_branch
      %117 = sbr.rel (0) target = $region65
    $region64: #{fwd.1} parent=1 // pred_region
      _
    $region65: #{fwd.1} parent=1 // pred_fallthru
      _
    // Predicated region
    $region66: #{fwd.1} parent=1 // pred_check
      _
    $region67: #{fwd.1} parent=1 // pred_check_branch
      %119 = sbr.rel (0) target = $region69
    $region68: #{fwd.1} parent=1 // pred_region
      _
    $region69: #{fwd.1} parent=1 // pred_fallthru
      _
    // Predicated region
    $region70: #{fwd.1} parent=1 // pred_check
      _
    $region71: #{fwd.1} parent=1 // pred_check_branch
      %121 = sbr.rel (0) target = $region73
    $region72: #{fwd.1} parent=1 // pred_region
      %122 = dma.done [#allocation5], 128
    $region73: #{fwd.1} parent=1 // pred_fallthru
      _
    // Predicated region
    $region74: #{fwd.1} parent=1 // pred_check
      _
    $region75: #{fwd.1} parent=1 // pred_check_branch
      %124 = sbr.rel (0) target = $region77
    $region76: #{fwd.1} parent=1 // pred_region
      %125 = dma.done [#allocation7], 512
    $region77: #{fwd.1} parent=1 // pred_fallthru
      _
    // Predicated region
    $region78: #{fwd.1} parent=1 // pred_check
      _
    $region79: #{fwd.1} parent=1 // pred_check_branch
      %127 = sbr.rel (0) target = $region81
    $region80: #{fwd.1} parent=1 // pred_region
      %128 = dma.done [#allocation7], 512
    $region81: #{fwd.1} parent=1 // pred_fallthru
      _
    // Predicated region
    $region82: #{fwd.1} parent=1 // pred_check
      _
    $region83: #{fwd.1} parent=1 // pred_check_branch
      %130 = sbr.rel (0) target = $region85
    $region84: #{fwd.1} parent=1 // pred_region
      %131 = dma.done [#allocation10], 512
    $region85: #{fwd.1} parent=1 // pred_fallthru
      _
    // Predicated region
    $region86: #{fwd.1} parent=1 // pred_check
      _
    $region87: #{fwd.1} parent=1 // pred_check_branch
      %133 = sbr.rel (0) target = $region89
    $region88: #{fwd.1} parent=1 // pred_region
      %134 = dma.done [#allocation10], 512
    $region89: #{fwd.1} parent=1 // pred_fallthru
      _
    // Predicated region
    $region90: #{fwd.1} parent=1 // pred_check
      _
    $region91: #{fwd.1} parent=1 // pred_check_branch
      %136 = sbr.rel (0) target = $region93
    $region92: #{fwd.1} parent=1 // pred_region
      %137 = dma.done [#allocation13], 512
    $region93: #{fwd.1} parent=1 // pred_fallthru
      _
    %v139 = vld [vmem:[%s0] sm:$0xff]
    %v140 = vld [vmem:[%s0 + $0x8] sm:$0xff]
    %v141 = vld [vmem:[#allocation4] sm:$0xf]
    %v142 = vld [vmem:[#allocation4 + $0x4] sm:$0xf]
    %v143 = vld [vmem:[%s2] ss:$0 sm:$0xff]
    %v144 = vpack.c.bf16 %v140, %v139
    %v147 = vunpack.c.l.b16 %v141
    %v148 = vunpack.c.l.b16 %v142
    %v149 = vpack.c.b16 %v148, %v147
    %vm151 = vcmask 130048
    %v153 = vsel %vm151, %v144, 0
    %155 = vmatprep.subr.bf16.mxu0 0
    %156 = vmatpush1.bf16.msra.mxu0 %v149
    %157 = vmatprep.subr.bf16.mxu0 0
    %158 = vmatpush1.bf16.msra.mxu0 0
    %159 = vmatprep.subr.bf16.mxu0 0
    %160 = vmatpush1.bf16.msra.mxu0 0
    %161 = vmatprep.subr.bf16.mxu0 0
    %162 = vmatpush1.bf16.msra.mxu0 0
    %163 = vmatprep.subr.bf16.mxu0 0
    %164 = vmatpush1.bf16.msra.mxu0 0
    %165 = vmatprep.subr.bf16.mxu0 0
    %166 = vmatpush1.bf16.msra.mxu0 0
    %167 = vmatprep.subr.bf16.mxu0 0
    %168 = vmatpush1.bf16.msra.mxu0 0
    %169 = vmatprep.subr.bf16.mxu0 0
    %170 = vmatpush1.bf16.msra.mxu0 0
    %171 = vmatprep.subr.bf16.mxu0 0
    %172 = vmatpush1.bf16.msra.mxu0 0
    %173 = vmatprep.subr.bf16.mxu0 0
    %174 = vmatpush1.bf16.msra.mxu0 0
    %175 = vmatprep.subr.bf16.mxu0 0
    %176 = vmatpush1.bf16.msra.mxu0 0
    %177 = vmatprep.subr.bf16.mxu0 0
    %178 = vmatpush1.bf16.msra.mxu0 0
    %179 = vmatprep.subr.bf16.mxu0 0
    %180 = vmatpush1.bf16.msra.mxu0 0
    %181 = vmatprep.subr.bf16.mxu0 0
    %182 = vmatpush1.bf16.msra.mxu0 0
    %183 = vmatprep.subr.bf16.mxu0 0
    %184 = vmatpush1.bf16.msra.mxu0 0
    %185 = vmatprep.subr.bf16.mxu0 0
    %186 = vmatpush1.bf16.msra.mxu0 0
    %187 = vmatprep.mubr.bf16.mxu0 0
    %188 = vmatmul.mubr.bf16.gmra.mrb[0].mxu0 %v153
    %v189 = vpop.f32.mrb[0].mxu0
    %v190 = vadd.f32 %v143, %v189
    %v191 = vpop.f32.mrb[0].mxu0
    %v192 = vpop.f32.mrb[0].mxu0
    %v193 = vadd.f32 %v143, %v192
    %v194 = vpop.f32.mrb[0].mxu0
    %195 = vdwg.mxu0
    %v196 = vld [vmem:[%s2 + $0x1] ss:$0 sm:$0xff]
    %v197 = vld [vmem:[%s2 + $0x2] ss:$0 sm:$0xff]
    %vm198 = vcmask 261120
    %v199 = vsel %vm198, %v190, 0.0
    %200 = vadd.xlane.f32.xlu0 %v199
    %v201 = vpop.xlane.xlu0 %200
    %v202 = vsel %vm198, %v193, 0.0
    %203 = vadd.xlane.f32.xlu0 %v202
    %v204 = vpop.xlane.xlu0 %203
    %v205 = vrcp.pop 32.0
    %v206 = vmul.f32 %v201, %v205
    %v207 = vmul.f32 %v204, %v205
    %v208 = vmul.f32 %v190, %v190
    %v209 = vmul.f32 %v193, %v193
    %v210 = vsel %vm198, %v208, 0.0
    %211 = vadd.xlane.f32.xlu0 %v210
    %v212 = vpop.xlane.xlu0 %211
    %v213 = vsel %vm198, %v209, 0.0
    %214 = vadd.xlane.f32.xlu0 %v213
    %v215 = vpop.xlane.xlu0 %214
    %v216 = vmul.f32 %v212, %v205
    %v217 = vmul.f32 %v215, %v205
    %v218 = vmul.f32 %v206, %v206
    %v219 = vmul.f32 %v207, %v207
    %v220 = vsub.f32 %v216, %v218
    %v221 = vsub.f32 %v217, %v219
    %v222 = vmax.f32 %v220, 0.0
    %v223 = vmax.f32 %v221, 0.0
    %v224 = vsub.f32 %v190, %v206
    %v225 = vsub.f32 %v193, %v207
    %v226 = vadd.f32 %v222, 1e-05
    %v227 = vadd.f32 %v223, 1e-05
    %v228 = vrsqrt.pop %v226
    %v229 = vrsqrt.pop %v227
    %v230 = vmul.f32 %v224, %v228
    %v231 = vmul.f32 %v225, %v229
    %v232 = vmul.f32 %v230, %v196
    %v233 = vmul.f32 %v231, %v196
    %v234 = vadd.f32 %v232, %v197
    %v235 = vadd.f32 %v233, %v197
    %v236 = vmax.f32 %v234, 0.0
    %v237 = vmax.f32 %v235, 0.0
    %v238 = vld [vmem:[%s1] sm:$0xff]
    %v239 = vadd.f32 %v236, %v238
    %v240 = vadd.f32 %v237, %v238
    %v241 = vld [vmem:[#allocation6] sm:$0xff]
    %v242 = vld [vmem:[#allocation6 + $0x8] sm:$0xff]
    %v243 = vld [vmem:[#allocation6 + $0x10] sm:$0xff]
    %v244 = vld [vmem:[#allocation6 + $0x18] sm:$0xff]
    %v245 = vld [vmem:[%s5] sm:$0xff]
    %v246 = vld [vmem:[%s5 + $0x8] sm:$0xff]
    %v247 = vld [vmem:[%s5 + $0x10] sm:$0xff]
    %v248 = vld [vmem:[%s5 + $0x18] sm:$0xff]
    %v249 = vld [vmem:[%s5 + $0x20] sm:$0xff]
    %v250 = vld [vmem:[%s5 + $0x28] sm:$0xff]
    %v251 = vld [vmem:[%s5 + $0x30] sm:$0xff]
    %v252 = vld [vmem:[%s5 + $0x38] sm:$0xff]
    %s253 = scalar_lea.vmem %s2, 3
    %v254 = vld [vmem:[%s253] ss:$8 sm:$0x3]
    %v255 = vpack.c.bf16 %v240, %v239
    %v257 = vlaneseq
    %v258 = vshrl.u32 %v257, 7
    %v259 = vsub.s32 0, %v258
    %v260 = vrot.slane %v254, %v259
    %v261 = vlaneseq
    %v262 = vshrl.u32 %v261, 7
    %v263 = vsub.s32 1, %v262
    %v264 = vrot.slane %v254, %v263
    %v271 = vunpack.c.l.b16 %v241
    %v272 = vunpack.c.h.b16 %v241
    %v273 = vunpack.c.l.b16 %v242
    %v274 = vunpack.c.h.b16 %v242
    %v275 = vunpack.c.l.b16 %v243
    %v276 = vunpack.c.h.b16 %v243
    %v277 = vunpack.c.l.b16 %v244
    %v278 = vunpack.c.h.b16 %v244
    %v279 = vpack.c.b16 %v273, %v271
    %v280 = vpack.c.b16 %v274, %v272
    %v281 = vpack.c.b16 %v277, %v275
    %v282 = vpack.c.b16 %v278, %v276
    %v288 = vsel %vm198, %v255, 0
    %290 = vmatprep.subr.bf16.mxu0 %v280
    %291 = vmatpush1.bf16.msra.mxu0 %v279
    %292 = vmatprep.subr.bf16.mxu0 %v282
    %293 = vmatpush1.bf16.msra.mxu0 %v281
    %294 = vmatprep.subr.bf16.mxu0 0
    %295 = vmatpush1.bf16.msra.mxu0 0
    %296 = vmatprep.subr.bf16.mxu0 0
    %297 = vmatpush1.bf16.msra.mxu0 0
    %298 = vmatprep.subr.bf16.mxu0 0
    %299 = vmatpush1.bf16.msra.mxu0 0
    %300 = vmatprep.subr.bf16.mxu0 0
    %301 = vmatpush1.bf16.msra.mxu0 0
    %302 = vmatprep.subr.bf16.mxu0 0
    %303 = vmatpush1.bf16.msra.mxu0 0
    %304 = vmatprep.subr.bf16.mxu0 0
    %305 = vmatpush1.bf16.msra.mxu0 0
    %306 = vmatprep.subr.bf16.mxu0 0
    %307 = vmatpush1.bf16.msra.mxu0 0
    %308 = vmatprep.subr.bf16.mxu0 0
    %309 = vmatpush1.bf16.msra.mxu0 0
    %310 = vmatprep.subr.bf16.mxu0 0
    %311 = vmatpush1.bf16.msra.mxu0 0
    %312 = vmatprep.subr.bf16.mxu0 0
    %313 = vmatpush1.bf16.msra.mxu0 0
    %314 = vmatprep.subr.bf16.mxu0 0
    %315 = vmatpush1.bf16.msra.mxu0 0
    %316 = vmatprep.subr.bf16.mxu0 0
    %317 = vmatpush1.bf16.msra.mxu0 0
    %318 = vmatprep.subr.bf16.mxu0 0
    %319 = vmatpush1.bf16.msra.mxu0 0
    %320 = vmatprep.subr.bf16.mxu0 0
    %321 = vmatpush1.bf16.msra.mxu0 0
    %322 = vmatprep.mubr.bf16.mxu0 0
    %323 = vmatmul.mubr.bf16.gmra.mrb[0].mxu0 %v288
    %v324 = vpop.f32.mrb[0].mxu0
    %v325 = vadd.f32 %v260, %v324
    %v326 = vpop.f32.mrb[0].mxu0
    %v327 = vadd.f32 %v264, %v326
    %v328 = vpop.f32.mrb[0].mxu0
    %v329 = vadd.f32 %v260, %v328
    %v330 = vpop.f32.mrb[0].mxu0
    %v331 = vadd.f32 %v264, %v330
    %332 = vdwg.mxu0
    %v333 = vxor.u32 %v325, 2147483648
    %v334 = vxor.u32 %v329, 2147483648
    %v335 = vmul.f32 %v333, 1.442695
    %v336 = vpow.pop %v335
    %v337 = vmul.f32 %v334, 1.442695
    %v338 = vpow.pop %v337
    %v339 = vadd.f32 %v336, 1.0
    %v340 = vadd.f32 %v338, 1.0
    %v341 = vrcp.pop %v339
    %v342 = vmul.f32 1.0, %v341
    %v343 = vrcp.pop %v340
    %v344 = vmul.f32 1.0, %v343
    %v345 = vxor.u32 %v327, 2147483648
    %v346 = vxor.u32 %v331, 2147483648
    %v347 = vmul.f32 %v345, 1.442695
    %v348 = vpow.pop %v347
    %v349 = vmul.f32 %v346, 1.442695
    %v350 = vpow.pop %v349
    %v351 = vadd.f32 %v348, 1.0
    %v352 = vadd.f32 %v350, 1.0
    %v353 = vrcp.pop %v351
    %v354 = vmul.f32 1.0, %v353
    %v355 = vrcp.pop %v352
    %v356 = vmul.f32 1.0, %v355
    %v357 = vtanh.pop %v325
    %v358 = vtanh.pop %v329
    %v359 = vtanh.pop %v327
    %v360 = vtanh.pop %v331
    %v361 = vmul.f32 %v342, 0.0
    %v362 = vmul.f32 %v344, 0.0
    %365 = vrot.lane.b32.xlu0 %v357, 32
    %v366 = vpop.permute.xlu0 %365
    %367 = vrot.lane.b32.xlu0 %v358, 32
    %v368 = vpop.permute.xlu0 %367
    %v371 = vmul.f32 %v342, %v366
    %v372 = vmul.f32 %v344, %v368
    %375 = vrot.lane.b32.xlu0 %v371, 32
    %v376 = vpop.permute.xlu0 %375
    %377 = vrot.lane.b32.xlu0 %v372, 32
    %v378 = vpop.permute.xlu0 %377
    %v381 = vadd.f32 %v361, %v376
    %v382 = vadd.f32 %v362, %v378
    %v383 = vmul.f32 %v354, 0.0
    %v384 = vmul.f32 %v356, 0.0
    %387 = vrot.lane.b32.xlu0 %v359, 32
    %v388 = vpop.permute.xlu0 %387
    %389 = vrot.lane.b32.xlu0 %v360, 32
    %v390 = vpop.permute.xlu0 %389
    %v393 = vmul.f32 %v354, %v388
    %v394 = vmul.f32 %v356, %v390
    %397 = vrot.lane.b32.xlu0 %v393, 32
    %v398 = vpop.permute.xlu0 %397
    %399 = vrot.lane.b32.xlu0 %v394, 32
    %v400 = vpop.permute.xlu0 %399
    %v403 = vadd.f32 %v383, %v398
    %v404 = vadd.f32 %v384, %v400
    %v405 = vtanh.pop %v381
    %v406 = vtanh.pop %v382
    %409 = vrot.lane.b32.xlu0 %v405, 32
    %v410 = vpop.permute.xlu0 %409
    %411 = vrot.lane.b32.xlu0 %v406, 32
    %v412 = vpop.permute.xlu0 %411
    %v415 = vmul.f32 %v342, %v410
    %v416 = vmul.f32 %v344, %v412
    %v417 = vtanh.pop %v403
    %v418 = vtanh.pop %v404
    %421 = vrot.lane.b32.xlu0 %v417, 32
    %v422 = vpop.permute.xlu0 %421
    %423 = vrot.lane.b32.xlu0 %v418, 32
    %v424 = vpop.permute.xlu0 %423
    %v427 = vmul.f32 %v354, %v422
    %v428 = vmul.f32 %v356, %v424
    %431 = vrot.lane.b32.xlu0 %v415, 64
    %v432 = vpop.permute.xlu0 %431
    %433 = vrot.lane.b32.xlu0 %v416, 64
    %v434 = vpop.permute.xlu0 %433
    %vm437 = vcmask 253952
    %438 = vst.msk [vmem:[#allocation2] sm:$0x1] %vm437, %v432
    %439 = vst.msk [vmem:[#allocation2 + $0x8] sm:$0x1] %vm437, %v434
    %442 = vrot.lane.b32.xlu0 %v427, 96
    %v443 = vpop.permute.xlu0 %442
    %444 = vrot.lane.b32.xlu0 %v428, 96
    %v445 = vpop.permute.xlu0 %444
    %vm448 = vcmask 523527
    %449 = vst.msk [vmem:[#allocation2] sm:$0x80] %vm448, %v443
    %450 = vst.msk [vmem:[#allocation2 + $0x8] sm:$0x80] %vm448, %v445
    %v451 = vrot.slane %v416, 7
    %vm452 = vcmask 1041409
    %v453 = vsel %vm452, %v451, %v415
    %454 = vrot.lane.b32.xlu0 %v453, 64
    %v455 = vpop.permute.xlu0 %454
    %v457 = vrot.slane %v427, 7
    %v458 = vrot.slane %v428, 6
    %v459 = vsel %vm452, %v458, %v457
    %460 = vrot.lane.b32.xlu0 %v459, 96
    %v461 = vpop.permute.xlu0 %460
    %v463 = vsel %vm198, %v455, %v461
    %v464 = vpack.c.bf16 %v463, %v463
    %v473 = vunpack.c.l.b16 %v245
    %v474 = vunpack.c.h.b16 %v245
    %v475 = vunpack.c.l.b16 %v246
    %v476 = vunpack.c.h.b16 %v246
    %v477 = vunpack.c.l.b16 %v247
    %v478 = vunpack.c.h.b16 %v247
    %v479 = vunpack.c.l.b16 %v248
    %v480 = vunpack.c.h.b16 %v248
    %v481 = vunpack.c.l.b16 %v249
    %v482 = vunpack.c.h.b16 %v249
    %v483 = vunpack.c.l.b16 %v250
    %v484 = vunpack.c.h.b16 %v250
    %v485 = vunpack.c.l.b16 %v251
    %v486 = vunpack.c.h.b16 %v251
    %v487 = vunpack.c.l.b16 %v252
    %v488 = vunpack.c.h.b16 %v252
    %v489 = vpack.c.b16 %v475, %v473
    %v490 = vpack.c.b16 %v476, %v474
    %v491 = vpack.c.b16 %v479, %v477
    %v492 = vpack.c.b16 %v480, %v478
    %v493 = vpack.c.b16 %v483, %v481
    %v494 = vpack.c.b16 %v484, %v482
    %v495 = vpack.c.b16 %v487, %v485
    %v496 = vpack.c.b16 %v488, %v486
    %vm505 = vcmask 523264
    %v507 = vsel %vm505, %v464, 0
    %509 = vmatprep.subr.bf16.mxu0 %v490
    %510 = vmatpush1.bf16.msra.mxu0 %v489
    %511 = vmatprep.subr.bf16.mxu0 %v492
    %512 = vmatpush1.bf16.msra.mxu0 %v491
    %513 = vmatprep.subr.bf16.mxu0 %v494
    %514 = vmatpush1.bf16.msra.mxu0 %v493
    %515 = vmatprep.subr.bf16.mxu0 %v496
    %516 = vmatpush1.bf16.msra.mxu0 %v495
    %517 = vmatprep.subr.bf16.mxu0 0
    %518 = vmatpush1.bf16.msra.mxu0 0
    %519 = vmatprep.subr.bf16.mxu0 0
    %520 = vmatpush1.bf16.msra.mxu0 0
    %521 = vmatprep.subr.bf16.mxu0 0
    %522 = vmatpush1.bf16.msra.mxu0 0
    %523 = vmatprep.subr.bf16.mxu0 0
    %524 = vmatpush1.bf16.msra.mxu0 0
    %525 = vmatprep.subr.bf16.mxu0 0
    %526 = vmatpush1.bf16.msra.mxu0 0
    %527 = vmatprep.subr.bf16.mxu0 0
    %528 = vmatpush1.bf16.msra.mxu0 0
    %529 = vmatprep.subr.bf16.mxu0 0
    %530 = vmatpush1.bf16.msra.mxu0 0
    %531 = vmatprep.subr.bf16.mxu0 0
    %532 = vmatpush1.bf16.msra.mxu0 0
    %533 = vmatprep.subr.bf16.mxu0 0
    %534 = vmatpush1.bf16.msra.mxu0 0
    %535 = vmatprep.subr.bf16.mxu0 0
    %536 = vmatpush1.bf16.msra.mxu0 0
    %537 = vmatprep.subr.bf16.mxu0 0
    %538 = vmatpush1.bf16.msra.mxu0 0
    %539 = vmatprep.subr.bf16.mxu0 0
    %540 = vmatpush1.bf16.msra.mxu0 0
    %541 = vmatprep.mubr.bf16.mxu0 0
    %542 = vmatmul.mubr.bf16.gmra.mrb[0].mxu0 %v507
    %v543 = vpop.f32.mrb[0].mxu0
    %v544 = vadd.f32 0.0, %v543
    %v545 = vpop.f32.mrb[0].mxu0
    %v546 = vadd.f32 0.0, %v545
    %v547 = vpop.f32.mrb[0].mxu0
    %v548 = vpop.f32.mrb[0].mxu0
    %549 = vdwg.mxu0
    %v551 = vrot.slane %v544, 7
    %v554 = vadd.f32 %v325, %v551
    %v555 = vadd.f32 %v329, %v544
    %v557 = vrot.slane %v546, 2
    %v558 = vrot.slane %v546, 3
    %v561 = vadd.f32 %v327, %v557
    %v562 = vadd.f32 %v331, %v558
    %v563 = vxor.u32 %v554, 2147483648
    %v564 = vxor.u32 %v555, 2147483648
    %v565 = vmul.f32 %v563, 1.442695
    %v566 = vpow.pop %v565
    %v567 = vmul.f32 %v564, 1.442695
    %v568 = vpow.pop %v567
    %v569 = vadd.f32 %v566, 1.0
    %v570 = vadd.f32 %v568, 1.0
    %v571 = vrcp.pop %v569
    %v572 = vmul.f32 1.0, %v571
    %v573 = vrcp.pop %v570
    %v574 = vmul.f32 1.0, %v573
    %v575 = vxor.u32 %v561, 2147483648
    %v576 = vxor.u32 %v562, 2147483648
    %v577 = vmul.f32 %v575, 1.442695
    %v578 = vpow.pop %v577
    %v579 = vmul.f32 %v576, 1.442695
    %v580 = vpow.pop %v579
    %v581 = vadd.f32 %v578, 1.0
    %v582 = vadd.f32 %v580, 1.0
    %v583 = vrcp.pop %v581
    %v584 = vmul.f32 1.0, %v583
    %v585 = vrcp.pop %v582
    %v586 = vmul.f32 1.0, %v585
    %v587 = vtanh.pop %v554
    %v588 = vtanh.pop %v555
    %v589 = vtanh.pop %v561
    %v590 = vtanh.pop %v562
    %v593 = vrot.slane %v381, 7
    %v594 = vrot.slane %v382, 7
    %v597 = vmul.f32 %v572, %v593
    %v598 = vmul.f32 %v574, %v594
    %601 = vrot.lane.b32.xlu0 %v587, 32
    %v602 = vpop.permute.xlu0 %601
    %603 = vrot.lane.b32.xlu0 %v588, 32
    %v604 = vpop.permute.xlu0 %603
    %v607 = vmul.f32 %v572, %v602
    %v608 = vmul.f32 %v574, %v604
    %611 = vrot.lane.b32.xlu0 %v607, 32
    %v612 = vpop.permute.xlu0 %611
    %613 = vrot.lane.b32.xlu0 %v608, 32
    %v614 = vpop.permute.xlu0 %613
    %v617 = vadd.f32 %v597, %v612
    %v618 = vadd.f32 %v598, %v614
    %v621 = vrot.slane %v403, 1
    %v622 = vrot.slane %v404, 1
    %v625 = vmul.f32 %v584, %v621
    %v626 = vmul.f32 %v586, %v622
    %629 = vrot.lane.b32.xlu0 %v589, 32
    %v630 = vpop.permute.xlu0 %629
    %631 = vrot.lane.b32.xlu0 %v590, 32
    %v632 = vpop.permute.xlu0 %631
    %v635 = vmul.f32 %v584, %v630
    %v636 = vmul.f32 %v586, %v632
    %639 = vrot.lane.b32.xlu0 %v635, 32
    %v640 = vpop.permute.xlu0 %639
    %641 = vrot.lane.b32.xlu0 %v636, 32
    %v642 = vpop.permute.xlu0 %641
    %v645 = vadd.f32 %v625, %v640
    %v646 = vadd.f32 %v626, %v642
    %v647 = vtanh.pop %v617
    %v648 = vtanh.pop %v618
    %651 = vrot.lane.b32.xlu0 %v647, 32
    %v652 = vpop.permute.xlu0 %651
    %653 = vrot.lane.b32.xlu0 %v648, 32
    %v654 = vpop.permute.xlu0 %653
    %v657 = vmul.f32 %v572, %v652
    %v658 = vmul.f32 %v574, %v654
    %v659 = vtanh.pop %v645
    %v660 = vtanh.pop %v646
    %663 = vrot.lane.b32.xlu0 %v659, 32
    %v664 = vpop.permute.xlu0 %663
    %665 = vrot.lane.b32.xlu0 %v660, 32
    %v666 = vpop.permute.xlu0 %665
    %v669 = vmul.f32 %v584, %v664
    %v670 = vmul.f32 %v586, %v666
    %673 = vrot.lane.b32.xlu0 %v657, 64
    %v674 = vpop.permute.xlu0 %673
    %675 = vrot.lane.b32.xlu0 %v658, 64
    %v676 = vpop.permute.xlu0 %675
    %vm679 = vcmask 254977
    %680 = vst.msk [vmem:[#allocation2] sm:$0x2] %vm679, %v674
    %681 = vst.msk [vmem:[#allocation2 + $0x8] sm:$0x2] %vm679, %v676
    %684 = vrot.lane.b32.xlu0 %v669, 96
    %v685 = vpop.permute.xlu0 %684
    %686 = vrot.lane.b32.xlu0 %v670, 96
    %v687 = vpop.permute.xlu0 %686
    %vm690 = vcmask 522502
    %691 = vst.msk [vmem:[#allocation2] sm:$0x40] %vm690, %v685
    %692 = vst.msk [vmem:[#allocation2 + $0x8] sm:$0x40] %vm690, %v687
    %v693 = vrot.slane %v658, 7
    %vm694 = vcmask 1042434
    %v695 = vsel %vm694, %v693, %v657
    %696 = vrot.lane.b32.xlu0 %v695, 64
    %v697 = vpop.permute.xlu0 %696
    %v699 = vrot.slane %v669, 5
    %v700 = vrot.slane %v670, 4
    %v701 = vsel %vm694, %v700, %v699
    %702 = vrot.lane.b32.xlu0 %v701, 96
    %v703 = vpop.permute.xlu0 %702
    %v705 = vsel %vm198, %v697, %v703
    %v706 = vpack.c.bf16 %v705, %v705
    %v708 = vshrl.u32 %v706, 16
    %v710 = vshll.u32 %v706, 16
    %v712 = vrot.slane %v710, 1
    %v713 = vor.u32 %v708, %v712
    %v715 = vsel %vm505, %v713, 0
    %717 = vmatprep.subr.bf16.mxu0 %v490
    %718 = vmatpush1.bf16.msra.mxu0 %v489
    %719 = vmatprep.subr.bf16.mxu0 %v492
    %720 = vmatpush1.bf16.msra.mxu0 %v491
    %721 = vmatprep.subr.bf16.mxu0 %v494
    %722 = vmatpush1.bf16.msra.mxu0 %v493
    %723 = vmatprep.subr.bf16.mxu0 %v496
    %724 = vmatpush1.bf16.msra.mxu0 %v495
    %725 = vmatprep.subr.bf16.mxu0 0
    %726 = vmatpush1.bf16.msra.mxu0 0
    %727 = vmatprep.subr.bf16.mxu0 0
    %728 = vmatpush1.bf16.msra.mxu0 0
    %729 = vmatprep.subr.bf16.mxu0 0
    %730 = vmatpush1.bf16.msra.mxu0 0
    %731 = vmatprep.subr.bf16.mxu0 0
    %732 = vmatpush1.bf16.msra.mxu0 0
    %733 = vmatprep.subr.bf16.mxu0 0
    %734 = vmatpush1.bf16.msra.mxu0 0
    %735 = vmatprep.subr.bf16.mxu0 0
    %736 = vmatpush1.bf16.msra.mxu0 0
    %737 = vmatprep.subr.bf16.mxu0 0
    %738 = vmatpush1.bf16.msra.mxu0 0
    %739 = vmatprep.subr.bf16.mxu0 0
    %740 = vmatpush1.bf16.msra.mxu0 0
    %741 = vmatprep.subr.bf16.mxu0 0
    %742 = vmatpush1.bf16.msra.mxu0 0
    %743 = vmatprep.subr.bf16.mxu0 0
    %744 = vmatpush1.bf16.msra.mxu0 0
    %745 = vmatprep.subr.bf16.mxu0 0
    %746 = vmatpush1.bf16.msra.mxu0 0
    %747 = vmatprep.subr.bf16.mxu0 0
    %748 = vmatpush1.bf16.msra.mxu0 0
    %749 = vmatprep.mubr.bf16.mxu0 0
    %750 = vmatmul.mubr.bf16.gmra.mrb[0].mxu0 %v715
    %v751 = vpop.f32.mrb[0].mxu0
    %v752 = vadd.f32 0.0, %v751
    %v753 = vpop.f32.mrb[0].mxu0
    %v754 = vadd.f32 0.0, %v753
    %v755 = vpop.f32.mrb[0].mxu0
    %v756 = vpop.f32.mrb[0].mxu0
    %757 = vdwg.mxu0
    %v759 = vrot.slane %v752, 6
    %v760 = vrot.slane %v752, 7
    %v763 = vadd.f32 %v325, %v759
    %v764 = vadd.f32 %v329, %v760
    %v766 = vrot.slane %v754, 3
    %v767 = vrot.slane %v754, 4
    %v770 = vadd.f32 %v327, %v766
    %v771 = vadd.f32 %v331, %v767
    %v772 = vxor.u32 %v763, 2147483648
    %v773 = vxor.u32 %v764, 2147483648
    %v774 = vmul.f32 %v772, 1.442695
    %v775 = vpow.pop %v774
    %v776 = vmul.f32 %v773, 1.442695
    %v777 = vpow.pop %v776
    %v778 = vadd.f32 %v775, 1.0
    %v779 = vadd.f32 %v777, 1.0
    %v780 = vrcp.pop %v778
    %v781 = vmul.f32 1.0, %v780
    %v782 = vrcp.pop %v779
    %v783 = vmul.f32 1.0, %v782
    %v784 = vxor.u32 %v770, 2147483648
    %v785 = vxor.u32 %v771, 2147483648
    %v786 = vmul.f32 %v784, 1.442695
    %v787 = vpow.pop %v786
    %v788 = vmul.f32 %v785, 1.442695
    %v789 = vpow.pop %v788
    %v790 = vadd.f32 %v787, 1.0
    %v791 = vadd.f32 %v789, 1.0
    %v792 = vrcp.pop %v790
    %v793 = vmul.f32 1.0, %v792
    %v794 = vrcp.pop %v791
    %v795 = vmul.f32 1.0, %v794
    %v796 = vtanh.pop %v763
    %v797 = vtanh.pop %v764
    %v798 = vtanh.pop %v770
    %v799 = vtanh.pop %v771
    %v802 = vrot.slane %v617, 7
    %v803 = vrot.slane %v618, 7
    %v806 = vmul.f32 %v781, %v802
    %v807 = vmul.f32 %v783, %v803
    %810 = vrot.lane.b32.xlu0 %v796, 32
    %v811 = vpop.permute.xlu0 %810
    %812 = vrot.lane.b32.xlu0 %v797, 32
    %v813 = vpop.permute.xlu0 %812
    %v816 = vmul.f32 %v781, %v811
    %v817 = vmul.f32 %v783, %v813
    %820 = vrot.lane.b32.xlu0 %v816, 32
    %v821 = vpop.permute.xlu0 %820
    %822 = vrot.lane.b32.xlu0 %v817, 32
    %v823 = vpop.permute.xlu0 %822
    %v826 = vadd.f32 %v806, %v821
    %v827 = vadd.f32 %v807, %v823
    %v830 = vrot.slane %v645, 1
    %v831 = vrot.slane %v646, 1
    %v834 = vmul.f32 %v793, %v830
    %v835 = vmul.f32 %v795, %v831
    %838 = vrot.lane.b32.xlu0 %v798, 32
    %v839 = vpop.permute.xlu0 %838
    %840 = vrot.lane.b32.xlu0 %v799, 32
    %v841 = vpop.permute.xlu0 %840
    %v844 = vmul.f32 %v793, %v839
    %v845 = vmul.f32 %v795, %v841
    %848 = vrot.lane.b32.xlu0 %v844, 32
    %v849 = vpop.permute.xlu0 %848
    %850 = vrot.lane.b32.xlu0 %v845, 32
    %v851 = vpop.permute.xlu0 %850
    %v854 = vadd.f32 %v834, %v849
    %v855 = vadd.f32 %v835, %v851
    %v856 = vtanh.pop %v826
    %v857 = vtanh.pop %v827
    %860 = vrot.lane.b32.xlu0 %v856, 32
    %v861 = vpop.permute.xlu0 %860
    %862 = vrot.lane.b32.xlu0 %v857, 32
    %v863 = vpop.permute.xlu0 %862
    %v866 = vmul.f32 %v781, %v861
    %v867 = vmul.f32 %v783, %v863
    %v868 = vtanh.pop %v854
    %v869 = vtanh.pop %v855
    %872 = vrot.lane.b32.xlu0 %v868, 32
    %v873 = vpop.permute.xlu0 %872
    %874 = vrot.lane.b32.xlu0 %v869, 32
    %v875 = vpop.permute.xlu0 %874
    %v878 = vmul.f32 %v793, %v873
    %v879 = vmul.f32 %v795, %v875
    %882 = vrot.lane.b32.xlu0 %v866, 64
    %v883 = vpop.permute.xlu0 %882
    %884 = vrot.lane.b32.xlu0 %v867, 64
    %v885 = vpop.permute.xlu0 %884
    %vm888 = vcmask 256002
    %889 = vst.msk [vmem:[#allocation2] sm:$0x4] %vm888, %v883
    %890 = vst.msk [vmem:[#allocation2 + $0x8] sm:$0x4] %vm888, %v885
    %893 = vrot.lane.b32.xlu0 %v878, 96
    %v894 = vpop.permute.xlu0 %893
    %895 = vrot.lane.b32.xlu0 %v879, 96
    %v896 = vpop.permute.xlu0 %895
    %vm899 = vcmask 521477
    %900 = vst.msk [vmem:[#allocation2] sm:$0x20] %vm899, %v894
    %901 = vst.msk [vmem:[#allocation2 + $0x8] sm:$0x20] %vm899, %v896
    %v902 = vrot.slane %v867, 7
    %vm903 = vcmask 1043459
    %v904 = vsel %vm903, %v902, %v866
    %905 = vrot.lane.b32.xlu0 %v904, 64
    %v906 = vpop.permute.xlu0 %905
    %v908 = vrot.slane %v878, 3
    %v909 = vrot.slane %v879, 2
    %v910 = vsel %vm903, %v909, %v908
    %911 = vrot.lane.b32.xlu0 %v910, 96
    %v912 = vpop.permute.xlu0 %911
    %v914 = vsel %vm198, %v906, %v912
    %v915 = vpack.c.bf16 %v914, %v914
    %v917 = vrot.slane %v915, 1
    %v919 = vsel %vm505, %v917, 0
    %921 = vmatprep.subr.bf16.mxu0 %v490
    %922 = vmatpush1.bf16.msra.mxu0 %v489
    %923 = vmatprep.subr.bf16.mxu0 %v492
    %924 = vmatpush1.bf16.msra.mxu0 %v491
    %925 = vmatprep.subr.bf16.mxu0 %v494
    %926 = vmatpush1.bf16.msra.mxu0 %v493
    %927 = vmatprep.subr.bf16.mxu0 %v496
    %928 = vmatpush1.bf16.msra.mxu0 %v495
    %929 = vmatprep.subr.bf16.mxu0 0
    %930 = vmatpush1.bf16.msra.mxu0 0
    %931 = vmatprep.subr.bf16.mxu0 0
    %932 = vmatpush1.bf16.msra.mxu0 0
    %933 = vmatprep.subr.bf16.mxu0 0
    %934 = vmatpush1.bf16.msra.mxu0 0
    %935 = vmatprep.subr.bf16.mxu0 0
    %936 = vmatpush1.bf16.msra.mxu0 0
    %937 = vmatprep.subr.bf16.mxu0 0
    %938 = vmatpush1.bf16.msra.mxu0 0
    %939 = vmatprep.subr.bf16.mxu0 0
    %940 = vmatpush1.bf16.msra.mxu0 0
    %941 = vmatprep.subr.bf16.mxu0 0
    %942 = vmatpush1.bf16.msra.mxu0 0
    %943 = vmatprep.subr.bf16.mxu0 0
    %944 = vmatpush1.bf16.msra.mxu0 0
    %945 = vmatprep.subr.bf16.mxu0 0
    %946 = vmatpush1.bf16.msra.mxu0 0
    %947 = vmatprep.subr.bf16.mxu0 0
    %948 = vmatpush1.bf16.msra.mxu0 0
    %949 = vmatprep.subr.bf16.mxu0 0
    %950 = vmatpush1.bf16.msra.mxu0 0
    %951 = vmatprep.subr.bf16.mxu0 0
    %952 = vmatpush1.bf16.msra.mxu0 0
    %953 = vmatprep.mubr.bf16.mxu0 0
    %954 = vmatmul.mubr.bf16.gmra.mrb[0].mxu0 %v919
    %v955 = vpop.f32.mrb[0].mxu0
    %v956 = vadd.f32 0.0, %v955
    %v957 = vpop.f32.mrb[0].mxu0
    %v958 = vadd.f32 0.0, %v957
    %v959 = vpop.f32.mrb[0].mxu0
    %v960 = vpop.f32.mrb[0].mxu0
    %961 = vdwg.mxu0
    %v963 = vrot.slane %v956, 5
    %v964 = vrot.slane %v956, 6
    %v967 = vadd.f32 %v325, %v963
    %v968 = vadd.f32 %v329, %v964
    %v970 = vrot.slane %v958, 4
    %v971 = vrot.slane %v958, 5
    %v974 = vadd.f32 %v327, %v970
    %v975 = vadd.f32 %v331, %v971
    %v976 = vxor.u32 %v967, 2147483648
    %v977 = vxor.u32 %v968, 2147483648
    %v978 = vmul.f32 %v976, 1.442695
    %v979 = vpow.pop %v978
    %v980 = vmul.f32 %v977, 1.442695
    %v981 = vpow.pop %v980
    %v982 = vadd.f32 %v979, 1.0
    %v983 = vadd.f32 %v981, 1.0
    %v984 = vrcp.pop %v982
    %v985 = vmul.f32 1.0, %v984
    %v986 = vrcp.pop %v983
    %v987 = vmul.f32 1.0, %v986
    %v988 = vxor.u32 %v974, 2147483648
    %v989 = vxor.u32 %v975, 2147483648
    %v990 = vmul.f32 %v988, 1.442695
    %v991 = vpow.pop %v990
    %v992 = vmul.f32 %v989, 1.442695
    %v993 = vpow.pop %v992
    %v994 = vadd.f32 %v991, 1.0
    %v995 = vadd.f32 %v993, 1.0
    %v996 = vrcp.pop %v994
    %v997 = vmul.f32 1.0, %v996
    %v998 = vrcp.pop %v995
    %v999 = vmul.f32 1.0, %v998
    %v1000 = vtanh.pop %v967
    %v1001 = vtanh.pop %v968
    %v1002 = vtanh.pop %v974
    %v1003 = vtanh.pop %v975
    %v1006 = vrot.slane %v826, 7
    %v1007 = vrot.slane %v827, 7
    %v1010 = vmul.f32 %v985, %v1006
    %v1011 = vmul.f32 %v987, %v1007
    %1014 = vrot.lane.b32.xlu0 %v1000, 32
    %v1015 = vpop.permute.xlu0 %1014
    %1016 = vrot.lane.b32.xlu0 %v1001, 32
    %v1017 = vpop.permute.xlu0 %1016
    %v1020 = vmul.f32 %v985, %v1015
    %v1021 = vmul.f32 %v987, %v1017
    %1024 = vrot.lane.b32.xlu0 %v1020, 32
    %v1025 = vpop.permute.xlu0 %1024
    %1026 = vrot.lane.b32.xlu0 %v1021, 32
    %v1027 = vpop.permute.xlu0 %1026
    %v1030 = vadd.f32 %v1010, %v1025
    %v1031 = vadd.f32 %v1011, %v1027
    %v1034 = vrot.slane %v854, 1
    %v1035 = vrot.slane %v855, 1
    %v1038 = vmul.f32 %v997, %v1034
    %v1039 = vmul.f32 %v999, %v1035
    %1042 = vrot.lane.b32.xlu0 %v1002, 32
    %v1043 = vpop.permute.xlu0 %1042
    %1044 = vrot.lane.b32.xlu0 %v1003, 32
    %v1045 = vpop.permute.xlu0 %1044
    %v1048 = vmul.f32 %v997, %v1043
    %v1049 = vmul.f32 %v999, %v1045
    %1052 = vrot.lane.b32.xlu0 %v1048, 32
    %v1053 = vpop.permute.xlu0 %1052
    %1054 = vrot.lane.b32.xlu0 %v1049, 32
    %v1055 = vpop.permute.xlu0 %1054
    %v1058 = vadd.f32 %v1038, %v1053
    %v1059 = vadd.f32 %v1039, %v1055
    %v1060 = vtanh.pop %v1030
    %v1061 = vtanh.pop %v1031
    %1064 = vrot.lane.b32.xlu0 %v1060, 32
    %v1065 = vpop.permute.xlu0 %1064
    %1066 = vrot.lane.b32.xlu0 %v1061, 32
    %v1067 = vpop.permute.xlu0 %1066
    %v1070 = vmul.f32 %v985, %v1065
    %v1071 = vmul.f32 %v987, %v1067
    %v1072 = vtanh.pop %v1058
    %v1073 = vtanh.pop %v1059
    %1076 = vrot.lane.b32.xlu0 %v1072, 32
    %v1077 = vpop.permute.xlu0 %1076
    %1078 = vrot.lane.b32.xlu0 %v1073, 32
    %v1079 = vpop.permute.xlu0 %1078
    %v1082 = vmul.f32 %v997, %v1077
    %v1083 = vmul.f32 %v999, %v1079
    %1086 = vrot.lane.b32.xlu0 %v1070, 64
    %v1087 = vpop.permute.xlu0 %1086
    %1088 = vrot.lane.b32.xlu0 %v1071, 64
    %v1089 = vpop.permute.xlu0 %1088
    %vm1092 = vcmask 257027
    %1093 = vst.msk [vmem:[#allocation2] sm:$0x8] %vm1092, %v1087
    %1094 = vst.msk [vmem:[#allocation2 + $0x8] sm:$0x8] %vm1092, %v1089
    %1097 = vrot.lane.b32.xlu0 %v1082, 96
    %v1098 = vpop.permute.xlu0 %1097
    %1099 = vrot.lane.b32.xlu0 %v1083, 96
    %v1100 = vpop.permute.xlu0 %1099
    %vm1103 = vcmask 520452
    %1104 = vst.msk [vmem:[#allocation2] sm:$0x10] %vm1103, %v1098
    %1105 = vst.msk [vmem:[#allocation2 + $0x8] sm:$0x10] %vm1103, %v1100
    %v1106 = vrot.slane %v1071, 7
    %vm1107 = vcmask 1044484
    %v1108 = vsel %vm1107, %v1106, %v1070
    %1109 = vrot.lane.b32.xlu0 %v1108, 64
    %v1110 = vpop.permute.xlu0 %1109
    %v1112 = vrot.slane %v1082, 1
    %v1113 = vsel %vm1107, %v1083, %v1112
    %1114 = vrot.lane.b32.xlu0 %v1113, 96
    %v1115 = vpop.permute.xlu0 %1114
    %v1117 = vsel %vm198, %v1110, %v1115
    %v1118 = vpack.c.bf16 %v1117, %v1117
    %v1120 = vshrl.u32 %v1118, 16
    %v1122 = vrot.slane %v1120, 1
    %v1123 = vshll.u32 %v1118, 16
    %v1125 = vrot.slane %v1123, 2
    %v1126 = vor.u32 %v1122, %v1125
    %v1128 = vsel %vm505, %v1126, 0
    %1130 = vmatprep.subr.bf16.mxu0 %v490
    %1131 = vmatpush1.bf16.msra.mxu0 %v489
    %1132 = vmatprep.subr.bf16.mxu0 %v492
    %1133 = vmatpush1.bf16.msra.mxu0 %v491
    %1134 = vmatprep.subr.bf16.mxu0 %v494
    %1135 = vmatpush1.bf16.msra.mxu0 %v493
    %1136 = vmatprep.subr.bf16.mxu0 %v496
    %1137 = vmatpush1.bf16.msra.mxu0 %v495
    %1138 = vmatprep.subr.bf16.mxu0 0
    %1139 = vmatpush1.bf16.msra.mxu0 0
    %1140 = vmatprep.subr.bf16.mxu0 0
    %1141 = vmatpush1.bf16.msra.mxu0 0
    %1142 = vmatprep.subr.bf16.mxu0 0
    %1143 = vmatpush1.bf16.msra.mxu0 0
    %1144 = vmatprep.subr.bf16.mxu0 0
    %1145 = vmatpush1.bf16.msra.mxu0 0
    %1146 = vmatprep.subr.bf16.mxu0 0
    %1147 = vmatpush1.bf16.msra.mxu0 0
    %1148 = vmatprep.subr.bf16.mxu0 0
    %1149 = vmatpush1.bf16.msra.mxu0 0
    %1150 = vmatprep.subr.bf16.mxu0 0
    %1151 = vmatpush1.bf16.msra.mxu0 0
    %1152 = vmatprep.subr.bf16.mxu0 0
    %1153 = vmatpush1.bf16.msra.mxu0 0
    %1154 = vmatprep.subr.bf16.mxu0 0
    %1155 = vmatpush1.bf16.msra.mxu0 0
    %1156 = vmatprep.subr.bf16.mxu0 0
    %1157 = vmatpush1.bf16.msra.mxu0 0
    %1158 = vmatprep.subr.bf16.mxu0 0
    %1159 = vmatpush1.bf16.msra.mxu0 0
    %1160 = vmatprep.subr.bf16.mxu0 0
    %1161 = vmatpush1.bf16.msra.mxu0 0
    %1162 = vmatprep.mubr.bf16.mxu0 0
    %1163 = vmatmul.mubr.bf16.gmra.mrb[0].mxu0 %v1128
    %v1164 = vpop.f32.mrb[0].mxu0
    %v1165 = vadd.f32 0.0, %v1164
    %v1166 = vpop.f32.mrb[0].mxu0
    %v1167 = vadd.f32 0.0, %v1166
    %v1168 = vpop.f32.mrb[0].mxu0
    %v1169 = vpop.f32.mrb[0].mxu0
    %1170 = vdwg.mxu0
    %v1172 = vrot.slane %v1165, 4
    %v1173 = vrot.slane %v1165, 5
    %v1176 = vadd.f32 %v325, %v1172
    %v1177 = vadd.f32 %v329, %v1173
    %v1179 = vrot.slane %v1167, 5
    %v1180 = vrot.slane %v1167, 6
    %v1183 = vadd.f32 %v327, %v1179
    %v1184 = vadd.f32 %v331, %v1180
    %v1185 = vxor.u32 %v1176, 2147483648
    %v1186 = vxor.u32 %v1177, 2147483648
    %v1187 = vmul.f32 %v1185, 1.442695
    %v1188 = vpow.pop %v1187
    %v1189 = vmul.f32 %v1186, 1.442695
    %v1190 = vpow.pop %v1189
    %v1191 = vadd.f32 %v1188, 1.0
    %v1192 = vadd.f32 %v1190, 1.0
    %v1193 = vrcp.pop %v1191
    %v1194 = vmul.f32 1.0, %v1193
    %v1195 = vrcp.pop %v1192
    %v1196 = vmul.f32 1.0, %v1195
    %v1197 = vxor.u32 %v1183, 2147483648
    %v1198 = vxor.u32 %v1184, 2147483648
    %v1199 = vmul.f32 %v1197, 1.442695
    %v1200 = vpow.pop %v1199
    %v1201 = vmul.f32 %v1198, 1.442695
    %v1202 = vpow.pop %v1201
    %v1203 = vadd.f32 %v1200, 1.0
    %v1204 = vadd.f32 %v1202, 1.0
    %v1205 = vrcp.pop %v1203
    %v1206 = vmul.f32 1.0, %v1205
    %v1207 = vrcp.pop %v1204
    %v1208 = vmul.f32 1.0, %v1207
    %v1209 = vtanh.pop %v1176
    %v1210 = vtanh.pop %v1177
    %v1211 = vtanh.pop %v1183
    %v1212 = vtanh.pop %v1184
    %v1215 = vrot.slane %v1030, 7
    %v1216 = vrot.slane %v1031, 7
    %v1219 = vmul.f32 %v1194, %v1215
    %v1220 = vmul.f32 %v1196, %v1216
    %1223 = vrot.lane.b32.xlu0 %v1209, 32
    %v1224 = vpop.permute.xlu0 %1223
    %1225 = vrot.lane.b32.xlu0 %v1210, 32
    %v1226 = vpop.permute.xlu0 %1225
    %v1229 = vmul.f32 %v1194, %v1224
    %v1230 = vmul.f32 %v1196, %v1226
    %1233 = vrot.lane.b32.xlu0 %v1229, 32
    %v1234 = vpop.permute.xlu0 %1233
    %1235 = vrot.lane.b32.xlu0 %v1230, 32
    %v1236 = vpop.permute.xlu0 %1235
    %v1239 = vadd.f32 %v1219, %v1234
    %v1240 = vadd.f32 %v1220, %v1236
    %v1243 = vrot.slane %v1058, 1
    %v1244 = vrot.slane %v1059, 1
    %v1247 = vmul.f32 %v1206, %v1243
    %v1248 = vmul.f32 %v1208, %v1244
    %1251 = vrot.lane.b32.xlu0 %v1211, 32
    %v1252 = vpop.permute.xlu0 %1251
    %1253 = vrot.lane.b32.xlu0 %v1212, 32
    %v1254 = vpop.permute.xlu0 %1253
    %v1257 = vmul.f32 %v1206, %v1252
    %v1258 = vmul.f32 %v1208, %v1254
    %1261 = vrot.lane.b32.xlu0 %v1257, 32
    %v1262 = vpop.permute.xlu0 %1261
    %1263 = vrot.lane.b32.xlu0 %v1258, 32
    %v1264 = vpop.permute.xlu0 %1263
    %v1267 = vadd.f32 %v1247, %v1262
    %v1268 = vadd.f32 %v1248, %v1264
    %v1269 = vtanh.pop %v1239
    %v1270 = vtanh.pop %v1240
    %1273 = vrot.lane.b32.xlu0 %v1269, 32
    %v1274 = vpop.permute.xlu0 %1273
    %1275 = vrot.lane.b32.xlu0 %v1270, 32
    %v1276 = vpop.permute.xlu0 %1275
    %v1279 = vmul.f32 %v1194, %v1274
    %v1280 = vmul.f32 %v1196, %v1276
    %v1281 = vtanh.pop %v1267
    %v1282 = vtanh.pop %v1268
    %1285 = vrot.lane.b32.xlu0 %v1281, 32
    %v1286 = vpop.permute.xlu0 %1285
    %1287 = vrot.lane.b32.xlu0 %v1282, 32
    %v1288 = vpop.permute.xlu0 %1287
    %v1291 = vmul.f32 %v1206, %v1286
    %v1292 = vmul.f32 %v1208, %v1288
    %1295 = vrot.lane.b32.xlu0 %v1279, 64
    %v1296 = vpop.permute.xlu0 %1295
    %1297 = vrot.lane.b32.xlu0 %v1280, 64
    %v1298 = vpop.permute.xlu0 %1297
    %vm1301 = vcmask 258052
    %1302 = vst.msk [vmem:[#allocation2] sm:$0x10] %vm1301, %v1296
    %1303 = vst.msk [vmem:[#allocation2 + $0x8] sm:$0x10] %vm1301, %v1298
    %1306 = vrot.lane.b32.xlu0 %v1291, 96
    %v1307 = vpop.permute.xlu0 %1306
    %1308 = vrot.lane.b32.xlu0 %v1292, 96
    %v1309 = vpop.permute.xlu0 %1308
    %vm1312 = vcmask 519427
    %1313 = vst.msk [vmem:[#allocation2] sm:$0x8] %vm1312, %v1307
    %1314 = vst.msk [vmem:[#allocation2 + $0x8] sm:$0x8] %vm1312, %v1309
    %v1315 = vrot.slane %v1280, 7
    %vm1316 = vcmask 1045509
    %v1317 = vsel %vm1316, %v1315, %v1279
    %1318 = vrot.lane.b32.xlu0 %v1317, 64
    %v1319 = vpop.permute.xlu0 %1318
    %v1321 = vrot.slane %v1291, 7
    %v1322 = vrot.slane %v1292, 6
    %v1323 = vsel %vm1316, %v1322, %v1321
    %1324 = vrot.lane.b32.xlu0 %v1323, 96
    %v1325 = vpop.permute.xlu0 %1324
    %v1327 = vsel %vm198, %v1319, %v1325
    %v1328 = vpack.c.bf16 %v1327, %v1327
    %v1330 = vrot.slane %v1328, 2
    %v1332 = vsel %vm505, %v1330, 0
    %1334 = vmatprep.subr.bf16.mxu0 %v490
    %1335 = vmatpush1.bf16.msra.mxu0 %v489
    %1336 = vmatprep.subr.bf16.mxu0 %v492
    %1337 = vmatpush1.bf16.msra.mxu0 %v491
    %1338 = vmatprep.subr.bf16.mxu0 %v494
    %1339 = vmatpush1.bf16.msra.mxu0 %v493
    %1340 = vmatprep.subr.bf16.mxu0 %v496
    %1341 = vmatpush1.bf16.msra.mxu0 %v495
    %1342 = vmatprep.subr.bf16.mxu0 0
    %1343 = vmatpush1.bf16.msra.mxu0 0
    %1344 = vmatprep.subr.bf16.mxu0 0
    %1345 = vmatpush1.bf16.msra.mxu0 0
    %1346 = vmatprep.subr.bf16.mxu0 0
    %1347 = vmatpush1.bf16.msra.mxu0 0
    %1348 = vmatprep.subr.bf16.mxu0 0
    %1349 = vmatpush1.bf16.msra.mxu0 0
    %1350 = vmatprep.subr.bf16.mxu0 0
    %1351 = vmatpush1.bf16.msra.mxu0 0
    %1352 = vmatprep.subr.bf16.mxu0 0
    %1353 = vmatpush1.bf16.msra.mxu0 0
    %1354 = vmatprep.subr.bf16.mxu0 0
    %1355 = vmatpush1.bf16.msra.mxu0 0
    %1356 = vmatprep.subr.bf16.mxu0 0
    %1357 = vmatpush1.bf16.msra.mxu0 0
    %1358 = vmatprep.subr.bf16.mxu0 0
    %1359 = vmatpush1.bf16.msra.mxu0 0
    %1360 = vmatprep.subr.bf16.mxu0 0
    %1361 = vmatpush1.bf16.msra.mxu0 0
    %1362 = vmatprep.subr.bf16.mxu0 0
    %1363 = vmatpush1.bf16.msra.mxu0 0
    %1364 = vmatprep.subr.bf16.mxu0 0
    %1365 = vmatpush1.bf16.msra.mxu0 0
    %1366 = vmatprep.mubr.bf16.mxu0 0
    %1367 = vmatmul.mubr.bf16.gmra.mrb[0].mxu0 %v1332
    %v1368 = vpop.f32.mrb[0].mxu0
    %v1369 = vadd.f32 0.0, %v1368
    %v1370 = vpop.f32.mrb[0].mxu0
    %v1371 = vadd.f32 0.0, %v1370
    %v1372 = vpop.f32.mrb[0].mxu0
    %v1373 = vpop.f32.mrb[0].mxu0
    %1374 = vdwg.mxu0
    %v1376 = vrot.slane %v1369, 3
    %v1377 = vrot.slane %v1369, 4
    %v1380 = vadd.f32 %v325, %v1376
    %v1381 = vadd.f32 %v329, %v1377
    %v1383 = vrot.slane %v1371, 6
    %v1384 = vrot.slane %v1371, 7
    %v1387 = vadd.f32 %v327, %v1383
    %v1388 = vadd.f32 %v331, %v1384
    %v1389 = vxor.u32 %v1380, 2147483648
    %v1390 = vxor.u32 %v1381, 2147483648
    %v1391 = vmul.f32 %v1389, 1.442695
    %v1392 = vpow.pop %v1391
    %v1393 = vmul.f32 %v1390, 1.442695
    %v1394 = vpow.pop %v1393
    %v1395 = vadd.f32 %v1392, 1.0
    %v1396 = vadd.f32 %v1394, 1.0
    %v1397 = vrcp.pop %v1395
    %v1398 = vmul.f32 1.0, %v1397
    %v1399 = vrcp.pop %v1396
    %v1400 = vmul.f32 1.0, %v1399
    %v1401 = vxor.u32 %v1387, 2147483648
    %v1402 = vxor.u32 %v1388, 2147483648
    %v1403 = vmul.f32 %v1401, 1.442695
    %v1404 = vpow.pop %v1403
    %v1405 = vmul.f32 %v1402, 1.442695
    %v1406 = vpow.pop %v1405
    %v1407 = vadd.f32 %v1404, 1.0
    %v1408 = vadd.f32 %v1406, 1.0
    %v1409 = vrcp.pop %v1407
    %v1410 = vmul.f32 1.0, %v1409
    %v1411 = vrcp.pop %v1408
    %v1412 = vmul.f32 1.0, %v1411
    %v1413 = vtanh.pop %v1380
    %v1414 = vtanh.pop %v1381
    %v1415 = vtanh.pop %v1387
    %v1416 = vtanh.pop %v1388
    %v1419 = vrot.slane %v1239, 7
    %v1420 = vrot.slane %v1240, 7
    %v1423 = vmul.f32 %v1398, %v1419
    %v1424 = vmul.f32 %v1400, %v1420
    %1427 = vrot.lane.b32.xlu0 %v1413, 32
    %v1428 = vpop.permute.xlu0 %1427
    %1429 = vrot.lane.b32.xlu0 %v1414, 32
    %v1430 = vpop.permute.xlu0 %1429
    %v1433 = vmul.f32 %v1398, %v1428
    %v1434 = vmul.f32 %v1400, %v1430
    %1437 = vrot.lane.b32.xlu0 %v1433, 32
    %v1438 = vpop.permute.xlu0 %1437
    %1439 = vrot.lane.b32.xlu0 %v1434, 32
    %v1440 = vpop.permute.xlu0 %1439
    %v1443 = vadd.f32 %v1423, %v1438
    %v1444 = vadd.f32 %v1424, %v1440
    %v1447 = vrot.slane %v1267, 1
    %v1448 = vrot.slane %v1268, 1
    %v1451 = vmul.f32 %v1410, %v1447
    %v1452 = vmul.f32 %v1412, %v1448
    %1455 = vrot.lane.b32.xlu0 %v1415, 32
    %v1456 = vpop.permute.xlu0 %1455
    %1457 = vrot.lane.b32.xlu0 %v1416, 32
    %v1458 = vpop.permute.xlu0 %1457
    %v1461 = vmul.f32 %v1410, %v1456
    %v1462 = vmul.f32 %v1412, %v1458
    %1465 = vrot.lane.b32.xlu0 %v1461, 32
    %v1466 = vpop.permute.xlu0 %1465
    %1467 = vrot.lane.b32.xlu0 %v1462, 32
    %v1468 = vpop.permute.xlu0 %1467
    %v1471 = vadd.f32 %v1451, %v1466
    %v1472 = vadd.f32 %v1452, %v1468
    %v1473 = vtanh.pop %v1443
    %v1474 = vtanh.pop %v1444
    %1477 = vrot.lane.b32.xlu0 %v1473, 32
    %v1478 = vpop.permute.xlu0 %1477
    %1479 = vrot.lane.b32.xlu0 %v1474, 32
    %v1480 = vpop.permute.xlu0 %1479
    %v1483 = vmul.f32 %v1398, %v1478
    %v1484 = vmul.f32 %v1400, %v1480
    %v1485 = vtanh.pop %v1471
    %v1486 = vtanh.pop %v1472
    %1489 = vrot.lane.b32.xlu0 %v1485, 32
    %v1490 = vpop.permute.xlu0 %1489
    %1491 = vrot.lane.b32.xlu0 %v1486, 32
    %v1492 = vpop.permute.xlu0 %1491
    %v1495 = vmul.f32 %v1410, %v1490
    %v1496 = vmul.f32 %v1412, %v1492
    %1499 = vrot.lane.b32.xlu0 %v1483, 64
    %v1500 = vpop.permute.xlu0 %1499
    %1501 = vrot.lane.b32.xlu0 %v1484, 64
    %v1502 = vpop.permute.xlu0 %1501
    %vm1505 = vcmask 259077
    %1506 = vst.msk [vmem:[#allocation2] sm:$0x20] %vm1505, %v1500
    %1507 = vst.msk [vmem:[#allocation2 + $0x8] sm:$0x20] %vm1505, %v1502
    %1510 = vrot.lane.b32.xlu0 %v1495, 96
    %v1511 = vpop.permute.xlu0 %1510
    %1512 = vrot.lane.b32.xlu0 %v1496, 96
    %v1513 = vpop.permute.xlu0 %1512
    %vm1516 = vcmask 518402
    %1517 = vst.msk [vmem:[#allocation2] sm:$0x4] %vm1516, %v1511
    %1518 = vst.msk [vmem:[#allocation2 + $0x8] sm:$0x4] %vm1516, %v1513
    %v1519 = vrot.slane %v1484, 7
    %vm1520 = vcmask 1046534
    %v1521 = vsel %vm1520, %v1519, %v1483
    %1522 = vrot.lane.b32.xlu0 %v1521, 64
    %v1523 = vpop.permute.xlu0 %1522
    %v1525 = vrot.slane %v1495, 5
    %v1526 = vrot.slane %v1496, 4
    %v1527 = vsel %vm1520, %v1526, %v1525
    %1528 = vrot.lane.b32.xlu0 %v1527, 96
    %v1529 = vpop.permute.xlu0 %1528
    %v1531 = vsel %vm198, %v1523, %v1529
    %v1532 = vpack.c.bf16 %v1531, %v1531
    %v1534 = vshrl.u32 %v1532, 16
    %v1536 = vrot.slane %v1534, 2
    %v1537 = vshll.u32 %v1532, 16
    %v1539 = vrot.slane %v1537, 3
    %v1540 = vor.u32 %v1536, %v1539
    %v1542 = vsel %vm505, %v1540, 0
    %1544 = vmatprep.subr.bf16.mxu0 %v490
    %1545 = vmatpush1.bf16.msra.mxu0 %v489
    %1546 = vmatprep.subr.bf16.mxu0 %v492
    %1547 = vmatpush1.bf16.msra.mxu0 %v491
    %1548 = vmatprep.subr.bf16.mxu0 %v494
    %1549 = vmatpush1.bf16.msra.mxu0 %v493
    %1550 = vmatprep.subr.bf16.mxu0 %v496
    %1551 = vmatpush1.bf16.msra.mxu0 %v495
    %1552 = vmatprep.subr.bf16.mxu0 0
    %1553 = vmatpush1.bf16.msra.mxu0 0
    %1554 = vmatprep.subr.bf16.mxu0 0
    %1555 = vmatpush1.bf16.msra.mxu0 0
    %1556 = vmatprep.subr.bf16.mxu0 0
    %1557 = vmatpush1.bf16.msra.mxu0 0
    %1558 = vmatprep.subr.bf16.mxu0 0
    %1559 = vmatpush1.bf16.msra.mxu0 0
    %1560 = vmatprep.subr.bf16.mxu0 0
    %1561 = vmatpush1.bf16.msra.mxu0 0
    %1562 = vmatprep.subr.bf16.mxu0 0
    %1563 = vmatpush1.bf16.msra.mxu0 0
    %1564 = vmatprep.subr.bf16.mxu0 0
    %1565 = vmatpush1.bf16.msra.mxu0 0
    %1566 = vmatprep.subr.bf16.mxu0 0
    %1567 = vmatpush1.bf16.msra.mxu0 0
    %1568 = vmatprep.subr.bf16.mxu0 0
    %1569 = vmatpush1.bf16.msra.mxu0 0
    %1570 = vmatprep.subr.bf16.mxu0 0
    %1571 = vmatpush1.bf16.msra.mxu0 0
    %1572 = vmatprep.subr.bf16.mxu0 0
    %1573 = vmatpush1.bf16.msra.mxu0 0
    %1574 = vmatprep.subr.bf16.mxu0 0
    %1575 = vmatpush1.bf16.msra.mxu0 0
    %1576 = vmatprep.mubr.bf16.mxu0 0
    %1577 = vmatmul.mubr.bf16.gmra.mrb[0].mxu0 %v1542
    %v1578 = vpop.f32.mrb[0].mxu0
    %v1579 = vadd.f32 0.0, %v1578
    %v1580 = vpop.f32.mrb[0].mxu0
    %v1581 = vadd.f32 0.0, %v1580
    %v1582 = vpop.f32.mrb[0].mxu0
    %v1583 = vpop.f32.mrb[0].mxu0
    %1584 = vdwg.mxu0
    %v1586 = vrot.slane %v1579, 2
    %v1587 = vrot.slane %v1579, 3
    %v1590 = vadd.f32 %v325, %v1586
    %v1591 = vadd.f32 %v329, %v1587
    %v1593 = vrot.slane %v1581, 7
    %v1596 = vadd.f32 %v327, %v1593
    %v1597 = vadd.f32 %v331, %v1581
    %v1598 = vxor.u32 %v1590, 2147483648
    %v1599 = vxor.u32 %v1591, 2147483648
    %v1600 = vmul.f32 %v1598, 1.442695
    %v1601 = vpow.pop %v1600
    %v1602 = vmul.f32 %v1599, 1.442695
    %v1603 = vpow.pop %v1602
    %v1604 = vadd.f32 %v1601, 1.0
    %v1605 = vadd.f32 %v1603, 1.0
    %v1606 = vrcp.pop %v1604
    %v1607 = vmul.f32 1.0, %v1606
    %v1608 = vrcp.pop %v1605
    %v1609 = vmul.f32 1.0, %v1608
    %v1610 = vxor.u32 %v1596, 2147483648
    %v1611 = vxor.u32 %v1597, 2147483648
    %v1612 = vmul.f32 %v1610, 1.442695
    %v1613 = vpow.pop %v1612
    %v1614 = vmul.f32 %v1611, 1.442695
    %v1615 = vpow.pop %v1614
    %v1616 = vadd.f32 %v1613, 1.0
    %v1617 = vadd.f32 %v1615, 1.0
    %v1618 = vrcp.pop %v1616
    %v1619 = vmul.f32 1.0, %v1618
    %v1620 = vrcp.pop %v1617
    %v1621 = vmul.f32 1.0, %v1620
    %v1622 = vtanh.pop %v1590
    %v1623 = vtanh.pop %v1591
    %v1624 = vtanh.pop %v1596
    %v1625 = vtanh.pop %v1597
    %v1628 = vrot.slane %v1443, 7
    %v1629 = vrot.slane %v1444, 7
    %v1632 = vmul.f32 %v1607, %v1628
    %v1633 = vmul.f32 %v1609, %v1629
    %1636 = vrot.lane.b32.xlu0 %v1622, 32
    %v1637 = vpop.permute.xlu0 %1636
    %1638 = vrot.lane.b32.xlu0 %v1623, 32
    %v1639 = vpop.permute.xlu0 %1638
    %v1642 = vmul.f32 %v1607, %v1637
    %v1643 = vmul.f32 %v1609, %v1639
    %1646 = vrot.lane.b32.xlu0 %v1642, 32
    %v1647 = vpop.permute.xlu0 %1646
    %1648 = vrot.lane.b32.xlu0 %v1643, 32
    %v1649 = vpop.permute.xlu0 %1648
    %v1652 = vadd.f32 %v1632, %v1647
    %v1653 = vadd.f32 %v1633, %v1649
    %v1656 = vrot.slane %v1471, 1
    %v1657 = vrot.slane %v1472, 1
    %v1660 = vmul.f32 %v1619, %v1656
    %v1661 = vmul.f32 %v1621, %v1657
    %1664 = vrot.lane.b32.xlu0 %v1624, 32
    %v1665 = vpop.permute.xlu0 %1664
    %1666 = vrot.lane.b32.xlu0 %v1625, 32
    %v1667 = vpop.permute.xlu0 %1666
    %v1670 = vmul.f32 %v1619, %v1665
    %v1671 = vmul.f32 %v1621, %v1667
    %1674 = vrot.lane.b32.xlu0 %v1670, 32
    %v1675 = vpop.permute.xlu0 %1674
    %1676 = vrot.lane.b32.xlu0 %v1671, 32
    %v1677 = vpop.permute.xlu0 %1676
    %v1680 = vadd.f32 %v1660, %v1675
    %v1681 = vadd.f32 %v1661, %v1677
    %v1682 = vtanh.pop %v1652
    %v1683 = vtanh.pop %v1653
    %1686 = vrot.lane.b32.xlu0 %v1682, 32
    %v1687 = vpop.permute.xlu0 %1686
    %1688 = vrot.lane.b32.xlu0 %v1683, 32
    %v1689 = vpop.permute.xlu0 %1688
    %v1692 = vmul.f32 %v1607, %v1687
    %v1693 = vmul.f32 %v1609, %v1689
    %v1694 = vtanh.pop %v1680
    %v1695 = vtanh.pop %v1681
    %1698 = vrot.lane.b32.xlu0 %v1694, 32
    %v1699 = vpop.permute.xlu0 %1698
    %1700 = vrot.lane.b32.xlu0 %v1695, 32
    %v1701 = vpop.permute.xlu0 %1700
    %v1704 = vmul.f32 %v1619, %v1699
    %v1705 = vmul.f32 %v1621, %v1701
    %1708 = vrot.lane.b32.xlu0 %v1692, 64
    %v1709 = vpop.permute.xlu0 %1708
    %1710 = vrot.lane.b32.xlu0 %v1693, 64
    %v1711 = vpop.permute.xlu0 %1710
    %vm1714 = vcmask 260102
    %1715 = vst.msk [vmem:[#allocation2] sm:$0x40] %vm1714, %v1709
    %1716 = vst.msk [vmem:[#allocation2 + $0x8] sm:$0x40] %vm1714, %v1711
    %1719 = vrot.lane.b32.xlu0 %v1704, 96
    %v1720 = vpop.permute.xlu0 %1719
    %1721 = vrot.lane.b32.xlu0 %v1705, 96
    %v1722 = vpop.permute.xlu0 %1721
    %vm1725 = vcmask 517377
    %1726 = vst.msk [vmem:[#allocation2] sm:$0x2] %vm1725, %v1720
    %1727 = vst.msk [vmem:[#allocation2 + $0x8] sm:$0x2] %vm1725, %v1722
    %v1728 = vrot.slane %v1693, 7
    %vm1729 = vcmask 1047559
    %v1730 = vsel %vm1729, %v1728, %v1692
    %1731 = vrot.lane.b32.xlu0 %v1730, 64
    %v1732 = vpop.permute.xlu0 %1731
    %v1734 = vrot.slane %v1704, 3
    %v1735 = vrot.slane %v1705, 2
    %v1736 = vsel %vm1729, %v1735, %v1734
    %1737 = vrot.lane.b32.xlu0 %v1736, 96
    %v1738 = vpop.permute.xlu0 %1737
    %v1740 = vsel %vm198, %v1732, %v1738
    %v1741 = vpack.c.bf16 %v1740, %v1740
    %v1743 = vrot.slane %v1741, 3
    %v1745 = vsel %vm505, %v1743, 0
    %1747 = vmatprep.subr.bf16.mxu0 %v490
    %1748 = vmatpush1.bf16.msra.mxu0 %v489
    %1749 = vmatprep.subr.bf16.mxu0 %v492
    %1750 = vmatpush1.bf16.msra.mxu0 %v491
    %1751 = vmatprep.subr.bf16.mxu0 %v494
    %1752 = vmatpush1.bf16.msra.mxu0 %v493
    %1753 = vmatprep.subr.bf16.mxu0 %v496
    %1754 = vmatpush1.bf16.msra.mxu0 %v495
    %1755 = vmatprep.subr.bf16.mxu0 0
    %1756 = vmatpush1.bf16.msra.mxu0 0
    %1757 = vmatprep.subr.bf16.mxu0 0
    %1758 = vmatpush1.bf16.msra.mxu0 0
    %1759 = vmatprep.subr.bf16.mxu0 0
    %1760 = vmatpush1.bf16.msra.mxu0 0
    %1761 = vmatprep.subr.bf16.mxu0 0
    %1762 = vmatpush1.bf16.msra.mxu0 0
    %1763 = vmatprep.subr.bf16.mxu0 0
    %1764 = vmatpush1.bf16.msra.mxu0 0
    %1765 = vmatprep.subr.bf16.mxu0 0
    %1766 = vmatpush1.bf16.msra.mxu0 0
    %1767 = vmatprep.subr.bf16.mxu0 0
    %1768 = vmatpush1.bf16.msra.mxu0 0
    %1769 = vmatprep.subr.bf16.mxu0 0
    %1770 = vmatpush1.bf16.msra.mxu0 0
    %1771 = vmatprep.subr.bf16.mxu0 0
    %1772 = vmatpush1.bf16.msra.mxu0 0
    %1773 = vmatprep.subr.bf16.mxu0 0
    %1774 = vmatpush1.bf16.msra.mxu0 0
    %1775 = vmatprep.subr.bf16.mxu0 0
    %1776 = vmatpush1.bf16.msra.mxu0 0
    %1777 = vmatprep.subr.bf16.mxu0 0
    %1778 = vmatpush1.bf16.msra.mxu0 0
    %1779 = vmatprep.mubr.bf16.mxu0 0
    %1780 = vmatmul.mubr.bf16.gmra.mrb[0].mxu0 %v1745
    %v1781 = vpop.f32.mrb[0].mxu0
    %v1782 = vadd.f32 0.0, %v1781
    %v1783 = vpop.f32.mrb[0].mxu0
    %v1784 = vadd.f32 0.0, %v1783
    %v1785 = vpop.f32.mrb[0].mxu0
    %v1786 = vpop.f32.mrb[0].mxu0
    %1787 = vdwg.mxu0
    %v1789 = vrot.slane %v1782, 1
    %v1790 = vrot.slane %v1782, 2
    %v1793 = vadd.f32 %v325, %v1789
    %v1794 = vadd.f32 %v329, %v1790
    %v1796 = vrot.slane %v1784, 1
    %v1799 = vadd.f32 %v327, %v1784
    %v1800 = vadd.f32 %v331, %v1796
    %v1801 = vxor.u32 %v1793, 2147483648
    %v1802 = vxor.u32 %v1794, 2147483648
    %v1803 = vmul.f32 %v1801, 1.442695
    %v1804 = vpow.pop %v1803
    %v1805 = vmul.f32 %v1802, 1.442695
    %v1806 = vpow.pop %v1805
    %v1807 = vadd.f32 %v1804, 1.0
    %v1808 = vadd.f32 %v1806, 1.0
    %v1809 = vrcp.pop %v1807
    %v1810 = vmul.f32 1.0, %v1809
    %v1811 = vrcp.pop %v1808
    %v1812 = vmul.f32 1.0, %v1811
    %v1813 = vxor.u32 %v1799, 2147483648
    %v1814 = vxor.u32 %v1800, 2147483648
    %v1815 = vmul.f32 %v1813, 1.442695
    %v1816 = vpow.pop %v1815
    %v1817 = vmul.f32 %v1814, 1.442695
    %v1818 = vpow.pop %v1817
    %v1819 = vadd.f32 %v1816, 1.0
    %v1820 = vadd.f32 %v1818, 1.0
    %v1821 = vrcp.pop %v1819
    %v1822 = vmul.f32 1.0, %v1821
    %v1823 = vrcp.pop %v1820
    %v1824 = vmul.f32 1.0, %v1823
    %v1825 = vtanh.pop %v1793
    %v1826 = vtanh.pop %v1794
    %v1827 = vtanh.pop %v1799
    %v1828 = vtanh.pop %v1800
    %v1831 = vrot.slane %v1652, 7
    %v1832 = vrot.slane %v1653, 7
    %v1835 = vmul.f32 %v1810, %v1831
    %v1836 = vmul.f32 %v1812, %v1832
    %1839 = vrot.lane.b32.xlu0 %v1825, 32
    %v1840 = vpop.permute.xlu0 %1839
    %1841 = vrot.lane.b32.xlu0 %v1826, 32
    %v1842 = vpop.permute.xlu0 %1841
    %v1845 = vmul.f32 %v1810, %v1840
    %v1846 = vmul.f32 %v1812, %v1842
    %1849 = vrot.lane.b32.xlu0 %v1845, 32
    %v1850 = vpop.permute.xlu0 %1849
    %1851 = vrot.lane.b32.xlu0 %v1846, 32
    %v1852 = vpop.permute.xlu0 %1851
    %v1855 = vadd.f32 %v1835, %v1850
    %v1856 = vadd.f32 %v1836, %v1852
    %v1859 = vrot.slane %v1680, 1
    %v1860 = vrot.slane %v1681, 1
    %v1863 = vmul.f32 %v1822, %v1859
    %v1864 = vmul.f32 %v1824, %v1860
    %1867 = vrot.lane.b32.xlu0 %v1827, 32
    %v1868 = vpop.permute.xlu0 %1867
    %1869 = vrot.lane.b32.xlu0 %v1828, 32
    %v1870 = vpop.permute.xlu0 %1869
    %v1873 = vmul.f32 %v1822, %v1868
    %v1874 = vmul.f32 %v1824, %v1870
    %1877 = vrot.lane.b32.xlu0 %v1873, 32
    %v1878 = vpop.permute.xlu0 %1877
    %1879 = vrot.lane.b32.xlu0 %v1874, 32
    %v1880 = vpop.permute.xlu0 %1879
    %v1883 = vadd.f32 %v1863, %v1878
    %v1884 = vadd.f32 %v1864, %v1880
    %v1885 = vtanh.pop %v1855
    %v1886 = vtanh.pop %v1856
    %1889 = vrot.lane.b32.xlu0 %v1885, 32
    %v1890 = vpop.permute.xlu0 %1889
    %1891 = vrot.lane.b32.xlu0 %v1886, 32
    %v1892 = vpop.permute.xlu0 %1891
    %v1895 = vmul.f32 %v1810, %v1890
    %v1896 = vmul.f32 %v1812, %v1892
    %v1897 = vtanh.pop %v1883
    %v1898 = vtanh.pop %v1884
    %1901 = vrot.lane.b32.xlu0 %v1897, 32
    %v1902 = vpop.permute.xlu0 %1901
    %1903 = vrot.lane.b32.xlu0 %v1898, 32
    %v1904 = vpop.permute.xlu0 %1903
    %v1907 = vmul.f32 %v1822, %v1902
    %v1908 = vmul.f32 %v1824, %v1904
    %1911 = vrot.lane.b32.xlu0 %v1895, 64
    %v1912 = vpop.permute.xlu0 %1911
    %1913 = vrot.lane.b32.xlu0 %v1896, 64
    %v1914 = vpop.permute.xlu0 %1913
    %vm1917 = vcmask 261127
    %1918 = vst.msk [vmem:[#allocation2] sm:$0x80] %vm1917, %v1912
    %1919 = vst.msk [vmem:[#allocation2 + $0x8] sm:$0x80] %vm1917, %v1914
    %1922 = vrot.lane.b32.xlu0 %v1907, 96
    %v1923 = vpop.permute.xlu0 %1922
    %1924 = vrot.lane.b32.xlu0 %v1908, 96
    %v1925 = vpop.permute.xlu0 %1924
    %vm1928 = vcmask 516352
    %1929 = vst.msk [vmem:[#allocation2] sm:$0x1] %vm1928, %v1923
    %1930 = vst.msk [vmem:[#allocation2 + $0x8] sm:$0x1] %vm1928, %v1925
    %v1931 = vld [vmem:[#allocation2] sm:$0xff]
    %v1932 = vld [vmem:[#allocation2 + $0x8] sm:$0xff]
    %v1933 = vld [vmem:[%s6] sm:$0xff]
    %v1934 = vld [vmem:[%s6 + $0x8] sm:$0xff]
    %v1935 = vld [vmem:[%s6 + $0x10] sm:$0xff]
    %v1936 = vld [vmem:[%s6 + $0x18] sm:$0xff]
    %v1937 = vld [vmem:[%s6 + $0x20] sm:$0xff]
    %v1938 = vld [vmem:[%s6 + $0x28] sm:$0xff]
    %v1939 = vld [vmem:[%s6 + $0x30] sm:$0xff]
    %v1940 = vld [vmem:[%s6 + $0x38] sm:$0xff]
    %v1941 = vld [vmem:[%s7] sm:$0xff]
    %v1942 = vld [vmem:[%s7 + $0x8] sm:$0xff]
    %v1943 = vld [vmem:[%s7 + $0x10] sm:$0xff]
    %v1944 = vld [vmem:[%s7 + $0x18] sm:$0xff]
    %v1945 = vld [vmem:[%s7 + $0x20] sm:$0xff]
    %v1946 = vld [vmem:[%s7 + $0x28] sm:$0xff]
    %v1947 = vld [vmem:[%s7 + $0x30] sm:$0xff]
    %v1948 = vld [vmem:[%s7 + $0x38] sm:$0xff]
    %s1949 = scalar_lea.vmem %s2, 4
    %v1950 = vld [vmem:[%s1949] ss:$8 sm:$0x3]
    %v1951 = vpack.c.bf16 %v1932, %v1931
    %v1953 = vlaneseq
    %v1954 = vshrl.u32 %v1953, 7
    %v1955 = vsub.s32 0, %v1954
    %v1956 = vrot.slane %v1950, %v1955
    %v1957 = vlaneseq
    %v1958 = vshrl.u32 %v1957, 7
    %v1959 = vsub.s32 1, %v1958
    %v1960 = vrot.slane %v1950, %v1959
    %v1971 = vunpack.c.l.b16 %v1933
    %v1972 = vunpack.c.h.b16 %v1933
    %v1973 = vunpack.c.l.b16 %v1934
    %v1974 = vunpack.c.h.b16 %v1934
    %v1975 = vunpack.c.l.b16 %v1935
    %v1976 = vunpack.c.h.b16 %v1935
    %v1977 = vunpack.c.l.b16 %v1936
    %v1978 = vunpack.c.h.b16 %v1936
    %v1979 = vunpack.c.l.b16 %v1937
    %v1980 = vunpack.c.h.b16 %v1937
    %v1981 = vunpack.c.l.b16 %v1938
    %v1982 = vunpack.c.h.b16 %v1938
    %v1983 = vunpack.c.l.b16 %v1939
    %v1984 = vunpack.c.h.b16 %v1939
    %v1985 = vunpack.c.l.b16 %v1940
    %v1986 = vunpack.c.h.b16 %v1940
    %v1987 = vpack.c.b16 %v1973, %v1971
    %v1988 = vpack.c.b16 %v1974, %v1972
    %v1989 = vpack.c.b16 %v1977, %v1975
    %v1990 = vpack.c.b16 %v1978, %v1976
    %v1991 = vpack.c.b16 %v1981, %v1979
    %v1992 = vpack.c.b16 %v1982, %v1980
    %v1993 = vpack.c.b16 %v1985, %v1983
    %v1994 = vpack.c.b16 %v1986, %v1984
    %v2004 = vsel %vm505, %v1951, 0
    %2006 = vmatprep.subr.bf16.mxu0 %v1988
    %2007 = vmatpush1.bf16.msra.mxu0 %v1987
    %2008 = vmatprep.subr.bf16.mxu0 %v1990
    %2009 = vmatpush1.bf16.msra.mxu0 %v1989
    %2010 = vmatprep.subr.bf16.mxu0 %v1992
    %2011 = vmatpush1.bf16.msra.mxu0 %v1991
    %2012 = vmatprep.subr.bf16.mxu0 %v1994
    %2013 = vmatpush1.bf16.msra.mxu0 %v1993
    %2014 = vmatprep.subr.bf16.mxu0 0
    %2015 = vmatpush1.bf16.msra.mxu0 0
    %2016 = vmatprep.subr.bf16.mxu0 0
    %2017 = vmatpush1.bf16.msra.mxu0 0
    %2018 = vmatprep.subr.bf16.mxu0 0
    %2019 = vmatpush1.bf16.msra.mxu0 0
    %2020 = vmatprep.subr.bf16.mxu0 0
    %2021 = vmatpush1.bf16.msra.mxu0 0
    %2022 = vmatprep.subr.bf16.mxu0 0
    %2023 = vmatpush1.bf16.msra.mxu0 0
    %2024 = vmatprep.subr.bf16.mxu0 0
    %2025 = vmatpush1.bf16.msra.mxu0 0
    %2026 = vmatprep.subr.bf16.mxu0 0
    %2027 = vmatpush1.bf16.msra.mxu0 0
    %2028 = vmatprep.subr.bf16.mxu0 0
    %2029 = vmatpush1.bf16.msra.mxu0 0
    %2030 = vmatprep.subr.bf16.mxu0 0
    %2031 = vmatpush1.bf16.msra.mxu0 0
    %2032 = vmatprep.subr.bf16.mxu0 0
    %2033 = vmatpush1.bf16.msra.mxu0 0
    %2034 = vmatprep.subr.bf16.mxu0 0
    %2035 = vmatpush1.bf16.msra.mxu0 0
    %2036 = vmatprep.subr.bf16.mxu0 0
    %2037 = vmatpush1.bf16.msra.mxu0 0
    %2038 = vmatprep.mubr.bf16.mxu0 0
    %2039 = vmatmul.mubr.bf16.gmra.mrb[0].mxu0 %v2004
    %v2040 = vpop.f32.mrb[0].mxu0
    %v2041 = vadd.f32 %v1956, %v2040
    %v2042 = vpop.f32.mrb[0].mxu0
    %v2043 = vadd.f32 %v1960, %v2042
    %v2044 = vpop.f32.mrb[0].mxu0
    %v2045 = vadd.f32 %v1956, %v2044
    %v2046 = vpop.f32.mrb[0].mxu0
    %v2047 = vadd.f32 %v1960, %v2046
    %2048 = vdwg.mxu0
    %v2049 = vxor.u32 %v2041, 2147483648
    %v2050 = vxor.u32 %v2045, 2147483648
    %v2051 = vmul.f32 %v2049, 1.442695
    %v2052 = vpow.pop %v2051
    %v2053 = vmul.f32 %v2050, 1.442695
    %v2054 = vpow.pop %v2053
    %v2055 = vadd.f32 %v2052, 1.0
    %v2056 = vadd.f32 %v2054, 1.0
    %v2057 = vrcp.pop %v2055
    %v2058 = vmul.f32 1.0, %v2057
    %v2059 = vrcp.pop %v2056
    %v2060 = vmul.f32 1.0, %v2059
    %v2061 = vxor.u32 %v2043, 2147483648
    %v2062 = vxor.u32 %v2047, 2147483648
    %v2063 = vmul.f32 %v2061, 1.442695
    %v2064 = vpow.pop %v2063
    %v2065 = vmul.f32 %v2062, 1.442695
    %v2066 = vpow.pop %v2065
    %v2067 = vadd.f32 %v2064, 1.0
    %v2068 = vadd.f32 %v2066, 1.0
    %v2069 = vrcp.pop %v2067
    %v2070 = vmul.f32 1.0, %v2069
    %v2071 = vrcp.pop %v2068
    %v2072 = vmul.f32 1.0, %v2071
    %v2073 = vtanh.pop %v2041
    %v2074 = vtanh.pop %v2045
    %v2075 = vtanh.pop %v2043
    %v2076 = vtanh.pop %v2047
    %v2077 = vmul.f32 %v2058, 0.0
    %v2078 = vmul.f32 %v2060, 0.0
    %2081 = vrot.lane.b32.xlu0 %v2073, 32
    %v2082 = vpop.permute.xlu0 %2081
    %2083 = vrot.lane.b32.xlu0 %v2074, 32
    %v2084 = vpop.permute.xlu0 %2083
    %v2087 = vmul.f32 %v2058, %v2082
    %v2088 = vmul.f32 %v2060, %v2084
    %2091 = vrot.lane.b32.xlu0 %v2087, 32
    %v2092 = vpop.permute.xlu0 %2091
    %2093 = vrot.lane.b32.xlu0 %v2088, 32
    %v2094 = vpop.permute.xlu0 %2093
    %v2097 = vadd.f32 %v2077, %v2092
    %v2098 = vadd.f32 %v2078, %v2094
    %v2099 = vmul.f32 %v2070, 0.0
    %v2100 = vmul.f32 %v2072, 0.0
    %2103 = vrot.lane.b32.xlu0 %v2075, 32
    %v2104 = vpop.permute.xlu0 %2103
    %2105 = vrot.lane.b32.xlu0 %v2076, 32
    %v2106 = vpop.permute.xlu0 %2105
    %v2109 = vmul.f32 %v2070, %v2104
    %v2110 = vmul.f32 %v2072, %v2106
    %2113 = vrot.lane.b32.xlu0 %v2109, 32
    %v2114 = vpop.permute.xlu0 %2113
    %2115 = vrot.lane.b32.xlu0 %v2110, 32
    %v2116 = vpop.permute.xlu0 %2115
    %v2119 = vadd.f32 %v2099, %v2114
    %v2120 = vadd.f32 %v2100, %v2116
    %v2121 = vtanh.pop %v2097
    %v2122 = vtanh.pop %v2098
    %2125 = vrot.lane.b32.xlu0 %v2121, 32
    %v2126 = vpop.permute.xlu0 %2125
    %2127 = vrot.lane.b32.xlu0 %v2122, 32
    %v2128 = vpop.permute.xlu0 %2127
    %v2131 = vmul.f32 %v2058, %v2126
    %v2132 = vmul.f32 %v2060, %v2128
    %v2133 = vtanh.pop %v2119
    %v2134 = vtanh.pop %v2120
    %2137 = vrot.lane.b32.xlu0 %v2133, 32
    %v2138 = vpop.permute.xlu0 %2137
    %2139 = vrot.lane.b32.xlu0 %v2134, 32
    %v2140 = vpop.permute.xlu0 %2139
    %v2143 = vmul.f32 %v2070, %v2138
    %v2144 = vmul.f32 %v2072, %v2140
    %2147 = vrot.lane.b32.xlu0 %v2131, 64
    %v2148 = vpop.permute.xlu0 %2147
    %2149 = vrot.lane.b32.xlu0 %v2132, 64
    %v2150 = vpop.permute.xlu0 %2149
    %2153 = vst.msk [vmem:[#allocation2] sm:$0x1] %vm437, %v2148
    %2154 = vst.msk [vmem:[#allocation2 + $0x8] sm:$0x1] %vm437, %v2150
    %2157 = vrot.lane.b32.xlu0 %v2143, 96
    %v2158 = vpop.permute.xlu0 %2157
    %2159 = vrot.lane.b32.xlu0 %v2144, 96
    %v2160 = vpop.permute.xlu0 %2159
    %2163 = vst.msk [vmem:[#allocation2] sm:$0x80] %vm448, %v2158
    %2164 = vst.msk [vmem:[#allocation2 + $0x8] sm:$0x80] %vm448, %v2160
    %v2165 = vrot.slane %v2132, 7
    %v2166 = vsel %vm452, %v2165, %v2131
    %2167 = vrot.lane.b32.xlu0 %v2166, 64
    %v2168 = vpop.permute.xlu0 %2167
    %v2170 = vrot.slane %v2143, 7
    %v2171 = vrot.slane %v2144, 6
    %v2172 = vsel %vm452, %v2171, %v2170
    %2173 = vrot.lane.b32.xlu0 %v2172, 96
    %v2174 = vpop.permute.xlu0 %2173
    %v2176 = vsel %vm198, %v2168, %v2174
    %v2177 = vpack.c.bf16 %v2176, %v2176
    %v2186 = vunpack.c.l.b16 %v1941
    %v2187 = vunpack.c.h.b16 %v1941
    %v2188 = vunpack.c.l.b16 %v1942
    %v2189 = vunpack.c.h.b16 %v1942
    %v2190 = vunpack.c.l.b16 %v1943
    %v2191 = vunpack.c.h.b16 %v1943
    %v2192 = vunpack.c.l.b16 %v1944
    %v2193 = vunpack.c.h.b16 %v1944
    %v2194 = vunpack.c.l.b16 %v1945
    %v2195 = vunpack.c.h.b16 %v1945
    %v2196 = vunpack.c.l.b16 %v1946
    %v2197 = vunpack.c.h.b16 %v1946
    %v2198 = vunpack.c.l.b16 %v1947
    %v2199 = vunpack.c.h.b16 %v1947
    %v2200 = vunpack.c.l.b16 %v1948
    %v2201 = vunpack.c.h.b16 %v1948
    %v2202 = vpack.c.b16 %v2188, %v2186
    %v2203 = vpack.c.b16 %v2189, %v2187
    %v2204 = vpack.c.b16 %v2192, %v2190
    %v2205 = vpack.c.b16 %v2193, %v2191
    %v2206 = vpack.c.b16 %v2196, %v2194
    %v2207 = vpack.c.b16 %v2197, %v2195
    %v2208 = vpack.c.b16 %v2200, %v2198
    %v2209 = vpack.c.b16 %v2201, %v2199
    %v2219 = vsel %vm505, %v2177, 0
    %2221 = vmatprep.subr.bf16.mxu0 %v2203
    %2222 = vmatpush1.bf16.msra.mxu0 %v2202
    %2223 = vmatprep.subr.bf16.mxu0 %v2205
    %2224 = vmatpush1.bf16.msra.mxu0 %v2204
    %2225 = vmatprep.subr.bf16.mxu0 %v2207
    %2226 = vmatpush1.bf16.msra.mxu0 %v2206
    %2227 = vmatprep.subr.bf16.mxu0 %v2209
    %2228 = vmatpush1.bf16.msra.mxu0 %v2208
    %2229 = vmatprep.subr.bf16.mxu0 0
    %2230 = vmatpush1.bf16.msra.mxu0 0
    %2231 = vmatprep.subr.bf16.mxu0 0
    %2232 = vmatpush1.bf16.msra.mxu0 0
    %2233 = vmatprep.subr.bf16.mxu0 0
    %2234 = vmatpush1.bf16.msra.mxu0 0
    %2235 = vmatprep.subr.bf16.mxu0 0
    %2236 = vmatpush1.bf16.msra.mxu0 0
    %2237 = vmatprep.subr.bf16.mxu0 0
    %2238 = vmatpush1.bf16.msra.mxu0 0
    %2239 = vmatprep.subr.bf16.mxu0 0
    %2240 = vmatpush1.bf16.msra.mxu0 0
    %2241 = vmatprep.subr.bf16.mxu0 0
    %2242 = vmatpush1.bf16.msra.mxu0 0
    %2243 = vmatprep.subr.bf16.mxu0 0
    %2244 = vmatpush1.bf16.msra.mxu0 0
    %2245 = vmatprep.subr.bf16.mxu0 0
    %2246 = vmatpush1.bf16.msra.mxu0 0
    %2247 = vmatprep.subr.bf16.mxu0 0
    %2248 = vmatpush1.bf16.msra.mxu0 0
    %2249 = vmatprep.subr.bf16.mxu0 0
    %2250 = vmatpush1.bf16.msra.mxu0 0
    %2251 = vmatprep.subr.bf16.mxu0 0
    %2252 = vmatpush1.bf16.msra.mxu0 0
    %2253 = vmatprep.mubr.bf16.mxu0 0
    %2254 = vmatmul.mubr.bf16.gmra.mrb[0].mxu0 %v2219
    %v2255 = vpop.f32.mrb[0].mxu0
    %v2256 = vadd.f32 0.0, %v2255
    %v2257 = vpop.f32.mrb[0].mxu0
    %v2258 = vadd.f32 0.0, %v2257
    %v2259 = vpop.f32.mrb[0].mxu0
    %v2260 = vpop.f32.mrb[0].mxu0
    %2261 = vdwg.mxu0
    %v2263 = vrot.slane %v2256, 7
    %v2266 = vadd.f32 %v2041, %v2263
    %v2267 = vadd.f32 %v2045, %v2256
    %v2269 = vrot.slane %v2258, 2
    %v2270 = vrot.slane %v2258, 3
    %v2273 = vadd.f32 %v2043, %v2269
    %v2274 = vadd.f32 %v2047, %v2270
    %v2275 = vxor.u32 %v2266, 2147483648
    %v2276 = vxor.u32 %v2267, 2147483648
    %v2277 = vmul.f32 %v2275, 1.442695
    %v2278 = vpow.pop %v2277
    %v2279 = vmul.f32 %v2276, 1.442695
    %v2280 = vpow.pop %v2279
    %v2281 = vadd.f32 %v2278, 1.0
    %v2282 = vadd.f32 %v2280, 1.0
    %v2283 = vrcp.pop %v2281
    %v2284 = vmul.f32 1.0, %v2283
    %v2285 = vrcp.pop %v2282
    %v2286 = vmul.f32 1.0, %v2285
    %v2287 = vxor.u32 %v2273, 2147483648
    %v2288 = vxor.u32 %v2274, 2147483648
    %v2289 = vmul.f32 %v2287, 1.442695
    %v2290 = vpow.pop %v2289
    %v2291 = vmul.f32 %v2288, 1.442695
    %v2292 = vpow.pop %v2291
    %v2293 = vadd.f32 %v2290, 1.0
    %v2294 = vadd.f32 %v2292, 1.0
    %v2295 = vrcp.pop %v2293
    %v2296 = vmul.f32 1.0, %v2295
    %v2297 = vrcp.pop %v2294
    %v2298 = vmul.f32 1.0, %v2297
    %v2299 = vtanh.pop %v2266
    %v2300 = vtanh.pop %v2267
    %v2301 = vtanh.pop %v2273
    %v2302 = vtanh.pop %v2274
    %v2305 = vrot.slane %v2097, 7
    %v2306 = vrot.slane %v2098, 7
    %v2309 = vmul.f32 %v2284, %v2305
    %v2310 = vmul.f32 %v2286, %v2306
    %2313 = vrot.lane.b32.xlu0 %v2299, 32
    %v2314 = vpop.permute.xlu0 %2313
    %2315 = vrot.lane.b32.xlu0 %v2300, 32
    %v2316 = vpop.permute.xlu0 %2315
    %v2319 = vmul.f32 %v2284, %v2314
    %v2320 = vmul.f32 %v2286, %v2316
    %2323 = vrot.lane.b32.xlu0 %v2319, 32
    %v2324 = vpop.permute.xlu0 %2323
    %2325 = vrot.lane.b32.xlu0 %v2320, 32
    %v2326 = vpop.permute.xlu0 %2325
    %v2329 = vadd.f32 %v2309, %v2324
    %v2330 = vadd.f32 %v2310, %v2326
    %v2333 = vrot.slane %v2119, 1
    %v2334 = vrot.slane %v2120, 1
    %v2337 = vmul.f32 %v2296, %v2333
    %v2338 = vmul.f32 %v2298, %v2334
    %2341 = vrot.lane.b32.xlu0 %v2301, 32
    %v2342 = vpop.permute.xlu0 %2341
    %2343 = vrot.lane.b32.xlu0 %v2302, 32
    %v2344 = vpop.permute.xlu0 %2343
    %v2347 = vmul.f32 %v2296, %v2342
    %v2348 = vmul.f32 %v2298, %v2344
    %2351 = vrot.lane.b32.xlu0 %v2347, 32
    %v2352 = vpop.permute.xlu0 %2351
    %2353 = vrot.lane.b32.xlu0 %v2348, 32
    %v2354 = vpop.permute.xlu0 %2353
    %v2357 = vadd.f32 %v2337, %v2352
    %v2358 = vadd.f32 %v2338, %v2354
    %v2359 = vtanh.pop %v2329
    %v2360 = vtanh.pop %v2330
    %2363 = vrot.lane.b32.xlu0 %v2359, 32
    %v2364 = vpop.permute.xlu0 %2363
    %2365 = vrot.lane.b32.xlu0 %v2360, 32
    %v2366 = vpop.permute.xlu0 %2365
    %v2369 = vmul.f32 %v2284, %v2364
    %v2370 = vmul.f32 %v2286, %v2366
    %v2371 = vtanh.pop %v2357
    %v2372 = vtanh.pop %v2358
    %2375 = vrot.lane.b32.xlu0 %v2371, 32
    %v2376 = vpop.permute.xlu0 %2375
    %2377 = vrot.lane.b32.xlu0 %v2372, 32
    %v2378 = vpop.permute.xlu0 %2377
    %v2381 = vmul.f32 %v2296, %v2376
    %v2382 = vmul.f32 %v2298, %v2378
    %2385 = vrot.lane.b32.xlu0 %v2369, 64
    %v2386 = vpop.permute.xlu0 %2385
    %2387 = vrot.lane.b32.xlu0 %v2370, 64
    %v2388 = vpop.permute.xlu0 %2387
    %2391 = vst.msk [vmem:[#allocation2] sm:$0x2] %vm679, %v2386
    %2392 = vst.msk [vmem:[#allocation2 + $0x8] sm:$0x2] %vm679, %v2388
    %2395 = vrot.lane.b32.xlu0 %v2381, 96
    %v2396 = vpop.permute.xlu0 %2395
    %2397 = vrot.lane.b32.xlu0 %v2382, 96
    %v2398 = vpop.permute.xlu0 %2397
    %2401 = vst.msk [vmem:[#allocation2] sm:$0x40] %vm690, %v2396
    %2402 = vst.msk [vmem:[#allocation2 + $0x8] sm:$0x40] %vm690, %v2398
    %v2403 = vrot.slane %v2370, 7
    %v2404 = vsel %vm694, %v2403, %v2369
    %2405 = vrot.lane.b32.xlu0 %v2404, 64
    %v2406 = vpop.permute.xlu0 %2405
    %v2408 = vrot.slane %v2381, 5
    %v2409 = vrot.slane %v2382, 4
    %v2410 = vsel %vm694, %v2409, %v2408
    %2411 = vrot.lane.b32.xlu0 %v2410, 96
    %v2412 = vpop.permute.xlu0 %2411
    %v2414 = vsel %vm198, %v2406, %v2412
    %v2415 = vpack.c.bf16 %v2414, %v2414
    %v2417 = vshrl.u32 %v2415, 16
    %v2419 = vshll.u32 %v2415, 16
    %v2421 = vrot.slane %v2419, 1
    %v2422 = vor.u32 %v2417, %v2421
    %v2424 = vsel %vm505, %v2422, 0
    %2426 = vmatprep.subr.bf16.mxu0 %v2203
    %2427 = vmatpush1.bf16.msra.mxu0 %v2202
    %2428 = vmatprep.subr.bf16.mxu0 %v2205
    %2429 = vmatpush1.bf16.msra.mxu0 %v2204
    %2430 = vmatprep.subr.bf16.mxu0 %v2207
    %2431 = vmatpush1.bf16.msra.mxu0 %v2206
    %2432 = vmatprep.subr.bf16.mxu0 %v2209
    %2433 = vmatpush1.bf16.msra.mxu0 %v2208
    %2434 = vmatprep.subr.bf16.mxu0 0
    %2435 = vmatpush1.bf16.msra.mxu0 0
    %2436 = vmatprep.subr.bf16.mxu0 0
    %2437 = vmatpush1.bf16.msra.mxu0 0
    %2438 = vmatprep.subr.bf16.mxu0 0
    %2439 = vmatpush1.bf16.msra.mxu0 0
    %2440 = vmatprep.subr.bf16.mxu0 0
    %2441 = vmatpush1.bf16.msra.mxu0 0
    %2442 = vmatprep.subr.bf16.mxu0 0
    %2443 = vmatpush1.bf16.msra.mxu0 0
    %2444 = vmatprep.subr.bf16.mxu0 0
    %2445 = vmatpush1.bf16.msra.mxu0 0
    %2446 = vmatprep.subr.bf16.mxu0 0
    %2447 = vmatpush1.bf16.msra.mxu0 0
    %2448 = vmatprep.subr.bf16.mxu0 0
    %2449 = vmatpush1.bf16.msra.mxu0 0
    %2450 = vmatprep.subr.bf16.mxu0 0
    %2451 = vmatpush1.bf16.msra.mxu0 0
    %2452 = vmatprep.subr.bf16.mxu0 0
    %2453 = vmatpush1.bf16.msra.mxu0 0
    %2454 = vmatprep.subr.bf16.mxu0 0
    %2455 = vmatpush1.bf16.msra.mxu0 0
    %2456 = vmatprep.subr.bf16.mxu0 0
    %2457 = vmatpush1.bf16.msra.mxu0 0
    %2458 = vmatprep.mubr.bf16.mxu0 0
    %2459 = vmatmul.mubr.bf16.gmra.mrb[0].mxu0 %v2424
    %v2460 = vpop.f32.mrb[0].mxu0
    %v2461 = vadd.f32 0.0, %v2460
    %v2462 = vpop.f32.mrb[0].mxu0
    %v2463 = vadd.f32 0.0, %v2462
    %v2464 = vpop.f32.mrb[0].mxu0
    %v2465 = vpop.f32.mrb[0].mxu0
    %2466 = vdwg.mxu0
    %v2468 = vrot.slane %v2461, 6
    %v2469 = vrot.slane %v2461, 7
    %v2472 = vadd.f32 %v2041, %v2468
    %v2473 = vadd.f32 %v2045, %v2469
    %v2475 = vrot.slane %v2463, 3
    %v2476 = vrot.slane %v2463, 4
    %v2479 = vadd.f32 %v2043, %v2475
    %v2480 = vadd.f32 %v2047, %v2476
    %v2481 = vxor.u32 %v2472, 2147483648
    %v2482 = vxor.u32 %v2473, 2147483648
    %v2483 = vmul.f32 %v2481, 1.442695
    %v2484 = vpow.pop %v2483
    %v2485 = vmul.f32 %v2482, 1.442695
    %v2486 = vpow.pop %v2485
    %v2487 = vadd.f32 %v2484, 1.0
    %v2488 = vadd.f32 %v2486, 1.0
    %v2489 = vrcp.pop %v2487
    %v2490 = vmul.f32 1.0, %v2489
    %v2491 = vrcp.pop %v2488
    %v2492 = vmul.f32 1.0, %v2491
    %v2493 = vxor.u32 %v2479, 2147483648
    %v2494 = vxor.u32 %v2480, 2147483648
    %v2495 = vmul.f32 %v2493, 1.442695
    %v2496 = vpow.pop %v2495
    %v2497 = vmul.f32 %v2494, 1.442695
    %v2498 = vpow.pop %v2497
    %v2499 = vadd.f32 %v2496, 1.0
    %v2500 = vadd.f32 %v2498, 1.0
    %v2501 = vrcp.pop %v2499
    %v2502 = vmul.f32 1.0, %v2501
    %v2503 = vrcp.pop %v2500
    %v2504 = vmul.f32 1.0, %v2503
    %v2505 = vtanh.pop %v2472
    %v2506 = vtanh.pop %v2473
    %v2507 = vtanh.pop %v2479
    %v2508 = vtanh.pop %v2480
    %v2511 = vrot.slane %v2329, 7
    %v2512 = vrot.slane %v2330, 7
    %v2515 = vmul.f32 %v2490, %v2511
    %v2516 = vmul.f32 %v2492, %v2512
    %2519 = vrot.lane.b32.xlu0 %v2505, 32
    %v2520 = vpop.permute.xlu0 %2519
    %2521 = vrot.lane.b32.xlu0 %v2506, 32
    %v2522 = vpop.permute.xlu0 %2521
    %v2525 = vmul.f32 %v2490, %v2520
    %v2526 = vmul.f32 %v2492, %v2522
    %2529 = vrot.lane.b32.xlu0 %v2525, 32
    %v2530 = vpop.permute.xlu0 %2529
    %2531 = vrot.lane.b32.xlu0 %v2526, 32
    %v2532 = vpop.permute.xlu0 %2531
    %v2535 = vadd.f32 %v2515, %v2530
    %v2536 = vadd.f32 %v2516, %v2532
    %v2539 = vrot.slane %v2357, 1
    %v2540 = vrot.slane %v2358, 1
    %v2543 = vmul.f32 %v2502, %v2539
    %v2544 = vmul.f32 %v2504, %v2540
    %2547 = vrot.lane.b32.xlu0 %v2507, 32
    %v2548 = vpop.permute.xlu0 %2547
    %2549 = vrot.lane.b32.xlu0 %v2508, 32
    %v2550 = vpop.permute.xlu0 %2549
    %v2553 = vmul.f32 %v2502, %v2548
    %v2554 = vmul.f32 %v2504, %v2550
    %2557 = vrot.lane.b32.xlu0 %v2553, 32
    %v2558 = vpop.permute.xlu0 %2557
    %2559 = vrot.lane.b32.xlu0 %v2554, 32
    %v2560 = vpop.permute.xlu0 %2559
    %v2563 = vadd.f32 %v2543, %v2558
    %v2564 = vadd.f32 %v2544, %v2560
    %v2565 = vtanh.pop %v2535
    %v2566 = vtanh.pop %v2536
    %2569 = vrot.lane.b32.xlu0 %v2565, 32
    %v2570 = vpop.permute.xlu0 %2569
    %2571 = vrot.lane.b32.xlu0 %v2566, 32
    %v2572 = vpop.permute.xlu0 %2571
    %v2575 = vmul.f32 %v2490, %v2570
    %v2576 = vmul.f32 %v2492, %v2572
    %v2577 = vtanh.pop %v2563
    %v2578 = vtanh.pop %v2564
    %2581 = vrot.lane.b32.xlu0 %v2577, 32
    %v2582 = vpop.permute.xlu0 %2581
    %2583 = vrot.lane.b32.xlu0 %v2578, 32
    %v2584 = vpop.permute.xlu0 %2583
    %v2587 = vmul.f32 %v2502, %v2582
    %v2588 = vmul.f32 %v2504, %v2584
    %2591 = vrot.lane.b32.xlu0 %v2575, 64
    %v2592 = vpop.permute.xlu0 %2591
    %2593 = vrot.lane.b32.xlu0 %v2576, 64
    %v2594 = vpop.permute.xlu0 %2593
    %2597 = vst.msk [vmem:[#allocation2] sm:$0x4] %vm888, %v2592
    %2598 = vst.msk [vmem:[#allocation2 + $0x8] sm:$0x4] %vm888, %v2594
    %2601 = vrot.lane.b32.xlu0 %v2587, 96
    %v2602 = vpop.permute.xlu0 %2601
    %2603 = vrot.lane.b32.xlu0 %v2588, 96
    %v2604 = vpop.permute.xlu0 %2603
    %2607 = vst.msk [vmem:[#allocation2] sm:$0x20] %vm899, %v2602
    %2608 = vst.msk [vmem:[#allocation2 + $0x8] sm:$0x20] %vm899, %v2604
    %v2609 = vrot.slane %v2576, 7
    %v2610 = vsel %vm903, %v2609, %v2575
    %2611 = vrot.lane.b32.xlu0 %v2610, 64
    %v2612 = vpop.permute.xlu0 %2611
    %v2614 = vrot.slane %v2587, 3
    %v2615 = vrot.slane %v2588, 2
    %v2616 = vsel %vm903, %v2615, %v2614
    %2617 = vrot.lane.b32.xlu0 %v2616, 96
    %v2618 = vpop.permute.xlu0 %2617
    %v2620 = vsel %vm198, %v2612, %v2618
    %v2621 = vpack.c.bf16 %v2620, %v2620
    %v2623 = vrot.slane %v2621, 1
    %v2625 = vsel %vm505, %v2623, 0
    %2627 = vmatprep.subr.bf16.mxu0 %v2203
    %2628 = vmatpush1.bf16.msra.mxu0 %v2202
    %2629 = vmatprep.subr.bf16.mxu0 %v2205
    %2630 = vmatpush1.bf16.msra.mxu0 %v2204
    %2631 = vmatprep.subr.bf16.mxu0 %v2207
    %2632 = vmatpush1.bf16.msra.mxu0 %v2206
    %2633 = vmatprep.subr.bf16.mxu0 %v2209
    %2634 = vmatpush1.bf16.msra.mxu0 %v2208
    %2635 = vmatprep.subr.bf16.mxu0 0
    %2636 = vmatpush1.bf16.msra.mxu0 0
    %2637 = vmatprep.subr.bf16.mxu0 0
    %2638 = vmatpush1.bf16.msra.mxu0 0
    %2639 = vmatprep.subr.bf16.mxu0 0
    %2640 = vmatpush1.bf16.msra.mxu0 0
    %2641 = vmatprep.subr.bf16.mxu0 0
    %2642 = vmatpush1.bf16.msra.mxu0 0
    %2643 = vmatprep.subr.bf16.mxu0 0
    %2644 = vmatpush1.bf16.msra.mxu0 0
    %2645 = vmatprep.subr.bf16.mxu0 0
    %2646 = vmatpush1.bf16.msra.mxu0 0
    %2647 = vmatprep.subr.bf16.mxu0 0
    %2648 = vmatpush1.bf16.msra.mxu0 0
    %2649 = vmatprep.subr.bf16.mxu0 0
    %2650 = vmatpush1.bf16.msra.mxu0 0
    %2651 = vmatprep.subr.bf16.mxu0 0
    %2652 = vmatpush1.bf16.msra.mxu0 0
    %2653 = vmatprep.subr.bf16.mxu0 0
    %2654 = vmatpush1.bf16.msra.mxu0 0
    %2655 = vmatprep.subr.bf16.mxu0 0
    %2656 = vmatpush1.bf16.msra.mxu0 0
    %2657 = vmatprep.subr.bf16.mxu0 0
    %2658 = vmatpush1.bf16.msra.mxu0 0
    %2659 = vmatprep.mubr.bf16.mxu0 0
    %2660 = vmatmul.mubr.bf16.gmra.mrb[0].mxu0 %v2625
    %v2661 = vpop.f32.mrb[0].mxu0
    %v2662 = vadd.f32 0.0, %v2661
    %v2663 = vpop.f32.mrb[0].mxu0
    %v2664 = vadd.f32 0.0, %v2663
    %v2665 = vpop.f32.mrb[0].mxu0
    %v2666 = vpop.f32.mrb[0].mxu0
    %2667 = vdwg.mxu0
    %v2669 = vrot.slane %v2662, 5
    %v2670 = vrot.slane %v2662, 6
    %v2673 = vadd.f32 %v2041, %v2669
    %v2674 = vadd.f32 %v2045, %v2670
    %v2676 = vrot.slane %v2664, 4
    %v2677 = vrot.slane %v2664, 5
    %v2680 = vadd.f32 %v2043, %v2676
    %v2681 = vadd.f32 %v2047, %v2677
    %v2682 = vxor.u32 %v2673, 2147483648
    %v2683 = vxor.u32 %v2674, 2147483648
    %v2684 = vmul.f32 %v2682, 1.442695
    %v2685 = vpow.pop %v2684
    %v2686 = vmul.f32 %v2683, 1.442695
    %v2687 = vpow.pop %v2686
    %v2688 = vadd.f32 %v2685, 1.0
    %v2689 = vadd.f32 %v2687, 1.0
    %v2690 = vrcp.pop %v2688
    %v2691 = vmul.f32 1.0, %v2690
    %v2692 = vrcp.pop %v2689
    %v2693 = vmul.f32 1.0, %v2692
    %v2694 = vxor.u32 %v2680, 2147483648
    %v2695 = vxor.u32 %v2681, 2147483648
    %v2696 = vmul.f32 %v2694, 1.442695
    %v2697 = vpow.pop %v2696
    %v2698 = vmul.f32 %v2695, 1.442695
    %v2699 = vpow.pop %v2698
    %v2700 = vadd.f32 %v2697, 1.0
    %v2701 = vadd.f32 %v2699, 1.0
    %v2702 = vrcp.pop %v2700
    %v2703 = vmul.f32 1.0, %v2702
    %v2704 = vrcp.pop %v2701
    %v2705 = vmul.f32 1.0, %v2704
    %v2706 = vtanh.pop %v2673
    %v2707 = vtanh.pop %v2674
    %v2708 = vtanh.pop %v2680
    %v2709 = vtanh.pop %v2681
    %v2712 = vrot.slane %v2535, 7
    %v2713 = vrot.slane %v2536, 7
    %v2716 = vmul.f32 %v2691, %v2712
    %v2717 = vmul.f32 %v2693, %v2713
    %2720 = vrot.lane.b32.xlu0 %v2706, 32
    %v2721 = vpop.permute.xlu0 %2720
    %2722 = vrot.lane.b32.xlu0 %v2707, 32
    %v2723 = vpop.permute.xlu0 %2722
    %v2726 = vmul.f32 %v2691, %v2721
    %v2727 = vmul.f32 %v2693, %v2723
    %2730 = vrot.lane.b32.xlu0 %v2726, 32
    %v2731 = vpop.permute.xlu0 %2730
    %2732 = vrot.lane.b32.xlu0 %v2727, 32
    %v2733 = vpop.permute.xlu0 %2732
    %v2736 = vadd.f32 %v2716, %v2731
    %v2737 = vadd.f32 %v2717, %v2733
    %v2740 = vrot.slane %v2563, 1
    %v2741 = vrot.slane %v2564, 1
    %v2744 = vmul.f32 %v2703, %v2740
    %v2745 = vmul.f32 %v2705, %v2741
    %2748 = vrot.lane.b32.xlu0 %v2708, 32
    %v2749 = vpop.permute.xlu0 %2748
    %2750 = vrot.lane.b32.xlu0 %v2709, 32
    %v2751 = vpop.permute.xlu0 %2750
    %v2754 = vmul.f32 %v2703, %v2749
    %v2755 = vmul.f32 %v2705, %v2751
    %2758 = vrot.lane.b32.xlu0 %v2754, 32
    %v2759 = vpop.permute.xlu0 %2758
    %2760 = vrot.lane.b32.xlu0 %v2755, 32
    %v2761 = vpop.permute.xlu0 %2760
    %v2764 = vadd.f32 %v2744, %v2759
    %v2765 = vadd.f32 %v2745, %v2761
    %v2766 = vtanh.pop %v2736
    %v2767 = vtanh.pop %v2737
    %2770 = vrot.lane.b32.xlu0 %v2766, 32
    %v2771 = vpop.permute.xlu0 %2770
    %2772 = vrot.lane.b32.xlu0 %v2767, 32
    %v2773 = vpop.permute.xlu0 %2772
    %v2776 = vmul.f32 %v2691, %v2771
    %v2777 = vmul.f32 %v2693, %v2773
    %v2778 = vtanh.pop %v2764
    %v2779 = vtanh.pop %v2765
    %2782 = vrot.lane.b32.xlu0 %v2778, 32
    %v2783 = vpop.permute.xlu0 %2782
    %2784 = vrot.lane.b32.xlu0 %v2779, 32
    %v2785 = vpop.permute.xlu0 %2784
    %v2788 = vmul.f32 %v2703, %v2783
    %v2789 = vmul.f32 %v2705, %v2785
    %2792 = vrot.lane.b32.xlu0 %v2776, 64
    %v2793 = vpop.permute.xlu0 %2792
    %2794 = vrot.lane.b32.xlu0 %v2777, 64
    %v2795 = vpop.permute.xlu0 %2794
    %2798 = vst.msk [vmem:[#allocation2] sm:$0x8] %vm1092, %v2793
    %2799 = vst.msk [vmem:[#allocation2 + $0x8] sm:$0x8] %vm1092, %v2795
    %2802 = vrot.lane.b32.xlu0 %v2788, 96
    %v2803 = vpop.permute.xlu0 %2802
    %2804 = vrot.lane.b32.xlu0 %v2789, 96
    %v2805 = vpop.permute.xlu0 %2804
    %2808 = vst.msk [vmem:[#allocation2] sm:$0x10] %vm1103, %v2803
    %2809 = vst.msk [vmem:[#allocation2 + $0x8] sm:$0x10] %vm1103, %v2805
    %v2810 = vrot.slane %v2777, 7
    %v2811 = vsel %vm1107, %v2810, %v2776
    %2812 = vrot.lane.b32.xlu0 %v2811, 64
    %v2813 = vpop.permute.xlu0 %2812
    %v2815 = vrot.slane %v2788, 1
    %v2816 = vsel %vm1107, %v2789, %v2815
    %2817 = vrot.lane.b32.xlu0 %v2816, 96
    %v2818 = vpop.permute.xlu0 %2817
    %v2820 = vsel %vm198, %v2813, %v2818
    %v2821 = vpack.c.bf16 %v2820, %v2820
    %v2823 = vshrl.u32 %v2821, 16
    %v2825 = vrot.slane %v2823, 1
    %v2826 = vshll.u32 %v2821, 16
    %v2828 = vrot.slane %v2826, 2
    %v2829 = vor.u32 %v2825, %v2828
    %v2831 = vsel %vm505, %v2829, 0
    %2833 = vmatprep.subr.bf16.mxu0 %v2203
    %2834 = vmatpush1.bf16.msra.mxu0 %v2202
    %2835 = vmatprep.subr.bf16.mxu0 %v2205
    %2836 = vmatpush1.bf16.msra.mxu0 %v2204
    %2837 = vmatprep.subr.bf16.mxu0 %v2207
    %2838 = vmatpush1.bf16.msra.mxu0 %v2206
    %2839 = vmatprep.subr.bf16.mxu0 %v2209
    %2840 = vmatpush1.bf16.msra.mxu0 %v2208
    %2841 = vmatprep.subr.bf16.mxu0 0
    %2842 = vmatpush1.bf16.msra.mxu0 0
    %2843 = vmatprep.subr.bf16.mxu0 0
    %2844 = vmatpush1.bf16.msra.mxu0 0
    %2845 = vmatprep.subr.bf16.mxu0 0
    %2846 = vmatpush1.bf16.msra.mxu0 0
    %2847 = vmatprep.subr.bf16.mxu0 0
    %2848 = vmatpush1.bf16.msra.mxu0 0
    %2849 = vmatprep.subr.bf16.mxu0 0
    %2850 = vmatpush1.bf16.msra.mxu0 0
    %2851 = vmatprep.subr.bf16.mxu0 0
    %2852 = vmatpush1.bf16.msra.mxu0 0
    %2853 = vmatprep.subr.bf16.mxu0 0
    %2854 = vmatpush1.bf16.msra.mxu0 0
    %2855 = vmatprep.subr.bf16.mxu0 0
    %2856 = vmatpush1.bf16.msra.mxu0 0
    %2857 = vmatprep.subr.bf16.mxu0 0
    %2858 = vmatpush1.bf16.msra.mxu0 0
    %2859 = vmatprep.subr.bf16.mxu0 0
    %2860 = vmatpush1.bf16.msra.mxu0 0
    %2861 = vmatprep.subr.bf16.mxu0 0
    %2862 = vmatpush1.bf16.msra.mxu0 0
    %2863 = vmatprep.subr.bf16.mxu0 0
    %2864 = vmatpush1.bf16.msra.mxu0 0
    %2865 = vmatprep.mubr.bf16.mxu0 0
    %2866 = vmatmul.mubr.bf16.gmra.mrb[0].mxu0 %v2831
    %v2867 = vpop.f32.mrb[0].mxu0
    %v2868 = vadd.f32 0.0, %v2867
    %v2869 = vpop.f32.mrb[0].mxu0
    %v2870 = vadd.f32 0.0, %v2869
    %v2871 = vpop.f32.mrb[0].mxu0
    %v2872 = vpop.f32.mrb[0].mxu0
    %2873 = vdwg.mxu0
    %v2875 = vrot.slane %v2868, 4
    %v2876 = vrot.slane %v2868, 5
    %v2879 = vadd.f32 %v2041, %v2875
    %v2880 = vadd.f32 %v2045, %v2876
    %v2882 = vrot.slane %v2870, 5
    %v2883 = vrot.slane %v2870, 6
    %v2886 = vadd.f32 %v2043, %v2882
    %v2887 = vadd.f32 %v2047, %v2883
    %v2888 = vxor.u32 %v2879, 2147483648
    %v2889 = vxor.u32 %v2880, 2147483648
    %v2890 = vmul.f32 %v2888, 1.442695
    %v2891 = vpow.pop %v2890
    %v2892 = vmul.f32 %v2889, 1.442695
    %v2893 = vpow.pop %v2892
    %v2894 = vadd.f32 %v2891, 1.0
    %v2895 = vadd.f32 %v2893, 1.0
    %v2896 = vrcp.pop %v2894
    %v2897 = vmul.f32 1.0, %v2896
    %v2898 = vrcp.pop %v2895
    %v2899 = vmul.f32 1.0, %v2898
    %v2900 = vxor.u32 %v2886, 2147483648
    %v2901 = vxor.u32 %v2887, 2147483648
    %v2902 = vmul.f32 %v2900, 1.442695
    %v2903 = vpow.pop %v2902
    %v2904 = vmul.f32 %v2901, 1.442695
    %v2905 = vpow.pop %v2904
    %v2906 = vadd.f32 %v2903, 1.0
    %v2907 = vadd.f32 %v2905, 1.0
    %v2908 = vrcp.pop %v2906
    %v2909 = vmul.f32 1.0, %v2908
    %v2910 = vrcp.pop %v2907
    %v2911 = vmul.f32 1.0, %v2910
    %v2912 = vtanh.pop %v2879
    %v2913 = vtanh.pop %v2880
    %v2914 = vtanh.pop %v2886
    %v2915 = vtanh.pop %v2887
    %v2918 = vrot.slane %v2736, 7
    %v2919 = vrot.slane %v2737, 7
    %v2922 = vmul.f32 %v2897, %v2918
    %v2923 = vmul.f32 %v2899, %v2919
    %2926 = vrot.lane.b32.xlu0 %v2912, 32
    %v2927 = vpop.permute.xlu0 %2926
    %2928 = vrot.lane.b32.xlu0 %v2913, 32
    %v2929 = vpop.permute.xlu0 %2928
    %v2932 = vmul.f32 %v2897, %v2927
    %v2933 = vmul.f32 %v2899, %v2929
    %2936 = vrot.lane.b32.xlu0 %v2932, 32
    %v2937 = vpop.permute.xlu0 %2936
    %2938 = vrot.lane.b32.xlu0 %v2933, 32
    %v2939 = vpop.permute.xlu0 %2938
    %v2942 = vadd.f32 %v2922, %v2937
    %v2943 = vadd.f32 %v2923, %v2939
    %v2946 = vrot.slane %v2764, 1
    %v2947 = vrot.slane %v2765, 1
    %v2950 = vmul.f32 %v2909, %v2946
    %v2951 = vmul.f32 %v2911, %v2947
    %2954 = vrot.lane.b32.xlu0 %v2914, 32
    %v2955 = vpop.permute.xlu0 %2954
    %2956 = vrot.lane.b32.xlu0 %v2915, 32
    %v2957 = vpop.permute.xlu0 %2956
    %v2960 = vmul.f32 %v2909, %v2955
    %v2961 = vmul.f32 %v2911, %v2957
    %2964 = vrot.lane.b32.xlu0 %v2960, 32
    %v2965 = vpop.permute.xlu0 %2964
    %2966 = vrot.lane.b32.xlu0 %v2961, 32
    %v2967 = vpop.permute.xlu0 %2966
    %v2970 = vadd.f32 %v2950, %v2965
    %v2971 = vadd.f32 %v2951, %v2967
    %v2972 = vtanh.pop %v2942
    %v2973 = vtanh.pop %v2943
    %2976 = vrot.lane.b32.xlu0 %v2972, 32
    %v2977 = vpop.permute.xlu0 %2976
    %2978 = vrot.lane.b32.xlu0 %v2973, 32
    %v2979 = vpop.permute.xlu0 %2978
    %v2982 = vmul.f32 %v2897, %v2977
    %v2983 = vmul.f32 %v2899, %v2979
    %v2984 = vtanh.pop %v2970
    %v2985 = vtanh.pop %v2971
    %2988 = vrot.lane.b32.xlu0 %v2984, 32
    %v2989 = vpop.permute.xlu0 %2988
    %2990 = vrot.lane.b32.xlu0 %v2985, 32
    %v2991 = vpop.permute.xlu0 %2990
    %v2994 = vmul.f32 %v2909, %v2989
    %v2995 = vmul.f32 %v2911, %v2991
    %2998 = vrot.lane.b32.xlu0 %v2982, 64
    %v2999 = vpop.permute.xlu0 %2998
    %3000 = vrot.lane.b32.xlu0 %v2983, 64
    %v3001 = vpop.permute.xlu0 %3000
    %3004 = vst.msk [vmem:[#allocation2] sm:$0x10] %vm1301, %v2999
    %3005 = vst.msk [vmem:[#allocation2 + $0x8] sm:$0x10] %vm1301, %v3001
    %3008 = vrot.lane.b32.xlu0 %v2994, 96
    %v3009 = vpop.permute.xlu0 %3008
    %3010 = vrot.lane.b32.xlu0 %v2995, 96
    %v3011 = vpop.permute.xlu0 %3010
    %3014 = vst.msk [vmem:[#allocation2] sm:$0x8] %vm1312, %v3009
    %3015 = vst.msk [vmem:[#allocation2 + $0x8] sm:$0x8] %vm1312, %v3011
    %v3016 = vrot.slane %v2983, 7
    %v3017 = vsel %vm1316, %v3016, %v2982
    %3018 = vrot.lane.b32.xlu0 %v3017, 64
    %v3019 = vpop.permute.xlu0 %3018
    %v3021 = vrot.slane %v2994, 7
    %v3022 = vrot.slane %v2995, 6
    %v3023 = vsel %vm1316, %v3022, %v3021
    %3024 = vrot.lane.b32.xlu0 %v3023, 96
    %v3025 = vpop.permute.xlu0 %3024
    %v3027 = vsel %vm198, %v3019, %v3025
    %v3028 = vpack.c.bf16 %v3027, %v3027
    %v3030 = vrot.slane %v3028, 2
    %v3032 = vsel %vm505, %v3030, 0
    %3034 = vmatprep.subr.bf16.mxu0 %v2203
    %3035 = vmatpush1.bf16.msra.mxu0 %v2202
    %3036 = vmatprep.subr.bf16.mxu0 %v2205
    %3037 = vmatpush1.bf16.msra.mxu0 %v2204
    %3038 = vmatprep.subr.bf16.mxu0 %v2207
    %3039 = vmatpush1.bf16.msra.mxu0 %v2206
    %3040 = vmatprep.subr.bf16.mxu0 %v2209
    %3041 = vmatpush1.bf16.msra.mxu0 %v2208
    %3042 = vmatprep.subr.bf16.mxu0 0
    %3043 = vmatpush1.bf16.msra.mxu0 0
    %3044 = vmatprep.subr.bf16.mxu0 0
    %3045 = vmatpush1.bf16.msra.mxu0 0
    %3046 = vmatprep.subr.bf16.mxu0 0
    %3047 = vmatpush1.bf16.msra.mxu0 0
    %3048 = vmatprep.subr.bf16.mxu0 0
    %3049 = vmatpush1.bf16.msra.mxu0 0
    %3050 = vmatprep.subr.bf16.mxu0 0
    %3051 = vmatpush1.bf16.msra.mxu0 0
    %3052 = vmatprep.subr.bf16.mxu0 0
    %3053 = vmatpush1.bf16.msra.mxu0 0
    %3054 = vmatprep.subr.bf16.mxu0 0
    %3055 = vmatpush1.bf16.msra.mxu0 0
    %3056 = vmatprep.subr.bf16.mxu0 0
    %3057 = vmatpush1.bf16.msra.mxu0 0
    %3058 = vmatprep.subr.bf16.mxu0 0
    %3059 = vmatpush1.bf16.msra.mxu0 0
    %3060 = vmatprep.subr.bf16.mxu0 0
    %3061 = vmatpush1.bf16.msra.mxu0 0
    %3062 = vmatprep.subr.bf16.mxu0 0
    %3063 = vmatpush1.bf16.msra.mxu0 0
    %3064 = vmatprep.subr.bf16.mxu0 0
    %3065 = vmatpush1.bf16.msra.mxu0 0
    %3066 = vmatprep.mubr.bf16.mxu0 0
    %3067 = vmatmul.mubr.bf16.gmra.mrb[0].mxu0 %v3032
    %v3068 = vpop.f32.mrb[0].mxu0
    %v3069 = vadd.f32 0.0, %v3068
    %v3070 = vpop.f32.mrb[0].mxu0
    %v3071 = vadd.f32 0.0, %v3070
    %v3072 = vpop.f32.mrb[0].mxu0
    %v3073 = vpop.f32.mrb[0].mxu0
    %3074 = vdwg.mxu0
    %v3076 = vrot.slane %v3069, 3
    %v3077 = vrot.slane %v3069, 4
    %v3080 = vadd.f32 %v2041, %v3076
    %v3081 = vadd.f32 %v2045, %v3077
    %v3083 = vrot.slane %v3071, 6
    %v3084 = vrot.slane %v3071, 7
    %v3087 = vadd.f32 %v2043, %v3083
    %v3088 = vadd.f32 %v2047, %v3084
    %v3089 = vxor.u32 %v3080, 2147483648
    %v3090 = vxor.u32 %v3081, 2147483648
    %v3091 = vmul.f32 %v3089, 1.442695
    %v3092 = vpow.pop %v3091
    %v3093 = vmul.f32 %v3090, 1.442695
    %v3094 = vpow.pop %v3093
    %v3095 = vadd.f32 %v3092, 1.0
    %v3096 = vadd.f32 %v3094, 1.0
    %v3097 = vrcp.pop %v3095
    %v3098 = vmul.f32 1.0, %v3097
    %v3099 = vrcp.pop %v3096
    %v3100 = vmul.f32 1.0, %v3099
    %v3101 = vxor.u32 %v3087, 2147483648
    %v3102 = vxor.u32 %v3088, 2147483648
    %v3103 = vmul.f32 %v3101, 1.442695
    %v3104 = vpow.pop %v3103
    %v3105 = vmul.f32 %v3102, 1.442695
    %v3106 = vpow.pop %v3105
    %v3107 = vadd.f32 %v3104, 1.0
    %v3108 = vadd.f32 %v3106, 1.0
    %v3109 = vrcp.pop %v3107
    %v3110 = vmul.f32 1.0, %v3109
    %v3111 = vrcp.pop %v3108
    %v3112 = vmul.f32 1.0, %v3111
    %v3113 = vtanh.pop %v3080
    %v3114 = vtanh.pop %v3081
    %v3115 = vtanh.pop %v3087
    %v3116 = vtanh.pop %v3088
    %v3119 = vrot.slane %v2942, 7
    %v3120 = vrot.slane %v2943, 7
    %v3123 = vmul.f32 %v3098, %v3119
    %v3124 = vmul.f32 %v3100, %v3120
    %3127 = vrot.lane.b32.xlu0 %v3113, 32
    %v3128 = vpop.permute.xlu0 %3127
    %3129 = vrot.lane.b32.xlu0 %v3114, 32
    %v3130 = vpop.permute.xlu0 %3129
    %v3133 = vmul.f32 %v3098, %v3128
    %v3134 = vmul.f32 %v3100, %v3130
    %3137 = vrot.lane.b32.xlu0 %v3133, 32
    %v3138 = vpop.permute.xlu0 %3137
    %3139 = vrot.lane.b32.xlu0 %v3134, 32
    %v3140 = vpop.permute.xlu0 %3139
    %v3143 = vadd.f32 %v3123, %v3138
    %v3144 = vadd.f32 %v3124, %v3140
    %v3147 = vrot.slane %v2970, 1
    %v3148 = vrot.slane %v2971, 1
    %v3151 = vmul.f32 %v3110, %v3147
    %v3152 = vmul.f32 %v3112, %v3148
    %3155 = vrot.lane.b32.xlu0 %v3115, 32
    %v3156 = vpop.permute.xlu0 %3155
    %3157 = vrot.lane.b32.xlu0 %v3116, 32
    %v3158 = vpop.permute.xlu0 %3157
    %v3161 = vmul.f32 %v3110, %v3156
    %v3162 = vmul.f32 %v3112, %v3158
    %3165 = vrot.lane.b32.xlu0 %v3161, 32
    %v3166 = vpop.permute.xlu0 %3165
    %3167 = vrot.lane.b32.xlu0 %v3162, 32
    %v3168 = vpop.permute.xlu0 %3167
    %v3171 = vadd.f32 %v3151, %v3166
    %v3172 = vadd.f32 %v3152, %v3168
    %v3173 = vtanh.pop %v3143
    %v3174 = vtanh.pop %v3144
    %3177 = vrot.lane.b32.xlu0 %v3173, 32
    %v3178 = vpop.permute.xlu0 %3177
    %3179 = vrot.lane.b32.xlu0 %v3174, 32
    %v3180 = vpop.permute.xlu0 %3179
    %v3183 = vmul.f32 %v3098, %v3178
    %v3184 = vmul.f32 %v3100, %v3180
    %v3185 = vtanh.pop %v3171
    %v3186 = vtanh.pop %v3172
    %3189 = vrot.lane.b32.xlu0 %v3185, 32
    %v3190 = vpop.permute.xlu0 %3189
    %3191 = vrot.lane.b32.xlu0 %v3186, 32
    %v3192 = vpop.permute.xlu0 %3191
    %v3195 = vmul.f32 %v3110, %v3190
    %v3196 = vmul.f32 %v3112, %v3192
    %3199 = vrot.lane.b32.xlu0 %v3183, 64
    %v3200 = vpop.permute.xlu0 %3199
    %3201 = vrot.lane.b32.xlu0 %v3184, 64
    %v3202 = vpop.permute.xlu0 %3201
    %3205 = vst.msk [vmem:[#allocation2] sm:$0x20] %vm1505, %v3200
    %3206 = vst.msk [vmem:[#allocation2 + $0x8] sm:$0x20] %vm1505, %v3202
    %3209 = vrot.lane.b32.xlu0 %v3195, 96
    %v3210 = vpop.permute.xlu0 %3209
    %3211 = vrot.lane.b32.xlu0 %v3196, 96
    %v3212 = vpop.permute.xlu0 %3211
    %3215 = vst.msk [vmem:[#allocation2] sm:$0x4] %vm1516, %v3210
    %3216 = vst.msk [vmem:[#allocation2 + $0x8] sm:$0x4] %vm1516, %v3212
    %v3217 = vrot.slane %v3184, 7
    %v3218 = vsel %vm1520, %v3217, %v3183
    %3219 = vrot.lane.b32.xlu0 %v3218, 64
    %v3220 = vpop.permute.xlu0 %3219
    %v3222 = vrot.slane %v3195, 5
    %v3223 = vrot.slane %v3196, 4
    %v3224 = vsel %vm1520, %v3223, %v3222
    %3225 = vrot.lane.b32.xlu0 %v3224, 96
    %v3226 = vpop.permute.xlu0 %3225
    %v3228 = vsel %vm198, %v3220, %v3226
    %v3229 = vpack.c.bf16 %v3228, %v3228
    %v3231 = vshrl.u32 %v3229, 16
    %v3233 = vrot.slane %v3231, 2
    %v3234 = vshll.u32 %v3229, 16
    %v3236 = vrot.slane %v3234, 3
    %v3237 = vor.u32 %v3233, %v3236
    %v3239 = vsel %vm505, %v3237, 0
    %3241 = vmatprep.subr.bf16.mxu0 %v2203
    %3242 = vmatpush1.bf16.msra.mxu0 %v2202
    %3243 = vmatprep.subr.bf16.mxu0 %v2205
    %3244 = vmatpush1.bf16.msra.mxu0 %v2204
    %3245 = vmatprep.subr.bf16.mxu0 %v2207
    %3246 = vmatpush1.bf16.msra.mxu0 %v2206
    %3247 = vmatprep.subr.bf16.mxu0 %v2209
    %3248 = vmatpush1.bf16.msra.mxu0 %v2208
    %3249 = vmatprep.subr.bf16.mxu0 0
    %3250 = vmatpush1.bf16.msra.mxu0 0
    %3251 = vmatprep.subr.bf16.mxu0 0
    %3252 = vmatpush1.bf16.msra.mxu0 0
    %3253 = vmatprep.subr.bf16.mxu0 0
    %3254 = vmatpush1.bf16.msra.mxu0 0
    %3255 = vmatprep.subr.bf16.mxu0 0
    %3256 = vmatpush1.bf16.msra.mxu0 0
    %3257 = vmatprep.subr.bf16.mxu0 0
    %3258 = vmatpush1.bf16.msra.mxu0 0
    %3259 = vmatprep.subr.bf16.mxu0 0
    %3260 = vmatpush1.bf16.msra.mxu0 0
    %3261 = vmatprep.subr.bf16.mxu0 0
    %3262 = vmatpush1.bf16.msra.mxu0 0
    %3263 = vmatprep.subr.bf16.mxu0 0
    %3264 = vmatpush1.bf16.msra.mxu0 0
    %3265 = vmatprep.subr.bf16.mxu0 0
    %3266 = vmatpush1.bf16.msra.mxu0 0
    %3267 = vmatprep.subr.bf16.mxu0 0
    %3268 = vmatpush1.bf16.msra.mxu0 0
    %3269 = vmatprep.subr.bf16.mxu0 0
    %3270 = vmatpush1.bf16.msra.mxu0 0
    %3271 = vmatprep.subr.bf16.mxu0 0
    %3272 = vmatpush1.bf16.msra.mxu0 0
    %3273 = vmatprep.mubr.bf16.mxu0 0
    %3274 = vmatmul.mubr.bf16.gmra.mrb[0].mxu0 %v3239
    %v3275 = vpop.f32.mrb[0].mxu0
    %v3276 = vadd.f32 0.0, %v3275
    %v3277 = vpop.f32.mrb[0].mxu0
    %v3278 = vadd.f32 0.0, %v3277
    %v3279 = vpop.f32.mrb[0].mxu0
    %v3280 = vpop.f32.mrb[0].mxu0
    %3281 = vdwg.mxu0
    %v3283 = vrot.slane %v3276, 2
    %v3284 = vrot.slane %v3276, 3
    %v3287 = vadd.f32 %v2041, %v3283
    %v3288 = vadd.f32 %v2045, %v3284
    %v3290 = vrot.slane %v3278, 7
    %v3293 = vadd.f32 %v2043, %v3290
    %v3294 = vadd.f32 %v2047, %v3278
    %v3295 = vxor.u32 %v3287, 2147483648
    %v3296 = vxor.u32 %v3288, 2147483648
    %v3297 = vmul.f32 %v3295, 1.442695
    %v3298 = vpow.pop %v3297
    %v3299 = vmul.f32 %v3296, 1.442695
    %v3300 = vpow.pop %v3299
    %v3301 = vadd.f32 %v3298, 1.0
    %v3302 = vadd.f32 %v3300, 1.0
    %v3303 = vrcp.pop %v3301
    %v3304 = vmul.f32 1.0, %v3303
    %v3305 = vrcp.pop %v3302
    %v3306 = vmul.f32 1.0, %v3305
    %v3307 = vxor.u32 %v3293, 2147483648
    %v3308 = vxor.u32 %v3294, 2147483648
    %v3309 = vmul.f32 %v3307, 1.442695
    %v3310 = vpow.pop %v3309
    %v3311 = vmul.f32 %v3308, 1.442695
    %v3312 = vpow.pop %v3311
    %v3313 = vadd.f32 %v3310, 1.0
    %v3314 = vadd.f32 %v3312, 1.0
    %v3315 = vrcp.pop %v3313
    %v3316 = vmul.f32 1.0, %v3315
    %v3317 = vrcp.pop %v3314
    %v3318 = vmul.f32 1.0, %v3317
    %v3319 = vtanh.pop %v3287
    %v3320 = vtanh.pop %v3288
    %v3321 = vtanh.pop %v3293
    %v3322 = vtanh.pop %v3294
    %v3325 = vrot.slane %v3143, 7
    %v3326 = vrot.slane %v3144, 7
    %v3329 = vmul.f32 %v3304, %v3325
    %v3330 = vmul.f32 %v3306, %v3326
    %3333 = vrot.lane.b32.xlu0 %v3319, 32
    %v3334 = vpop.permute.xlu0 %3333
    %3335 = vrot.lane.b32.xlu0 %v3320, 32
    %v3336 = vpop.permute.xlu0 %3335
    %v3339 = vmul.f32 %v3304, %v3334
    %v3340 = vmul.f32 %v3306, %v3336
    %3343 = vrot.lane.b32.xlu0 %v3339, 32
    %v3344 = vpop.permute.xlu0 %3343
    %3345 = vrot.lane.b32.xlu0 %v3340, 32
    %v3346 = vpop.permute.xlu0 %3345
    %v3349 = vadd.f32 %v3329, %v3344
    %v3350 = vadd.f32 %v3330, %v3346
    %v3353 = vrot.slane %v3171, 1
    %v3354 = vrot.slane %v3172, 1
    %v3357 = vmul.f32 %v3316, %v3353
    %v3358 = vmul.f32 %v3318, %v3354
    %3361 = vrot.lane.b32.xlu0 %v3321, 32
    %v3362 = vpop.permute.xlu0 %3361
    %3363 = vrot.lane.b32.xlu0 %v3322, 32
    %v3364 = vpop.permute.xlu0 %3363
    %v3367 = vmul.f32 %v3316, %v3362
    %v3368 = vmul.f32 %v3318, %v3364
    %3371 = vrot.lane.b32.xlu0 %v3367, 32
    %v3372 = vpop.permute.xlu0 %3371
    %3373 = vrot.lane.b32.xlu0 %v3368, 32
    %v3374 = vpop.permute.xlu0 %3373
    %v3377 = vadd.f32 %v3357, %v3372
    %v3378 = vadd.f32 %v3358, %v3374
    %v3379 = vtanh.pop %v3349
    %v3380 = vtanh.pop %v3350
    %3383 = vrot.lane.b32.xlu0 %v3379, 32
    %v3384 = vpop.permute.xlu0 %3383
    %3385 = vrot.lane.b32.xlu0 %v3380, 32
    %v3386 = vpop.permute.xlu0 %3385
    %v3389 = vmul.f32 %v3304, %v3384
    %v3390 = vmul.f32 %v3306, %v3386
    %v3391 = vtanh.pop %v3377
    %v3392 = vtanh.pop %v3378
    %3395 = vrot.lane.b32.xlu0 %v3391, 32
    %v3396 = vpop.permute.xlu0 %3395
    %3397 = vrot.lane.b32.xlu0 %v3392, 32
    %v3398 = vpop.permute.xlu0 %3397
    %v3401 = vmul.f32 %v3316, %v3396
    %v3402 = vmul.f32 %v3318, %v3398
    %3405 = vrot.lane.b32.xlu0 %v3389, 64
    %v3406 = vpop.permute.xlu0 %3405
    %3407 = vrot.lane.b32.xlu0 %v3390, 64
    %v3408 = vpop.permute.xlu0 %3407
    %3411 = vst.msk [vmem:[#allocation2] sm:$0x40] %vm1714, %v3406
    %3412 = vst.msk [vmem:[#allocation2 + $0x8] sm:$0x40] %vm1714, %v3408
    %3415 = vrot.lane.b32.xlu0 %v3401, 96
    %v3416 = vpop.permute.xlu0 %3415
    %3417 = vrot.lane.b32.xlu0 %v3402, 96
    %v3418 = vpop.permute.xlu0 %3417
    %3421 = vst.msk [vmem:[#allocation2] sm:$0x2] %vm1725, %v3416
    %3422 = vst.msk [vmem:[#allocation2 + $0x8] sm:$0x2] %vm1725, %v3418
    %v3423 = vrot.slane %v3390, 7
    %v3424 = vsel %vm1729, %v3423, %v3389
    %3425 = vrot.lane.b32.xlu0 %v3424, 64
    %v3426 = vpop.permute.xlu0 %3425
    %v3428 = vrot.slane %v3401, 3
    %v3429 = vrot.slane %v3402, 2
    %v3430 = vsel %vm1729, %v3429, %v3428
    %3431 = vrot.lane.b32.xlu0 %v3430, 96
    %v3432 = vpop.permute.xlu0 %3431
    %v3434 = vsel %vm198, %v3426, %v3432
    %v3435 = vpack.c.bf16 %v3434, %v3434
    %v3437 = vrot.slane %v3435, 3
    %v3439 = vsel %vm505, %v3437, 0
    %3441 = vmatprep.subr.bf16.mxu0 %v2203
    %3442 = vmatpush1.bf16.msra.mxu0 %v2202
    %3443 = vmatprep.subr.bf16.mxu0 %v2205
    %3444 = vmatpush1.bf16.msra.mxu0 %v2204
    %3445 = vmatprep.subr.bf16.mxu0 %v2207
    %3446 = vmatpush1.bf16.msra.mxu0 %v2206
    %3447 = vmatprep.subr.bf16.mxu0 %v2209
    %3448 = vmatpush1.bf16.msra.mxu0 %v2208
    %3449 = vmatprep.subr.bf16.mxu0 0
    %3450 = vmatpush1.bf16.msra.mxu0 0
    %3451 = vmatprep.subr.bf16.mxu0 0
    %3452 = vmatpush1.bf16.msra.mxu0 0
    %3453 = vmatprep.subr.bf16.mxu0 0
    %3454 = vmatpush1.bf16.msra.mxu0 0
    %3455 = vmatprep.subr.bf16.mxu0 0
    %3456 = vmatpush1.bf16.msra.mxu0 0
    %3457 = vmatprep.subr.bf16.mxu0 0
    %3458 = vmatpush1.bf16.msra.mxu0 0
    %3459 = vmatprep.subr.bf16.mxu0 0
    %3460 = vmatpush1.bf16.msra.mxu0 0
    %3461 = vmatprep.subr.bf16.mxu0 0
    %3462 = vmatpush1.bf16.msra.mxu0 0
    %3463 = vmatprep.subr.bf16.mxu0 0
    %3464 = vmatpush1.bf16.msra.mxu0 0
    %3465 = vmatprep.subr.bf16.mxu0 0
    %3466 = vmatpush1.bf16.msra.mxu0 0
    %3467 = vmatprep.subr.bf16.mxu0 0
    %3468 = vmatpush1.bf16.msra.mxu0 0
    %3469 = vmatprep.subr.bf16.mxu0 0
    %3470 = vmatpush1.bf16.msra.mxu0 0
    %3471 = vmatprep.subr.bf16.mxu0 0
    %3472 = vmatpush1.bf16.msra.mxu0 0
    %3473 = vmatprep.mubr.bf16.mxu0 0
    %3474 = vmatmul.mubr.bf16.gmra.mrb[0].mxu0 %v3439
    %v3475 = vpop.f32.mrb[0].mxu0
    %v3476 = vadd.f32 0.0, %v3475
    %v3477 = vpop.f32.mrb[0].mxu0
    %v3478 = vadd.f32 0.0, %v3477
    %v3479 = vpop.f32.mrb[0].mxu0
    %v3480 = vpop.f32.mrb[0].mxu0
    %3481 = vdwg.mxu0
    %v3483 = vrot.slane %v3476, 1
    %v3484 = vrot.slane %v3476, 2
    %v3487 = vadd.f32 %v2041, %v3483
    %v3488 = vadd.f32 %v2045, %v3484
    %v3490 = vrot.slane %v3478, 1
    %v3493 = vadd.f32 %v2043, %v3478
    %v3494 = vadd.f32 %v2047, %v3490
    %v3495 = vxor.u32 %v3487, 2147483648
    %v3496 = vxor.u32 %v3488, 2147483648
    %v3497 = vmul.f32 %v3495, 1.442695
    %v3498 = vpow.pop %v3497
    %v3499 = vmul.f32 %v3496, 1.442695
    %v3500 = vpow.pop %v3499
    %v3501 = vadd.f32 %v3498, 1.0
    %v3502 = vadd.f32 %v3500, 1.0
    %v3503 = vrcp.pop %v3501
    %v3504 = vmul.f32 1.0, %v3503
    %v3505 = vrcp.pop %v3502
    %v3506 = vmul.f32 1.0, %v3505
    %v3507 = vxor.u32 %v3493, 2147483648
    %v3508 = vxor.u32 %v3494, 2147483648
    %v3509 = vmul.f32 %v3507, 1.442695
    %v3510 = vpow.pop %v3509
    %v3511 = vmul.f32 %v3508, 1.442695
    %v3512 = vpow.pop %v3511
    %v3513 = vadd.f32 %v3510, 1.0
    %v3514 = vadd.f32 %v3512, 1.0
    %v3515 = vrcp.pop %v3513
    %v3516 = vmul.f32 1.0, %v3515
    %v3517 = vrcp.pop %v3514
    %v3518 = vmul.f32 1.0, %v3517
    %v3519 = vtanh.pop %v3487
    %v3520 = vtanh.pop %v3488
    %v3521 = vtanh.pop %v3493
    %v3522 = vtanh.pop %v3494
    %v3525 = vrot.slane %v3349, 7
    %v3526 = vrot.slane %v3350, 7
    %v3529 = vmul.f32 %v3504, %v3525
    %v3530 = vmul.f32 %v3506, %v3526
    %3533 = vrot.lane.b32.xlu0 %v3519, 32
    %v3534 = vpop.permute.xlu0 %3533
    %3535 = vrot.lane.b32.xlu0 %v3520, 32
    %v3536 = vpop.permute.xlu0 %3535
    %v3539 = vmul.f32 %v3504, %v3534
    %v3540 = vmul.f32 %v3506, %v3536
    %3543 = vrot.lane.b32.xlu0 %v3539, 32
    %v3544 = vpop.permute.xlu0 %3543
    %3545 = vrot.lane.b32.xlu0 %v3540, 32
    %v3546 = vpop.permute.xlu0 %3545
    %v3549 = vadd.f32 %v3529, %v3544
    %v3550 = vadd.f32 %v3530, %v3546
    %v3553 = vrot.slane %v3377, 1
    %v3554 = vrot.slane %v3378, 1
    %v3557 = vmul.f32 %v3516, %v3553
    %v3558 = vmul.f32 %v3518, %v3554
    %3561 = vrot.lane.b32.xlu0 %v3521, 32
    %v3562 = vpop.permute.xlu0 %3561
    %3563 = vrot.lane.b32.xlu0 %v3522, 32
    %v3564 = vpop.permute.xlu0 %3563
    %v3567 = vmul.f32 %v3516, %v3562
    %v3568 = vmul.f32 %v3518, %v3564
    %3571 = vrot.lane.b32.xlu0 %v3567, 32
    %v3572 = vpop.permute.xlu0 %3571
    %3573 = vrot.lane.b32.xlu0 %v3568, 32
    %v3574 = vpop.permute.xlu0 %3573
    %v3577 = vadd.f32 %v3557, %v3572
    %v3578 = vadd.f32 %v3558, %v3574
    %v3579 = vtanh.pop %v3549
    %v3580 = vtanh.pop %v3550
    %3583 = vrot.lane.b32.xlu0 %v3579, 32
    %v3584 = vpop.permute.xlu0 %3583
    %3585 = vrot.lane.b32.xlu0 %v3580, 32
    %v3586 = vpop.permute.xlu0 %3585
    %v3589 = vmul.f32 %v3504, %v3584
    %v3590 = vmul.f32 %v3506, %v3586
    %v3591 = vtanh.pop %v3577
    %v3592 = vtanh.pop %v3578
    %3595 = vrot.lane.b32.xlu0 %v3591, 32
    %v3596 = vpop.permute.xlu0 %3595
    %3597 = vrot.lane.b32.xlu0 %v3592, 32
    %v3598 = vpop.permute.xlu0 %3597
    %v3601 = vmul.f32 %v3516, %v3596
    %v3602 = vmul.f32 %v3518, %v3598
    %3605 = vrot.lane.b32.xlu0 %v3589, 64
    %v3606 = vpop.permute.xlu0 %3605
    %3607 = vrot.lane.b32.xlu0 %v3590, 64
    %v3608 = vpop.permute.xlu0 %3607
    %3611 = vst.msk [vmem:[#allocation2] sm:$0x80] %vm1917, %v3606
    %3612 = vst.msk [vmem:[#allocation2 + $0x8] sm:$0x80] %vm1917, %v3608
    %3615 = vrot.lane.b32.xlu0 %v3601, 96
    %v3616 = vpop.permute.xlu0 %3615
    %3617 = vrot.lane.b32.xlu0 %v3602, 96
    %v3618 = vpop.permute.xlu0 %3617
    %3621 = vst.msk [vmem:[#allocation2] sm:$0x1] %vm1928, %v3616
    %3622 = vst.msk [vmem:[#allocation2 + $0x8] sm:$0x1] %vm1928, %v3618
    %v3623 = vld [vmem:[#allocation2] sm:$0xff]
    %v3624 = vld [vmem:[#allocation2 + $0x8] sm:$0xff]
    %v3625 = vld [vmem:[%s8] sm:$0xff]
    %v3626 = vld [vmem:[%s8 + $0x8] sm:$0xff]
    %v3627 = vld [vmem:[%s8 + $0x10] sm:$0xff]
    %v3628 = vld [vmem:[%s8 + $0x18] sm:$0xff]
    %v3629 = vld [vmem:[%s8 + $0x20] sm:$0xff]
    %v3630 = vld [vmem:[%s8 + $0x28] sm:$0xff]
    %v3631 = vld [vmem:[%s8 + $0x30] sm:$0xff]
    %v3632 = vld [vmem:[%s8 + $0x38] sm:$0xff]
    %s3633 = scalar_lea.vmem %s2, 5
    %v3634 = vld [vmem:[%s3633] ss:$8 sm:$0x3]
    %v3635 = vld [vmem:[#allocation8] sm:$0xf]
    %v3636 = vld [vmem:[#allocation8 + $0x4] sm:$0xf]
    %v3637 = vld [vmem:[#allocation8 + $0x8] sm:$0xf]
    %v3638 = vld [vmem:[#allocation8 + $0xc] sm:$0xf]
    %v3639 = vld [vmem:[#allocation8 + $0x10] sm:$0xf]
    %v3640 = vld [vmem:[#allocation8 + $0x14] sm:$0xf]
    %v3641 = vld [vmem:[#allocation8 + $0x18] sm:$0xf]
    %v3642 = vld [vmem:[#allocation8 + $0x1c] sm:$0xf]
    %v3643 = vld [vmem:[%s2 + $0x6] ss:$0 sm:$0xff]
    %v3644 = vld [vmem:[%s2 + $0x7] ss:$0 sm:$0xff]
    %v3645 = vld [vmem:[%s2 + $0x10] ss:$0 sm:$0xff]
    %v3646 = vld [vmem:[#allocation9] sm:$0xf]
    %v3647 = vld [vmem:[#allocation9 + $0x4] sm:$0xf]
    %v3648 = vld [vmem:[#allocation9 + $0x8] sm:$0xf]
    %v3649 = vld [vmem:[#allocation9 + $0xc] sm:$0xf]
    %v3650 = vld [vmem:[#allocation9 + $0x10] sm:$0xf]
    %v3651 = vld [vmem:[#allocation9 + $0x14] sm:$0xf]
    %v3652 = vld [vmem:[#allocation9 + $0x18] sm:$0xf]
    %v3653 = vld [vmem:[#allocation9 + $0x1c] sm:$0xf]
    %v3654 = vld [vmem:[%s2 + $0x11] ss:$0 sm:$0xff]
    %v3655 = vld [vmem:[%s11] sm:$0xf]
    %v3656 = vld [vmem:[%s11 + $0x4] sm:$0xf]
    %v3657 = vld [vmem:[%s11 + $0x8] sm:$0xf]
    %v3658 = vld [vmem:[%s11 + $0xc] sm:$0xf]
    %v3659 = vld [vmem:[%s11 + $0x10] sm:$0xf]
    %v3660 = vld [vmem:[%s11 + $0x14] sm:$0xf]
    %v3661 = vld [vmem:[%s11 + $0x18] sm:$0xf]
    %v3662 = vld [vmem:[%s11 + $0x1c] sm:$0xf]
    %v3663 = vld [vmem:[%s11 + $0x20] sm:$0xf]
    %v3664 = vld [vmem:[%s11 + $0x24] sm:$0xf]
    %v3665 = vld [vmem:[%s11 + $0x28] sm:$0xf]
    %v3666 = vld [vmem:[%s11 + $0x2c] sm:$0xf]
    %v3667 = vld [vmem:[%s11 + $0x30] sm:$0xf]
    %v3668 = vld [vmem:[%s11 + $0x34] sm:$0xf]
    %v3669 = vld [vmem:[%s11 + $0x38] sm:$0xf]
    %v3670 = vld [vmem:[%s11 + $0x3c] sm:$0xf]
    %v3671 = vld [vmem:[%s2 + $0x12] ss:$0 sm:$0xff]
    %v3672 = vld [vmem:[%s2 + $0x13] ss:$0 sm:$0xff]
    %v3673 = vld [vmem:[%s2 + $0x14] ss:$0 sm:$0xff]
    %v3674 = vpack.c.bf16 %v3624, %v3623
    %v3676 = vlaneseq
    %v3677 = vshrl.u32 %v3676, 7
    %v3678 = vsub.s32 0, %v3677
    %v3679 = vrot.slane %v3634, %v3678
    %v3680 = vlaneseq
    %v3681 = vshrl.u32 %v3680, 7
    %v3682 = vsub.s32 1, %v3681
    %v3683 = vrot.slane %v3634, %v3682
    %v3694 = vunpack.c.l.b16 %v3625
    %v3695 = vunpack.c.h.b16 %v3625
    %v3696 = vunpack.c.l.b16 %v3626
    %v3697 = vunpack.c.h.b16 %v3626
    %v3698 = vunpack.c.l.b16 %v3627
    %v3699 = vunpack.c.h.b16 %v3627
    %v3700 = vunpack.c.l.b16 %v3628
    %v3701 = vunpack.c.h.b16 %v3628
    %v3702 = vunpack.c.l.b16 %v3629
    %v3703 = vunpack.c.h.b16 %v3629
    %v3704 = vunpack.c.l.b16 %v3630
    %v3705 = vunpack.c.h.b16 %v3630
    %v3706 = vunpack.c.l.b16 %v3631
    %v3707 = vunpack.c.h.b16 %v3631
    %v3708 = vunpack.c.l.b16 %v3632
    %v3709 = vunpack.c.h.b16 %v3632
    %v3710 = vpack.c.b16 %v3696, %v3694
    %v3711 = vpack.c.b16 %v3697, %v3695
    %v3712 = vpack.c.b16 %v3700, %v3698
    %v3713 = vpack.c.b16 %v3701, %v3699
    %v3714 = vpack.c.b16 %v3704, %v3702
    %v3715 = vpack.c.b16 %v3705, %v3703
    %v3716 = vpack.c.b16 %v3708, %v3706
    %v3717 = vpack.c.b16 %v3709, %v3707
    %v3727 = vsel %vm505, %v3674, 0
    %3729 = vmatprep.subr.bf16.mxu0 %v3711
    %3730 = vmatpush1.bf16.msra.mxu0 %v3710
    %3731 = vmatprep.subr.bf16.mxu0 %v3713
    %3732 = vmatpush1.bf16.msra.mxu0 %v3712
    %3733 = vmatprep.subr.bf16.mxu0 %v3715
    %3734 = vmatpush1.bf16.msra.mxu0 %v3714
    %3735 = vmatprep.subr.bf16.mxu0 %v3717
    %3736 = vmatpush1.bf16.msra.mxu0 %v3716
    %3737 = vmatprep.subr.bf16.mxu0 0
    %3738 = vmatpush1.bf16.msra.mxu0 0
    %3739 = vmatprep.subr.bf16.mxu0 0
    %3740 = vmatpush1.bf16.msra.mxu0 0
    %3741 = vmatprep.subr.bf16.mxu0 0
    %3742 = vmatpush1.bf16.msra.mxu0 0
    %3743 = vmatprep.subr.bf16.mxu0 0
    %3744 = vmatpush1.bf16.msra.mxu0 0
    %3745 = vmatprep.subr.bf16.mxu0 0
    %3746 = vmatpush1.bf16.msra.mxu0 0
    %3747 = vmatprep.subr.bf16.mxu0 0
    %3748 = vmatpush1.bf16.msra.mxu0 0
    %3749 = vmatprep.subr.bf16.mxu0 0
    %3750 = vmatpush1.bf16.msra.mxu0 0
    %3751 = vmatprep.subr.bf16.mxu0 0
    %3752 = vmatpush1.bf16.msra.mxu0 0
    %3753 = vmatprep.subr.bf16.mxu0 0
    %3754 = vmatpush1.bf16.msra.mxu0 0
    %3755 = vmatprep.subr.bf16.mxu0 0
    %3756 = vmatpush1.bf16.msra.mxu0 0
    %3757 = vmatprep.subr.bf16.mxu0 0
    %3758 = vmatpush1.bf16.msra.mxu0 0
    %3759 = vmatprep.subr.bf16.mxu0 0
    %3760 = vmatpush1.bf16.msra.mxu0 0
    %3761 = vmatprep.mubr.bf16.mxu0 0
    %3762 = vmatmul.mubr.bf16.gmra.mrb[0].mxu0 %v3727
    %v3763 = vpop.f32.mrb[0].mxu0
    %v3764 = vadd.f32 %v3679, %v3763
    %v3765 = vpop.f32.mrb[0].mxu0
    %v3766 = vadd.f32 %v3683, %v3765
    %v3767 = vpop.f32.mrb[0].mxu0
    %v3768 = vadd.f32 %v3679, %v3767
    %v3769 = vpop.f32.mrb[0].mxu0
    %v3770 = vadd.f32 %v3683, %v3769
    %3771 = vdwg.mxu0
    %v3772 = vpack.c.bf16 %v3764, %v3764
    %v3773 = vpack.c.bf16 %v3768, %v3768
    %3775 = vrot.lane.b32.xlu0 %v3772, 64
    %v3776 = vpop.permute.xlu0 %3775
    %v3778 = vsel %vm151, %v3772, 0
    %v3781 = vsel %vm151, %v3776, 0
    %3783 = vmatprep.subr.bf16.mxu0 0
    %3784 = vmatpush1.bf16.xpose.msra.mxu0 %v3781
    %3785 = vmatprep.subr.bf16.mxu0 0
    %3786 = vmatpush1.bf16.xpose.msra.mxu0 0
    %3787 = vmatprep.subr.bf16.mxu0 0
    %3788 = vmatpush1.bf16.xpose.msra.mxu0 0
    %3789 = vmatprep.subr.bf16.mxu0 0
    %3790 = vmatpush1.bf16.xpose.msra.mxu0 0
    %3791 = vmatprep.subr.bf16.mxu0 0
    %3792 = vmatpush1.bf16.xpose.msra.mxu0 0
    %3793 = vmatprep.subr.bf16.mxu0 0
    %3794 = vmatpush1.bf16.xpose.msra.mxu0 0
    %3795 = vmatprep.subr.bf16.mxu0 0
    %3796 = vmatpush1.bf16.xpose.msra.mxu0 0
    %3797 = vmatprep.subr.bf16.mxu0 0
    %3798 = vmatpush1.bf16.xpose.msra.mxu0 0
    %3799 = vmatprep.subr.bf16.mxu0 0
    %3800 = vmatpush1.bf16.xpose.msra.mxu0 0
    %3801 = vmatprep.subr.bf16.mxu0 0
    %3802 = vmatpush1.bf16.xpose.msra.mxu0 0
    %3803 = vmatprep.subr.bf16.mxu0 0
    %3804 = vmatpush1.bf16.xpose.msra.mxu0 0
    %3805 = vmatprep.subr.bf16.mxu0 0
    %3806 = vmatpush1.bf16.xpose.msra.mxu0 0
    %3807 = vmatprep.subr.bf16.mxu0 0
    %3808 = vmatpush1.bf16.xpose.msra.mxu0 0
    %3809 = vmatprep.subr.bf16.mxu0 0
    %3810 = vmatpush1.bf16.xpose.msra.mxu0 0
    %3811 = vmatprep.subr.bf16.mxu0 0
    %3812 = vmatpush1.bf16.xpose.msra.mxu0 0
    %3813 = vmatprep.subr.bf16.mxu0 0
    %3814 = vmatpush1.bf16.xpose.msra.mxu0 0
    %3815 = vmatprep.mubr.bf16.mxu0 0
    %3816 = vmatmul.mubr.bf16.gmra.mrb[0].mxu0 %v3778
    %v3817 = vpop.f32.mrb[0].mxu0
    %v3818 = vadd.f32 0.0, %v3817
    %v3819 = vpop.f32.mrb[0].mxu0
    %v3820 = vpop.f32.mrb[0].mxu0
    %v3821 = vpop.f32.mrb[0].mxu0
    %3822 = vdwg.mxu0
    %3824 = vrot.lane.b32.xlu0 %v3773, 64
    %v3825 = vpop.permute.xlu0 %3824
    %v3827 = vsel %vm151, %v3773, 0
    %v3830 = vsel %vm151, %v3825, 0
    %3832 = vmatprep.subr.bf16.mxu0 0
    %3833 = vmatpush1.bf16.xpose.msra.mxu0 %v3830
    %3834 = vmatprep.subr.bf16.mxu0 0
    %3835 = vmatpush1.bf16.xpose.msra.mxu0 0
    %3836 = vmatprep.subr.bf16.mxu0 0
    %3837 = vmatpush1.bf16.xpose.msra.mxu0 0
    %3838 = vmatprep.subr.bf16.mxu0 0
    %3839 = vmatpush1.bf16.xpose.msra.mxu0 0
    %3840 = vmatprep.subr.bf16.mxu0 0
    %3841 = vmatpush1.bf16.xpose.msra.mxu0 0
    %3842 = vmatprep.subr.bf16.mxu0 0
    %3843 = vmatpush1.bf16.xpose.msra.mxu0 0
    %3844 = vmatprep.subr.bf16.mxu0 0
    %3845 = vmatpush1.bf16.xpose.msra.mxu0 0
    %3846 = vmatprep.subr.bf16.mxu0 0
    %3847 = vmatpush1.bf16.xpose.msra.mxu0 0
    %3848 = vmatprep.subr.bf16.mxu0 0
    %3849 = vmatpush1.bf16.xpose.msra.mxu0 0
    %3850 = vmatprep.subr.bf16.mxu0 0
    %3851 = vmatpush1.bf16.xpose.msra.mxu0 0
    %3852 = vmatprep.subr.bf16.mxu0 0
    %3853 = vmatpush1.bf16.xpose.msra.mxu0 0
    %3854 = vmatprep.subr.bf16.mxu0 0
    %3855 = vmatpush1.bf16.xpose.msra.mxu0 0
    %3856 = vmatprep.subr.bf16.mxu0 0
    %3857 = vmatpush1.bf16.xpose.msra.mxu0 0
    %3858 = vmatprep.subr.bf16.mxu0 0
    %3859 = vmatpush1.bf16.xpose.msra.mxu0 0
    %3860 = vmatprep.subr.bf16.mxu0 0
    %3861 = vmatpush1.bf16.xpose.msra.mxu0 0
    %3862 = vmatprep.subr.bf16.mxu0 0
    %3863 = vmatpush1.bf16.xpose.msra.mxu0 0
    %3864 = vmatprep.mubr.bf16.mxu0 0
    %3865 = vmatmul.mubr.bf16.gmra.mrb[0].mxu0 %v3827
    %v3866 = vpop.f32.mrb[0].mxu0
    %v3867 = vadd.f32 0.0, %v3866
    %v3868 = vpop.f32.mrb[0].mxu0
    %v3869 = vpop.f32.mrb[0].mxu0
    %v3870 = vpop.f32.mrb[0].mxu0
    %3871 = vdwg.mxu0
    %v3872 = vmul.f32 %v3818, 0.25
    %v3873 = vmul.f32 %v3867, 0.25
    %vm3874 = vcmask 64512
    %v3875 = vsel %vm3874, %v3872, -inf
    %3876 = vmax.xlane.f32.xlu0 %v3875
    %v3877 = vpop.xlane.xlu0 %3876
    %v3878 = vsel %vm3874, %v3873, -inf
    %3879 = vmax.xlane.f32.xlu0 %v3878
    %v3880 = vpop.xlane.xlu0 %3879
    %v3881 = vsub.f32 %v3872, %v3877
    %v3882 = vsub.f32 %v3873, %v3880
    %v3883 = vmul.f32 %v3881, 1.442695
    %v3884 = vpow.pop %v3883
    %v3885 = vmul.f32 %v3882, 1.442695
    %v3886 = vpow.pop %v3885
    %v3887 = vsel %vm3874, %v3884, 0.0
    %3888 = vadd.xlane.f32.xlu0 %v3887
    %v3889 = vpop.xlane.xlu0 %3888
    %v3890 = vsel %vm3874, %v3886, 0.0
    %3891 = vadd.xlane.f32.xlu0 %v3890
    %v3892 = vpop.xlane.xlu0 %3891
    %v3893 = vrcp.pop %v3889
    %v3894 = vrcp.pop %v3892
    %v3895 = vmul.f32 %v3884, %v3893
    %v3896 = vmul.f32 %v3886, %v3894
    %v3897 = vpack.c.bf16 %v3895, %v3895
    %v3898 = vpack.c.bf16 %v3896, %v3896
    %v3899 = vpack.c.bf16 %v3766, %v3766
    %v3900 = vpack.c.bf16 %v3770, %v3770
    %v3902 = vsel %vm3874, %v3897, 0
    %vm3904 = vcmask 1043456
    %v3906 = vsel %vm3904, %v3899, 0
    %3908 = vmatprep.subr.bf16.mxu0 0
    %3909 = vmatpush1.bf16.msra.mxu0 %v3906
    %3910 = vmatprep.subr.bf16.mxu0 0
    %3911 = vmatpush1.bf16.msra.mxu0 0
    %3912 = vmatprep.subr.bf16.mxu0 0
    %3913 = vmatpush1.bf16.msra.mxu0 0
    %3914 = vmatprep.subr.bf16.mxu0 0
    %3915 = vmatpush1.bf16.msra.mxu0 0
    %3916 = vmatprep.subr.bf16.mxu0 0
    %3917 = vmatpush1.bf16.msra.mxu0 0
    %3918 = vmatprep.subr.bf16.mxu0 0
    %3919 = vmatpush1.bf16.msra.mxu0 0
    %3920 = vmatprep.subr.bf16.mxu0 0
    %3921 = vmatpush1.bf16.msra.mxu0 0
    %3922 = vmatprep.subr.bf16.mxu0 0
    %3923 = vmatpush1.bf16.msra.mxu0 0
    %3924 = vmatprep.subr.bf16.mxu0 0
    %3925 = vmatpush1.bf16.msra.mxu0 0
    %3926 = vmatprep.subr.bf16.mxu0 0
    %3927 = vmatpush1.bf16.msra.mxu0 0
    %3928 = vmatprep.subr.bf16.mxu0 0
    %3929 = vmatpush1.bf16.msra.mxu0 0
    %3930 = vmatprep.subr.bf16.mxu0 0
    %3931 = vmatpush1.bf16.msra.mxu0 0
    %3932 = vmatprep.subr.bf16.mxu0 0
    %3933 = vmatpush1.bf16.msra.mxu0 0
    %3934 = vmatprep.subr.bf16.mxu0 0
    %3935 = vmatpush1.bf16.msra.mxu0 0
    %3936 = vmatprep.subr.bf16.mxu0 0
    %3937 = vmatpush1.bf16.msra.mxu0 0
    %3938 = vmatprep.subr.bf16.mxu0 0
    %3939 = vmatpush1.bf16.msra.mxu0 0
    %3940 = vmatprep.mubr.bf16.mxu0 0
    %3941 = vmatmul.mubr.bf16.gmra.mrb[0].mxu0 %v3902
    %v3942 = vpop.f32.mrb[0].mxu0
    %v3943 = vadd.f32 0.0, %v3942
    %v3944 = vpop.f32.mrb[0].mxu0
    %v3945 = vpop.f32.mrb[0].mxu0
    %v3946 = vpop.f32.mrb[0].mxu0
    %3947 = vdwg.mxu0
    %v3949 = vsel %vm3874, %v3898, 0
    %v3952 = vsel %vm3904, %v3900, 0
    %3954 = vmatprep.subr.bf16.mxu0 0
    %3955 = vmatpush1.bf16.msra.mxu0 %v3952
    %3956 = vmatprep.subr.bf16.mxu0 0
    %3957 = vmatpush1.bf16.msra.mxu0 0
    %3958 = vmatprep.subr.bf16.mxu0 0
    %3959 = vmatpush1.bf16.msra.mxu0 0
    %3960 = vmatprep.subr.bf16.mxu0 0
    %3961 = vmatpush1.bf16.msra.mxu0 0
    %3962 = vmatprep.subr.bf16.mxu0 0
    %3963 = vmatpush1.bf16.msra.mxu0 0
    %3964 = vmatprep.subr.bf16.mxu0 0
    %3965 = vmatpush1.bf16.msra.mxu0 0
    %3966 = vmatprep.subr.bf16.mxu0 0
    %3967 = vmatpush1.bf16.msra.mxu0 0
    %3968 = vmatprep.subr.bf16.mxu0 0
    %3969 = vmatpush1.bf16.msra.mxu0 0
    %3970 = vmatprep.subr.bf16.mxu0 0
    %3971 = vmatpush1.bf16.msra.mxu0 0
    %3972 = vmatprep.subr.bf16.mxu0 0
    %3973 = vmatpush1.bf16.msra.mxu0 0
    %3974 = vmatprep.subr.bf16.mxu0 0
    %3975 = vmatpush1.bf16.msra.mxu0 0
    %3976 = vmatprep.subr.bf16.mxu0 0
    %3977 = vmatpush1.bf16.msra.mxu0 0
    %3978 = vmatprep.subr.bf16.mxu0 0
    %3979 = vmatpush1.bf16.msra.mxu0 0
    %3980 = vmatprep.subr.bf16.mxu0 0
    %3981 = vmatpush1.bf16.msra.mxu0 0
    %3982 = vmatprep.subr.bf16.mxu0 0
    %3983 = vmatpush1.bf16.msra.mxu0 0
    %3984 = vmatprep.subr.bf16.mxu0 0
    %3985 = vmatpush1.bf16.msra.mxu0 0
    %3986 = vmatprep.mubr.bf16.mxu0 0
    %3987 = vmatmul.mubr.bf16.gmra.mrb[0].mxu0 %v3949
    %v3988 = vpop.f32.mrb[0].mxu0
    %v3989 = vadd.f32 0.0, %v3988
    %v3990 = vpop.f32.mrb[0].mxu0
    %v3991 = vpop.f32.mrb[0].mxu0
    %v3992 = vpop.f32.mrb[0].mxu0
    %3993 = vdwg.mxu0
    %3994 = vst.msk [vmem:[#allocation3] sm:$0xff] %vm151, %v3943
    %3995 = vst.msk [vmem:[#allocation3 + $0x8] sm:$0xff] %vm151, %v3989
    %3996 = vrot.lane.b32.xlu0 %v3772, 112
    %v3997 = vpop.permute.xlu0 %3996
    %3998 = vrot.lane.b32.xlu0 %v3772, 48
    %v3999 = vpop.permute.xlu0 %3998
    %v4001 = vsel %vm151, %v3997, 0
    %v4004 = vsel %vm151, %v3999, 0
    %4006 = vmatprep.subr.bf16.mxu0 0
    %4007 = vmatpush1.bf16.xpose.msra.mxu0 %v4004
    %4008 = vmatprep.subr.bf16.mxu0 0
    %4009 = vmatpush1.bf16.xpose.msra.mxu0 0
    %4010 = vmatprep.subr.bf16.mxu0 0
    %4011 = vmatpush1.bf16.xpose.msra.mxu0 0
    %4012 = vmatprep.subr.bf16.mxu0 0
    %4013 = vmatpush1.bf16.xpose.msra.mxu0 0
    %4014 = vmatprep.subr.bf16.mxu0 0
    %4015 = vmatpush1.bf16.xpose.msra.mxu0 0
    %4016 = vmatprep.subr.bf16.mxu0 0
    %4017 = vmatpush1.bf16.xpose.msra.mxu0 0
    %4018 = vmatprep.subr.bf16.mxu0 0
    %4019 = vmatpush1.bf16.xpose.msra.mxu0 0
    %4020 = vmatprep.subr.bf16.mxu0 0
    %4021 = vmatpush1.bf16.xpose.msra.mxu0 0
    %4022 = vmatprep.subr.bf16.mxu0 0
    %4023 = vmatpush1.bf16.xpose.msra.mxu0 0
    %4024 = vmatprep.subr.bf16.mxu0 0
    %4025 = vmatpush1.bf16.xpose.msra.mxu0 0
    %4026 = vmatprep.subr.bf16.mxu0 0
    %4027 = vmatpush1.bf16.xpose.msra.mxu0 0
    %4028 = vmatprep.subr.bf16.mxu0 0
    %4029 = vmatpush1.bf16.xpose.msra.mxu0 0
    %4030 = vmatprep.subr.bf16.mxu0 0
    %4031 = vmatpush1.bf16.xpose.msra.mxu0 0
    %4032 = vmatprep.subr.bf16.mxu0 0
    %4033 = vmatpush1.bf16.xpose.msra.mxu0 0
    %4034 = vmatprep.subr.bf16.mxu0 0
    %4035 = vmatpush1.bf16.xpose.msra.mxu0 0
    %4036 = vmatprep.subr.bf16.mxu0 0
    %4037 = vmatpush1.bf16.xpose.msra.mxu0 0
    %4038 = vmatprep.mubr.bf16.mxu0 0
    %4039 = vmatmul.mubr.bf16.gmra.mrb[0].mxu0 %v4001
    %v4040 = vpop.f32.mrb[0].mxu0
    %v4041 = vadd.f32 0.0, %v4040
    %v4042 = vpop.f32.mrb[0].mxu0
    %v4043 = vpop.f32.mrb[0].mxu0
    %v4044 = vpop.f32.mrb[0].mxu0
    %4045 = vdwg.mxu0
    %4046 = vrot.lane.b32.xlu0 %v3773, 112
    %v4047 = vpop.permute.xlu0 %4046
    %4048 = vrot.lane.b32.xlu0 %v3773, 48
    %v4049 = vpop.permute.xlu0 %4048
    %v4051 = vsel %vm151, %v4047, 0
    %v4054 = vsel %vm151, %v4049, 0
    %4056 = vmatprep.subr.bf16.mxu0 0
    %4057 = vmatpush1.bf16.xpose.msra.mxu0 %v4054
    %4058 = vmatprep.subr.bf16.mxu0 0
    %4059 = vmatpush1.bf16.xpose.msra.mxu0 0
    %4060 = vmatprep.subr.bf16.mxu0 0
    %4061 = vmatpush1.bf16.xpose.msra.mxu0 0
    %4062 = vmatprep.subr.bf16.mxu0 0
    %4063 = vmatpush1.bf16.xpose.msra.mxu0 0
    %4064 = vmatprep.subr.bf16.mxu0 0
    %4065 = vmatpush1.bf16.xpose.msra.mxu0 0
    %4066 = vmatprep.subr.bf16.mxu0 0
    %4067 = vmatpush1.bf16.xpose.msra.mxu0 0
    %4068 = vmatprep.subr.bf16.mxu0 0
    %4069 = vmatpush1.bf16.xpose.msra.mxu0 0
    %4070 = vmatprep.subr.bf16.mxu0 0
    %4071 = vmatpush1.bf16.xpose.msra.mxu0 0
    %4072 = vmatprep.subr.bf16.mxu0 0
    %4073 = vmatpush1.bf16.xpose.msra.mxu0 0
    %4074 = vmatprep.subr.bf16.mxu0 0
    %4075 = vmatpush1.bf16.xpose.msra.mxu0 0
    %4076 = vmatprep.subr.bf16.mxu0 0
    %4077 = vmatpush1.bf16.xpose.msra.mxu0 0
    %4078 = vmatprep.subr.bf16.mxu0 0
    %4079 = vmatpush1.bf16.xpose.msra.mxu0 0
    %4080 = vmatprep.subr.bf16.mxu0 0
    %4081 = vmatpush1.bf16.xpose.msra.mxu0 0
    %4082 = vmatprep.subr.bf16.mxu0 0
    %4083 = vmatpush1.bf16.xpose.msra.mxu0 0
    %4084 = vmatprep.subr.bf16.mxu0 0
    %4085 = vmatpush1.bf16.xpose.msra.mxu0 0
    %4086 = vmatprep.subr.bf16.mxu0 0
    %4087 = vmatpush1.bf16.xpose.msra.mxu0 0
    %4088 = vmatprep.mubr.bf16.mxu0 0
    %4089 = vmatmul.mubr.bf16.gmra.mrb[0].mxu0 %v4051
    %v4090 = vpop.f32.mrb[0].mxu0
    %v4091 = vadd.f32 0.0, %v4090
    %v4092 = vpop.f32.mrb[0].mxu0
    %v4093 = vpop.f32.mrb[0].mxu0
    %v4094 = vpop.f32.mrb[0].mxu0
    %4095 = vdwg.mxu0
    %v4096 = vmul.f32 %v4041, 0.25
    %v4097 = vmul.f32 %v4091, 0.25
    %v4098 = vsel %vm3874, %v4096, -inf
    %4099 = vmax.xlane.f32.xlu0 %v4098
    %v4100 = vpop.xlane.xlu0 %4099
    %v4101 = vsel %vm3874, %v4097, -inf
    %4102 = vmax.xlane.f32.xlu0 %v4101
    %v4103 = vpop.xlane.xlu0 %4102
    %v4104 = vsub.f32 %v4096, %v4100
    %v4105 = vsub.f32 %v4097, %v4103
    %v4106 = vmul.f32 %v4104, 1.442695
    %v4107 = vpow.pop %v4106
    %v4108 = vmul.f32 %v4105, 1.442695
    %v4109 = vpow.pop %v4108
    %v4110 = vsel %vm3874, %v4107, 0.0
    %4111 = vadd.xlane.f32.xlu0 %v4110
    %v4112 = vpop.xlane.xlu0 %4111
    %v4113 = vsel %vm3874, %v4109, 0.0
    %4114 = vadd.xlane.f32.xlu0 %v4113
    %v4115 = vpop.xlane.xlu0 %4114
    %v4116 = vrcp.pop %v4112
    %v4117 = vrcp.pop %v4115
    %v4118 = vmul.f32 %v4107, %v4116
    %v4119 = vmul.f32 %v4109, %v4117
    %v4120 = vpack.c.bf16 %v4118, %v4118
    %v4121 = vpack.c.bf16 %v4119, %v4119
    %4123 = vrot.lane.b32.xlu0 %v3899, 112
    %v4124 = vpop.permute.xlu0 %4123
    %v4126 = vsel %vm3874, %v4120, 0
    %v4129 = vsel %vm3904, %v4124, 0
    %4131 = vmatprep.subr.bf16.mxu0 0
    %4132 = vmatpush1.bf16.msra.mxu0 %v4129
    %4133 = vmatprep.subr.bf16.mxu0 0
    %4134 = vmatpush1.bf16.msra.mxu0 0
    %4135 = vmatprep.subr.bf16.mxu0 0
    %4136 = vmatpush1.bf16.msra.mxu0 0
    %4137 = vmatprep.subr.bf16.mxu0 0
    %4138 = vmatpush1.bf16.msra.mxu0 0
    %4139 = vmatprep.subr.bf16.mxu0 0
    %4140 = vmatpush1.bf16.msra.mxu0 0
    %4141 = vmatprep.subr.bf16.mxu0 0
    %4142 = vmatpush1.bf16.msra.mxu0 0
    %4143 = vmatprep.subr.bf16.mxu0 0
    %4144 = vmatpush1.bf16.msra.mxu0 0
    %4145 = vmatprep.subr.bf16.mxu0 0
    %4146 = vmatpush1.bf16.msra.mxu0 0
    %4147 = vmatprep.subr.bf16.mxu0 0
    %4148 = vmatpush1.bf16.msra.mxu0 0
    %4149 = vmatprep.subr.bf16.mxu0 0
    %4150 = vmatpush1.bf16.msra.mxu0 0
    %4151 = vmatprep.subr.bf16.mxu0 0
    %4152 = vmatpush1.bf16.msra.mxu0 0
    %4153 = vmatprep.subr.bf16.mxu0 0
    %4154 = vmatpush1.bf16.msra.mxu0 0
    %4155 = vmatprep.subr.bf16.mxu0 0
    %4156 = vmatpush1.bf16.msra.mxu0 0
    %4157 = vmatprep.subr.bf16.mxu0 0
    %4158 = vmatpush1.bf16.msra.mxu0 0
    %4159 = vmatprep.subr.bf16.mxu0 0
    %4160 = vmatpush1.bf16.msra.mxu0 0
    %4161 = vmatprep.subr.bf16.mxu0 0
    %4162 = vmatpush1.bf16.msra.mxu0 0
    %4163 = vmatprep.mubr.bf16.mxu0 0
    %4164 = vmatmul.mubr.bf16.gmra.mrb[0].mxu0 %v4126
    %v4165 = vpop.f32.mrb[0].mxu0
    %v4166 = vadd.f32 0.0, %v4165
    %v4167 = vpop.f32.mrb[0].mxu0
    %v4168 = vpop.f32.mrb[0].mxu0
    %v4169 = vpop.f32.mrb[0].mxu0
    %4170 = vdwg.mxu0
    %4172 = vrot.lane.b32.xlu0 %v3900, 112
    %v4173 = vpop.permute.xlu0 %4172
    %v4175 = vsel %vm3874, %v4121, 0
    %v4178 = vsel %vm3904, %v4173, 0
    %4180 = vmatprep.subr.bf16.mxu0 0
    %4181 = vmatpush1.bf16.msra.mxu0 %v4178
    %4182 = vmatprep.subr.bf16.mxu0 0
    %4183 = vmatpush1.bf16.msra.mxu0 0
    %4184 = vmatprep.subr.bf16.mxu0 0
    %4185 = vmatpush1.bf16.msra.mxu0 0
    %4186 = vmatprep.subr.bf16.mxu0 0
    %4187 = vmatpush1.bf16.msra.mxu0 0
    %4188 = vmatprep.subr.bf16.mxu0 0
    %4189 = vmatpush1.bf16.msra.mxu0 0
    %4190 = vmatprep.subr.bf16.mxu0 0
    %4191 = vmatpush1.bf16.msra.mxu0 0
    %4192 = vmatprep.subr.bf16.mxu0 0
    %4193 = vmatpush1.bf16.msra.mxu0 0
    %4194 = vmatprep.subr.bf16.mxu0 0
    %4195 = vmatpush1.bf16.msra.mxu0 0
    %4196 = vmatprep.subr.bf16.mxu0 0
    %4197 = vmatpush1.bf16.msra.mxu0 0
    %4198 = vmatprep.subr.bf16.mxu0 0
    %4199 = vmatpush1.bf16.msra.mxu0 0
    %4200 = vmatprep.subr.bf16.mxu0 0
    %4201 = vmatpush1.bf16.msra.mxu0 0
    %4202 = vmatprep.subr.bf16.mxu0 0
    %4203 = vmatpush1.bf16.msra.mxu0 0
    %4204 = vmatprep.subr.bf16.mxu0 0
    %4205 = vmatpush1.bf16.msra.mxu0 0
    %4206 = vmatprep.subr.bf16.mxu0 0
    %4207 = vmatpush1.bf16.msra.mxu0 0
    %4208 = vmatprep.subr.bf16.mxu0 0
    %4209 = vmatpush1.bf16.msra.mxu0 0
    %4210 = vmatprep.subr.bf16.mxu0 0
    %4211 = vmatpush1.bf16.msra.mxu0 0
    %4212 = vmatprep.mubr.bf16.mxu0 0
    %4213 = vmatmul.mubr.bf16.gmra.mrb[0].mxu0 %v4175
    %v4214 = vpop.f32.mrb[0].mxu0
    %v4215 = vadd.f32 0.0, %v4214
    %v4216 = vpop.f32.mrb[0].mxu0
    %v4217 = vpop.f32.mrb[0].mxu0
    %v4218 = vpop.f32.mrb[0].mxu0
    %4219 = vdwg.mxu0
    %4222 = vrot.lane.b32.xlu0 %v4166, 16
    %v4223 = vpop.permute.xlu0 %4222
    %4224 = vrot.lane.b32.xlu0 %v4215, 16
    %v4225 = vpop.permute.xlu0 %4224
    %vm4228 = vcmask 261248
    %4229 = vst.msk [vmem:[#allocation3] sm:$0xff] %vm4228, %v4223
    %4230 = vst.msk [vmem:[#allocation3 + $0x8] sm:$0xff] %vm4228, %v4225
    %4231 = vrot.lane.b32.xlu0 %v3772, 96
    %v4232 = vpop.permute.xlu0 %4231
    %4233 = vrot.lane.b32.xlu0 %v3772, 32
    %v4234 = vpop.permute.xlu0 %4233
    %v4236 = vsel %vm151, %v4232, 0
    %v4239 = vsel %vm151, %v4234, 0
    %4241 = vmatprep.subr.bf16.mxu0 0
    %4242 = vmatpush1.bf16.xpose.msra.mxu0 %v4239
    %4243 = vmatprep.subr.bf16.mxu0 0
    %4244 = vmatpush1.bf16.xpose.msra.mxu0 0
    %4245 = vmatprep.subr.bf16.mxu0 0
    %4246 = vmatpush1.bf16.xpose.msra.mxu0 0
    %4247 = vmatprep.subr.bf16.mxu0 0
    %4248 = vmatpush1.bf16.xpose.msra.mxu0 0
    %4249 = vmatprep.subr.bf16.mxu0 0
    %4250 = vmatpush1.bf16.xpose.msra.mxu0 0
    %4251 = vmatprep.subr.bf16.mxu0 0
    %4252 = vmatpush1.bf16.xpose.msra.mxu0 0
    %4253 = vmatprep.subr.bf16.mxu0 0
    %4254 = vmatpush1.bf16.xpose.msra.mxu0 0
    %4255 = vmatprep.subr.bf16.mxu0 0
    %4256 = vmatpush1.bf16.xpose.msra.mxu0 0
    %4257 = vmatprep.subr.bf16.mxu0 0
    %4258 = vmatpush1.bf16.xpose.msra.mxu0 0
    %4259 = vmatprep.subr.bf16.mxu0 0
    %4260 = vmatpush1.bf16.xpose.msra.mxu0 0
    %4261 = vmatprep.subr.bf16.mxu0 0
    %4262 = vmatpush1.bf16.xpose.msra.mxu0 0
    %4263 = vmatprep.subr.bf16.mxu0 0
    %4264 = vmatpush1.bf16.xpose.msra.mxu0 0
    %4265 = vmatprep.subr.bf16.mxu0 0
    %4266 = vmatpush1.bf16.xpose.msra.mxu0 0
    %4267 = vmatprep.subr.bf16.mxu0 0
    %4268 = vmatpush1.bf16.xpose.msra.mxu0 0
    %4269 = vmatprep.subr.bf16.mxu0 0
    %4270 = vmatpush1.bf16.xpose.msra.mxu0 0
    %4271 = vmatprep.subr.bf16.mxu0 0
    %4272 = vmatpush1.bf16.xpose.msra.mxu0 0
    %4273 = vmatprep.mubr.bf16.mxu0 0
    %4274 = vmatmul.mubr.bf16.gmra.mrb[0].mxu0 %v4236
    %v4275 = vpop.f32.mrb[0].mxu0
    %v4276 = vadd.f32 0.0, %v4275
    %v4277 = vpop.f32.mrb[0].mxu0
    %v4278 = vpop.f32.mrb[0].mxu0
    %v4279 = vpop.f32.mrb[0].mxu0
    %4280 = vdwg.mxu0
    %4281 = vrot.lane.b32.xlu0 %v3773, 96
    %v4282 = vpop.permute.xlu0 %4281
    %4283 = vrot.lane.b32.xlu0 %v3773, 32
    %v4284 = vpop.permute.xlu0 %4283
    %v4286 = vsel %vm151, %v4282, 0
    %v4289 = vsel %vm151, %v4284, 0
    %4291 = vmatprep.subr.bf16.mxu0 0
    %4292 = vmatpush1.bf16.xpose.msra.mxu0 %v4289
    %4293 = vmatprep.subr.bf16.mxu0 0
    %4294 = vmatpush1.bf16.xpose.msra.mxu0 0
    %4295 = vmatprep.subr.bf16.mxu0 0
    %4296 = vmatpush1.bf16.xpose.msra.mxu0 0
    %4297 = vmatprep.subr.bf16.mxu0 0
    %4298 = vmatpush1.bf16.xpose.msra.mxu0 0
    %4299 = vmatprep.subr.bf16.mxu0 0
    %4300 = vmatpush1.bf16.xpose.msra.mxu0 0
    %4301 = vmatprep.subr.bf16.mxu0 0
    %4302 = vmatpush1.bf16.xpose.msra.mxu0 0
    %4303 = vmatprep.subr.bf16.mxu0 0
    %4304 = vmatpush1.bf16.xpose.msra.mxu0 0
    %4305 = vmatprep.subr.bf16.mxu0 0
    %4306 = vmatpush1.bf16.xpose.msra.mxu0 0
    %4307 = vmatprep.subr.bf16.mxu0 0
    %4308 = vmatpush1.bf16.xpose.msra.mxu0 0
    %4309 = vmatprep.subr.bf16.mxu0 0
    %4310 = vmatpush1.bf16.xpose.msra.mxu0 0
    %4311 = vmatprep.subr.bf16.mxu0 0
    %4312 = vmatpush1.bf16.xpose.msra.mxu0 0
    %4313 = vmatprep.subr.bf16.mxu0 0
    %4314 = vmatpush1.bf16.xpose.msra.mxu0 0
    %4315 = vmatprep.subr.bf16.mxu0 0
    %4316 = vmatpush1.bf16.xpose.msra.mxu0 0
    %4317 = vmatprep.subr.bf16.mxu0 0
    %4318 = vmatpush1.bf16.xpose.msra.mxu0 0
    %4319 = vmatprep.subr.bf16.mxu0 0
    %4320 = vmatpush1.bf16.xpose.msra.mxu0 0
    %4321 = vmatprep.subr.bf16.mxu0 0
    %4322 = vmatpush1.bf16.xpose.msra.mxu0 0
    %4323 = vmatprep.mubr.bf16.mxu0 0
    %4324 = vmatmul.mubr.bf16.gmra.mrb[0].mxu0 %v4286
    %v4325 = vpop.f32.mrb[0].mxu0
    %v4326 = vadd.f32 0.0, %v4325
    %v4327 = vpop.f32.mrb[0].mxu0
    %v4328 = vpop.f32.mrb[0].mxu0
    %v4329 = vpop.f32.mrb[0].mxu0
    %4330 = vdwg.mxu0
    %v4331 = vmul.f32 %v4276, 0.25
    %v4332 = vmul.f32 %v4326, 0.25
    %v4333 = vsel %vm3874, %v4331, -inf
    %4334 = vmax.xlane.f32.xlu0 %v4333
    %v4335 = vpop.xlane.xlu0 %4334
    %v4336 = vsel %vm3874, %v4332, -inf
    %4337 = vmax.xlane.f32.xlu0 %v4336
    %v4338 = vpop.xlane.xlu0 %4337
    %v4339 = vsub.f32 %v4331, %v4335
    %v4340 = vsub.f32 %v4332, %v4338
    %v4341 = vmul.f32 %v4339, 1.442695
    %v4342 = vpow.pop %v4341
    %v4343 = vmul.f32 %v4340, 1.442695
    %v4344 = vpow.pop %v4343
    %v4345 = vsel %vm3874, %v4342, 0.0
    %4346 = vadd.xlane.f32.xlu0 %v4345
    %v4347 = vpop.xlane.xlu0 %4346
    %v4348 = vsel %vm3874, %v4344, 0.0
    %4349 = vadd.xlane.f32.xlu0 %v4348
    %v4350 = vpop.xlane.xlu0 %4349
    %v4351 = vrcp.pop %v4347
    %v4352 = vrcp.pop %v4350
    %v4353 = vmul.f32 %v4342, %v4351
    %v4354 = vmul.f32 %v4344, %v4352
    %v4355 = vpack.c.bf16 %v4353, %v4353
    %v4356 = vpack.c.bf16 %v4354, %v4354
    %4357 = vrot.lane.b32.xlu0 %v3899, 96
    %v4358 = vpop.permute.xlu0 %4357
    %v4360 = vsel %vm3874, %v4355, 0
    %v4363 = vsel %vm3904, %v4358, 0
    %4365 = vmatprep.subr.bf16.mxu0 0
    %4366 = vmatpush1.bf16.msra.mxu0 %v4363
    %4367 = vmatprep.subr.bf16.mxu0 0
    %4368 = vmatpush1.bf16.msra.mxu0 0
    %4369 = vmatprep.subr.bf16.mxu0 0
    %4370 = vmatpush1.bf16.msra.mxu0 0
    %4371 = vmatprep.subr.bf16.mxu0 0
    %4372 = vmatpush1.bf16.msra.mxu0 0
    %4373 = vmatprep.subr.bf16.mxu0 0
    %4374 = vmatpush1.bf16.msra.mxu0 0
    %4375 = vmatprep.subr.bf16.mxu0 0
    %4376 = vmatpush1.bf16.msra.mxu0 0
    %4377 = vmatprep.subr.bf16.mxu0 0
    %4378 = vmatpush1.bf16.msra.mxu0 0
    %4379 = vmatprep.subr.bf16.mxu0 0
    %4380 = vmatpush1.bf16.msra.mxu0 0
    %4381 = vmatprep.subr.bf16.mxu0 0
    %4382 = vmatpush1.bf16.msra.mxu0 0
    %4383 = vmatprep.subr.bf16.mxu0 0
    %4384 = vmatpush1.bf16.msra.mxu0 0
    %4385 = vmatprep.subr.bf16.mxu0 0
    %4386 = vmatpush1.bf16.msra.mxu0 0
    %4387 = vmatprep.subr.bf16.mxu0 0
    %4388 = vmatpush1.bf16.msra.mxu0 0
    %4389 = vmatprep.subr.bf16.mxu0 0
    %4390 = vmatpush1.bf16.msra.mxu0 0
    %4391 = vmatprep.subr.bf16.mxu0 0
    %4392 = vmatpush1.bf16.msra.mxu0 0
    %4393 = vmatprep.subr.bf16.mxu0 0
    %4394 = vmatpush1.bf16.msra.mxu0 0
    %4395 = vmatprep.subr.bf16.mxu0 0
    %4396 = vmatpush1.bf16.msra.mxu0 0
    %4397 = vmatprep.mubr.bf16.mxu0 0
    %4398 = vmatmul.mubr.bf16.gmra.mrb[0].mxu0 %v4360
    %v4399 = vpop.f32.mrb[0].mxu0
    %v4400 = vadd.f32 0.0, %v4399
    %v4401 = vpop.f32.mrb[0].mxu0
    %v4402 = vpop.f32.mrb[0].mxu0
    %v4403 = vpop.f32.mrb[0].mxu0
    %4404 = vdwg.mxu0
    %4405 = vrot.lane.b32.xlu0 %v3900, 96
    %v4406 = vpop.permute.xlu0 %4405
    %v4408 = vsel %vm3874, %v4356, 0
    %v4411 = vsel %vm3904, %v4406, 0
    %4413 = vmatprep.subr.bf16.mxu0 0
    %4414 = vmatpush1.bf16.msra.mxu0 %v4411
    %4415 = vmatprep.subr.bf16.mxu0 0
    %4416 = vmatpush1.bf16.msra.mxu0 0
    %4417 = vmatprep.subr.bf16.mxu0 0
    %4418 = vmatpush1.bf16.msra.mxu0 0
    %4419 = vmatprep.subr.bf16.mxu0 0
    %4420 = vmatpush1.bf16.msra.mxu0 0
    %4421 = vmatprep.subr.bf16.mxu0 0
    %4422 = vmatpush1.bf16.msra.mxu0 0
    %4423 = vmatprep.subr.bf16.mxu0 0
    %4424 = vmatpush1.bf16.msra.mxu0 0
    %4425 = vmatprep.subr.bf16.mxu0 0
    %4426 = vmatpush1.bf16.msra.mxu0 0
    %4427 = vmatprep.subr.bf16.mxu0 0
    %4428 = vmatpush1.bf16.msra.mxu0 0
    %4429 = vmatprep.subr.bf16.mxu0 0
    %4430 = vmatpush1.bf16.msra.mxu0 0
    %4431 = vmatprep.subr.bf16.mxu0 0
    %4432 = vmatpush1.bf16.msra.mxu0 0
    %4433 = vmatprep.subr.bf16.mxu0 0
    %4434 = vmatpush1.bf16.msra.mxu0 0
    %4435 = vmatprep.subr.bf16.mxu0 0
    %4436 = vmatpush1.bf16.msra.mxu0 0
    %4437 = vmatprep.subr.bf16.mxu0 0
    %4438 = vmatpush1.bf16.msra.mxu0 0
    %4439 = vmatprep.subr.bf16.mxu0 0
    %4440 = vmatpush1.bf16.msra.mxu0 0
    %4441 = vmatprep.subr.bf16.mxu0 0
    %4442 = vmatpush1.bf16.msra.mxu0 0
    %4443 = vmatprep.subr.bf16.mxu0 0
    %4444 = vmatpush1.bf16.msra.mxu0 0
    %4445 = vmatprep.mubr.bf16.mxu0 0
    %4446 = vmatmul.mubr.bf16.gmra.mrb[0].mxu0 %v4408
    %v4447 = vpop.f32.mrb[0].mxu0
    %v4448 = vadd.f32 0.0, %v4447
    %v4449 = vpop.f32.mrb[0].mxu0
    %v4450 = vpop.f32.mrb[0].mxu0
    %v4451 = vpop.f32.mrb[0].mxu0
    %4452 = vdwg.mxu0
    %4455 = vrot.lane.b32.xlu0 %v4400, 32
    %v4456 = vpop.permute.xlu0 %4455
    %4457 = vrot.lane.b32.xlu0 %v4448, 32
    %v4458 = vpop.permute.xlu0 %4457
    %vm4461 = vcmask 392448
    %4462 = vst.msk [vmem:[#allocation3] sm:$0xff] %vm4461, %v4456
    %4463 = vst.msk [vmem:[#allocation3 + $0x8] sm:$0xff] %vm4461, %v4458
    %4464 = vrot.lane.b32.xlu0 %v3772, 80
    %v4465 = vpop.permute.xlu0 %4464
    %4466 = vrot.lane.b32.xlu0 %v3772, 16
    %v4467 = vpop.permute.xlu0 %4466
    %v4469 = vsel %vm151, %v4465, 0
    %v4472 = vsel %vm151, %v4467, 0
    %4474 = vmatprep.subr.bf16.mxu0 0
    %4475 = vmatpush1.bf16.xpose.msra.mxu0 %v4472
    %4476 = vmatprep.subr.bf16.mxu0 0
    %4477 = vmatpush1.bf16.xpose.msra.mxu0 0
    %4478 = vmatprep.subr.bf16.mxu0 0
    %4479 = vmatpush1.bf16.xpose.msra.mxu0 0
    %4480 = vmatprep.subr.bf16.mxu0 0
    %4481 = vmatpush1.bf16.xpose.msra.mxu0 0
    %4482 = vmatprep.subr.bf16.mxu0 0
    %4483 = vmatpush1.bf16.xpose.msra.mxu0 0
    %4484 = vmatprep.subr.bf16.mxu0 0
    %4485 = vmatpush1.bf16.xpose.msra.mxu0 0
    %4486 = vmatprep.subr.bf16.mxu0 0
    %4487 = vmatpush1.bf16.xpose.msra.mxu0 0
    %4488 = vmatprep.subr.bf16.mxu0 0
    %4489 = vmatpush1.bf16.xpose.msra.mxu0 0
    %4490 = vmatprep.subr.bf16.mxu0 0
    %4491 = vmatpush1.bf16.xpose.msra.mxu0 0
    %4492 = vmatprep.subr.bf16.mxu0 0
    %4493 = vmatpush1.bf16.xpose.msra.mxu0 0
    %4494 = vmatprep.subr.bf16.mxu0 0
    %4495 = vmatpush1.bf16.xpose.msra.mxu0 0
    %4496 = vmatprep.subr.bf16.mxu0 0
    %4497 = vmatpush1.bf16.xpose.msra.mxu0 0
    %4498 = vmatprep.subr.bf16.mxu0 0
    %4499 = vmatpush1.bf16.xpose.msra.mxu0 0
    %4500 = vmatprep.subr.bf16.mxu0 0
    %4501 = vmatpush1.bf16.xpose.msra.mxu0 0
    %4502 = vmatprep.subr.bf16.mxu0 0
    %4503 = vmatpush1.bf16.xpose.msra.mxu0 0
    %4504 = vmatprep.subr.bf16.mxu0 0
    %4505 = vmatpush1.bf16.xpose.msra.mxu0 0
    %4506 = vmatprep.mubr.bf16.mxu0 0
    %4507 = vmatmul.mubr.bf16.gmra.mrb[0].mxu0 %v4469
    %v4508 = vpop.f32.mrb[0].mxu0
    %v4509 = vadd.f32 0.0, %v4508
    %v4510 = vpop.f32.mrb[0].mxu0
    %v4511 = vpop.f32.mrb[0].mxu0
    %v4512 = vpop.f32.mrb[0].mxu0
    %4513 = vdwg.mxu0
    %4514 = vrot.lane.b32.xlu0 %v3773, 80
    %v4515 = vpop.permute.xlu0 %4514
    %4516 = vrot.lane.b32.xlu0 %v3773, 16
    %v4517 = vpop.permute.xlu0 %4516
    %v4519 = vsel %vm151, %v4515, 0
    %v4522 = vsel %vm151, %v4517, 0
    %4524 = vmatprep.subr.bf16.mxu0 0
    %4525 = vmatpush1.bf16.xpose.msra.mxu0 %v4522
    %4526 = vmatprep.subr.bf16.mxu0 0
    %4527 = vmatpush1.bf16.xpose.msra.mxu0 0
    %4528 = vmatprep.subr.bf16.mxu0 0
    %4529 = vmatpush1.bf16.xpose.msra.mxu0 0
    %4530 = vmatprep.subr.bf16.mxu0 0
    %4531 = vmatpush1.bf16.xpose.msra.mxu0 0
    %4532 = vmatprep.subr.bf16.mxu0 0
    %4533 = vmatpush1.bf16.xpose.msra.mxu0 0
    %4534 = vmatprep.subr.bf16.mxu0 0
    %4535 = vmatpush1.bf16.xpose.msra.mxu0 0
    %4536 = vmatprep.subr.bf16.mxu0 0
    %4537 = vmatpush1.bf16.xpose.msra.mxu0 0
    %4538 = vmatprep.subr.bf16.mxu0 0
    %4539 = vmatpush1.bf16.xpose.msra.mxu0 0
    %4540 = vmatprep.subr.bf16.mxu0 0
    %4541 = vmatpush1.bf16.xpose.msra.mxu0 0
    %4542 = vmatprep.subr.bf16.mxu0 0
    %4543 = vmatpush1.bf16.xpose.msra.mxu0 0
    %4544 = vmatprep.subr.bf16.mxu0 0
    %4545 = vmatpush1.bf16.xpose.msra.mxu0 0
    %4546 = vmatprep.subr.bf16.mxu0 0
    %4547 = vmatpush1.bf16.xpose.msra.mxu0 0
    %4548 = vmatprep.subr.bf16.mxu0 0
    %4549 = vmatpush1.bf16.xpose.msra.mxu0 0
    %4550 = vmatprep.subr.bf16.mxu0 0
    %4551 = vmatpush1.bf16.xpose.msra.mxu0 0
    %4552 = vmatprep.subr.bf16.mxu0 0
    %4553 = vmatpush1.bf16.xpose.msra.mxu0 0
    %4554 = vmatprep.subr.bf16.mxu0 0
    %4555 = vmatpush1.bf16.xpose.msra.mxu0 0
    %4556 = vmatprep.mubr.bf16.mxu0 0
    %4557 = vmatmul.mubr.bf16.gmra.mrb[0].mxu0 %v4519
    %v4558 = vpop.f32.mrb[0].mxu0
    %v4559 = vadd.f32 0.0, %v4558
    %v4560 = vpop.f32.mrb[0].mxu0
    %v4561 = vpop.f32.mrb[0].mxu0
    %v4562 = vpop.f32.mrb[0].mxu0
    %4563 = vdwg.mxu0
    %v4564 = vmul.f32 %v4509, 0.25
    %v4565 = vmul.f32 %v4559, 0.25
    %v4566 = vsel %vm3874, %v4564, -inf
    %4567 = vmax.xlane.f32.xlu0 %v4566
    %v4568 = vpop.xlane.xlu0 %4567
    %v4569 = vsel %vm3874, %v4565, -inf
    %4570 = vmax.xlane.f32.xlu0 %v4569
    %v4571 = vpop.xlane.xlu0 %4570
    %v4572 = vsub.f32 %v4564, %v4568
    %v4573 = vsub.f32 %v4565, %v4571
    %v4574 = vmul.f32 %v4572, 1.442695
    %v4575 = vpow.pop %v4574
    %v4576 = vmul.f32 %v4573, 1.442695
    %v4577 = vpow.pop %v4576
    %v4578 = vsel %vm3874, %v4575, 0.0
    %4579 = vadd.xlane.f32.xlu0 %v4578
    %v4580 = vpop.xlane.xlu0 %4579
    %v4581 = vsel %vm3874, %v4577, 0.0
    %4582 = vadd.xlane.f32.xlu0 %v4581
    %v4583 = vpop.xlane.xlu0 %4582
    %v4584 = vrcp.pop %v4580
    %v4585 = vrcp.pop %v4583
    %v4586 = vmul.f32 %v4575, %v4584
    %v4587 = vmul.f32 %v4577, %v4585
    %v4588 = vpack.c.bf16 %v4586, %v4586
    %v4589 = vpack.c.bf16 %v4587, %v4587
    %4590 = vrot.lane.b32.xlu0 %v3899, 80
    %v4591 = vpop.permute.xlu0 %4590
    %v4593 = vsel %vm3874, %v4588, 0
    %v4596 = vsel %vm3904, %v4591, 0
    %4598 = vmatprep.subr.bf16.mxu0 0
    %4599 = vmatpush1.bf16.msra.mxu0 %v4596
    %4600 = vmatprep.subr.bf16.mxu0 0
    %4601 = vmatpush1.bf16.msra.mxu0 0
    %4602 = vmatprep.subr.bf16.mxu0 0
    %4603 = vmatpush1.bf16.msra.mxu0 0
    %4604 = vmatprep.subr.bf16.mxu0 0
    %4605 = vmatpush1.bf16.msra.mxu0 0
    %4606 = vmatprep.subr.bf16.mxu0 0
    %4607 = vmatpush1.bf16.msra.mxu0 0
    %4608 = vmatprep.subr.bf16.mxu0 0
    %4609 = vmatpush1.bf16.msra.mxu0 0
    %4610 = vmatprep.subr.bf16.mxu0 0
    %4611 = vmatpush1.bf16.msra.mxu0 0
    %4612 = vmatprep.subr.bf16.mxu0 0
    %4613 = vmatpush1.bf16.msra.mxu0 0
    %4614 = vmatprep.subr.bf16.mxu0 0
    %4615 = vmatpush1.bf16.msra.mxu0 0
    %4616 = vmatprep.subr.bf16.mxu0 0
    %4617 = vmatpush1.bf16.msra.mxu0 0
    %4618 = vmatprep.subr.bf16.mxu0 0
    %4619 = vmatpush1.bf16.msra.mxu0 0
    %4620 = vmatprep.subr.bf16.mxu0 0
    %4621 = vmatpush1.bf16.msra.mxu0 0
    %4622 = vmatprep.subr.bf16.mxu0 0
    %4623 = vmatpush1.bf16.msra.mxu0 0
    %4624 = vmatprep.subr.bf16.mxu0 0
    %4625 = vmatpush1.bf16.msra.mxu0 0
    %4626 = vmatprep.subr.bf16.mxu0 0
    %4627 = vmatpush1.bf16.msra.mxu0 0
    %4628 = vmatprep.subr.bf16.mxu0 0
    %4629 = vmatpush1.bf16.msra.mxu0 0
    %4630 = vmatprep.mubr.bf16.mxu0 0
    %4631 = vmatmul.mubr.bf16.gmra.mrb[0].mxu0 %v4593
    %v4632 = vpop.f32.mrb[0].mxu0
    %v4633 = vadd.f32 0.0, %v4632
    %v4634 = vpop.f32.mrb[0].mxu0
    %v4635 = vpop.f32.mrb[0].mxu0
    %v4636 = vpop.f32.mrb[0].mxu0
    %4637 = vdwg.mxu0
    %4638 = vrot.lane.b32.xlu0 %v3900, 80
    %v4639 = vpop.permute.xlu0 %4638
    %v4641 = vsel %vm3874, %v4589, 0
    %v4644 = vsel %vm3904, %v4639, 0
    %4646 = vmatprep.subr.bf16.mxu0 0
    %4647 = vmatpush1.bf16.msra.mxu0 %v4644
    %4648 = vmatprep.subr.bf16.mxu0 0
    %4649 = vmatpush1.bf16.msra.mxu0 0
    %4650 = vmatprep.subr.bf16.mxu0 0
    %4651 = vmatpush1.bf16.msra.mxu0 0
    %4652 = vmatprep.subr.bf16.mxu0 0
    %4653 = vmatpush1.bf16.msra.mxu0 0
    %4654 = vmatprep.subr.bf16.mxu0 0
    %4655 = vmatpush1.bf16.msra.mxu0 0
    %4656 = vmatprep.subr.bf16.mxu0 0
    %4657 = vmatpush1.bf16.msra.mxu0 0
    %4658 = vmatprep.subr.bf16.mxu0 0
    %4659 = vmatpush1.bf16.msra.mxu0 0
    %4660 = vmatprep.subr.bf16.mxu0 0
    %4661 = vmatpush1.bf16.msra.mxu0 0
    %4662 = vmatprep.subr.bf16.mxu0 0
    %4663 = vmatpush1.bf16.msra.mxu0 0
    %4664 = vmatprep.subr.bf16.mxu0 0
    %4665 = vmatpush1.bf16.msra.mxu0 0
    %4666 = vmatprep.subr.bf16.mxu0 0
    %4667 = vmatpush1.bf16.msra.mxu0 0
    %4668 = vmatprep.subr.bf16.mxu0 0
    %4669 = vmatpush1.bf16.msra.mxu0 0
    %4670 = vmatprep.subr.bf16.mxu0 0
    %4671 = vmatpush1.bf16.msra.mxu0 0
    %4672 = vmatprep.subr.bf16.mxu0 0
    %4673 = vmatpush1.bf16.msra.mxu0 0
    %4674 = vmatprep.subr.bf16.mxu0 0
    %4675 = vmatpush1.bf16.msra.mxu0 0
    %4676 = vmatprep.subr.bf16.mxu0 0
    %4677 = vmatpush1.bf16.msra.mxu0 0
    %4678 = vmatprep.mubr.bf16.mxu0 0
    %4679 = vmatmul.mubr.bf16.gmra.mrb[0].mxu0 %v4641
    %v4680 = vpop.f32.mrb[0].mxu0
    %v4681 = vadd.f32 0.0, %v4680
    %v4682 = vpop.f32.mrb[0].mxu0
    %v4683 = vpop.f32.mrb[0].mxu0
    %v4684 = vpop.f32.mrb[0].mxu0
    %4685 = vdwg.mxu0
    %4688 = vrot.lane.b32.xlu0 %v4633, 48
    %v4689 = vpop.permute.xlu0 %4688
    %4690 = vrot.lane.b32.xlu0 %v4681, 48
    %v4691 = vpop.permute.xlu0 %4690
    %vm4694 = vcmask 523648
    %4695 = vst.msk [vmem:[#allocation3] sm:$0xff] %vm4694, %v4689
    %4696 = vst.msk [vmem:[#allocation3 + $0x8] sm:$0xff] %vm4694, %v4691
    %v4697 = vld [vmem:[#allocation3] sm:$0xff]
    %v4698 = vld [vmem:[#allocation3 + $0x8] sm:$0xff]
    %v4699 = vpack.c.bf16 %v4698, %v4697
    %v4708 = vunpack.c.l.b16 %v3635
    %v4709 = vunpack.c.l.b16 %v3636
    %v4710 = vunpack.c.l.b16 %v3637
    %v4711 = vunpack.c.l.b16 %v3638
    %v4712 = vunpack.c.l.b16 %v3639
    %v4713 = vunpack.c.l.b16 %v3640
    %v4714 = vunpack.c.l.b16 %v3641
    %v4715 = vunpack.c.l.b16 %v3642
    %v4716 = vpack.c.b16 %v4709, %v4708
    %v4717 = vpack.c.b16 %v4711, %v4710
    %v4718 = vpack.c.b16 %v4713, %v4712
    %v4719 = vpack.c.b16 %v4715, %v4714
    %v4725 = vsel %vm505, %v4699, 0
    %4727 = vmatprep.subr.bf16.mxu0 0
    %4728 = vmatpush1.bf16.msra.mxu0 %v4716
    %4729 = vmatprep.subr.bf16.mxu0 0
    %4730 = vmatpush1.bf16.msra.mxu0 %v4717
    %4731 = vmatprep.subr.bf16.mxu0 0
    %4732 = vmatpush1.bf16.msra.mxu0 %v4718
    %4733 = vmatprep.subr.bf16.mxu0 0
    %4734 = vmatpush1.bf16.msra.mxu0 %v4719
    %4735 = vmatprep.subr.bf16.mxu0 0
    %4736 = vmatpush1.bf16.msra.mxu0 0
    %4737 = vmatprep.subr.bf16.mxu0 0
    %4738 = vmatpush1.bf16.msra.mxu0 0
    %4739 = vmatprep.subr.bf16.mxu0 0
    %4740 = vmatpush1.bf16.msra.mxu0 0
    %4741 = vmatprep.subr.bf16.mxu0 0
    %4742 = vmatpush1.bf16.msra.mxu0 0
    %4743 = vmatprep.subr.bf16.mxu0 0
    %4744 = vmatpush1.bf16.msra.mxu0 0
    %4745 = vmatprep.subr.bf16.mxu0 0
    %4746 = vmatpush1.bf16.msra.mxu0 0
    %4747 = vmatprep.subr.bf16.mxu0 0
    %4748 = vmatpush1.bf16.msra.mxu0 0
    %4749 = vmatprep.subr.bf16.mxu0 0
    %4750 = vmatpush1.bf16.msra.mxu0 0
    %4751 = vmatprep.subr.bf16.mxu0 0
    %4752 = vmatpush1.bf16.msra.mxu0 0
    %4753 = vmatprep.subr.bf16.mxu0 0
    %4754 = vmatpush1.bf16.msra.mxu0 0
    %4755 = vmatprep.subr.bf16.mxu0 0
    %4756 = vmatpush1.bf16.msra.mxu0 0
    %4757 = vmatprep.subr.bf16.mxu0 0
    %4758 = vmatpush1.bf16.msra.mxu0 0
    %4759 = vmatprep.mubr.bf16.mxu0 0
    %4760 = vmatmul.mubr.bf16.gmra.mrb[0].mxu0 %v4725
    %v4761 = vpop.f32.mrb[0].mxu0
    %v4762 = vadd.f32 %v3643, %v4761
    %v4763 = vpop.f32.mrb[0].mxu0
    %v4764 = vpop.f32.mrb[0].mxu0
    %v4765 = vadd.f32 %v3643, %v4764
    %v4766 = vpop.f32.mrb[0].mxu0
    %4767 = vdwg.mxu0
    %v4768 = vadd.f32 %v3623, %v4762
    %v4769 = vadd.f32 %v3624, %v4765
    %v4770 = vsel %vm505, %v4768, 0.0
    %4771 = vadd.xlane.f32.xlu0 %v4770
    %v4772 = vpop.xlane.xlu0 %4771
    %v4773 = vsel %vm505, %v4769, 0.0
    %4774 = vadd.xlane.f32.xlu0 %v4773
    %v4775 = vpop.xlane.xlu0 %4774
    %v4776 = vrcp.pop 64.0
    %v4777 = vmul.f32 %v4772, %v4776
    %v4778 = vmul.f32 %v4775, %v4776
    %v4779 = vmul.f32 %v4768, %v4768
    %v4780 = vmul.f32 %v4769, %v4769
    %v4781 = vsel %vm505, %v4779, 0.0
    %4782 = vadd.xlane.f32.xlu0 %v4781
    %v4783 = vpop.xlane.xlu0 %4782
    %v4784 = vsel %vm505, %v4780, 0.0
    %4785 = vadd.xlane.f32.xlu0 %v4784
    %v4786 = vpop.xlane.xlu0 %4785
    %v4787 = vmul.f32 %v4783, %v4776
    %v4788 = vmul.f32 %v4786, %v4776
    %v4789 = vmul.f32 %v4777, %v4777
    %v4790 = vmul.f32 %v4778, %v4778
    %v4791 = vsub.f32 %v4787, %v4789
    %v4792 = vsub.f32 %v4788, %v4790
    %v4793 = vmax.f32 %v4791, 0.0
    %v4794 = vmax.f32 %v4792, 0.0
    %v4795 = vsub.f32 %v4768, %v4777
    %v4796 = vsub.f32 %v4769, %v4778
    %v4797 = vadd.f32 %v4793, 1e-05
    %v4798 = vadd.f32 %v4794, 1e-05
    %v4799 = vrsqrt.pop %v4797
    %v4800 = vrsqrt.pop %v4798
    %v4801 = vmul.f32 %v4795, %v4799
    %v4802 = vmul.f32 %v4796, %v4800
    %v4803 = vmul.f32 %v4801, %v3644
    %v4804 = vmul.f32 %v4802, %v3644
    %v4805 = vadd.f32 %v4803, %v3645
    %v4806 = vadd.f32 %v4804, %v3645
    %v4807 = vpack.c.bf16 %v4806, %v4805
    %v4816 = vunpack.c.l.b16 %v3646
    %v4817 = vunpack.c.l.b16 %v3647
    %v4818 = vunpack.c.l.b16 %v3648
    %v4819 = vunpack.c.l.b16 %v3649
    %v4820 = vunpack.c.l.b16 %v3650
    %v4821 = vunpack.c.l.b16 %v3651
    %v4822 = vunpack.c.l.b16 %v3652
    %v4823 = vunpack.c.l.b16 %v3653
    %v4824 = vpack.c.b16 %v4817, %v4816
    %v4825 = vpack.c.b16 %v4819, %v4818
    %v4826 = vpack.c.b16 %v4821, %v4820
    %v4827 = vpack.c.b16 %v4823, %v4822
    %v4833 = vsel %vm505, %v4807, 0
    %4835 = vmatprep.subr.bf16.mxu0 0
    %4836 = vmatpush1.bf16.msra.mxu0 %v4824
    %4837 = vmatprep.subr.bf16.mxu0 0
    %4838 = vmatpush1.bf16.msra.mxu0 %v4825
    %4839 = vmatprep.subr.bf16.mxu0 0
    %4840 = vmatpush1.bf16.msra.mxu0 %v4826
    %4841 = vmatprep.subr.bf16.mxu0 0
    %4842 = vmatpush1.bf16.msra.mxu0 %v4827
    %4843 = vmatprep.subr.bf16.mxu0 0
    %4844 = vmatpush1.bf16.msra.mxu0 0
    %4845 = vmatprep.subr.bf16.mxu0 0
    %4846 = vmatpush1.bf16.msra.mxu0 0
    %4847 = vmatprep.subr.bf16.mxu0 0
    %4848 = vmatpush1.bf16.msra.mxu0 0
    %4849 = vmatprep.subr.bf16.mxu0 0
    %4850 = vmatpush1.bf16.msra.mxu0 0
    %4851 = vmatprep.subr.bf16.mxu0 0
    %4852 = vmatpush1.bf16.msra.mxu0 0
    %4853 = vmatprep.subr.bf16.mxu0 0
    %4854 = vmatpush1.bf16.msra.mxu0 0
    %4855 = vmatprep.subr.bf16.mxu0 0
    %4856 = vmatpush1.bf16.msra.mxu0 0
    %4857 = vmatprep.subr.bf16.mxu0 0
    %4858 = vmatpush1.bf16.msra.mxu0 0
    %4859 = vmatprep.subr.bf16.mxu0 0
    %4860 = vmatpush1.bf16.msra.mxu0 0
    %4861 = vmatprep.subr.bf16.mxu0 0
    %4862 = vmatpush1.bf16.msra.mxu0 0
    %4863 = vmatprep.subr.bf16.mxu0 0
    %4864 = vmatpush1.bf16.msra.mxu0 0
    %4865 = vmatprep.subr.bf16.mxu0 0
    %4866 = vmatpush1.bf16.msra.mxu0 0
    %4867 = vmatprep.mubr.bf16.mxu0 0
    %4868 = vmatmul.mubr.bf16.gmra.mrb[0].mxu0 %v4833
    %v4869 = vpop.f32.mrb[0].mxu0
    %v4870 = vadd.f32 %v3654, %v4869
    %v4871 = vpop.f32.mrb[0].mxu0
    %v4872 = vpop.f32.mrb[0].mxu0
    %v4873 = vadd.f32 %v3654, %v4872
    %v4874 = vpop.f32.mrb[0].mxu0
    %4875 = vdwg.mxu0
    %v4876 = vmax.f32 %v4870, 0.0
    %v4877 = vmax.f32 %v4873, 0.0
    %v4878 = vpack.c.bf16 %v4877, %v4876
    %v4895 = vunpack.c.l.b16 %v3655
    %v4896 = vunpack.c.l.b16 %v3656
    %v4897 = vunpack.c.l.b16 %v3657
    %v4898 = vunpack.c.l.b16 %v3658
    %v4899 = vunpack.c.l.b16 %v3659
    %v4900 = vunpack.c.l.b16 %v3660
    %v4901 = vunpack.c.l.b16 %v3661
    %v4902 = vunpack.c.l.b16 %v3662
    %v4903 = vunpack.c.l.b16 %v3663
    %v4904 = vunpack.c.l.b16 %v3664
    %v4905 = vunpack.c.l.b16 %v3665
    %v4906 = vunpack.c.l.b16 %v3666
    %v4907 = vunpack.c.l.b16 %v3667
    %v4908 = vunpack.c.l.b16 %v3668
    %v4909 = vunpack.c.l.b16 %v3669
    %v4910 = vunpack.c.l.b16 %v3670
    %v4911 = vpack.c.b16 %v4896, %v4895
    %v4912 = vpack.c.b16 %v4898, %v4897
    %v4913 = vpack.c.b16 %v4900, %v4899
    %v4914 = vpack.c.b16 %v4902, %v4901
    %v4915 = vpack.c.b16 %v4904, %v4903
    %v4916 = vpack.c.b16 %v4906, %v4905
    %v4917 = vpack.c.b16 %v4908, %v4907
    %v4918 = vpack.c.b16 %v4910, %v4909
    %4927 = vmatprep.subr.bf16.mxu0 0
    %4928 = vmatpush1.bf16.msra.mxu0 %v4911
    %4929 = vmatprep.subr.bf16.mxu0 0
    %4930 = vmatpush1.bf16.msra.mxu0 %v4912
    %4931 = vmatprep.subr.bf16.mxu0 0
    %4932 = vmatpush1.bf16.msra.mxu0 %v4913
    %4933 = vmatprep.subr.bf16.mxu0 0
    %4934 = vmatpush1.bf16.msra.mxu0 %v4914
    %4935 = vmatprep.subr.bf16.mxu0 0
    %4936 = vmatpush1.bf16.msra.mxu0 %v4915
    %4937 = vmatprep.subr.bf16.mxu0 0
    %4938 = vmatpush1.bf16.msra.mxu0 %v4916
    %4939 = vmatprep.subr.bf16.mxu0 0
    %4940 = vmatpush1.bf16.msra.mxu0 %v4917
    %4941 = vmatprep.subr.bf16.mxu0 0
    %4942 = vmatpush1.bf16.msra.mxu0 %v4918
    %4943 = vmatprep.subr.bf16.mxu0 0
    %4944 = vmatpush1.bf16.msra.mxu0 0
    %4945 = vmatprep.subr.bf16.mxu0 0
    %4946 = vmatpush1.bf16.msra.mxu0 0
    %4947 = vmatprep.subr.bf16.mxu0 0
    %4948 = vmatpush1.bf16.msra.mxu0 0
    %4949 = vmatprep.subr.bf16.mxu0 0
    %4950 = vmatpush1.bf16.msra.mxu0 0
    %4951 = vmatprep.subr.bf16.mxu0 0
    %4952 = vmatpush1.bf16.msra.mxu0 0
    %4953 = vmatprep.subr.bf16.mxu0 0
    %4954 = vmatpush1.bf16.msra.mxu0 0
    %4955 = vmatprep.subr.bf16.mxu0 0
    %4956 = vmatpush1.bf16.msra.mxu0 0
    %4957 = vmatprep.subr.bf16.mxu0 0
    %4958 = vmatpush1.bf16.msra.mxu0 0
    %4959 = vmatprep.mubr.bf16.mxu0 0
    %4960 = vmatmul.mubr.bf16.gmra.mrb[0].mxu0 %v4878
    %v4961 = vpop.f32.mrb[0].mxu0
    %v4962 = vadd.f32 %v3671, %v4961
    %v4963 = vpop.f32.mrb[0].mxu0
    %v4964 = vpop.f32.mrb[0].mxu0
    %v4965 = vadd.f32 %v3671, %v4964
    %v4966 = vpop.f32.mrb[0].mxu0
    %4967 = vdwg.mxu0
    %v4968 = vadd.f32 %v4805, %v4962
    %v4969 = vadd.f32 %v4806, %v4965
    %v4970 = vsel %vm505, %v4968, 0.0
    %4971 = vadd.xlane.f32.xlu0 %v4970
    %v4972 = vpop.xlane.xlu0 %4971
    %v4973 = vsel %vm505, %v4969, 0.0
    %4974 = vadd.xlane.f32.xlu0 %v4973
    %v4975 = vpop.xlane.xlu0 %4974
    %v4976 = vmul.f32 %v4972, %v4776
    %v4977 = vmul.f32 %v4975, %v4776
    %v4978 = vmul.f32 %v4968, %v4968
    %v4979 = vmul.f32 %v4969, %v4969
    %v4980 = vsel %vm505, %v4978, 0.0
    %4981 = vadd.xlane.f32.xlu0 %v4980
    %v4982 = vpop.xlane.xlu0 %4981
    %v4983 = vsel %vm505, %v4979, 0.0
    %4984 = vadd.xlane.f32.xlu0 %v4983
    %v4985 = vpop.xlane.xlu0 %4984
    %v4986 = vmul.f32 %v4982, %v4776
    %v4987 = vmul.f32 %v4985, %v4776
    %v4988 = vmul.f32 %v4976, %v4976
    %v4989 = vmul.f32 %v4977, %v4977
    %v4990 = vsub.f32 %v4986, %v4988
    %v4991 = vsub.f32 %v4987, %v4989
    %v4992 = vmax.f32 %v4990, 0.0
    %v4993 = vmax.f32 %v4991, 0.0
    %v4994 = vsub.f32 %v4968, %v4976
    %v4995 = vsub.f32 %v4969, %v4977
    %v4996 = vadd.f32 %v4992, 1e-05
    %v4997 = vadd.f32 %v4993, 1e-05
    %v4998 = vrsqrt.pop %v4996
    %v4999 = vrsqrt.pop %v4997
    %v5000 = vmul.f32 %v4994, %v4998
    %v5001 = vmul.f32 %v4995, %v4999
    %v5002 = vmul.f32 %v5000, %v3672
    %v5003 = vmul.f32 %v5001, %v3672
    %v5004 = vadd.f32 %v5002, %v3673
    %v5005 = vadd.f32 %v5003, %v3673
    %v5006 = vld [vmem:[%s12] sm:$0xff]
    %v5007 = vld [vmem:[%s12 + $0x8] sm:$0xff]
    %v5008 = vld [vmem:[%s12 + $0x10] sm:$0xff]
    %v5009 = vld [vmem:[%s12 + $0x18] sm:$0xff]
    %v5010 = vld [vmem:[%s12 + $0x20] sm:$0xff]
    %v5011 = vld [vmem:[%s12 + $0x28] sm:$0xff]
    %v5012 = vld [vmem:[%s12 + $0x30] sm:$0xff]
    %v5013 = vld [vmem:[%s12 + $0x38] sm:$0xff]
    %s5014 = scalar_lea.vmem %s2, 21
    %v5015 = vld [vmem:[%s5014] ss:$8 sm:$0x3]
    %v5016 = vld [vmem:[#allocation11] sm:$0xf]
    %v5017 = vld [vmem:[#allocation11 + $0x4] sm:$0xf]
    %v5018 = vld [vmem:[#allocation11 + $0x8] sm:$0xf]
    %v5019 = vld [vmem:[#allocation11 + $0xc] sm:$0xf]
    %v5020 = vld [vmem:[#allocation11 + $0x10] sm:$0xf]
    %v5021 = vld [vmem:[#allocation11 + $0x14] sm:$0xf]
    %v5022 = vld [vmem:[#allocation11 + $0x18] sm:$0xf]
    %v5023 = vld [vmem:[#allocation11 + $0x1c] sm:$0xf]
    %v5024 = vld [vmem:[%s2 + $0x16] ss:$0 sm:$0xff]
    %v5025 = vld [vmem:[%s2 + $0x17] ss:$0 sm:$0xff]
    %v5026 = vld [vmem:[%s2 + $0x20] ss:$0 sm:$0xff]
    %v5027 = vld [vmem:[#allocation12] sm:$0xf]
    %v5028 = vld [vmem:[#allocation12 + $0x4] sm:$0xf]
    %v5029 = vld [vmem:[#allocation12 + $0x8] sm:$0xf]
    %v5030 = vld [vmem:[#allocation12 + $0xc] sm:$0xf]
    %v5031 = vld [vmem:[#allocation12 + $0x10] sm:$0xf]
    %v5032 = vld [vmem:[#allocation12 + $0x14] sm:$0xf]
    %v5033 = vld [vmem:[#allocation12 + $0x18] sm:$0xf]
    %v5034 = vld [vmem:[#allocation12 + $0x1c] sm:$0xf]
    %v5035 = vld [vmem:[%s2 + $0x21] ss:$0 sm:$0xff]
    %v5036 = vld [vmem:[%s15] sm:$0xf]
    %v5037 = vld [vmem:[%s15 + $0x4] sm:$0xf]
    %v5038 = vld [vmem:[%s15 + $0x8] sm:$0xf]
    %v5039 = vld [vmem:[%s15 + $0xc] sm:$0xf]
    %v5040 = vld [vmem:[%s15 + $0x10] sm:$0xf]
    %v5041 = vld [vmem:[%s15 + $0x14] sm:$0xf]
    %v5042 = vld [vmem:[%s15 + $0x18] sm:$0xf]
    %v5043 = vld [vmem:[%s15 + $0x1c] sm:$0xf]
    %v5044 = vld [vmem:[%s15 + $0x20] sm:$0xf]
    %v5045 = vld [vmem:[%s15 + $0x24] sm:$0xf]
    %v5046 = vld [vmem:[%s15 + $0x28] sm:$0xf]
    %v5047 = vld [vmem:[%s15 + $0x2c] sm:$0xf]
    %v5048 = vld [vmem:[%s15 + $0x30] sm:$0xf]
    %v5049 = vld [vmem:[%s15 + $0x34] sm:$0xf]
    %v5050 = vld [vmem:[%s15 + $0x38] sm:$0xf]
    %v5051 = vld [vmem:[%s15 + $0x3c] sm:$0xf]
    %v5052 = vld [vmem:[%s2 + $0x22] ss:$0 sm:$0xff]
    %v5053 = vld [vmem:[%s2 + $0x23] ss:$0 sm:$0xff]
    %v5054 = vld [vmem:[%s2 + $0x24] ss:$0 sm:$0xff]
    %v5055 = vpack.c.bf16 %v5005, %v5004
    %v5057 = vlaneseq
    %v5058 = vshrl.u32 %v5057, 7
    %v5059 = vsub.s32 0, %v5058
    %v5060 = vrot.slane %v5015, %v5059
    %v5061 = vlaneseq
    %v5062 = vshrl.u32 %v5061, 7
    %v5063 = vsub.s32 1, %v5062
    %v5064 = vrot.slane %v5015, %v5063
    %v5075 = vunpack.c.l.b16 %v5006
    %v5076 = vunpack.c.h.b16 %v5006
    %v5077 = vunpack.c.l.b16 %v5007
    %v5078 = vunpack.c.h.b16 %v5007
    %v5079 = vunpack.c.l.b16 %v5008
    %v5080 = vunpack.c.h.b16 %v5008
    %v5081 = vunpack.c.l.b16 %v5009
    %v5082 = vunpack.c.h.b16 %v5009
    %v5083 = vunpack.c.l.b16 %v5010
    %v5084 = vunpack.c.h.b16 %v5010
    %v5085 = vunpack.c.l.b16 %v5011
    %v5086 = vunpack.c.h.b16 %v5011
    %v5087 = vunpack.c.l.b16 %v5012
    %v5088 = vunpack.c.h.b16 %v5012
    %v5089 = vunpack.c.l.b16 %v5013
    %v5090 = vunpack.c.h.b16 %v5013
    %v5091 = vpack.c.b16 %v5077, %v5075
    %v5092 = vpack.c.b16 %v5078, %v5076
    %v5093 = vpack.c.b16 %v5081, %v5079
    %v5094 = vpack.c.b16 %v5082, %v5080
    %v5095 = vpack.c.b16 %v5085, %v5083
    %v5096 = vpack.c.b16 %v5086, %v5084
    %v5097 = vpack.c.b16 %v5089, %v5087
    %v5098 = vpack.c.b16 %v5090, %v5088
    %v5108 = vsel %vm505, %v5055, 0
    %5110 = vmatprep.subr.bf16.mxu0 %v5092
    %5111 = vmatpush1.bf16.msra.mxu0 %v5091
    %5112 = vmatprep.subr.bf16.mxu0 %v5094
    %5113 = vmatpush1.bf16.msra.mxu0 %v5093
    %5114 = vmatprep.subr.bf16.mxu0 %v5096
    %5115 = vmatpush1.bf16.msra.mxu0 %v5095
    %5116 = vmatprep.subr.bf16.mxu0 %v5098
    %5117 = vmatpush1.bf16.msra.mxu0 %v5097
    %5118 = vmatprep.subr.bf16.mxu0 0
    %5119 = vmatpush1.bf16.msra.mxu0 0
    %5120 = vmatprep.subr.bf16.mxu0 0
    %5121 = vmatpush1.bf16.msra.mxu0 0
    %5122 = vmatprep.subr.bf16.mxu0 0
    %5123 = vmatpush1.bf16.msra.mxu0 0
    %5124 = vmatprep.subr.bf16.mxu0 0
    %5125 = vmatpush1.bf16.msra.mxu0 0
    %5126 = vmatprep.subr.bf16.mxu0 0
    %5127 = vmatpush1.bf16.msra.mxu0 0
    %5128 = vmatprep.subr.bf16.mxu0 0
    %5129 = vmatpush1.bf16.msra.mxu0 0
    %5130 = vmatprep.subr.bf16.mxu0 0
    %5131 = vmatpush1.bf16.msra.mxu0 0
    %5132 = vmatprep.subr.bf16.mxu0 0
    %5133 = vmatpush1.bf16.msra.mxu0 0
    %5134 = vmatprep.subr.bf16.mxu0 0
    %5135 = vmatpush1.bf16.msra.mxu0 0
    %5136 = vmatprep.subr.bf16.mxu0 0
    %5137 = vmatpush1.bf16.msra.mxu0 0
    %5138 = vmatprep.subr.bf16.mxu0 0
    %5139 = vmatpush1.bf16.msra.mxu0 0
    %5140 = vmatprep.subr.bf16.mxu0 0
    %5141 = vmatpush1.bf16.msra.mxu0 0
    %5142 = vmatprep.mubr.bf16.mxu0 0
    %5143 = vmatmul.mubr.bf16.gmra.mrb[0].mxu0 %v5108
    %v5144 = vpop.f32.mrb[0].mxu0
    %v5145 = vadd.f32 %v5060, %v5144
    %v5146 = vpop.f32.mrb[0].mxu0
    %v5147 = vadd.f32 %v5064, %v5146
    %v5148 = vpop.f32.mrb[0].mxu0
    %v5149 = vadd.f32 %v5060, %v5148
    %v5150 = vpop.f32.mrb[0].mxu0
    %v5151 = vadd.f32 %v5064, %v5150
    %5152 = vdwg.mxu0
    %v5153 = vpack.c.bf16 %v5145, %v5145
    %v5154 = vpack.c.bf16 %v5149, %v5149
    %5156 = vrot.lane.b32.xlu0 %v5153, 64
    %v5157 = vpop.permute.xlu0 %5156
    %v5159 = vsel %vm151, %v5153, 0
    %v5162 = vsel %vm151, %v5157, 0
    %5164 = vmatprep.subr.bf16.mxu0 0
    %5165 = vmatpush1.bf16.xpose.msra.mxu0 %v5162
    %5166 = vmatprep.subr.bf16.mxu0 0
    %5167 = vmatpush1.bf16.xpose.msra.mxu0 0
    %5168 = vmatprep.subr.bf16.mxu0 0
    %5169 = vmatpush1.bf16.xpose.msra.mxu0 0
    %5170 = vmatprep.subr.bf16.mxu0 0
    %5171 = vmatpush1.bf16.xpose.msra.mxu0 0
    %5172 = vmatprep.subr.bf16.mxu0 0
    %5173 = vmatpush1.bf16.xpose.msra.mxu0 0
    %5174 = vmatprep.subr.bf16.mxu0 0
    %5175 = vmatpush1.bf16.xpose.msra.mxu0 0
    %5176 = vmatprep.subr.bf16.mxu0 0
    %5177 = vmatpush1.bf16.xpose.msra.mxu0 0
    %5178 = vmatprep.subr.bf16.mxu0 0
    %5179 = vmatpush1.bf16.xpose.msra.mxu0 0
    %5180 = vmatprep.subr.bf16.mxu0 0
    %5181 = vmatpush1.bf16.xpose.msra.mxu0 0
    %5182 = vmatprep.subr.bf16.mxu0 0
    %5183 = vmatpush1.bf16.xpose.msra.mxu0 0
    %5184 = vmatprep.subr.bf16.mxu0 0
    %5185 = vmatpush1.bf16.xpose.msra.mxu0 0
    %5186 = vmatprep.subr.bf16.mxu0 0
    %5187 = vmatpush1.bf16.xpose.msra.mxu0 0
    %5188 = vmatprep.subr.bf16.mxu0 0
    %5189 = vmatpush1.bf16.xpose.msra.mxu0 0
    %5190 = vmatprep.subr.bf16.mxu0 0
    %5191 = vmatpush1.bf16.xpose.msra.mxu0 0
    %5192 = vmatprep.subr.bf16.mxu0 0
    %5193 = vmatpush1.bf16.xpose.msra.mxu0 0
    %5194 = vmatprep.subr.bf16.mxu0 0
    %5195 = vmatpush1.bf16.xpose.msra.mxu0 0
    %5196 = vmatprep.mubr.bf16.mxu0 0
    %5197 = vmatmul.mubr.bf16.gmra.mrb[0].mxu0 %v5159
    %v5198 = vpop.f32.mrb[0].mxu0
    %v5199 = vadd.f32 0.0, %v5198
    %v5200 = vpop.f32.mrb[0].mxu0
    %v5201 = vpop.f32.mrb[0].mxu0
    %v5202 = vpop.f32.mrb[0].mxu0
    %5203 = vdwg.mxu0
    %5205 = vrot.lane.b32.xlu0 %v5154, 64
    %v5206 = vpop.permute.xlu0 %5205
    %v5208 = vsel %vm151, %v5154, 0
    %v5211 = vsel %vm151, %v5206, 0
    %5213 = vmatprep.subr.bf16.mxu0 0
    %5214 = vmatpush1.bf16.xpose.msra.mxu0 %v5211
    %5215 = vmatprep.subr.bf16.mxu0 0
    %5216 = vmatpush1.bf16.xpose.msra.mxu0 0
    %5217 = vmatprep.subr.bf16.mxu0 0
    %5218 = vmatpush1.bf16.xpose.msra.mxu0 0
    %5219 = vmatprep.subr.bf16.mxu0 0
    %5220 = vmatpush1.bf16.xpose.msra.mxu0 0
    %5221 = vmatprep.subr.bf16.mxu0 0
    %5222 = vmatpush1.bf16.xpose.msra.mxu0 0
    %5223 = vmatprep.subr.bf16.mxu0 0
    %5224 = vmatpush1.bf16.xpose.msra.mxu0 0
    %5225 = vmatprep.subr.bf16.mxu0 0
    %5226 = vmatpush1.bf16.xpose.msra.mxu0 0
    %5227 = vmatprep.subr.bf16.mxu0 0
    %5228 = vmatpush1.bf16.xpose.msra.mxu0 0
    %5229 = vmatprep.subr.bf16.mxu0 0
    %5230 = vmatpush1.bf16.xpose.msra.mxu0 0
    %5231 = vmatprep.subr.bf16.mxu0 0
    %5232 = vmatpush1.bf16.xpose.msra.mxu0 0
    %5233 = vmatprep.subr.bf16.mxu0 0
    %5234 = vmatpush1.bf16.xpose.msra.mxu0 0
    %5235 = vmatprep.subr.bf16.mxu0 0
    %5236 = vmatpush1.bf16.xpose.msra.mxu0 0
    %5237 = vmatprep.subr.bf16.mxu0 0
    %5238 = vmatpush1.bf16.xpose.msra.mxu0 0
    %5239 = vmatprep.subr.bf16.mxu0 0
    %5240 = vmatpush1.bf16.xpose.msra.mxu0 0
    %5241 = vmatprep.subr.bf16.mxu0 0
    %5242 = vmatpush1.bf16.xpose.msra.mxu0 0
    %5243 = vmatprep.subr.bf16.mxu0 0
    %5244 = vmatpush1.bf16.xpose.msra.mxu0 0
    %5245 = vmatprep.mubr.bf16.mxu0 0
    %5246 = vmatmul.mubr.bf16.gmra.mrb[0].mxu0 %v5208
    %v5247 = vpop.f32.mrb[0].mxu0
    %v5248 = vadd.f32 0.0, %v5247
    %v5249 = vpop.f32.mrb[0].mxu0
    %v5250 = vpop.f32.mrb[0].mxu0
    %v5251 = vpop.f32.mrb[0].mxu0
    %5252 = vdwg.mxu0
    %v5253 = vmul.f32 %v5199, 0.25
    %v5254 = vmul.f32 %v5248, 0.25
    %v5255 = vsel %vm3874, %v5253, -inf
    %5256 = vmax.xlane.f32.xlu0 %v5255
    %v5257 = vpop.xlane.xlu0 %5256
    %v5258 = vsel %vm3874, %v5254, -inf
    %5259 = vmax.xlane.f32.xlu0 %v5258
    %v5260 = vpop.xlane.xlu0 %5259
    %v5261 = vsub.f32 %v5253, %v5257
    %v5262 = vsub.f32 %v5254, %v5260
    %v5263 = vmul.f32 %v5261, 1.442695
    %v5264 = vpow.pop %v5263
    %v5265 = vmul.f32 %v5262, 1.442695
    %v5266 = vpow.pop %v5265
    %v5267 = vsel %vm3874, %v5264, 0.0
    %5268 = vadd.xlane.f32.xlu0 %v5267
    %v5269 = vpop.xlane.xlu0 %5268
    %v5270 = vsel %vm3874, %v5266, 0.0
    %5271 = vadd.xlane.f32.xlu0 %v5270
    %v5272 = vpop.xlane.xlu0 %5271
    %v5273 = vrcp.pop %v5269
    %v5274 = vrcp.pop %v5272
    %v5275 = vmul.f32 %v5264, %v5273
    %v5276 = vmul.f32 %v5266, %v5274
    %v5277 = vpack.c.bf16 %v5275, %v5275
    %v5278 = vpack.c.bf16 %v5276, %v5276
    %v5279 = vpack.c.bf16 %v5147, %v5147
    %v5280 = vpack.c.bf16 %v5151, %v5151
    %v5282 = vsel %vm3874, %v5277, 0
    %v5285 = vsel %vm3904, %v5279, 0
    %5287 = vmatprep.subr.bf16.mxu0 0
    %5288 = vmatpush1.bf16.msra.mxu0 %v5285
    %5289 = vmatprep.subr.bf16.mxu0 0
    %5290 = vmatpush1.bf16.msra.mxu0 0
    %5291 = vmatprep.subr.bf16.mxu0 0
    %5292 = vmatpush1.bf16.msra.mxu0 0
    %5293 = vmatprep.subr.bf16.mxu0 0
    %5294 = vmatpush1.bf16.msra.mxu0 0
    %5295 = vmatprep.subr.bf16.mxu0 0
    %5296 = vmatpush1.bf16.msra.mxu0 0
    %5297 = vmatprep.subr.bf16.mxu0 0
    %5298 = vmatpush1.bf16.msra.mxu0 0
    %5299 = vmatprep.subr.bf16.mxu0 0
    %5300 = vmatpush1.bf16.msra.mxu0 0
    %5301 = vmatprep.subr.bf16.mxu0 0
    %5302 = vmatpush1.bf16.msra.mxu0 0
    %5303 = vmatprep.subr.bf16.mxu0 0
    %5304 = vmatpush1.bf16.msra.mxu0 0
    %5305 = vmatprep.subr.bf16.mxu0 0
    %5306 = vmatpush1.bf16.msra.mxu0 0
    %5307 = vmatprep.subr.bf16.mxu0 0
    %5308 = vmatpush1.bf16.msra.mxu0 0
    %5309 = vmatprep.subr.bf16.mxu0 0
    %5310 = vmatpush1.bf16.msra.mxu0 0
    %5311 = vmatprep.subr.bf16.mxu0 0
    %5312 = vmatpush1.bf16.msra.mxu0 0
    %5313 = vmatprep.subr.bf16.mxu0 0
    %5314 = vmatpush1.bf16.msra.mxu0 0
    %5315 = vmatprep.subr.bf16.mxu0 0
    %5316 = vmatpush1.bf16.msra.mxu0 0
    %5317 = vmatprep.subr.bf16.mxu0 0
    %5318 = vmatpush1.bf16.msra.mxu0 0
    %5319 = vmatprep.mubr.bf16.mxu0 0
    %5320 = vmatmul.mubr.bf16.gmra.mrb[0].mxu0 %v5282
    %v5321 = vpop.f32.mrb[0].mxu0
    %v5322 = vadd.f32 0.0, %v5321
    %v5323 = vpop.f32.mrb[0].mxu0
    %v5324 = vpop.f32.mrb[0].mxu0
    %v5325 = vpop.f32.mrb[0].mxu0
    %5326 = vdwg.mxu0
    %v5328 = vsel %vm3874, %v5278, 0
    %v5331 = vsel %vm3904, %v5280, 0
    %5333 = vmatprep.subr.bf16.mxu0 0
    %5334 = vmatpush1.bf16.msra.mxu0 %v5331
    %5335 = vmatprep.subr.bf16.mxu0 0
    %5336 = vmatpush1.bf16.msra.mxu0 0
    %5337 = vmatprep.subr.bf16.mxu0 0
    %5338 = vmatpush1.bf16.msra.mxu0 0
    %5339 = vmatprep.subr.bf16.mxu0 0
    %5340 = vmatpush1.bf16.msra.mxu0 0
    %5341 = vmatprep.subr.bf16.mxu0 0
    %5342 = vmatpush1.bf16.msra.mxu0 0
    %5343 = vmatprep.subr.bf16.mxu0 0
    %5344 = vmatpush1.bf16.msra.mxu0 0
    %5345 = vmatprep.subr.bf16.mxu0 0
    %5346 = vmatpush1.bf16.msra.mxu0 0
    %5347 = vmatprep.subr.bf16.mxu0 0
    %5348 = vmatpush1.bf16.msra.mxu0 0
    %5349 = vmatprep.subr.bf16.mxu0 0
    %5350 = vmatpush1.bf16.msra.mxu0 0
    %5351 = vmatprep.subr.bf16.mxu0 0
    %5352 = vmatpush1.bf16.msra.mxu0 0
    %5353 = vmatprep.subr.bf16.mxu0 0
    %5354 = vmatpush1.bf16.msra.mxu0 0
    %5355 = vmatprep.subr.bf16.mxu0 0
    %5356 = vmatpush1.bf16.msra.mxu0 0
    %5357 = vmatprep.subr.bf16.mxu0 0
    %5358 = vmatpush1.bf16.msra.mxu0 0
    %5359 = vmatprep.subr.bf16.mxu0 0
    %5360 = vmatpush1.bf16.msra.mxu0 0
    %5361 = vmatprep.subr.bf16.mxu0 0
    %5362 = vmatpush1.bf16.msra.mxu0 0
    %5363 = vmatprep.subr.bf16.mxu0 0
    %5364 = vmatpush1.bf16.msra.mxu0 0
    %5365 = vmatprep.mubr.bf16.mxu0 0
    %5366 = vmatmul.mubr.bf16.gmra.mrb[0].mxu0 %v5328
    %v5367 = vpop.f32.mrb[0].mxu0
    %v5368 = vadd.f32 0.0, %v5367
    %v5369 = vpop.f32.mrb[0].mxu0
    %v5370 = vpop.f32.mrb[0].mxu0
    %v5371 = vpop.f32.mrb[0].mxu0
    %5372 = vdwg.mxu0
    %5373 = vst.msk [vmem:[#allocation3] sm:$0xff] %vm151, %v5322
    %5374 = vst.msk [vmem:[#allocation3 + $0x8] sm:$0xff] %vm151, %v5368
    %5375 = vrot.lane.b32.xlu0 %v5153, 112
    %v5376 = vpop.permute.xlu0 %5375
    %5377 = vrot.lane.b32.xlu0 %v5153, 48
    %v5378 = vpop.permute.xlu0 %5377
    %v5380 = vsel %vm151, %v5376, 0
    %v5383 = vsel %vm151, %v5378, 0
    %5385 = vmatprep.subr.bf16.mxu0 0
    %5386 = vmatpush1.bf16.xpose.msra.mxu0 %v5383
    %5387 = vmatprep.subr.bf16.mxu0 0
    %5388 = vmatpush1.bf16.xpose.msra.mxu0 0
    %5389 = vmatprep.subr.bf16.mxu0 0
    %5390 = vmatpush1.bf16.xpose.msra.mxu0 0
    %5391 = vmatprep.subr.bf16.mxu0 0
    %5392 = vmatpush1.bf16.xpose.msra.mxu0 0
    %5393 = vmatprep.subr.bf16.mxu0 0
    %5394 = vmatpush1.bf16.xpose.msra.mxu0 0
    %5395 = vmatprep.subr.bf16.mxu0 0
    %5396 = vmatpush1.bf16.xpose.msra.mxu0 0
    %5397 = vmatprep.subr.bf16.mxu0 0
    %5398 = vmatpush1.bf16.xpose.msra.mxu0 0
    %5399 = vmatprep.subr.bf16.mxu0 0
    %5400 = vmatpush1.bf16.xpose.msra.mxu0 0
    %5401 = vmatprep.subr.bf16.mxu0 0
    %5402 = vmatpush1.bf16.xpose.msra.mxu0 0
    %5403 = vmatprep.subr.bf16.mxu0 0
    %5404 = vmatpush1.bf16.xpose.msra.mxu0 0
    %5405 = vmatprep.subr.bf16.mxu0 0
    %5406 = vmatpush1.bf16.xpose.msra.mxu0 0
    %5407 = vmatprep.subr.bf16.mxu0 0
    %5408 = vmatpush1.bf16.xpose.msra.mxu0 0
    %5409 = vmatprep.subr.bf16.mxu0 0
    %5410 = vmatpush1.bf16.xpose.msra.mxu0 0
    %5411 = vmatprep.subr.bf16.mxu0 0
    %5412 = vmatpush1.bf16.xpose.msra.mxu0 0
    %5413 = vmatprep.subr.bf16.mxu0 0
    %5414 = vmatpush1.bf16.xpose.msra.mxu0 0
    %5415 = vmatprep.subr.bf16.mxu0 0
    %5416 = vmatpush1.bf16.xpose.msra.mxu0 0
    %5417 = vmatprep.mubr.bf16.mxu0 0
    %5418 = vmatmul.mubr.bf16.gmra.mrb[0].mxu0 %v5380
    %v5419 = vpop.f32.mrb[0].mxu0
    %v5420 = vadd.f32 0.0, %v5419
    %v5421 = vpop.f32.mrb[0].mxu0
    %v5422 = vpop.f32.mrb[0].mxu0
    %v5423 = vpop.f32.mrb[0].mxu0
    %5424 = vdwg.mxu0
    %5425 = vrot.lane.b32.xlu0 %v5154, 112
    %v5426 = vpop.permute.xlu0 %5425
    %5427 = vrot.lane.b32.xlu0 %v5154, 48
    %v5428 = vpop.permute.xlu0 %5427
    %v5430 = vsel %vm151, %v5426, 0
    %v5433 = vsel %vm151, %v5428, 0
    %5435 = vmatprep.subr.bf16.mxu0 0
    %5436 = vmatpush1.bf16.xpose.msra.mxu0 %v5433
    %5437 = vmatprep.subr.bf16.mxu0 0
    %5438 = vmatpush1.bf16.xpose.msra.mxu0 0
    %5439 = vmatprep.subr.bf16.mxu0 0
    %5440 = vmatpush1.bf16.xpose.msra.mxu0 0
    %5441 = vmatprep.subr.bf16.mxu0 0
    %5442 = vmatpush1.bf16.xpose.msra.mxu0 0
    %5443 = vmatprep.subr.bf16.mxu0 0
    %5444 = vmatpush1.bf16.xpose.msra.mxu0 0
    %5445 = vmatprep.subr.bf16.mxu0 0
    %5446 = vmatpush1.bf16.xpose.msra.mxu0 0
    %5447 = vmatprep.subr.bf16.mxu0 0
    %5448 = vmatpush1.bf16.xpose.msra.mxu0 0
    %5449 = vmatprep.subr.bf16.mxu0 0
    %5450 = vmatpush1.bf16.xpose.msra.mxu0 0
    %5451 = vmatprep.subr.bf16.mxu0 0
    %5452 = vmatpush1.bf16.xpose.msra.mxu0 0
    %5453 = vmatprep.subr.bf16.mxu0 0
    %5454 = vmatpush1.bf16.xpose.msra.mxu0 0
    %5455 = vmatprep.subr.bf16.mxu0 0
    %5456 = vmatpush1.bf16.xpose.msra.mxu0 0
    %5457 = vmatprep.subr.bf16.mxu0 0
    %5458 = vmatpush1.bf16.xpose.msra.mxu0 0
    %5459 = vmatprep.subr.bf16.mxu0 0
    %5460 = vmatpush1.bf16.xpose.msra.mxu0 0
    %5461 = vmatprep.subr.bf16.mxu0 0
    %5462 = vmatpush1.bf16.xpose.msra.mxu0 0
    %5463 = vmatprep.subr.bf16.mxu0 0
    %5464 = vmatpush1.bf16.xpose.msra.mxu0 0
    %5465 = vmatprep.subr.bf16.mxu0 0
    %5466 = vmatpush1.bf16.xpose.msra.mxu0 0
    %5467 = vmatprep.mubr.bf16.mxu0 0
    %5468 = vmatmul.mubr.bf16.gmra.mrb[0].mxu0 %v5430
    %v5469 = vpop.f32.mrb[0].mxu0
    %v5470 = vadd.f32 0.0, %v5469
    %v5471 = vpop.f32.mrb[0].mxu0
    %v5472 = vpop.f32.mrb[0].mxu0
    %v5473 = vpop.f32.mrb[0].mxu0
    %5474 = vdwg.mxu0
    %v5475 = vmul.f32 %v5420, 0.25
    %v5476 = vmul.f32 %v5470, 0.25
    %v5477 = vsel %vm3874, %v5475, -inf
    %5478 = vmax.xlane.f32.xlu0 %v5477
    %v5479 = vpop.xlane.xlu0 %5478
    %v5480 = vsel %vm3874, %v5476, -inf
    %5481 = vmax.xlane.f32.xlu0 %v5480
    %v5482 = vpop.xlane.xlu0 %5481
    %v5483 = vsub.f32 %v5475, %v5479
    %v5484 = vsub.f32 %v5476, %v5482
    %v5485 = vmul.f32 %v5483, 1.442695
    %v5486 = vpow.pop %v5485
    %v5487 = vmul.f32 %v5484, 1.442695
    %v5488 = vpow.pop %v5487
    %v5489 = vsel %vm3874, %v5486, 0.0
    %5490 = vadd.xlane.f32.xlu0 %v5489
    %v5491 = vpop.xlane.xlu0 %5490
    %v5492 = vsel %vm3874, %v5488, 0.0
    %5493 = vadd.xlane.f32.xlu0 %v5492
    %v5494 = vpop.xlane.xlu0 %5493
    %v5495 = vrcp.pop %v5491
    %v5496 = vrcp.pop %v5494
    %v5497 = vmul.f32 %v5486, %v5495
    %v5498 = vmul.f32 %v5488, %v5496
    %v5499 = vpack.c.bf16 %v5497, %v5497
    %v5500 = vpack.c.bf16 %v5498, %v5498
    %5502 = vrot.lane.b32.xlu0 %v5279, 112
    %v5503 = vpop.permute.xlu0 %5502
    %v5505 = vsel %vm3874, %v5499, 0
    %v5508 = vsel %vm3904, %v5503, 0
    %5510 = vmatprep.subr.bf16.mxu0 0
    %5511 = vmatpush1.bf16.msra.mxu0 %v5508
    %5512 = vmatprep.subr.bf16.mxu0 0
    %5513 = vmatpush1.bf16.msra.mxu0 0
    %5514 = vmatprep.subr.bf16.mxu0 0
    %5515 = vmatpush1.bf16.msra.mxu0 0
    %5516 = vmatprep.subr.bf16.mxu0 0
    %5517 = vmatpush1.bf16.msra.mxu0 0
    %5518 = vmatprep.subr.bf16.mxu0 0
    %5519 = vmatpush1.bf16.msra.mxu0 0
    %5520 = vmatprep.subr.bf16.mxu0 0
    %5521 = vmatpush1.bf16.msra.mxu0 0
    %5522 = vmatprep.subr.bf16.mxu0 0
    %5523 = vmatpush1.bf16.msra.mxu0 0
    %5524 = vmatprep.subr.bf16.mxu0 0
    %5525 = vmatpush1.bf16.msra.mxu0 0
    %5526 = vmatprep.subr.bf16.mxu0 0
    %5527 = vmatpush1.bf16.msra.mxu0 0
    %5528 = vmatprep.subr.bf16.mxu0 0
    %5529 = vmatpush1.bf16.msra.mxu0 0
    %5530 = vmatprep.subr.bf16.mxu0 0
    %5531 = vmatpush1.bf16.msra.mxu0 0
    %5532 = vmatprep.subr.bf16.mxu0 0
    %5533 = vmatpush1.bf16.msra.mxu0 0
    %5534 = vmatprep.subr.bf16.mxu0 0
    %5535 = vmatpush1.bf16.msra.mxu0 0
    %5536 = vmatprep.subr.bf16.mxu0 0
    %5537 = vmatpush1.bf16.msra.mxu0 0
    %5538 = vmatprep.subr.bf16.mxu0 0
    %5539 = vmatpush1.bf16.msra.mxu0 0
    %5540 = vmatprep.subr.bf16.mxu0 0
    %5541 = vmatpush1.bf16.msra.mxu0 0
    %5542 = vmatprep.mubr.bf16.mxu0 0
    %5543 = vmatmul.mubr.bf16.gmra.mrb[0].mxu0 %v5505
    %v5544 = vpop.f32.mrb[0].mxu0
    %v5545 = vadd.f32 0.0, %v5544
    %v5546 = vpop.f32.mrb[0].mxu0
    %v5547 = vpop.f32.mrb[0].mxu0
    %v5548 = vpop.f32.mrb[0].mxu0
    %5549 = vdwg.mxu0
    %5551 = vrot.lane.b32.xlu0 %v5280, 112
    %v5552 = vpop.permute.xlu0 %5551
    %v5554 = vsel %vm3874, %v5500, 0
    %v5557 = vsel %vm3904, %v5552, 0
    %5559 = vmatprep.subr.bf16.mxu0 0
    %5560 = vmatpush1.bf16.msra.mxu0 %v5557
    %5561 = vmatprep.subr.bf16.mxu0 0
    %5562 = vmatpush1.bf16.msra.mxu0 0
    %5563 = vmatprep.subr.bf16.mxu0 0
    %5564 = vmatpush1.bf16.msra.mxu0 0
    %5565 = vmatprep.subr.bf16.mxu0 0
    %5566 = vmatpush1.bf16.msra.mxu0 0
    %5567 = vmatprep.subr.bf16.mxu0 0
    %5568 = vmatpush1.bf16.msra.mxu0 0
    %5569 = vmatprep.subr.bf16.mxu0 0
    %5570 = vmatpush1.bf16.msra.mxu0 0
    %5571 = vmatprep.subr.bf16.mxu0 0
    %5572 = vmatpush1.bf16.msra.mxu0 0
    %5573 = vmatprep.subr.bf16.mxu0 0
    %5574 = vmatpush1.bf16.msra.mxu0 0
    %5575 = vmatprep.subr.bf16.mxu0 0
    %5576 = vmatpush1.bf16.msra.mxu0 0
    %5577 = vmatprep.subr.bf16.mxu0 0
    %5578 = vmatpush1.bf16.msra.mxu0 0
    %5579 = vmatprep.subr.bf16.mxu0 0
    %5580 = vmatpush1.bf16.msra.mxu0 0
    %5581 = vmatprep.subr.bf16.mxu0 0
    %5582 = vmatpush1.bf16.msra.mxu0 0
    %5583 = vmatprep.subr.bf16.mxu0 0
    %5584 = vmatpush1.bf16.msra.mxu0 0
    %5585 = vmatprep.subr.bf16.mxu0 0
    %5586 = vmatpush1.bf16.msra.mxu0 0
    %5587 = vmatprep.subr.bf16.mxu0 0
    %5588 = vmatpush1.bf16.msra.mxu0 0
    %5589 = vmatprep.subr.bf16.mxu0 0
    %5590 = vmatpush1.bf16.msra.mxu0 0
    %5591 = vmatprep.mubr.bf16.mxu0 0
    %5592 = vmatmul.mubr.bf16.gmra.mrb[0].mxu0 %v5554
    %v5593 = vpop.f32.mrb[0].mxu0
    %v5594 = vadd.f32 0.0, %v5593
    %v5595 = vpop.f32.mrb[0].mxu0
    %v5596 = vpop.f32.mrb[0].mxu0
    %v5597 = vpop.f32.mrb[0].mxu0
    %5598 = vdwg.mxu0
    %5601 = vrot.lane.b32.xlu0 %v5545, 16
    %v5602 = vpop.permute.xlu0 %5601
    %5603 = vrot.lane.b32.xlu0 %v5594, 16
    %v5604 = vpop.permute.xlu0 %5603
    %5607 = vst.msk [vmem:[#allocation3] sm:$0xff] %vm4228, %v5602
    %5608 = vst.msk [vmem:[#allocation3 + $0x8] sm:$0xff] %vm4228, %v5604
    %5609 = vrot.lane.b32.xlu0 %v5153, 96
    %v5610 = vpop.permute.xlu0 %5609
    %5611 = vrot.lane.b32.xlu0 %v5153, 32
    %v5612 = vpop.permute.xlu0 %5611
    %v5614 = vsel %vm151, %v5610, 0
    %v5617 = vsel %vm151, %v5612, 0
    %5619 = vmatprep.subr.bf16.mxu0 0
    %5620 = vmatpush1.bf16.xpose.msra.mxu0 %v5617
    %5621 = vmatprep.subr.bf16.mxu0 0
    %5622 = vmatpush1.bf16.xpose.msra.mxu0 0
    %5623 = vmatprep.subr.bf16.mxu0 0
    %5624 = vmatpush1.bf16.xpose.msra.mxu0 0
    %5625 = vmatprep.subr.bf16.mxu0 0
    %5626 = vmatpush1.bf16.xpose.msra.mxu0 0
    %5627 = vmatprep.subr.bf16.mxu0 0
    %5628 = vmatpush1.bf16.xpose.msra.mxu0 0
    %5629 = vmatprep.subr.bf16.mxu0 0
    %5630 = vmatpush1.bf16.xpose.msra.mxu0 0
    %5631 = vmatprep.subr.bf16.mxu0 0
    %5632 = vmatpush1.bf16.xpose.msra.mxu0 0
    %5633 = vmatprep.subr.bf16.mxu0 0
    %5634 = vmatpush1.bf16.xpose.msra.mxu0 0
    %5635 = vmatprep.subr.bf16.mxu0 0
    %5636 = vmatpush1.bf16.xpose.msra.mxu0 0
    %5637 = vmatprep.subr.bf16.mxu0 0
    %5638 = vmatpush1.bf16.xpose.msra.mxu0 0
    %5639 = vmatprep.subr.bf16.mxu0 0
    %5640 = vmatpush1.bf16.xpose.msra.mxu0 0
    %5641 = vmatprep.subr.bf16.mxu0 0
    %5642 = vmatpush1.bf16.xpose.msra.mxu0 0
    %5643 = vmatprep.subr.bf16.mxu0 0
    %5644 = vmatpush1.bf16.xpose.msra.mxu0 0
    %5645 = vmatprep.subr.bf16.mxu0 0
    %5646 = vmatpush1.bf16.xpose.msra.mxu0 0
    %5647 = vmatprep.subr.bf16.mxu0 0
    %5648 = vmatpush1.bf16.xpose.msra.mxu0 0
    %5649 = vmatprep.subr.bf16.mxu0 0
    %5650 = vmatpush1.bf16.xpose.msra.mxu0 0
    %5651 = vmatprep.mubr.bf16.mxu0 0
    %5652 = vmatmul.mubr.bf16.gmra.mrb[0].mxu0 %v5614
    %v5653 = vpop.f32.mrb[0].mxu0
    %v5654 = vadd.f32 0.0, %v5653
    %v5655 = vpop.f32.mrb[0].mxu0
    %v5656 = vpop.f32.mrb[0].mxu0
    %v5657 = vpop.f32.mrb[0].mxu0
    %5658 = vdwg.mxu0
    %5659 = vrot.lane.b32.xlu0 %v5154, 96
    %v5660 = vpop.permute.xlu0 %5659
    %5661 = vrot.lane.b32.xlu0 %v5154, 32
    %v5662 = vpop.permute.xlu0 %5661
    %v5664 = vsel %vm151, %v5660, 0
    %v5667 = vsel %vm151, %v5662, 0
    %5669 = vmatprep.subr.bf16.mxu0 0
    %5670 = vmatpush1.bf16.xpose.msra.mxu0 %v5667
    %5671 = vmatprep.subr.bf16.mxu0 0
    %5672 = vmatpush1.bf16.xpose.msra.mxu0 0
    %5673 = vmatprep.subr.bf16.mxu0 0
    %5674 = vmatpush1.bf16.xpose.msra.mxu0 0
    %5675 = vmatprep.subr.bf16.mxu0 0
    %5676 = vmatpush1.bf16.xpose.msra.mxu0 0
    %5677 = vmatprep.subr.bf16.mxu0 0
    %5678 = vmatpush1.bf16.xpose.msra.mxu0 0
    %5679 = vmatprep.subr.bf16.mxu0 0
    %5680 = vmatpush1.bf16.xpose.msra.mxu0 0
    %5681 = vmatprep.subr.bf16.mxu0 0
    %5682 = vmatpush1.bf16.xpose.msra.mxu0 0
    %5683 = vmatprep.subr.bf16.mxu0 0
    %5684 = vmatpush1.bf16.xpose.msra.mxu0 0
    %5685 = vmatprep.subr.bf16.mxu0 0
    %5686 = vmatpush1.bf16.xpose.msra.mxu0 0
    %5687 = vmatprep.subr.bf16.mxu0 0
    %5688 = vmatpush1.bf16.xpose.msra.mxu0 0
    %5689 = vmatprep.subr.bf16.mxu0 0
    %5690 = vmatpush1.bf16.xpose.msra.mxu0 0
    %5691 = vmatprep.subr.bf16.mxu0 0
    %5692 = vmatpush1.bf16.xpose.msra.mxu0 0
    %5693 = vmatprep.subr.bf16.mxu0 0
    %5694 = vmatpush1.bf16.xpose.msra.mxu0 0
    %5695 = vmatprep.subr.bf16.mxu0 0
    %5696 = vmatpush1.bf16.xpose.msra.mxu0 0
    %5697 = vmatprep.subr.bf16.mxu0 0
    %5698 = vmatpush1.bf16.xpose.msra.mxu0 0
    %5699 = vmatprep.subr.bf16.mxu0 0
    %5700 = vmatpush1.bf16.xpose.msra.mxu0 0
    %5701 = vmatprep.mubr.bf16.mxu0 0
    %5702 = vmatmul.mubr.bf16.gmra.mrb[0].mxu0 %v5664
    %v5703 = vpop.f32.mrb[0].mxu0
    %v5704 = vadd.f32 0.0, %v5703
    %v5705 = vpop.f32.mrb[0].mxu0
    %v5706 = vpop.f32.mrb[0].mxu0
    %v5707 = vpop.f32.mrb[0].mxu0
    %5708 = vdwg.mxu0
    %v5709 = vmul.f32 %v5654, 0.25
    %v5710 = vmul.f32 %v5704, 0.25
    %v5711 = vsel %vm3874, %v5709, -inf
    %5712 = vmax.xlane.f32.xlu0 %v5711
    %v5713 = vpop.xlane.xlu0 %5712
    %v5714 = vsel %vm3874, %v5710, -inf
    %5715 = vmax.xlane.f32.xlu0 %v5714
    %v5716 = vpop.xlane.xlu0 %5715
    %v5717 = vsub.f32 %v5709, %v5713
    %v5718 = vsub.f32 %v5710, %v5716
    %v5719 = vmul.f32 %v5717, 1.442695
    %v5720 = vpow.pop %v5719
    %v5721 = vmul.f32 %v5718, 1.442695
    %v5722 = vpow.pop %v5721
    %v5723 = vsel %vm3874, %v5720, 0.0
    %5724 = vadd.xlane.f32.xlu0 %v5723
    %v5725 = vpop.xlane.xlu0 %5724
    %v5726 = vsel %vm3874, %v5722, 0.0
    %5727 = vadd.xlane.f32.xlu0 %v5726
    %v5728 = vpop.xlane.xlu0 %5727
    %v5729 = vrcp.pop %v5725
    %v5730 = vrcp.pop %v5728
    %v5731 = vmul.f32 %v5720, %v5729
    %v5732 = vmul.f32 %v5722, %v5730
    %v5733 = vpack.c.bf16 %v5731, %v5731
    %v5734 = vpack.c.bf16 %v5732, %v5732
    %5735 = vrot.lane.b32.xlu0 %v5279, 96
    %v5736 = vpop.permute.xlu0 %5735
    %v5738 = vsel %vm3874, %v5733, 0
    %v5741 = vsel %vm3904, %v5736, 0
    %5743 = vmatprep.subr.bf16.mxu0 0
    %5744 = vmatpush1.bf16.msra.mxu0 %v5741
    %5745 = vmatprep.subr.bf16.mxu0 0
    %5746 = vmatpush1.bf16.msra.mxu0 0
    %5747 = vmatprep.subr.bf16.mxu0 0
    %5748 = vmatpush1.bf16.msra.mxu0 0
    %5749 = vmatprep.subr.bf16.mxu0 0
    %5750 = vmatpush1.bf16.msra.mxu0 0
    %5751 = vmatprep.subr.bf16.mxu0 0
    %5752 = vmatpush1.bf16.msra.mxu0 0
    %5753 = vmatprep.subr.bf16.mxu0 0
    %5754 = vmatpush1.bf16.msra.mxu0 0
    %5755 = vmatprep.subr.bf16.mxu0 0
    %5756 = vmatpush1.bf16.msra.mxu0 0
    %5757 = vmatprep.subr.bf16.mxu0 0
    %5758 = vmatpush1.bf16.msra.mxu0 0
    %5759 = vmatprep.subr.bf16.mxu0 0
    %5760 = vmatpush1.bf16.msra.mxu0 0
    %5761 = vmatprep.subr.bf16.mxu0 0
    %5762 = vmatpush1.bf16.msra.mxu0 0
    %5763 = vmatprep.subr.bf16.mxu0 0
    %5764 = vmatpush1.bf16.msra.mxu0 0
    %5765 = vmatprep.subr.bf16.mxu0 0
    %5766 = vmatpush1.bf16.msra.mxu0 0
    %5767 = vmatprep.subr.bf16.mxu0 0
    %5768 = vmatpush1.bf16.msra.mxu0 0
    %5769 = vmatprep.subr.bf16.mxu0 0
    %5770 = vmatpush1.bf16.msra.mxu0 0
    %5771 = vmatprep.subr.bf16.mxu0 0
    %5772 = vmatpush1.bf16.msra.mxu0 0
    %5773 = vmatprep.subr.bf16.mxu0 0
    %5774 = vmatpush1.bf16.msra.mxu0 0
    %5775 = vmatprep.mubr.bf16.mxu0 0
    %5776 = vmatmul.mubr.bf16.gmra.mrb[0].mxu0 %v5738
    %v5777 = vpop.f32.mrb[0].mxu0
    %v5778 = vadd.f32 0.0, %v5777
    %v5779 = vpop.f32.mrb[0].mxu0
    %v5780 = vpop.f32.mrb[0].mxu0
    %v5781 = vpop.f32.mrb[0].mxu0
    %5782 = vdwg.mxu0
    %5783 = vrot.lane.b32.xlu0 %v5280, 96
    %v5784 = vpop.permute.xlu0 %5783
    %v5786 = vsel %vm3874, %v5734, 0
    %v5789 = vsel %vm3904, %v5784, 0
    %5791 = vmatprep.subr.bf16.mxu0 0
    %5792 = vmatpush1.bf16.msra.mxu0 %v5789
    %5793 = vmatprep.subr.bf16.mxu0 0
    %5794 = vmatpush1.bf16.msra.mxu0 0
    %5795 = vmatprep.subr.bf16.mxu0 0
    %5796 = vmatpush1.bf16.msra.mxu0 0
    %5797 = vmatprep.subr.bf16.mxu0 0
    %5798 = vmatpush1.bf16.msra.mxu0 0
    %5799 = vmatprep.subr.bf16.mxu0 0
    %5800 = vmatpush1.bf16.msra.mxu0 0
    %5801 = vmatprep.subr.bf16.mxu0 0
    %5802 = vmatpush1.bf16.msra.mxu0 0
    %5803 = vmatprep.subr.bf16.mxu0 0
    %5804 = vmatpush1.bf16.msra.mxu0 0
    %5805 = vmatprep.subr.bf16.mxu0 0
    %5806 = vmatpush1.bf16.msra.mxu0 0
    %5807 = vmatprep.subr.bf16.mxu0 0
    %5808 = vmatpush1.bf16.msra.mxu0 0
    %5809 = vmatprep.subr.bf16.mxu0 0
    %5810 = vmatpush1.bf16.msra.mxu0 0
    %5811 = vmatprep.subr.bf16.mxu0 0
    %5812 = vmatpush1.bf16.msra.mxu0 0
    %5813 = vmatprep.subr.bf16.mxu0 0
    %5814 = vmatpush1.bf16.msra.mxu0 0
    %5815 = vmatprep.subr.bf16.mxu0 0
    %5816 = vmatpush1.bf16.msra.mxu0 0
    %5817 = vmatprep.subr.bf16.mxu0 0
    %5818 = vmatpush1.bf16.msra.mxu0 0
    %5819 = vmatprep.subr.bf16.mxu0 0
    %5820 = vmatpush1.bf16.msra.mxu0 0
    %5821 = vmatprep.subr.bf16.mxu0 0
    %5822 = vmatpush1.bf16.msra.mxu0 0
    %5823 = vmatprep.mubr.bf16.mxu0 0
    %5824 = vmatmul.mubr.bf16.gmra.mrb[0].mxu0 %v5786
    %v5825 = vpop.f32.mrb[0].mxu0
    %v5826 = vadd.f32 0.0, %v5825
    %v5827 = vpop.f32.mrb[0].mxu0
    %v5828 = vpop.f32.mrb[0].mxu0
    %v5829 = vpop.f32.mrb[0].mxu0
    %5830 = vdwg.mxu0
    %5833 = vrot.lane.b32.xlu0 %v5778, 32
    %v5834 = vpop.permute.xlu0 %5833
    %5835 = vrot.lane.b32.xlu0 %v5826, 32
    %v5836 = vpop.permute.xlu0 %5835
    %5839 = vst.msk [vmem:[#allocation3] sm:$0xff] %vm4461, %v5834
    %5840 = vst.msk [vmem:[#allocation3 + $0x8] sm:$0xff] %vm4461, %v5836
    %5841 = vrot.lane.b32.xlu0 %v5153, 80
    %v5842 = vpop.permute.xlu0 %5841
    %5843 = vrot.lane.b32.xlu0 %v5153, 16
    %v5844 = vpop.permute.xlu0 %5843
    %v5846 = vsel %vm151, %v5842, 0
    %v5849 = vsel %vm151, %v5844, 0
    %5851 = vmatprep.subr.bf16.mxu0 0
    %5852 = vmatpush1.bf16.xpose.msra.mxu0 %v5849
    %5853 = vmatprep.subr.bf16.mxu0 0
    %5854 = vmatpush1.bf16.xpose.msra.mxu0 0
    %5855 = vmatprep.subr.bf16.mxu0 0
    %5856 = vmatpush1.bf16.xpose.msra.mxu0 0
    %5857 = vmatprep.subr.bf16.mxu0 0
    %5858 = vmatpush1.bf16.xpose.msra.mxu0 0
    %5859 = vmatprep.subr.bf16.mxu0 0
    %5860 = vmatpush1.bf16.xpose.msra.mxu0 0
    %5861 = vmatprep.subr.bf16.mxu0 0
    %5862 = vmatpush1.bf16.xpose.msra.mxu0 0
    %5863 = vmatprep.subr.bf16.mxu0 0
    %5864 = vmatpush1.bf16.xpose.msra.mxu0 0
    %5865 = vmatprep.subr.bf16.mxu0 0
    %5866 = vmatpush1.bf16.xpose.msra.mxu0 0
    %5867 = vmatprep.subr.bf16.mxu0 0
    %5868 = vmatpush1.bf16.xpose.msra.mxu0 0
    %5869 = vmatprep.subr.bf16.mxu0 0
    %5870 = vmatpush1.bf16.xpose.msra.mxu0 0
    %5871 = vmatprep.subr.bf16.mxu0 0
    %5872 = vmatpush1.bf16.xpose.msra.mxu0 0
    %5873 = vmatprep.subr.bf16.mxu0 0
    %5874 = vmatpush1.bf16.xpose.msra.mxu0 0
    %5875 = vmatprep.subr.bf16.mxu0 0
    %5876 = vmatpush1.bf16.xpose.msra.mxu0 0
    %5877 = vmatprep.subr.bf16.mxu0 0
    %5878 = vmatpush1.bf16.xpose.msra.mxu0 0
    %5879 = vmatprep.subr.bf16.mxu0 0
    %5880 = vmatpush1.bf16.xpose.msra.mxu0 0
    %5881 = vmatprep.subr.bf16.mxu0 0
    %5882 = vmatpush1.bf16.xpose.msra.mxu0 0
    %5883 = vmatprep.mubr.bf16.mxu0 0
    %5884 = vmatmul.mubr.bf16.gmra.mrb[0].mxu0 %v5846
    %v5885 = vpop.f32.mrb[0].mxu0
    %v5886 = vadd.f32 0.0, %v5885
    %v5887 = vpop.f32.mrb[0].mxu0
    %v5888 = vpop.f32.mrb[0].mxu0
    %v5889 = vpop.f32.mrb[0].mxu0
    %5890 = vdwg.mxu0
    %5891 = vrot.lane.b32.xlu0 %v5154, 80
    %v5892 = vpop.permute.xlu0 %5891
    %5893 = vrot.lane.b32.xlu0 %v5154, 16
    %v5894 = vpop.permute.xlu0 %5893
    %v5896 = vsel %vm151, %v5892, 0
    %v5899 = vsel %vm151, %v5894, 0
    %5901 = vmatprep.subr.bf16.mxu0 0
    %5902 = vmatpush1.bf16.xpose.msra.mxu0 %v5899
    %5903 = vmatprep.subr.bf16.mxu0 0
    %5904 = vmatpush1.bf16.xpose.msra.mxu0 0
    %5905 = vmatprep.subr.bf16.mxu0 0
    %5906 = vmatpush1.bf16.xpose.msra.mxu0 0
    %5907 = vmatprep.subr.bf16.mxu0 0
    %5908 = vmatpush1.bf16.xpose.msra.mxu0 0
    %5909 = vmatprep.subr.bf16.mxu0 0
    %5910 = vmatpush1.bf16.xpose.msra.mxu0 0
    %5911 = vmatprep.subr.bf16.mxu0 0
    %5912 = vmatpush1.bf16.xpose.msra.mxu0 0
    %5913 = vmatprep.subr.bf16.mxu0 0
    %5914 = vmatpush1.bf16.xpose.msra.mxu0 0
    %5915 = vmatprep.subr.bf16.mxu0 0
    %5916 = vmatpush1.bf16.xpose.msra.mxu0 0
    %5917 = vmatprep.subr.bf16.mxu0 0
    %5918 = vmatpush1.bf16.xpose.msra.mxu0 0
    %5919 = vmatprep.subr.bf16.mxu0 0
    %5920 = vmatpush1.bf16.xpose.msra.mxu0 0
    %5921 = vmatprep.subr.bf16.mxu0 0
    %5922 = vmatpush1.bf16.xpose.msra.mxu0 0
    %5923 = vmatprep.subr.bf16.mxu0 0
    %5924 = vmatpush1.bf16.xpose.msra.mxu0 0
    %5925 = vmatprep.subr.bf16.mxu0 0
    %5926 = vmatpush1.bf16.xpose.msra.mxu0 0
    %5927 = vmatprep.subr.bf16.mxu0 0
    %5928 = vmatpush1.bf16.xpose.msra.mxu0 0
    %5929 = vmatprep.subr.bf16.mxu0 0
    %5930 = vmatpush1.bf16.xpose.msra.mxu0 0
    %5931 = vmatprep.subr.bf16.mxu0 0
    %5932 = vmatpush1.bf16.xpose.msra.mxu0 0
    %5933 = vmatprep.mubr.bf16.mxu0 0
    %5934 = vmatmul.mubr.bf16.gmra.mrb[0].mxu0 %v5896
    %v5935 = vpop.f32.mrb[0].mxu0
    %v5936 = vadd.f32 0.0, %v5935
    %v5937 = vpop.f32.mrb[0].mxu0
    %v5938 = vpop.f32.mrb[0].mxu0
    %v5939 = vpop.f32.mrb[0].mxu0
    %5940 = vdwg.mxu0
    %v5941 = vmul.f32 %v5886, 0.25
    %v5942 = vmul.f32 %v5936, 0.25
    %v5943 = vsel %vm3874, %v5941, -inf
    %5944 = vmax.xlane.f32.xlu0 %v5943
    %v5945 = vpop.xlane.xlu0 %5944
    %v5946 = vsel %vm3874, %v5942, -inf
    %5947 = vmax.xlane.f32.xlu0 %v5946
    %v5948 = vpop.xlane.xlu0 %5947
    %v5949 = vsub.f32 %v5941, %v5945
    %v5950 = vsub.f32 %v5942, %v5948
    %v5951 = vmul.f32 %v5949, 1.442695
    %v5952 = vpow.pop %v5951
    %v5953 = vmul.f32 %v5950, 1.442695
    %v5954 = vpow.pop %v5953
    %v5955 = vsel %vm3874, %v5952, 0.0
    %5956 = vadd.xlane.f32.xlu0 %v5955
    %v5957 = vpop.xlane.xlu0 %5956
    %v5958 = vsel %vm3874, %v5954, 0.0
    %5959 = vadd.xlane.f32.xlu0 %v5958
    %v5960 = vpop.xlane.xlu0 %5959
    %v5961 = vrcp.pop %v5957
    %v5962 = vrcp.pop %v5960
    %v5963 = vmul.f32 %v5952, %v5961
    %v5964 = vmul.f32 %v5954, %v5962
    %v5965 = vpack.c.bf16 %v5963, %v5963
    %v5966 = vpack.c.bf16 %v5964, %v5964
    %5967 = vrot.lane.b32.xlu0 %v5279, 80
    %v5968 = vpop.permute.xlu0 %5967
    %v5970 = vsel %vm3874, %v5965, 0
    %v5973 = vsel %vm3904, %v5968, 0
    %5975 = vmatprep.subr.bf16.mxu0 0
    %5976 = vmatpush1.bf16.msra.mxu0 %v5973
    %5977 = vmatprep.subr.bf16.mxu0 0
    %5978 = vmatpush1.bf16.msra.mxu0 0
    %5979 = vmatprep.subr.bf16.mxu0 0
    %5980 = vmatpush1.bf16.msra.mxu0 0
    %5981 = vmatprep.subr.bf16.mxu0 0
    %5982 = vmatpush1.bf16.msra.mxu0 0
    %5983 = vmatprep.subr.bf16.mxu0 0
    %5984 = vmatpush1.bf16.msra.mxu0 0
    %5985 = vmatprep.subr.bf16.mxu0 0
    %5986 = vmatpush1.bf16.msra.mxu0 0
    %5987 = vmatprep.subr.bf16.mxu0 0
    %5988 = vmatpush1.bf16.msra.mxu0 0
    %5989 = vmatprep.subr.bf16.mxu0 0
    %5990 = vmatpush1.bf16.msra.mxu0 0
    %5991 = vmatprep.subr.bf16.mxu0 0
    %5992 = vmatpush1.bf16.msra.mxu0 0
    %5993 = vmatprep.subr.bf16.mxu0 0
    %5994 = vmatpush1.bf16.msra.mxu0 0
    %5995 = vmatprep.subr.bf16.mxu0 0
    %5996 = vmatpush1.bf16.msra.mxu0 0
    %5997 = vmatprep.subr.bf16.mxu0 0
    %5998 = vmatpush1.bf16.msra.mxu0 0
    %5999 = vmatprep.subr.bf16.mxu0 0
    %6000 = vmatpush1.bf16.msra.mxu0 0
    %6001 = vmatprep.subr.bf16.mxu0 0
    %6002 = vmatpush1.bf16.msra.mxu0 0
    %6003 = vmatprep.subr.bf16.mxu0 0
    %6004 = vmatpush1.bf16.msra.mxu0 0
    %6005 = vmatprep.subr.bf16.mxu0 0
    %6006 = vmatpush1.bf16.msra.mxu0 0
    %6007 = vmatprep.mubr.bf16.mxu0 0
    %6008 = vmatmul.mubr.bf16.gmra.mrb[0].mxu0 %v5970
    %v6009 = vpop.f32.mrb[0].mxu0
    %v6010 = vadd.f32 0.0, %v6009
    %v6011 = vpop.f32.mrb[0].mxu0
    %v6012 = vpop.f32.mrb[0].mxu0
    %v6013 = vpop.f32.mrb[0].mxu0
    %6014 = vdwg.mxu0
    %6015 = vrot.lane.b32.xlu0 %v5280, 80
    %v6016 = vpop.permute.xlu0 %6015
    %v6018 = vsel %vm3874, %v5966, 0
    %v6021 = vsel %vm3904, %v6016, 0
    %6023 = vmatprep.subr.bf16.mxu0 0
    %6024 = vmatpush1.bf16.msra.mxu0 %v6021
    %6025 = vmatprep.subr.bf16.mxu0 0
    %6026 = vmatpush1.bf16.msra.mxu0 0
    %6027 = vmatprep.subr.bf16.mxu0 0
    %6028 = vmatpush1.bf16.msra.mxu0 0
    %6029 = vmatprep.subr.bf16.mxu0 0
    %6030 = vmatpush1.bf16.msra.mxu0 0
    %6031 = vmatprep.subr.bf16.mxu0 0
    %6032 = vmatpush1.bf16.msra.mxu0 0
    %6033 = vmatprep.subr.bf16.mxu0 0
    %6034 = vmatpush1.bf16.msra.mxu0 0
    %6035 = vmatprep.subr.bf16.mxu0 0
    %6036 = vmatpush1.bf16.msra.mxu0 0
    %6037 = vmatprep.subr.bf16.mxu0 0
    %6038 = vmatpush1.bf16.msra.mxu0 0
    %6039 = vmatprep.subr.bf16.mxu0 0
    %6040 = vmatpush1.bf16.msra.mxu0 0
    %6041 = vmatprep.subr.bf16.mxu0 0
    %6042 = vmatpush1.bf16.msra.mxu0 0
    %6043 = vmatprep.subr.bf16.mxu0 0
    %6044 = vmatpush1.bf16.msra.mxu0 0
    %6045 = vmatprep.subr.bf16.mxu0 0
    %6046 = vmatpush1.bf16.msra.mxu0 0
    %6047 = vmatprep.subr.bf16.mxu0 0
    %6048 = vmatpush1.bf16.msra.mxu0 0
    %6049 = vmatprep.subr.bf16.mxu0 0
    %6050 = vmatpush1.bf16.msra.mxu0 0
    %6051 = vmatprep.subr.bf16.mxu0 0
    %6052 = vmatpush1.bf16.msra.mxu0 0
    %6053 = vmatprep.subr.bf16.mxu0 0
    %6054 = vmatpush1.bf16.msra.mxu0 0
    %6055 = vmatprep.mubr.bf16.mxu0 0
    %6056 = vmatmul.mubr.bf16.gmra.mrb[0].mxu0 %v6018
    %v6057 = vpop.f32.mrb[0].mxu0
    %v6058 = vadd.f32 0.0, %v6057
    %v6059 = vpop.f32.mrb[0].mxu0
    %v6060 = vpop.f32.mrb[0].mxu0
    %v6061 = vpop.f32.mrb[0].mxu0
    %6062 = vdwg.mxu0
    %6065 = vrot.lane.b32.xlu0 %v6010, 48
    %v6066 = vpop.permute.xlu0 %6065
    %6067 = vrot.lane.b32.xlu0 %v6058, 48
    %v6068 = vpop.permute.xlu0 %6067
    %6071 = vst.msk [vmem:[#allocation3] sm:$0xff] %vm4694, %v6066
    %6072 = vst.msk [vmem:[#allocation3 + $0x8] sm:$0xff] %vm4694, %v6068
    %v6073 = vld [vmem:[#allocation3] sm:$0xff]
    %v6074 = vld [vmem:[#allocation3 + $0x8] sm:$0xff]
    %v6075 = vpack.c.bf16 %v6074, %v6073
    %v6084 = vunpack.c.l.b16 %v5016
    %v6085 = vunpack.c.l.b16 %v5017
    %v6086 = vunpack.c.l.b16 %v5018
    %v6087 = vunpack.c.l.b16 %v5019
    %v6088 = vunpack.c.l.b16 %v5020
    %v6089 = vunpack.c.l.b16 %v5021
    %v6090 = vunpack.c.l.b16 %v5022
    %v6091 = vunpack.c.l.b16 %v5023
    %v6092 = vpack.c.b16 %v6085, %v6084
    %v6093 = vpack.c.b16 %v6087, %v6086
    %v6094 = vpack.c.b16 %v6089, %v6088
    %v6095 = vpack.c.b16 %v6091, %v6090
    %v6101 = vsel %vm505, %v6075, 0
    %6103 = vmatprep.subr.bf16.mxu0 0
    %6104 = vmatpush1.bf16.msra.mxu0 %v6092
    %6105 = vmatprep.subr.bf16.mxu0 0
    %6106 = vmatpush1.bf16.msra.mxu0 %v6093
    %6107 = vmatprep.subr.bf16.mxu0 0
    %6108 = vmatpush1.bf16.msra.mxu0 %v6094
    %6109 = vmatprep.subr.bf16.mxu0 0
    %6110 = vmatpush1.bf16.msra.mxu0 %v6095
    %6111 = vmatprep.subr.bf16.mxu0 0
    %6112 = vmatpush1.bf16.msra.mxu0 0
    %6113 = vmatprep.subr.bf16.mxu0 0
    %6114 = vmatpush1.bf16.msra.mxu0 0
    %6115 = vmatprep.subr.bf16.mxu0 0
    %6116 = vmatpush1.bf16.msra.mxu0 0
    %6117 = vmatprep.subr.bf16.mxu0 0
    %6118 = vmatpush1.bf16.msra.mxu0 0
    %6119 = vmatprep.subr.bf16.mxu0 0
    %6120 = vmatpush1.bf16.msra.mxu0 0
    %6121 = vmatprep.subr.bf16.mxu0 0
    %6122 = vmatpush1.bf16.msra.mxu0 0
    %6123 = vmatprep.subr.bf16.mxu0 0
    %6124 = vmatpush1.bf16.msra.mxu0 0
    %6125 = vmatprep.subr.bf16.mxu0 0
    %6126 = vmatpush1.bf16.msra.mxu0 0
    %6127 = vmatprep.subr.bf16.mxu0 0
    %6128 = vmatpush1.bf16.msra.mxu0 0
    %6129 = vmatprep.subr.bf16.mxu0 0
    %6130 = vmatpush1.bf16.msra.mxu0 0
    %6131 = vmatprep.subr.bf16.mxu0 0
    %6132 = vmatpush1.bf16.msra.mxu0 0
    %6133 = vmatprep.subr.bf16.mxu0 0
    %6134 = vmatpush1.bf16.msra.mxu0 0
    %6135 = vmatprep.mubr.bf16.mxu0 0
    %6136 = vmatmul.mubr.bf16.gmra.mrb[0].mxu0 %v6101
    %v6137 = vpop.f32.mrb[0].mxu0
    %v6138 = vadd.f32 %v5024, %v6137
    %v6139 = vpop.f32.mrb[0].mxu0
    %v6140 = vpop.f32.mrb[0].mxu0
    %v6141 = vadd.f32 %v5024, %v6140
    %v6142 = vpop.f32.mrb[0].mxu0
    %6143 = vdwg.mxu0
    %v6144 = vadd.f32 %v5004, %v6138
    %v6145 = vadd.f32 %v5005, %v6141
    %v6146 = vsel %vm505, %v6144, 0.0
    %6147 = vadd.xlane.f32.xlu0 %v6146
    %v6148 = vpop.xlane.xlu0 %6147
    %v6149 = vsel %vm505, %v6145, 0.0
    %6150 = vadd.xlane.f32.xlu0 %v6149
    %v6151 = vpop.xlane.xlu0 %6150
    %v6152 = vmul.f32 %v6148, %v4776
    %v6153 = vmul.f32 %v6151, %v4776
    %v6154 = vmul.f32 %v6144, %v6144
    %v6155 = vmul.f32 %v6145, %v6145
    %v6156 = vsel %vm505, %v6154, 0.0
    %6157 = vadd.xlane.f32.xlu0 %v6156
    %v6158 = vpop.xlane.xlu0 %6157
    %v6159 = vsel %vm505, %v6155, 0.0
    %6160 = vadd.xlane.f32.xlu0 %v6159
    %v6161 = vpop.xlane.xlu0 %6160
    %v6162 = vmul.f32 %v6158, %v4776
    %v6163 = vmul.f32 %v6161, %v4776
    %v6164 = vmul.f32 %v6152, %v6152
    %v6165 = vmul.f32 %v6153, %v6153
    %v6166 = vsub.f32 %v6162, %v6164
    %v6167 = vsub.f32 %v6163, %v6165
    %v6168 = vmax.f32 %v6166, 0.0
    %v6169 = vmax.f32 %v6167, 0.0
    %v6170 = vsub.f32 %v6144, %v6152
    %v6171 = vsub.f32 %v6145, %v6153
    %v6172 = vadd.f32 %v6168, 1e-05
    %v6173 = vadd.f32 %v6169, 1e-05
    %v6174 = vrsqrt.pop %v6172
    %v6175 = vrsqrt.pop %v6173
    %v6176 = vmul.f32 %v6170, %v6174
    %v6177 = vmul.f32 %v6171, %v6175
    %v6178 = vmul.f32 %v6176, %v5025
    %v6179 = vmul.f32 %v6177, %v5025
    %v6180 = vadd.f32 %v6178, %v5026
    %v6181 = vadd.f32 %v6179, %v5026
    %v6182 = vpack.c.bf16 %v6181, %v6180
    %v6191 = vunpack.c.l.b16 %v5027
    %v6192 = vunpack.c.l.b16 %v5028
    %v6193 = vunpack.c.l.b16 %v5029
    %v6194 = vunpack.c.l.b16 %v5030
    %v6195 = vunpack.c.l.b16 %v5031
    %v6196 = vunpack.c.l.b16 %v5032
    %v6197 = vunpack.c.l.b16 %v5033
    %v6198 = vunpack.c.l.b16 %v5034
    %v6199 = vpack.c.b16 %v6192, %v6191
    %v6200 = vpack.c.b16 %v6194, %v6193
    %v6201 = vpack.c.b16 %v6196, %v6195
    %v6202 = vpack.c.b16 %v6198, %v6197
    %v6208 = vsel %vm505, %v6182, 0
    %6210 = vmatprep.subr.bf16.mxu0 0
    %6211 = vmatpush1.bf16.msra.mxu0 %v6199
    %6212 = vmatprep.subr.bf16.mxu0 0
    %6213 = vmatpush1.bf16.msra.mxu0 %v6200
    %6214 = vmatprep.subr.bf16.mxu0 0
    %6215 = vmatpush1.bf16.msra.mxu0 %v6201
    %6216 = vmatprep.subr.bf16.mxu0 0
    %6217 = vmatpush1.bf16.msra.mxu0 %v6202
    %6218 = vmatprep.subr.bf16.mxu0 0
    %6219 = vmatpush1.bf16.msra.mxu0 0
    %6220 = vmatprep.subr.bf16.mxu0 0
    %6221 = vmatpush1.bf16.msra.mxu0 0
    %6222 = vmatprep.subr.bf16.mxu0 0
    %6223 = vmatpush1.bf16.msra.mxu0 0
    %6224 = vmatprep.subr.bf16.mxu0 0
    %6225 = vmatpush1.bf16.msra.mxu0 0
    %6226 = vmatprep.subr.bf16.mxu0 0
    %6227 = vmatpush1.bf16.msra.mxu0 0
    %6228 = vmatprep.subr.bf16.mxu0 0
    %6229 = vmatpush1.bf16.msra.mxu0 0
    %6230 = vmatprep.subr.bf16.mxu0 0
    %6231 = vmatpush1.bf16.msra.mxu0 0
    %6232 = vmatprep.subr.bf16.mxu0 0
    %6233 = vmatpush1.bf16.msra.mxu0 0
    %6234 = vmatprep.subr.bf16.mxu0 0
    %6235 = vmatpush1.bf16.msra.mxu0 0
    %6236 = vmatprep.subr.bf16.mxu0 0
    %6237 = vmatpush1.bf16.msra.mxu0 0
    %6238 = vmatprep.subr.bf16.mxu0 0
    %6239 = vmatpush1.bf16.msra.mxu0 0
    %6240 = vmatprep.subr.bf16.mxu0 0
    %6241 = vmatpush1.bf16.msra.mxu0 0
    %6242 = vmatprep.mubr.bf16.mxu0 0
    %6243 = vmatmul.mubr.bf16.gmra.mrb[0].mxu0 %v6208
    %v6244 = vpop.f32.mrb[0].mxu0
    %v6245 = vadd.f32 %v5035, %v6244
    %v6246 = vpop.f32.mrb[0].mxu0
    %v6247 = vpop.f32.mrb[0].mxu0
    %v6248 = vadd.f32 %v5035, %v6247
    %v6249 = vpop.f32.mrb[0].mxu0
    %6250 = vdwg.mxu0
    %v6251 = vmax.f32 %v6245, 0.0
    %v6252 = vmax.f32 %v6248, 0.0
    %v6253 = vpack.c.bf16 %v6252, %v6251
    %v6270 = vunpack.c.l.b16 %v5036
    %v6271 = vunpack.c.l.b16 %v5037
    %v6272 = vunpack.c.l.b16 %v5038
    %v6273 = vunpack.c.l.b16 %v5039
    %v6274 = vunpack.c.l.b16 %v5040
    %v6275 = vunpack.c.l.b16 %v5041
    %v6276 = vunpack.c.l.b16 %v5042
    %v6277 = vunpack.c.l.b16 %v5043
    %v6278 = vunpack.c.l.b16 %v5044
    %v6279 = vunpack.c.l.b16 %v5045
    %v6280 = vunpack.c.l.b16 %v5046
    %v6281 = vunpack.c.l.b16 %v5047
    %v6282 = vunpack.c.l.b16 %v5048
    %v6283 = vunpack.c.l.b16 %v5049
    %v6284 = vunpack.c.l.b16 %v5050
    %v6285 = vunpack.c.l.b16 %v5051
    %v6286 = vpack.c.b16 %v6271, %v6270
    %v6287 = vpack.c.b16 %v6273, %v6272
    %v6288 = vpack.c.b16 %v6275, %v6274
    %v6289 = vpack.c.b16 %v6277, %v6276
    %v6290 = vpack.c.b16 %v6279, %v6278
    %v6291 = vpack.c.b16 %v6281, %v6280
    %v6292 = vpack.c.b16 %v6283, %v6282
    %v6293 = vpack.c.b16 %v6285, %v6284
    %6302 = vmatprep.subr.bf16.mxu0 0
    %6303 = vmatpush1.bf16.msra.mxu0 %v6286
    %6304 = vmatprep.subr.bf16.mxu0 0
    %6305 = vmatpush1.bf16.msra.mxu0 %v6287
    %6306 = vmatprep.subr.bf16.mxu0 0
    %6307 = vmatpush1.bf16.msra.mxu0 %v6288
    %6308 = vmatprep.subr.bf16.mxu0 0
    %6309 = vmatpush1.bf16.msra.mxu0 %v6289
    %6310 = vmatprep.subr.bf16.mxu0 0
    %6311 = vmatpush1.bf16.msra.mxu0 %v6290
    %6312 = vmatprep.subr.bf16.mxu0 0
    %6313 = vmatpush1.bf16.msra.mxu0 %v6291
    %6314 = vmatprep.subr.bf16.mxu0 0
    %6315 = vmatpush1.bf16.msra.mxu0 %v6292
    %6316 = vmatprep.subr.bf16.mxu0 0
    %6317 = vmatpush1.bf16.msra.mxu0 %v6293
    %6318 = vmatprep.subr.bf16.mxu0 0
    %6319 = vmatpush1.bf16.msra.mxu0 0
    %6320 = vmatprep.subr.bf16.mxu0 0
    %6321 = vmatpush1.bf16.msra.mxu0 0
    %6322 = vmatprep.subr.bf16.mxu0 0
    %6323 = vmatpush1.bf16.msra.mxu0 0
    %6324 = vmatprep.subr.bf16.mxu0 0
    %6325 = vmatpush1.bf16.msra.mxu0 0
    %6326 = vmatprep.subr.bf16.mxu0 0
    %6327 = vmatpush1.bf16.msra.mxu0 0
    %6328 = vmatprep.subr.bf16.mxu0 0
    %6329 = vmatpush1.bf16.msra.mxu0 0
    %6330 = vmatprep.subr.bf16.mxu0 0
    %6331 = vmatpush1.bf16.msra.mxu0 0
    %6332 = vmatprep.subr.bf16.mxu0 0
    %6333 = vmatpush1.bf16.msra.mxu0 0
    %6334 = vmatprep.mubr.bf16.mxu0 0
    %6335 = vmatmul.mubr.bf16.gmra.mrb[0].mxu0 %v6253
    %v6336 = vpop.f32.mrb[0].mxu0
    %v6337 = vadd.f32 %v5052, %v6336
    %v6338 = vpop.f32.mrb[0].mxu0
    %v6339 = vpop.f32.mrb[0].mxu0
    %v6340 = vadd.f32 %v5052, %v6339
    %v6341 = vpop.f32.mrb[0].mxu0
    %6342 = vdwg.mxu0
    %v6343 = vadd.f32 %v6180, %v6337
    %v6344 = vadd.f32 %v6181, %v6340
    %v6345 = vsel %vm505, %v6343, 0.0
    %6346 = vadd.xlane.f32.xlu0 %v6345
    %v6347 = vpop.xlane.xlu0 %6346
    %v6348 = vsel %vm505, %v6344, 0.0
    %6349 = vadd.xlane.f32.xlu0 %v6348
    %v6350 = vpop.xlane.xlu0 %6349
    %v6351 = vmul.f32 %v6347, %v4776
    %v6352 = vmul.f32 %v6350, %v4776
    %v6353 = vmul.f32 %v6343, %v6343
    %v6354 = vmul.f32 %v6344, %v6344
    %v6355 = vsel %vm505, %v6353, 0.0
    %6356 = vadd.xlane.f32.xlu0 %v6355
    %v6357 = vpop.xlane.xlu0 %6356
    %v6358 = vsel %vm505, %v6354, 0.0
    %6359 = vadd.xlane.f32.xlu0 %v6358
    %v6360 = vpop.xlane.xlu0 %6359
    %v6361 = vmul.f32 %v6357, %v4776
    %v6362 = vmul.f32 %v6360, %v4776
    %v6363 = vmul.f32 %v6351, %v6351
    %v6364 = vmul.f32 %v6352, %v6352
    %v6365 = vsub.f32 %v6361, %v6363
    %v6366 = vsub.f32 %v6362, %v6364
    %v6367 = vmax.f32 %v6365, 0.0
    %v6368 = vmax.f32 %v6366, 0.0
    %v6369 = vsub.f32 %v6343, %v6351
    %v6370 = vsub.f32 %v6344, %v6352
    %v6371 = vadd.f32 %v6367, 1e-05
    %v6372 = vadd.f32 %v6368, 1e-05
    %v6373 = vrsqrt.pop %v6371
    %v6374 = vrsqrt.pop %v6372
    %v6375 = vmul.f32 %v6369, %v6373
    %v6376 = vmul.f32 %v6370, %v6374
    %v6377 = vmul.f32 %v6375, %v5053
    %v6378 = vmul.f32 %v6376, %v5053
    %v6379 = vadd.f32 %v6377, %v5054
    %v6380 = vadd.f32 %v6378, %v5054
    %v6381 = vld [vmem:[%s2 + $0x25] ss:$0 sm:$0xff]
    %v6382 = vld [vmem:[%s2 + $0x26] ss:$0 sm:$0xff]
    %v6385 = vrot.slane %v6380, 7
    %vm6388 = vcmask 523271
    %v6389 = vsel %vm6388, %v6379, 0.0
    %6390 = vadd.xlane.f32.xlu0 %v6389
    %v6391 = vpop.xlane.xlu0 %6390
    %vm6392 = vcmask 516096
    %v6393 = vsel %vm6392, %v6385, 0.0
    %6394 = vadd.xlane.f32.xlu0 %v6393
    %v6395 = vpop.xlane.xlu0 %6394
    %v6396 = vmul.f32 %v6391, %v4776
    %v6397 = vmul.f32 %v6395, %v4776
    %v6398 = vmul.f32 %v6379, %v6379
    %v6399 = vmul.f32 %v6380, %v6380
    %v6402 = vrot.slane %v6399, 7
    %v6405 = vsel %vm6388, %v6398, 0.0
    %6406 = vadd.xlane.f32.xlu0 %v6405
    %v6407 = vpop.xlane.xlu0 %6406
    %v6408 = vsel %vm6392, %v6402, 0.0
    %6409 = vadd.xlane.f32.xlu0 %v6408
    %v6410 = vpop.xlane.xlu0 %6409
    %v6411 = vmul.f32 %v6407, %v4776
    %v6412 = vmul.f32 %v6410, %v4776
    %v6413 = vmul.f32 %v6396, %v6396
    %v6414 = vmul.f32 %v6397, %v6397
    %v6415 = vsub.f32 %v6411, %v6413
    %v6416 = vsub.f32 %v6412, %v6414
    %v6417 = vmax.f32 %v6415, 0.0
    %v6418 = vmax.f32 %v6416, 0.0
    %v6421 = vrot.slane %v6397, 1
    %v6424 = vsub.f32 %v6379, %v6396
    %v6425 = vsub.f32 %v6380, %v6421
    %v6426 = vadd.f32 %v6417, 1e-05
    %v6427 = vadd.f32 %v6418, 1e-05
    %v6428 = vrsqrt.pop %v6426
    %v6429 = vrsqrt.pop %v6427
    %v6432 = vrot.slane %v6429, 1
    %v6435 = vmul.f32 %v6424, %v6428
    %v6436 = vmul.f32 %v6425, %v6432
    %v6437 = vmul.f32 %v6435, %v6381
    %v6438 = vmul.f32 %v6436, %v6381
    %v6439 = vadd.f32 %v6437, %v6382
    %v6440 = vadd.f32 %v6438, %v6382
    %v6441 = vld [vmem:[%s16] sm:$0xf]
    %v6442 = vld [vmem:[%s16 + $0x4] sm:$0xf]
    %v6443 = vld [vmem:[%s16 + $0x8] sm:$0xf]
    %v6444 = vld [vmem:[%s16 + $0xc] sm:$0xf]
    %v6445 = vld [vmem:[%s16 + $0x10] sm:$0xf]
    %v6446 = vld [vmem:[%s16 + $0x14] sm:$0xf]
    %v6447 = vld [vmem:[%s16 + $0x18] sm:$0xf]
    %v6448 = vld [vmem:[%s16 + $0x1c] sm:$0xf]
    %v6449 = vld [vmem:[%s2 + $0x27] ss:$0 sm:$0xff]
    %v6450 = vpack.c.bf16 %v6439, %v6439
    %v6451 = vpack.c.bf16 %v6440, %v6440
    %v6454 = vunpack.c.l.b16 %v6450
    %v6455 = vunpack.c.l.b16 %v6451
    %v6456 = vrot.slane %v6454, 7
    %v6457 = vrot.slane %v6455, 6
    %v6458 = vsel %vm452, %v6457, %v6456
    %v6459 = vpack.c.b16 %v6458, %v6458
    %v6468 = vunpack.c.l.b16 %v6441
    %v6469 = vunpack.c.l.b16 %v6442
    %v6470 = vunpack.c.l.b16 %v6443
    %v6471 = vunpack.c.l.b16 %v6444
    %v6472 = vunpack.c.l.b16 %v6445
    %v6473 = vunpack.c.l.b16 %v6446
    %v6474 = vunpack.c.l.b16 %v6447
    %v6475 = vunpack.c.l.b16 %v6448
    %v6476 = vpack.c.b16 %v6469, %v6468
    %v6477 = vpack.c.b16 %v6471, %v6470
    %v6478 = vpack.c.b16 %v6473, %v6472
    %v6479 = vpack.c.b16 %v6475, %v6474
    %v6485 = vsel %vm505, %v6459, 0
    %6487 = vmatprep.subr.bf16.mxu0 0
    %6488 = vmatpush1.bf16.msra.mxu0 %v6476
    %6489 = vmatprep.subr.bf16.mxu0 0
    %6490 = vmatpush1.bf16.msra.mxu0 %v6477
    %6491 = vmatprep.subr.bf16.mxu0 0
    %6492 = vmatpush1.bf16.msra.mxu0 %v6478
    %6493 = vmatprep.subr.bf16.mxu0 0
    %6494 = vmatpush1.bf16.msra.mxu0 %v6479
    %6495 = vmatprep.subr.bf16.mxu0 0
    %6496 = vmatpush1.bf16.msra.mxu0 0
    %6497 = vmatprep.subr.bf16.mxu0 0
    %6498 = vmatpush1.bf16.msra.mxu0 0
    %6499 = vmatprep.subr.bf16.mxu0 0
    %6500 = vmatpush1.bf16.msra.mxu0 0
    %6501 = vmatprep.subr.bf16.mxu0 0
    %6502 = vmatpush1.bf16.msra.mxu0 0
    %6503 = vmatprep.subr.bf16.mxu0 0
    %6504 = vmatpush1.bf16.msra.mxu0 0
    %6505 = vmatprep.subr.bf16.mxu0 0
    %6506 = vmatpush1.bf16.msra.mxu0 0
    %6507 = vmatprep.subr.bf16.mxu0 0
    %6508 = vmatpush1.bf16.msra.mxu0 0
    %6509 = vmatprep.subr.bf16.mxu0 0
    %6510 = vmatpush1.bf16.msra.mxu0 0
    %6511 = vmatprep.subr.bf16.mxu0 0
    %6512 = vmatpush1.bf16.msra.mxu0 0
    %6513 = vmatprep.subr.bf16.mxu0 0
    %6514 = vmatpush1.bf16.msra.mxu0 0
    %6515 = vmatprep.subr.bf16.mxu0 0
    %6516 = vmatpush1.bf16.msra.mxu0 0
    %6517 = vmatprep.subr.bf16.mxu0 0
    %6518 = vmatpush1.bf16.msra.mxu0 0
    %6519 = vmatprep.mubr.bf16.mxu0 0
    %6520 = vmatmul.mubr.bf16.gmra.mrb[0].mxu0 %v6485
    %v6521 = vpop.f32.mrb[0].mxu0
    %v6522 = vadd.f32 %v6449, %v6521
    %v6523 = vpop.f32.mrb[0].mxu0
    %v6524 = vpop.f32.mrb[0].mxu0
    %v6525 = vpop.f32.mrb[0].mxu0
    %6526 = vdwg.mxu0
    %v6527 = vmax.f32 %v6522, 0.0
    %v6528 = vld [vmem:[%s2 + $0x30] ss:$0 sm:$0xff]
    %v6529 = vmul.f32 %v6527, %v6528
    %vm6530 = vcmask 254976
    %v6531 = vsel %vm6530, %v6529, 0.0
    %6532 = vadd.xlane.f32.xlu0 %v6531
    %v6533 = vpop.xlane.xlu0 %6532
    %v6534 = vld [vmem:[%s2 + $0x31] ss:$0 sm:$0xff]
    %v6535 = vadd.f32 %v6533, %v6534
    %vm6536 = vcmask 1024
    %6537 = vst.msk [vmem:[%s17] sm:$0x3] %vm6536, %v6535
    // Predicated region
    $region94: #{fwd.1} parent=1 // pred_check
      _
    $region95: #{fwd.1} parent=1 // pred_check_branch
      %6539 = sbr.rel (0) target = $region97
    $region96: #{fwd.1} parent=1 // pred_region
      _
    $region97: #{fwd.1} parent=1 // pred_fallthru
      _
    // Predicated region
    $region98: #{fwd.1} parent=1 // pred_check
      _
    $region99: #{fwd.1} parent=1 // pred_check_branch
      %6541 = sbr.rel (0) target = $region101
    $region100: #{fwd.1} parent=1 // pred_region
      _
    $region101: #{fwd.1} parent=1 // pred_fallthru
      _
    %6542 = vsyncpa [#allocation5], 1
    %6543 = vsyncpa [#allocation7], 1
    %6544 = vsyncpa [#allocation10], 1
    %6545 = vsyncpa [#allocation13], 1

</llo_original>
